<compile_context>
chip_gen: v6e
topology: v6e:2x2x1
jax: 0.10.0
libtpu: 0.0.40
codegen_flags: <defaults>
</compile_context>

<pallas_src>
import functools

import jax
import jax.numpy as jnp
import numpy as np
from jax.experimental import pallas as pl
from jax.experimental.pallas import tpu as pltpu


def _lora_mha_kernel(x_ref, wq_ref, wk_ref, wv_ref, bq_ref, bk_ref, bv_ref,
                     wp_ref, bp_ref, out_ref, *, num_heads):
    BB, S, D = x_ref.shape
    HD = D // num_heads
    cdt = wq_ref.dtype                    # compute dtype for MXU operands

    # (BB, S, D) -> (BB*S, D): leading-dim collapse, layout preserving.
    x = x_ref[...].reshape(BB * S, D)

    # Fused q/k/v projections over all BB*S rows.  LoRA deltas and the
    # attention scale are already folded into wq/bq by the wrapper; weights
    # are pre-transposed to (in, out).
    q = (jnp.dot(x, wq_ref[...], preferred_element_type=jnp.float32)
         + bq_ref[...]).astype(cdt)
    k = (jnp.dot(x, wk_ref[...], preferred_element_type=jnp.float32)
         + bk_ref[...]).astype(cdt)
    v = (jnp.dot(x, wv_ref[...], preferred_element_type=jnp.float32)
         + bv_ref[...]).astype(cdt)

    # Attention + output projection per batch element (BB is a small static
    # constant; slices are static and sublane-aligned, S % 8 == 0).
    for b in range(BB):
        lo = b * S
        qb = q[lo:lo + S].reshape(S, num_heads, HD)
        kb = k[lo:lo + S].reshape(S, num_heads, HD)
        vb = v[lo:lo + S].reshape(S, num_heads, HD)

        logits = jnp.einsum('qhd,khd->hqk', qb, kb,
                            preferred_element_type=jnp.float32)   # (H, S, S)
        logits = logits - jnp.max(logits, axis=-1, keepdims=True)
        p = jnp.exp(logits)
        p = p * pl.reciprocal(jnp.sum(p, axis=-1, keepdims=True), approx=True)

        ctxb = jnp.einsum('hqk,khd->qhd', p.astype(cdt), vb,
                          preferred_element_type=jnp.float32)     # (S, H, HD)
        ctxb = ctxb.reshape(S, D).astype(cdt)

        outb = jnp.dot(ctxb, wp_ref[...],
                       preferred_element_type=jnp.float32) + bp_ref[...]
        # TODO(synk): output last dim is D=64 (< 128 lanes) -> masked stores;
        # a lane-dense (BB, S*D) slab would need an in-kernel sublane->lane
        # relayout that is not worth it at this problem size.
        out_ref[b] = outb.astype(out_ref.dtype)


def lora_mha_forward(x, params, *, num_heads, rank, lora_scaling,
                     batch_block=None, compute_dtype=jnp.bfloat16):
    """Forward pass of LoRAMultiheadAttention1 (use_rel_pos=False)."""
    B, H, W, D = x.shape
    S = H * W
    R = rank
    HD = D // num_heads
    scale = float(HD ** -0.5)
    if batch_block is None:
        batch_block = B                   # single grid step by default
    assert B % batch_block == 0
    num_blocks = B // batch_block

    w_qkv = params['w_qkv']          # (3D, D)  PyTorch (out, in) layout
    b_qkv = params['b_qkv']          # (1, 3D)
    lora_A = params['lora_A']        # (2R, D)
    lora_B = params['lora_B']        # (2D, R)
    w_proj = params['w_proj']        # (D, D)
    b_proj = params['b_proj']        # (1, D)

    # ---- wrapper-side weight prep (one-time XLA cost, outside the kernel) ---
    # Merge LoRA into the frozen weights:
    #   y = x @ W^T + s*(x @ A^T) @ B^T == x @ (W + s*(B @ A))^T
    dwq = lora_scaling * (lora_B[:D] @ lora_A[:R])        # adds to W_q  (D, D)
    dwv = lora_scaling * (lora_B[D:] @ lora_A[R:])        # adds to W_v  (D, D)
    # Split q/k/v, pre-transpose to (in, out), fold the attention scale into q.
    wq_t = ((w_qkv[:D] + dwq).T * scale).astype(compute_dtype)
    wk_t = w_qkv[D:2 * D].T.astype(compute_dtype)
    wv_t = (w_qkv[2 * D:] + dwv).T.astype(compute_dtype)
    wp_t = w_proj.T.astype(compute_dtype)
    bq = (b_qkv[:, :D] * scale).astype(jnp.float32)
    bk = b_qkv[:, D:2 * D].astype(jnp.float32)
    bv = b_qkv[:, 2 * D:].astype(jnp.float32)
    bp = b_proj.astype(jnp.float32)

    x2 = x.reshape(B, S, D).astype(compute_dtype)

    kernel = functools.partial(_lora_mha_kernel, num_heads=num_heads)
    weight_spec = pl.BlockSpec((D, D), lambda i: (0, 0))
    bias_spec = pl.BlockSpec((1, D), lambda i: (0, 0))

    out = pl.pallas_call(
        kernel,
        out_shape=jax.ShapeDtypeStruct((B, S, D), jnp.float32),
        grid=(num_blocks,),
        in_specs=[
            pl.BlockSpec((batch_block, S, D), lambda i: (i, 0, 0)),   # x
            weight_spec, weight_spec, weight_spec,                    # wq, wk, wv
            bias_spec, bias_spec, bias_spec,                          # bq, bk, bv
            weight_spec,                                              # w_proj^T
            bias_spec,                                                # b_proj
        ],
        out_specs=pl.BlockSpec((batch_block, S, D), lambda i: (i, 0, 0)),
        compiler_params=pltpu.CompilerParams(
            dimension_semantics=("parallel",)),   # batch blocks across TCs (v7x)
    )(x2, wq_t, wk_t, wv_t, bq, bk, bv, wp_t, bp)

    return out.reshape(B, H, W, D)


def reference(x, params, *, num_heads, rank, lora_scaling):
    """Pure-JAX f32 reference mirroring the PyTorch forward pass."""
    B, H, W, D = x.shape
    S = H * W
    hd = D // num_heads
    scale = hd ** -0.5

    x2 = x.reshape(B, S, D)
    qkv = x2 @ params['w_qkv'].T + params['b_qkv'][0]
    after_a = x2 @ params['lora_A'].T
    lora_q = after_a[..., :rank] @ params['lora_B'][:D].T
    lora_v = after_a[..., rank:] @ params['lora_B'][D:].T
    q = qkv[..., :D] + lora_scaling * lora_q
    k = qkv[..., D:2 * D]
    v = qkv[..., 2 * D:] + lora_scaling * lora_v

    qh = q.reshape(B, S, num_heads, hd).transpose(0, 2, 1, 3)
    kh = k.reshape(B, S, num_heads, hd).transpose(0, 2, 1, 3)
    vh = v.reshape(B, S, num_heads, hd).transpose(0, 2, 1, 3)

    attn = (qh * scale) @ jnp.swapaxes(kh, -1, -2)
    attn = jax.nn.softmax(attn, axis=-1)
    ctx = (attn @ vh).transpose(0, 2, 1, 3).reshape(B, S, D)
    out = ctx @ params['w_proj'].T + params['b_proj'][0]
    return out.reshape(B, H, W, D)


if __name__ == "__main__":
    B, H, W, D = 2, 8, 8, 64          # dim=64, seq = H*W = 64
    num_heads = 8
    rank = 4
    lora_alpha = 1.0
    lora_scaling = lora_alpha / rank  # loralib default scaling

    key = jax.random.PRNGKey(0)
    ks = jax.random.split(key, 7)
    x = jax.random.normal(ks[0], (B, H, W, D), jnp.float32)

    params = {
        'w_qkv':  jax.random.normal(ks[1], (3 * D, D), jnp.float32) * 0.05,
        'b_qkv':  jax.random.normal(ks[2], (1, 3 * D), jnp.float32) * 0.05,
        'lora_A': jax.random.normal(ks[3], (2 * rank, D), jnp.float32) * 0.05,
        # NOTE: loralib zero-inits lora_B; use nonzero values so the merged
        # LoRA path is actually exercised / validated.
        'lora_B': jax.random.normal(ks[4], (2 * D, rank), jnp.float32) * 0.05,
        'w_proj': jax.random.normal(ks[5], (D, D), jnp.float32) * 0.05,
        'b_proj': jax.random.normal(ks[6], (1, D), jnp.float32) * 0.05,
    }

    ref = reference(x, params, num_heads=num_heads, rank=rank,
                    lora_scaling=lora_scaling)

    # Tolerance sized for bf16 MXU operands with f32 accumulation.
    RTOL, ATOL = 2e-2, 3e-3

    # Config 1 (default): all batches in a single grid step (v5e/v6e best:
    # M = B*S = 128 rows per projection matmul, one pipeline prologue/epilogue).
    out1 = jax.block_until_ready(
        lora_mha_forward(x, params, num_heads=num_heads, rank=rank,
                         lora_scaling=lora_scaling))
    assert out1.shape == (B, H, W, D)
    np.testing.assert_allclose(np.asarray(out1), np.asarray(ref),
                               rtol=RTOL, atol=ATOL)

    # Config 2: one batch per grid step, batch axis "parallel" (v7x: 2 TCs).
    out2 = jax.block_until_ready(
        lora_mha_forward(x, params, num_heads=num_heads, rank=rank,
                         lora_scaling=lora_scaling, batch_block=1))
    np.testing.assert_allclose(np.asarray(out2), np.asarray(ref),
                               rtol=RTOL, atol=ATOL)

    print("KERNEL_OK")
</pallas_src>

<mosaic_0001>
module attributes {stable_mosaic.version = 11 : i64} {
  func.func @_lora_mha_kernel(%arg0: i32, %arg1: memref<2x64x64xbf16, #tpu.memory_space<vmem>>, %arg2: memref<64x64xbf16, #tpu.memory_space<vmem>>, %arg3: memref<64x64xbf16, #tpu.memory_space<vmem>>, %arg4: memref<64x64xbf16, #tpu.memory_space<vmem>>, %arg5: memref<1x64xf32, #tpu.memory_space<vmem>>, %arg6: memref<1x64xf32, #tpu.memory_space<vmem>>, %arg7: memref<1x64xf32, #tpu.memory_space<vmem>>, %arg8: memref<64x64xbf16, #tpu.memory_space<vmem>>, %arg9: memref<1x64xf32, #tpu.memory_space<vmem>>, %arg10: memref<2x64x64xf32, #tpu.memory_space<vmem>>) attributes {dimension_semantics = [#tpu.dimension_semantics<parallel>], iteration_bounds = array<i64: 1>, scalar_prefetch = 0 : i64, scratch_operands = 0 : i64, tpu.core_type = #tpu.core_type<tc>, window_params = [{transform_indices = @transform_0, window_bounds = array<i64: 2, 64, 64>}, {pipeline_mode = #tpu.pipeline_mode<synchronous>, transform_indices = @transform_1, window_bounds = array<i64: 64, 64>}, {pipeline_mode = #tpu.pipeline_mode<synchronous>, transform_indices = @transform_2, window_bounds = array<i64: 64, 64>}, {pipeline_mode = #tpu.pipeline_mode<synchronous>, transform_indices = @transform_3, window_bounds = array<i64: 64, 64>}, {pipeline_mode = #tpu.pipeline_mode<synchronous>, transform_indices = @transform_4, window_bounds = array<i64: 1, 64>}, {pipeline_mode = #tpu.pipeline_mode<synchronous>, transform_indices = @transform_5, window_bounds = array<i64: 1, 64>}, {pipeline_mode = #tpu.pipeline_mode<synchronous>, transform_indices = @transform_6, window_bounds = array<i64: 1, 64>}, {pipeline_mode = #tpu.pipeline_mode<synchronous>, transform_indices = @transform_7, window_bounds = array<i64: 64, 64>}, {pipeline_mode = #tpu.pipeline_mode<synchronous>, transform_indices = @transform_8, window_bounds = array<i64: 1, 64>}, {transform_indices = @transform_9, window_bounds = array<i64: 2, 64, 64>}]} {
    %c0 = arith.constant 0 : index
    %c0_0 = arith.constant 0 : index
    %c0_1 = arith.constant 0 : index
    %0 = vector.load %arg1[%c0, %c0_0, %c0_1] : memref<2x64x64xbf16, #tpu.memory_space<vmem>>, vector<2x64x64xbf16>
    %1 = vector.shape_cast %0 : vector<2x64x64xbf16> to vector<128x64xbf16>
    %c0_2 = arith.constant 0 : index
    %c0_3 = arith.constant 0 : index
    %2 = vector.load %arg2[%c0_2, %c0_3] : memref<64x64xbf16, #tpu.memory_space<vmem>>, vector<64x64xbf16>
    %cst = arith.constant dense<0.000000e+00> : vector<128x64xf32>
    %3 = tpu.matmul %1, %2, %cst {dimension_numbers = #tpu.dot_dimension_numbers<[1], [0], [0], [1], [0, 0, 1, 1], [], []>} : vector<128x64xbf16>, vector<64x64xbf16>, vector<128x64xf32> -> vector<128x64xf32>
    %c0_4 = arith.constant 0 : index
    %c0_5 = arith.constant 0 : index
    %4 = vector.load %arg5[%c0_4, %c0_5] : memref<1x64xf32, #tpu.memory_space<vmem>>, vector<1x64xf32>
    %5 = vector.broadcast %4 : vector<1x64xf32> to vector<128x64xf32>
    %6 = arith.addf %3, %5 : vector<128x64xf32>
    %7 = arith.truncf %6 : vector<128x64xf32> to vector<128x64xbf16>
    %c0_6 = arith.constant 0 : index
    %c0_7 = arith.constant 0 : index
    %8 = vector.load %arg3[%c0_6, %c0_7] : memref<64x64xbf16, #tpu.memory_space<vmem>>, vector<64x64xbf16>
    %cst_8 = arith.constant dense<0.000000e+00> : vector<128x64xf32>
    %9 = tpu.matmul %1, %8, %cst_8 {dimension_numbers = #tpu.dot_dimension_numbers<[1], [0], [0], [1], [0, 0, 1, 1], [], []>} : vector<128x64xbf16>, vector<64x64xbf16>, vector<128x64xf32> -> vector<128x64xf32>
    %c0_9 = arith.constant 0 : index
    %c0_10 = arith.constant 0 : index
    %10 = vector.load %arg6[%c0_9, %c0_10] : memref<1x64xf32, #tpu.memory_space<vmem>>, vector<1x64xf32>
    %11 = vector.broadcast %10 : vector<1x64xf32> to vector<128x64xf32>
    %12 = arith.addf %9, %11 : vector<128x64xf32>
    %13 = arith.truncf %12 : vector<128x64xf32> to vector<128x64xbf16>
    %c0_11 = arith.constant 0 : index
    %c0_12 = arith.constant 0 : index
    %14 = vector.load %arg4[%c0_11, %c0_12] : memref<64x64xbf16, #tpu.memory_space<vmem>>, vector<64x64xbf16>
    %cst_13 = arith.constant dense<0.000000e+00> : vector<128x64xf32>
    %15 = tpu.matmul %1, %14, %cst_13 {dimension_numbers = #tpu.dot_dimension_numbers<[1], [0], [0], [1], [0, 0, 1, 1], [], []>} : vector<128x64xbf16>, vector<64x64xbf16>, vector<128x64xf32> -> vector<128x64xf32>
    %c0_14 = arith.constant 0 : index
    %c0_15 = arith.constant 0 : index
    %16 = vector.load %arg7[%c0_14, %c0_15] : memref<1x64xf32, #tpu.memory_space<vmem>>, vector<1x64xf32>
    %17 = vector.broadcast %16 : vector<1x64xf32> to vector<128x64xf32>
    %18 = arith.addf %15, %17 : vector<128x64xf32>
    %19 = arith.truncf %18 : vector<128x64xf32> to vector<128x64xbf16>
    %20 = vector.extract_strided_slice %7 {offsets = [0, 0], sizes = [64, 64], strides = [1, 1]} : vector<128x64xbf16> to vector<64x64xbf16>
    %21 = vector.shape_cast %20 : vector<64x64xbf16> to vector<64x8x8xbf16>
    %22 = vector.extract_strided_slice %13 {offsets = [0, 0], sizes = [64, 64], strides = [1, 1]} : vector<128x64xbf16> to vector<64x64xbf16>
    %23 = vector.shape_cast %22 : vector<64x64xbf16> to vector<64x8x8xbf16>
    %24 = vector.extract_strided_slice %19 {offsets = [0, 0], sizes = [64, 64], strides = [1, 1]} : vector<128x64xbf16> to vector<64x64xbf16>
    %25 = vector.shape_cast %24 : vector<64x64xbf16> to vector<64x8x8xbf16>
    "tpu.trace_start"() <{level = 10 : i32, message = "qhd,khd->hqk"}> : () -> ()
    %cst_16 = arith.constant dense<0.000000e+00> : vector<8x64x64xf32>
    %26 = tpu.matmul %21, %23, %cst_16 {dimension_numbers = #tpu.dot_dimension_numbers<[2], [2], [0], [0], [0, 1, 0, 0, 1, 0], [1], [1]>} : vector<64x8x8xbf16>, vector<64x8x8xbf16>, vector<8x64x64xf32> -> vector<8x64x64xf32>
    "tpu.trace_stop"() : () -> ()
    %cst_17 = arith.constant dense<0xFF800000> : vector<8x64xf32>
    %27 = vector.multi_reduction <maximumf>, %26, %cst_17 [2] : vector<8x64x64xf32> to vector<8x64xf32>
    %28 = vector.shape_cast %27 : vector<8x64xf32> to vector<8x64x1xf32>
    %29 = vector.broadcast %28 : vector<8x64x1xf32> to vector<8x64x64xf32>
    %30 = arith.subf %26, %29 : vector<8x64x64xf32>
    %31 = math.exp %30 : vector<8x64x64xf32>
    %cst_18 = arith.constant dense<0.000000e+00> : vector<8x64xf32>
    %32 = vector.multi_reduction <add>, %31, %cst_18 [2] : vector<8x64x64xf32> to vector<8x64xf32>
    %33 = vector.shape_cast %32 : vector<8x64xf32> to vector<8x64x1xf32>
    %34 = tpu.reciprocal %33 {approx = true} : vector<8x64x1xf32> -> vector<8x64x1xf32>
    %35 = vector.broadcast %34 : vector<8x64x1xf32> to vector<8x64x64xf32>
    %36 = arith.mulf %31, %35 : vector<8x64x64xf32>
    %37 = arith.truncf %36 : vector<8x64x64xf32> to vector<8x64x64xbf16>
    "tpu.trace_start"() <{level = 10 : i32, message = "hqk,khd->qhd"}> : () -> ()
    %cst_19 = arith.constant dense<0.000000e+00> : vector<8x8x64xf32>
    %38 = tpu.matmul %25, %37, %cst_19 {dimension_numbers = #tpu.dot_dimension_numbers<[0], [2], [2], [1], [0, 1, 0, 2, 1, 1], [1], [0]>} : vector<64x8x8xbf16>, vector<8x64x64xbf16>, vector<8x8x64xf32> -> vector<8x8x64xf32>
    %39 = tpu.transpose %38, [2, 0, 1] : vector<8x8x64xf32> -> vector<64x8x8xf32>
    "tpu.trace_stop"() : () -> ()
    %40 = vector.shape_cast %39 : vector<64x8x8xf32> to vector<64x64xf32>
    %41 = arith.truncf %40 : vector<64x64xf32> to vector<64x64xbf16>
    %c0_20 = arith.constant 0 : index
    %c0_21 = arith.constant 0 : index
    %42 = vector.load %arg8[%c0_20, %c0_21] : memref<64x64xbf16, #tpu.memory_space<vmem>>, vector<64x64xbf16>
    %cst_22 = arith.constant dense<0.000000e+00> : vector<64x64xf32>
    %43 = tpu.matmul %41, %42, %cst_22 {dimension_numbers = #tpu.dot_dimension_numbers<[1], [0], [0], [1], [0, 0, 1, 1], [], []>} : vector<64x64xbf16>, vector<64x64xbf16>, vector<64x64xf32> -> vector<64x64xf32>
    %c0_23 = arith.constant 0 : index
    %c0_24 = arith.constant 0 : index
    %44 = vector.load %arg9[%c0_23, %c0_24] : memref<1x64xf32, #tpu.memory_space<vmem>>, vector<1x64xf32>
    %45 = vector.broadcast %44 : vector<1x64xf32> to vector<64x64xf32>
    %46 = arith.addf %43, %45 : vector<64x64xf32>
    %c0_25 = arith.constant 0 : index
    %c0_26 = arith.constant 0 : index
    %c0_27 = arith.constant 0 : index
    %47 = vector.load %arg10[%c0_25, %c0_26, %c0_27] : memref<2x64x64xf32, #tpu.memory_space<vmem>>, vector<1x64x64xf32>
    %48 = vector.shape_cast %47 : vector<1x64x64xf32> to vector<64x64xf32>
    %49 = vector.shape_cast %46 : vector<64x64xf32> to vector<1x64x64xf32>
    tpu.vector_store %arg10[%c0_25, %c0_26, %c0_27], %49 {strides = array<i32>} : memref<2x64x64xf32, #tpu.memory_space<vmem>>, vector<1x64x64xf32>,
    %50 = vector.extract_strided_slice %7 {offsets = [64, 0], sizes = [64, 64], strides = [1, 1]} : vector<128x64xbf16> to vector<64x64xbf16>
    %51 = vector.shape_cast %50 : vector<64x64xbf16> to vector<64x8x8xbf16>
    %52 = vector.extract_strided_slice %13 {offsets = [64, 0], sizes = [64, 64], strides = [1, 1]} : vector<128x64xbf16> to vector<64x64xbf16>
    %53 = vector.shape_cast %52 : vector<64x64xbf16> to vector<64x8x8xbf16>
    %54 = vector.extract_strided_slice %19 {offsets = [64, 0], sizes = [64, 64], strides = [1, 1]} : vector<128x64xbf16> to vector<64x64xbf16>
    %55 = vector.shape_cast %54 : vector<64x64xbf16> to vector<64x8x8xbf16>
    "tpu.trace_start"() <{level = 10 : i32, message = "qhd,khd->hqk"}> : () -> ()
    %cst_28 = arith.constant dense<0.000000e+00> : vector<8x64x64xf32>
    %56 = tpu.matmul %51, %53, %cst_28 {dimension_numbers = #tpu.dot_dimension_numbers<[2], [2], [0], [0], [0, 1, 0, 0, 1, 0], [1], [1]>} : vector<64x8x8xbf16>, vector<64x8x8xbf16>, vector<8x64x64xf32> -> vector<8x64x64xf32>
    "tpu.trace_stop"() : () -> ()
    %cst_29 = arith.constant dense<0xFF800000> : vector<8x64xf32>
    %57 = vector.multi_reduction <maximumf>, %56, %cst_29 [2] : vector<8x64x64xf32> to vector<8x64xf32>
    %58 = vector.shape_cast %57 : vector<8x64xf32> to vector<8x64x1xf32>
    %59 = vector.broadcast %58 : vector<8x64x1xf32> to vector<8x64x64xf32>
    %60 = arith.subf %56, %59 : vector<8x64x64xf32>
    %61 = math.exp %60 : vector<8x64x64xf32>
    %cst_30 = arith.constant dense<0.000000e+00> : vector<8x64xf32>
    %62 = vector.multi_reduction <add>, %61, %cst_30 [2] : vector<8x64x64xf32> to vector<8x64xf32>
    %63 = vector.shape_cast %62 : vector<8x64xf32> to vector<8x64x1xf32>
    %64 = tpu.reciprocal %63 {approx = true} : vector<8x64x1xf32> -> vector<8x64x1xf32>
    %65 = vector.broadcast %64 : vector<8x64x1xf32> to vector<8x64x64xf32>
    %66 = arith.mulf %61, %65 : vector<8x64x64xf32>
    %67 = arith.truncf %66 : vector<8x64x64xf32> to vector<8x64x64xbf16>
    "tpu.trace_start"() <{level = 10 : i32, message = "hqk,khd->qhd"}> : () -> ()
    %cst_31 = arith.constant dense<0.000000e+00> : vector<8x8x64xf32>
    %68 = tpu.matmul %55, %67, %cst_31 {dimension_numbers = #tpu.dot_dimension_numbers<[0], [2], [2], [1], [0, 1, 0, 2, 1, 1], [1], [0]>} : vector<64x8x8xbf16>, vector<8x64x64xbf16>, vector<8x8x64xf32> -> vector<8x8x64xf32>
    %69 = tpu.transpose %68, [2, 0, 1] : vector<8x8x64xf32> -> vector<64x8x8xf32>
    "tpu.trace_stop"() : () -> ()
    %70 = vector.shape_cast %69 : vector<64x8x8xf32> to vector<64x64xf32>
    %71 = arith.truncf %70 : vector<64x64xf32> to vector<64x64xbf16>
    %c0_32 = arith.constant 0 : index
    %c0_33 = arith.constant 0 : index
    %72 = vector.load %arg8[%c0_32, %c0_33] : memref<64x64xbf16, #tpu.memory_space<vmem>>, vector<64x64xbf16>
    %cst_34 = arith.constant dense<0.000000e+00> : vector<64x64xf32>
    %73 = tpu.matmul %71, %72, %cst_34 {dimension_numbers = #tpu.dot_dimension_numbers<[1], [0], [0], [1], [0, 0, 1, 1], [], []>} : vector<64x64xbf16>, vector<64x64xbf16>, vector<64x64xf32> -> vector<64x64xf32>
    %c0_35 = arith.constant 0 : index
    %c0_36 = arith.constant 0 : index
    %74 = vector.load %arg9[%c0_35, %c0_36] : memref<1x64xf32, #tpu.memory_space<vmem>>, vector<1x64xf32>
    %75 = vector.broadcast %74 : vector<1x64xf32> to vector<64x64xf32>
    %76 = arith.addf %73, %75 : vector<64x64xf32>
    %c1 = arith.constant 1 : index
    %c0_37 = arith.constant 0 : index
    %c0_38 = arith.constant 0 : index
    %77 = vector.load %arg10[%c1, %c0_37, %c0_38] : memref<2x64x64xf32, #tpu.memory_space<vmem>>, vector<1x64x64xf32>
    %78 = vector.shape_cast %77 : vector<1x64x64xf32> to vector<64x64xf32>
    %79 = vector.shape_cast %76 : vector<64x64xf32> to vector<1x64x64xf32>
    tpu.vector_store %arg10[%c1, %c0_37, %c0_38], %79 {strides = array<i32>} : memref<2x64x64xf32, #tpu.memory_space<vmem>>, vector<1x64x64xf32>,
    return
  }
  func.func @transform_0(%arg0: i32) -> (i32, i32, i32) {
    %c0_i32 = arith.constant 0 : i32
    %c0_i32_0 = arith.constant 0 : i32
    %c0_i32_1 = arith.constant 0 : i32
    return %arg0, %c0_i32, %c0_i32_0 : i32, i32, i32
  }
  func.func @transform_1(%arg0: i32) -> (i32, i32) {
    %c0_i32 = arith.constant 0 : i32
    %c0_i32_0 = arith.constant 0 : i32
    %c0_i32_1 = arith.constant 0 : i32
    return %c0_i32, %c0_i32_0 : i32, i32
  }
  func.func @transform_2(%arg0: i32) -> (i32, i32) {
    %c0_i32 = arith.constant 0 : i32
    %c0_i32_0 = arith.constant 0 : i32
    %c0_i32_1 = arith.constant 0 : i32
    return %c0_i32, %c0_i32_0 : i32, i32
  }
  func.func @transform_3(%arg0: i32) -> (i32, i32) {
    %c0_i32 = arith.constant 0 : i32
    %c0_i32_0 = arith.constant 0 : i32
    %c0_i32_1 = arith.constant 0 : i32
    return %c0_i32, %c0_i32_0 : i32, i32
  }
  func.func @transform_4(%arg0: i32) -> (i32, i32) {
    %c0_i32 = arith.constant 0 : i32
    %c0_i32_0 = arith.constant 0 : i32
    %c0_i32_1 = arith.constant 0 : i32
    return %c0_i32, %c0_i32_0 : i32, i32
  }
  func.func @transform_5(%arg0: i32) -> (i32, i32) {
    %c0_i32 = arith.constant 0 : i32
    %c0_i32_0 = arith.constant 0 : i32
    %c0_i32_1 = arith.constant 0 : i32
    return %c0_i32, %c0_i32_0 : i32, i32
  }
  func.func @transform_6(%arg0: i32) -> (i32, i32) {
    %c0_i32 = arith.constant 0 : i32
    %c0_i32_0 = arith.constant 0 : i32
    %c0_i32_1 = arith.constant 0 : i32
    return %c0_i32, %c0_i32_0 : i32, i32
  }
  func.func @transform_7(%arg0: i32) -> (i32, i32) {
    %c0_i32 = arith.constant 0 : i32
    %c0_i32_0 = arith.constant 0 : i32
    %c0_i32_1 = arith.constant 0 : i32
    return %c0_i32, %c0_i32_0 : i32, i32
  }
  func.func @transform_8(%arg0: i32) -> (i32, i32) {
    %c0_i32 = arith.constant 0 : i32
    %c0_i32_0 = arith.constant 0 : i32
    %c0_i32_1 = arith.constant 0 : i32
    return %c0_i32, %c0_i32_0 : i32, i32
  }
  func.func @transform_9(%arg0: i32) -> (i32, i32, i32) {
    %c0_i32 = arith.constant 0 : i32
    %c0_i32_0 = arith.constant 0 : i32
    %c0_i32_1 = arith.constant 0 : i32
    return %arg0, %c0_i32, %c0_i32_0 : i32, i32, i32
  }
}

</mosaic_0001>

<llo_original>
// kernel: tpu_custom_call.1
$region0: #{tpu_custom_call.1}
  #allocation0 [shape = 'u32[]', space=smem, size = 0x4, offset = 0x4, fixed_abs, tag = 'smem constant byte address 0x4 - core index']
  #allocation1 [shape = 'u32[144,128]{1,0:T(1,128)}', space=vmem, size = 0x12000, scoped, tag = 'internal scratch']
  %s0 = inlined_call_operand.hbm [shape: bf16[2,64,64], index: 0, kind: input, shape index: {}]
  %s1 = inlined_call_operand.hbm [shape: bf16[64,64], index: 1, kind: input, shape index: {}]
  %s2 = inlined_call_operand.hbm [shape: bf16[64,64], index: 2, kind: input, shape index: {}]
  %s3 = inlined_call_operand.hbm [shape: bf16[64,64], index: 3, kind: input, shape index: {}]
  %s4 = inlined_call_operand.vmem [shape: f32[1,64], index: 4, kind: input, shape index: {}]
  %s5 = inlined_call_operand.vmem [shape: f32[1,64], index: 5, kind: input, shape index: {}]
  %s6 = inlined_call_operand.vmem [shape: f32[1,64], index: 6, kind: input, shape index: {}]
  %s7 = inlined_call_operand.hbm [shape: bf16[64,64], index: 7, kind: input, shape index: {}]
  %s8 = inlined_call_operand.vmem [shape: f32[1,64], index: 8, kind: input, shape index: {}]
  %s9 = inlined_call_operand.hbm [shape: f32[2,64,64], index: 9, kind: output, shape index: {}]
  %s10 = sld [smem:[#allocation0]]
  $region66: #{tpu_custom_call.1} parent=0
    _
  %s12 = ssub.s32 1, %s10
  %s13 = scalar_select 0, %s12, %s10
  $region1: #{tpu_custom_call.1} parent=0
    #allocation2 [shape = 'u8[32768]{0}', space=vmem, size = 0x8000, scoped, tag = 'input window, operand 0, single buffered']
    #allocation3 [shape = 's32[1]{0}', space=sflag, size = 0x4, scoped, tag = 'scoped memory for tpu_custom_call.1']
    #allocation4 [shape = 's32[1]{0}', space=sflag, size = 0x4, scoped, tag = 'scoped memory for tpu_custom_call.1']
    #allocation5 [shape = 'u8[16384]{0}', space=vmem, size = 0x4000, scoped, tag = 'input window, operand 1, single buffered']
    #allocation6 [shape = 's32[1]{0}', space=sflag, size = 0x4, scoped, tag = 'scoped memory for tpu_custom_call.1']
    #allocation7 [shape = 'u8[16384]{0}', space=vmem, size = 0x4000, scoped, tag = 'input window, operand 2, single buffered']
    #allocation8 [shape = 'u8[16384]{0}', space=vmem, size = 0x4000, scoped, tag = 'input window, operand 3, single buffered']
    #allocation9 [shape = 's32[1]{0}', space=sflag, size = 0x4, scoped, tag = 'scoped memory for tpu_custom_call.1']
    #allocation10 [shape = 'u8[16384]{0}', space=vmem, size = 0x4000, scoped, tag = 'input window, operand 7, single buffered']
    #allocation11 [shape = 'u8[65536]{0}', space=vmem, size = 0x10000, scoped, tag = 'output window, operand 0, single buffered']
    %14 = vsyncpa [#allocation3], 0
    %15 = vsyncpa [#allocation6], 0
    %16 = vsyncpa [#allocation9], 0
    %17 = vsyncpa [#allocation4], 0
    // Predicated region
    $region2: #{tpu_custom_call.1} parent=1 // pred_check
      _
    $region3: #{tpu_custom_call.1} parent=1 // pred_check_branch
      %19 = sbr.rel (0) target = $region5
    $region4: #{tpu_custom_call.1} parent=1 // pred_region
      %s21 = ssub.s32 1024, 1024
      %22 = vsyncadd [#allocation3], %s21
      %s23 = sshll.u32 [#allocation2], 4
      %s24 = int_to_ptr.vmem [resolvable:$true] %s23
      %29 = dma.hbm_to_vmem [thread:$0]  %s0, 1024, %s24, [#allocation3], 64, 64, 4
    $region5: #{tpu_custom_call.1} parent=1 // pred_fallthru
      _
    // Predicated region
    $region6: #{tpu_custom_call.1} parent=1 // pred_check
      _
    $region7: #{tpu_custom_call.1} parent=1 // pred_check_branch
      %31 = sbr.rel (0) target = $region9
    $region8: #{tpu_custom_call.1} parent=1 // pred_region
      %s33 = ssub.s32 512, 512
      %34 = vsyncadd [#allocation6], %s33
      %s35 = sshll.u32 [#allocation5], 4
      %s36 = int_to_ptr.vmem [resolvable:$true] %s35
      %41 = dma.hbm_to_vmem [thread:$0]  %s1, 512, %s36, [#allocation6], 64, 64, 4
    $region9: #{tpu_custom_call.1} parent=1 // pred_fallthru
      _
    // Predicated region
    $region10: #{tpu_custom_call.1} parent=1 // pred_check
      _
    $region11: #{tpu_custom_call.1} parent=1 // pred_check_branch
      %43 = sbr.rel (0) target = $region13
    $region12: #{tpu_custom_call.1} parent=1 // pred_region
      %s45 = ssub.s32 512, 512
      %46 = vsyncadd [#allocation6], %s45
      %s47 = sshll.u32 [#allocation7], 4
      %s48 = int_to_ptr.vmem [resolvable:$true] %s47
      %53 = dma.hbm_to_vmem [thread:$0]  %s2, 512, %s48, [#allocation6], 64, 64, 4
    $region13: #{tpu_custom_call.1} parent=1 // pred_fallthru
      _
    // Predicated region
    $region14: #{tpu_custom_call.1} parent=1 // pred_check
      _
    $region15: #{tpu_custom_call.1} parent=1 // pred_check_branch
      %55 = sbr.rel (0) target = $region17
    $region16: #{tpu_custom_call.1} parent=1 // pred_region
      %s57 = ssub.s32 512, 512
      %58 = vsyncadd [#allocation9], %s57
      %s59 = sshll.u32 [#allocation8], 4
      %s60 = int_to_ptr.vmem [resolvable:$true] %s59
      %65 = dma.hbm_to_vmem [thread:$0]  %s3, 512, %s60, [#allocation9], 64, 64, 4
    $region17: #{tpu_custom_call.1} parent=1 // pred_fallthru
      _
    // Predicated region
    $region18: #{tpu_custom_call.1} parent=1 // pred_check
      _
    $region19: #{tpu_custom_call.1} parent=1 // pred_check_branch
      %67 = sbr.rel (0) target = $region21
    $region20: #{tpu_custom_call.1} parent=1 // pred_region
      _
    $region21: #{tpu_custom_call.1} parent=1 // pred_fallthru
      _
    // Predicated region
    $region22: #{tpu_custom_call.1} parent=1 // pred_check
      _
    $region23: #{tpu_custom_call.1} parent=1 // pred_check_branch
      %69 = sbr.rel (0) target = $region25
    $region24: #{tpu_custom_call.1} parent=1 // pred_region
      _
    $region25: #{tpu_custom_call.1} parent=1 // pred_fallthru
      _
    // Predicated region
    $region26: #{tpu_custom_call.1} parent=1 // pred_check
      _
    $region27: #{tpu_custom_call.1} parent=1 // pred_check_branch
      %71 = sbr.rel (0) target = $region29
    $region28: #{tpu_custom_call.1} parent=1 // pred_region
      _
    $region29: #{tpu_custom_call.1} parent=1 // pred_fallthru
      _
    // Predicated region
    $region30: #{tpu_custom_call.1} parent=1 // pred_check
      _
    $region31: #{tpu_custom_call.1} parent=1 // pred_check_branch
      %73 = sbr.rel (0) target = $region33
    $region32: #{tpu_custom_call.1} parent=1 // pred_region
      %s75 = ssub.s32 512, 512
      %76 = vsyncadd [#allocation9], %s75
      %s77 = sshll.u32 [#allocation10], 4
      %s78 = int_to_ptr.vmem [resolvable:$true] %s77
      %83 = dma.hbm_to_vmem [thread:$0]  %s7, 512, %s78, [#allocation9], 64, 64, 4
    $region33: #{tpu_custom_call.1} parent=1 // pred_fallthru
      _
    // Predicated region
    $region34: #{tpu_custom_call.1} parent=1 // pred_check
      _
    $region35: #{tpu_custom_call.1} parent=1 // pred_check_branch
      %85 = sbr.rel (0) target = $region37
    $region36: #{tpu_custom_call.1} parent=1 // pred_region
      _
    $region37: #{tpu_custom_call.1} parent=1 // pred_fallthru
      _
    // Predicated region
    $region38: #{tpu_custom_call.1} parent=1 // pred_check
      _
    $region39: #{tpu_custom_call.1} parent=1 // pred_check_branch
      %87 = sbr.rel (0) target = $region41
    $region40: #{tpu_custom_call.1} parent=1 // pred_region
      %88 = dma.done [#allocation3], 1024
    $region41: #{tpu_custom_call.1} parent=1 // pred_fallthru
      _
    // Predicated region
    $region42: #{tpu_custom_call.1} parent=1 // pred_check
      _
    $region43: #{tpu_custom_call.1} parent=1 // pred_check_branch
      %90 = sbr.rel (0) target = $region45
    $region44: #{tpu_custom_call.1} parent=1 // pred_region
      %91 = dma.done [#allocation6], 512
    $region45: #{tpu_custom_call.1} parent=1 // pred_fallthru
      _
    // Predicated region
    $region46: #{tpu_custom_call.1} parent=1 // pred_check
      _
    $region47: #{tpu_custom_call.1} parent=1 // pred_check_branch
      %93 = sbr.rel (0) target = $region49
    $region48: #{tpu_custom_call.1} parent=1 // pred_region
      %94 = dma.done [#allocation6], 512
    $region49: #{tpu_custom_call.1} parent=1 // pred_fallthru
      _
    // Predicated region
    $region50: #{tpu_custom_call.1} parent=1 // pred_check
      _
    $region51: #{tpu_custom_call.1} parent=1 // pred_check_branch
      %96 = sbr.rel (0) target = $region53
    $region52: #{tpu_custom_call.1} parent=1 // pred_region
      %97 = dma.done [#allocation9], 512
    $region53: #{tpu_custom_call.1} parent=1 // pred_fallthru
      _
    // Predicated region
    $region54: #{tpu_custom_call.1} parent=1 // pred_check
      _
    $region55: #{tpu_custom_call.1} parent=1 // pred_check_branch
      %99 = sbr.rel (0) target = $region57
    $region56: #{tpu_custom_call.1} parent=1 // pred_region
      %100 = dma.done [#allocation9], 512
    $region57: #{tpu_custom_call.1} parent=1 // pred_fallthru
      _
    %v102 = vld [vmem:[#allocation2] sm:$0xf]
    %v103 = vld [vmem:[#allocation2 + $0x4] sm:$0xf]
    %v104 = vld [vmem:[#allocation2 + $0x8] sm:$0xf]
    %v105 = vld [vmem:[#allocation2 + $0xc] sm:$0xf]
    %v106 = vld [vmem:[#allocation2 + $0x10] sm:$0xf]
    %v107 = vld [vmem:[#allocation2 + $0x14] sm:$0xf]
    %v108 = vld [vmem:[#allocation2 + $0x18] sm:$0xf]
    %v109 = vld [vmem:[#allocation2 + $0x1c] sm:$0xf]
    %v110 = vld [vmem:[#allocation2 + $0x20] sm:$0xf]
    %v111 = vld [vmem:[#allocation2 + $0x24] sm:$0xf]
    %v112 = vld [vmem:[#allocation2 + $0x28] sm:$0xf]
    %v113 = vld [vmem:[#allocation2 + $0x2c] sm:$0xf]
    %v114 = vld [vmem:[#allocation2 + $0x30] sm:$0xf]
    %v115 = vld [vmem:[#allocation2 + $0x34] sm:$0xf]
    %v116 = vld [vmem:[#allocation2 + $0x38] sm:$0xf]
    %v117 = vld [vmem:[#allocation2 + $0x3c] sm:$0xf]
    %v118 = vld [vmem:[#allocation5] sm:$0xf]
    %v119 = vld [vmem:[#allocation5 + $0x4] sm:$0xf]
    %v120 = vld [vmem:[#allocation5 + $0x8] sm:$0xf]
    %v121 = vld [vmem:[#allocation5 + $0xc] sm:$0xf]
    %v122 = vld [vmem:[#allocation5 + $0x10] sm:$0xf]
    %v123 = vld [vmem:[#allocation5 + $0x14] sm:$0xf]
    %v124 = vld [vmem:[#allocation5 + $0x18] sm:$0xf]
    %v125 = vld [vmem:[#allocation5 + $0x1c] sm:$0xf]
    %v126 = vld [vmem:[%s4] sm:$0x1]
    %v128 = vlaneseq
    %v129 = vshrl.u32 %v128, 7
    %v130 = vsub.s32 0, %v129
    %v131 = vrot.slane %v126, %v130
    %v149 = vunpack.c.l.b16 %v102
    %v150 = vunpack.c.l.b16 %v103
    %v151 = vunpack.c.l.b16 %v104
    %v152 = vunpack.c.l.b16 %v105
    %v153 = vunpack.c.l.b16 %v106
    %v154 = vunpack.c.l.b16 %v107
    %v155 = vunpack.c.l.b16 %v108
    %v156 = vunpack.c.l.b16 %v109
    %v157 = vunpack.c.l.b16 %v110
    %v158 = vunpack.c.l.b16 %v111
    %v159 = vunpack.c.l.b16 %v112
    %v160 = vunpack.c.l.b16 %v113
    %v161 = vunpack.c.l.b16 %v114
    %v162 = vunpack.c.l.b16 %v115
    %v163 = vunpack.c.l.b16 %v116
    %v164 = vunpack.c.l.b16 %v117
    %v165 = vpack.c.b16 %v150, %v149
    %v166 = vpack.c.b16 %v152, %v151
    %v167 = vpack.c.b16 %v154, %v153
    %v168 = vpack.c.b16 %v156, %v155
    %v169 = vpack.c.b16 %v158, %v157
    %v170 = vpack.c.b16 %v160, %v159
    %v171 = vpack.c.b16 %v162, %v161
    %v172 = vpack.c.b16 %v164, %v163
    %v181 = vunpack.c.l.b16 %v118
    %v182 = vunpack.c.l.b16 %v119
    %v183 = vunpack.c.l.b16 %v120
    %v184 = vunpack.c.l.b16 %v121
    %v185 = vunpack.c.l.b16 %v122
    %v186 = vunpack.c.l.b16 %v123
    %v187 = vunpack.c.l.b16 %v124
    %v188 = vunpack.c.l.b16 %v125
    %v189 = vpack.c.b16 %v182, %v181
    %v190 = vpack.c.b16 %v184, %v183
    %v191 = vpack.c.b16 %v186, %v185
    %v192 = vpack.c.b16 %v188, %v187
    %vm197 = vcmask 523264
    %v199 = vsel %vm197, %v165, 0
    %v202 = vsel %vm197, %v166, 0
    %v205 = vsel %vm197, %v167, 0
    %v208 = vsel %vm197, %v168, 0
    %v211 = vsel %vm197, %v169, 0
    %v214 = vsel %vm197, %v170, 0
    %v217 = vsel %vm197, %v171, 0
    %v220 = vsel %vm197, %v172, 0
    %222 = vmatprep.subr.bf16.mxu0 0
    %223 = vmatpush1.bf16.msra.mxu0 0
    %224 = vmatprep.subr.bf16.mxu0 0
    %225 = vmatpush1.bf16.msra.mxu0 0
    %226 = vmatprep.subr.bf16.mxu0 0
    %227 = vmatpush1.bf16.msra.mxu0 0
    %228 = vmatprep.subr.bf16.mxu0 0
    %229 = vmatpush1.bf16.msra.mxu0 0
    %230 = vmatprep.subr.bf16.mxu0 0
    %231 = vmatpush1.bf16.msra.mxu0 %v192
    %232 = vmatprep.subr.bf16.mxu0 0
    %233 = vmatpush1.bf16.msra.mxu0 %v191
    %234 = vmatprep.subr.bf16.mxu0 0
    %235 = vmatpush1.bf16.msra.mxu0 %v190
    %236 = vmatprep.subr.bf16.mxu0 0
    %237 = vmatpush1.bf16.msra.mxu0 %v189
    %238 = vmatprep.subr.bf16.mxu0 0
    %239 = vmatpush2.bf16.msra.mxu0 0
    %240 = vmatprep.subr.bf16.mxu0 0
    %241 = vmatpush2.bf16.msra.mxu0 0
    %242 = vmatprep.subr.bf16.mxu0 0
    %243 = vmatpush2.bf16.msra.mxu0 0
    %244 = vmatprep.subr.bf16.mxu0 0
    %245 = vmatpush2.bf16.msra.mxu0 0
    %246 = vmatprep.subr.bf16.mxu0 0
    %247 = vmatpush2.bf16.msra.mxu0 0
    %248 = vmatprep.subr.bf16.mxu0 0
    %249 = vmatpush2.bf16.msra.mxu0 0
    %250 = vmatprep.subr.bf16.mxu0 0
    %251 = vmatpush2.bf16.msra.mxu0 0
    %252 = vmatprep.subr.bf16.mxu0 0
    %253 = vmatpush2.bf16.msra.mxu0 0
    %254 = vmatprep.mubr.bf16.mxu0 0
    %255 = vmatmul.mubr.bf16.gmra.mxu0 %v199
    %v256 = vpop.f32.mrf.mxu0
    %v257 = vadd.f32 %v131, %v256
    %v258 = vpop.f32.mrf.mxu0
    %v259 = vpop.f32.mrf.mxu0
    %v260 = vadd.f32 %v131, %v259
    %v261 = vpop.f32.mrf.mxu0
    %262 = vmatprep.mubr.bf16.mxu0 0
    %263 = vmatmul.mubr.bf16.gmra.mxu0 %v202
    %v264 = vpop.f32.mrf.mxu0
    %v265 = vadd.f32 %v131, %v264
    %v266 = vpop.f32.mrf.mxu0
    %v267 = vpop.f32.mrf.mxu0
    %v268 = vadd.f32 %v131, %v267
    %v269 = vpop.f32.mrf.mxu0
    %270 = vmatprep.mubr.bf16.mxu0 0
    %271 = vmatmul.mubr.bf16.gmra.mxu0 %v205
    %v272 = vpop.f32.mrf.mxu0
    %v273 = vadd.f32 %v131, %v272
    %v274 = vpop.f32.mrf.mxu0
    %v275 = vpop.f32.mrf.mxu0
    %v276 = vadd.f32 %v131, %v275
    %v277 = vpop.f32.mrf.mxu0
    %278 = vmatprep.mubr.bf16.mxu0 0
    %279 = vmatmul.mubr.bf16.gmra.mxu0 %v208
    %v280 = vpop.f32.mrf.mxu0
    %v281 = vadd.f32 %v131, %v280
    %v282 = vpop.f32.mrf.mxu0
    %v283 = vpop.f32.mrf.mxu0
    %v284 = vadd.f32 %v131, %v283
    %v285 = vpop.f32.mrf.mxu0
    %286 = vmatprep.mubr.bf16.mxu0 0
    %287 = vmatmul.mubr.bf16.gmra.mxu0 %v211
    %v288 = vpop.f32.mrf.mxu0
    %v289 = vadd.f32 %v131, %v288
    %v290 = vpop.f32.mrf.mxu0
    %v291 = vpop.f32.mrf.mxu0
    %v292 = vadd.f32 %v131, %v291
    %v293 = vpop.f32.mrf.mxu0
    %294 = vmatprep.mubr.bf16.mxu0 0
    %295 = vmatmul.mubr.bf16.gmra.mxu0 %v214
    %v296 = vpop.f32.mrf.mxu0
    %v297 = vadd.f32 %v131, %v296
    %v298 = vpop.f32.mrf.mxu0
    %v299 = vpop.f32.mrf.mxu0
    %v300 = vadd.f32 %v131, %v299
    %v301 = vpop.f32.mrf.mxu0
    %302 = vmatprep.mubr.bf16.mxu0 0
    %303 = vmatmul.mubr.bf16.gmra.mxu0 %v217
    %v304 = vpop.f32.mrf.mxu0
    %v305 = vadd.f32 %v131, %v304
    %v306 = vpop.f32.mrf.mxu0
    %v307 = vpop.f32.mrf.mxu0
    %v308 = vadd.f32 %v131, %v307
    %v309 = vpop.f32.mrf.mxu0
    %310 = vmatprep.mubr.bf16.mxu0 0
    %311 = vmatmul.mubr.bf16.gmra.mxu0 %v220
    %v312 = vpop.f32.mrf.mxu0
    %v313 = vadd.f32 %v131, %v312
    %v314 = vpop.f32.mrf.mxu0
    %v315 = vpop.f32.mrf.mxu0
    %v316 = vadd.f32 %v131, %v315
    %v317 = vpop.f32.mrf.mxu0
    %318 = vdwg.mxu0
    %v319 = vpack.c.bf16 %v260, %v257
    %v320 = vpack.c.bf16 %v268, %v265
    %v321 = vpack.c.bf16 %v276, %v273
    %v322 = vpack.c.bf16 %v284, %v281
    %v323 = vpack.c.bf16 %v292, %v289
    %v324 = vpack.c.bf16 %v300, %v297
    %v325 = vpack.c.bf16 %v308, %v305
    %v326 = vpack.c.bf16 %v316, %v313
    %v327 = vld [vmem:[#allocation7] sm:$0xf]
    %v328 = vld [vmem:[#allocation7 + $0x4] sm:$0xf]
    %v329 = vld [vmem:[#allocation7 + $0x8] sm:$0xf]
    %v330 = vld [vmem:[#allocation7 + $0xc] sm:$0xf]
    %v331 = vld [vmem:[#allocation7 + $0x10] sm:$0xf]
    %v332 = vld [vmem:[#allocation7 + $0x14] sm:$0xf]
    %v333 = vld [vmem:[#allocation7 + $0x18] sm:$0xf]
    %v334 = vld [vmem:[#allocation7 + $0x1c] sm:$0xf]
    %v335 = vld [vmem:[%s5] sm:$0x1]
    %v337 = vlaneseq
    %v338 = vshrl.u32 %v337, 7
    %v339 = vsub.s32 0, %v338
    %v340 = vrot.slane %v335, %v339
    %v350 = vunpack.c.l.b16 %v327
    %v351 = vunpack.c.l.b16 %v328
    %v352 = vunpack.c.l.b16 %v329
    %v353 = vunpack.c.l.b16 %v330
    %v354 = vunpack.c.l.b16 %v331
    %v355 = vunpack.c.l.b16 %v332
    %v356 = vunpack.c.l.b16 %v333
    %v357 = vunpack.c.l.b16 %v334
    %v358 = vpack.c.b16 %v351, %v350
    %v359 = vpack.c.b16 %v353, %v352
    %v360 = vpack.c.b16 %v355, %v354
    %v361 = vpack.c.b16 %v357, %v356
    %366 = vmatprep.subr.bf16.mxu0 0
    %367 = vmatpush1.bf16.msra.mxu0 0
    %368 = vmatprep.subr.bf16.mxu0 0
    %369 = vmatpush1.bf16.msra.mxu0 0
    %370 = vmatprep.subr.bf16.mxu0 0
    %371 = vmatpush1.bf16.msra.mxu0 0
    %372 = vmatprep.subr.bf16.mxu0 0
    %373 = vmatpush1.bf16.msra.mxu0 0
    %374 = vmatprep.subr.bf16.mxu0 0
    %375 = vmatpush1.bf16.msra.mxu0 %v361
    %376 = vmatprep.subr.bf16.mxu0 0
    %377 = vmatpush1.bf16.msra.mxu0 %v360
    %378 = vmatprep.subr.bf16.mxu0 0
    %379 = vmatpush1.bf16.msra.mxu0 %v359
    %380 = vmatprep.subr.bf16.mxu0 0
    %381 = vmatpush1.bf16.msra.mxu0 %v358
    %382 = vmatprep.subr.bf16.mxu0 0
    %383 = vmatpush2.bf16.msra.mxu0 0
    %384 = vmatprep.subr.bf16.mxu0 0
    %385 = vmatpush2.bf16.msra.mxu0 0
    %386 = vmatprep.subr.bf16.mxu0 0
    %387 = vmatpush2.bf16.msra.mxu0 0
    %388 = vmatprep.subr.bf16.mxu0 0
    %389 = vmatpush2.bf16.msra.mxu0 0
    %390 = vmatprep.subr.bf16.mxu0 0
    %391 = vmatpush2.bf16.msra.mxu0 0
    %392 = vmatprep.subr.bf16.mxu0 0
    %393 = vmatpush2.bf16.msra.mxu0 0
    %394 = vmatprep.subr.bf16.mxu0 0
    %395 = vmatpush2.bf16.msra.mxu0 0
    %396 = vmatprep.subr.bf16.mxu0 0
    %397 = vmatpush2.bf16.msra.mxu0 0
    %398 = vmatprep.mubr.bf16.mxu0 0
    %399 = vmatmul.mubr.bf16.gmra.mxu0 %v199
    %v400 = vpop.f32.mrf.mxu0
    %v401 = vadd.f32 %v340, %v400
    %v402 = vpop.f32.mrf.mxu0
    %v403 = vpop.f32.mrf.mxu0
    %v404 = vadd.f32 %v340, %v403
    %v405 = vpop.f32.mrf.mxu0
    %406 = vmatprep.mubr.bf16.mxu0 0
    %407 = vmatmul.mubr.bf16.gmra.mxu0 %v202
    %v408 = vpop.f32.mrf.mxu0
    %v409 = vadd.f32 %v340, %v408
    %v410 = vpop.f32.mrf.mxu0
    %v411 = vpop.f32.mrf.mxu0
    %v412 = vadd.f32 %v340, %v411
    %v413 = vpop.f32.mrf.mxu0
    %414 = vmatprep.mubr.bf16.mxu0 0
    %415 = vmatmul.mubr.bf16.gmra.mxu0 %v205
    %v416 = vpop.f32.mrf.mxu0
    %v417 = vadd.f32 %v340, %v416
    %v418 = vpop.f32.mrf.mxu0
    %v419 = vpop.f32.mrf.mxu0
    %v420 = vadd.f32 %v340, %v419
    %v421 = vpop.f32.mrf.mxu0
    %422 = vmatprep.mubr.bf16.mxu0 0
    %423 = vmatmul.mubr.bf16.gmra.mxu0 %v208
    %v424 = vpop.f32.mrf.mxu0
    %v425 = vadd.f32 %v340, %v424
    %v426 = vpop.f32.mrf.mxu0
    %v427 = vpop.f32.mrf.mxu0
    %v428 = vadd.f32 %v340, %v427
    %v429 = vpop.f32.mrf.mxu0
    %430 = vmatprep.mubr.bf16.mxu0 0
    %431 = vmatmul.mubr.bf16.gmra.mxu0 %v211
    %v432 = vpop.f32.mrf.mxu0
    %v433 = vadd.f32 %v340, %v432
    %v434 = vpop.f32.mrf.mxu0
    %v435 = vpop.f32.mrf.mxu0
    %v436 = vadd.f32 %v340, %v435
    %v437 = vpop.f32.mrf.mxu0
    %438 = vmatprep.mubr.bf16.mxu0 0
    %439 = vmatmul.mubr.bf16.gmra.mxu0 %v214
    %v440 = vpop.f32.mrf.mxu0
    %v441 = vadd.f32 %v340, %v440
    %v442 = vpop.f32.mrf.mxu0
    %v443 = vpop.f32.mrf.mxu0
    %v444 = vadd.f32 %v340, %v443
    %v445 = vpop.f32.mrf.mxu0
    %446 = vmatprep.mubr.bf16.mxu0 0
    %447 = vmatmul.mubr.bf16.gmra.mxu0 %v217
    %v448 = vpop.f32.mrf.mxu0
    %v449 = vadd.f32 %v340, %v448
    %v450 = vpop.f32.mrf.mxu0
    %v451 = vpop.f32.mrf.mxu0
    %v452 = vadd.f32 %v340, %v451
    %v453 = vpop.f32.mrf.mxu0
    %454 = vmatprep.mubr.bf16.mxu0 0
    %455 = vmatmul.mubr.bf16.gmra.mxu0 %v220
    %v456 = vpop.f32.mrf.mxu0
    %v457 = vadd.f32 %v340, %v456
    %v458 = vpop.f32.mrf.mxu0
    %v459 = vpop.f32.mrf.mxu0
    %v460 = vadd.f32 %v340, %v459
    %v461 = vpop.f32.mrf.mxu0
    %462 = vdwg.mxu0
    %v463 = vpack.c.bf16 %v404, %v401
    %v464 = vpack.c.bf16 %v412, %v409
    %v465 = vpack.c.bf16 %v420, %v417
    %v466 = vpack.c.bf16 %v428, %v425
    %v467 = vpack.c.bf16 %v436, %v433
    %v468 = vpack.c.bf16 %v444, %v441
    %v469 = vpack.c.bf16 %v452, %v449
    %v470 = vpack.c.bf16 %v460, %v457
    %v471 = vld [vmem:[#allocation8] sm:$0xf]
    %v472 = vld [vmem:[#allocation8 + $0x4] sm:$0xf]
    %v473 = vld [vmem:[#allocation8 + $0x8] sm:$0xf]
    %v474 = vld [vmem:[#allocation8 + $0xc] sm:$0xf]
    %v475 = vld [vmem:[#allocation8 + $0x10] sm:$0xf]
    %v476 = vld [vmem:[#allocation8 + $0x14] sm:$0xf]
    %v477 = vld [vmem:[#allocation8 + $0x18] sm:$0xf]
    %v478 = vld [vmem:[#allocation8 + $0x1c] sm:$0xf]
    %v479 = vld [vmem:[%s6] sm:$0x1]
    %v481 = vlaneseq
    %v482 = vshrl.u32 %v481, 7
    %v483 = vsub.s32 0, %v482
    %v484 = vrot.slane %v479, %v483
    %v494 = vunpack.c.l.b16 %v471
    %v495 = vunpack.c.l.b16 %v472
    %v496 = vunpack.c.l.b16 %v473
    %v497 = vunpack.c.l.b16 %v474
    %v498 = vunpack.c.l.b16 %v475
    %v499 = vunpack.c.l.b16 %v476
    %v500 = vunpack.c.l.b16 %v477
    %v501 = vunpack.c.l.b16 %v478
    %v502 = vpack.c.b16 %v495, %v494
    %v503 = vpack.c.b16 %v497, %v496
    %v504 = vpack.c.b16 %v499, %v498
    %v505 = vpack.c.b16 %v501, %v500
    %510 = vmatprep.subr.bf16.mxu0 0
    %511 = vmatpush1.bf16.msra.mxu0 0
    %512 = vmatprep.subr.bf16.mxu0 0
    %513 = vmatpush1.bf16.msra.mxu0 0
    %514 = vmatprep.subr.bf16.mxu0 0
    %515 = vmatpush1.bf16.msra.mxu0 0
    %516 = vmatprep.subr.bf16.mxu0 0
    %517 = vmatpush1.bf16.msra.mxu0 0
    %518 = vmatprep.subr.bf16.mxu0 0
    %519 = vmatpush1.bf16.msra.mxu0 %v505
    %520 = vmatprep.subr.bf16.mxu0 0
    %521 = vmatpush1.bf16.msra.mxu0 %v504
    %522 = vmatprep.subr.bf16.mxu0 0
    %523 = vmatpush1.bf16.msra.mxu0 %v503
    %524 = vmatprep.subr.bf16.mxu0 0
    %525 = vmatpush1.bf16.msra.mxu0 %v502
    %526 = vmatprep.subr.bf16.mxu0 0
    %527 = vmatpush2.bf16.msra.mxu0 0
    %528 = vmatprep.subr.bf16.mxu0 0
    %529 = vmatpush2.bf16.msra.mxu0 0
    %530 = vmatprep.subr.bf16.mxu0 0
    %531 = vmatpush2.bf16.msra.mxu0 0
    %532 = vmatprep.subr.bf16.mxu0 0
    %533 = vmatpush2.bf16.msra.mxu0 0
    %534 = vmatprep.subr.bf16.mxu0 0
    %535 = vmatpush2.bf16.msra.mxu0 0
    %536 = vmatprep.subr.bf16.mxu0 0
    %537 = vmatpush2.bf16.msra.mxu0 0
    %538 = vmatprep.subr.bf16.mxu0 0
    %539 = vmatpush2.bf16.msra.mxu0 0
    %540 = vmatprep.subr.bf16.mxu0 0
    %541 = vmatpush2.bf16.msra.mxu0 0
    %542 = vmatprep.mubr.bf16.mxu0 0
    %543 = vmatmul.mubr.bf16.gmra.mxu0 %v199
    %v544 = vpop.f32.mrf.mxu0
    %v545 = vadd.f32 %v484, %v544
    %v546 = vpop.f32.mrf.mxu0
    %v547 = vpop.f32.mrf.mxu0
    %v548 = vadd.f32 %v484, %v547
    %v549 = vpop.f32.mrf.mxu0
    %550 = vmatprep.mubr.bf16.mxu0 0
    %551 = vmatmul.mubr.bf16.gmra.mxu0 %v202
    %v552 = vpop.f32.mrf.mxu0
    %v553 = vadd.f32 %v484, %v552
    %v554 = vpop.f32.mrf.mxu0
    %v555 = vpop.f32.mrf.mxu0
    %v556 = vadd.f32 %v484, %v555
    %v557 = vpop.f32.mrf.mxu0
    %558 = vmatprep.mubr.bf16.mxu0 0
    %559 = vmatmul.mubr.bf16.gmra.mxu0 %v205
    %v560 = vpop.f32.mrf.mxu0
    %v561 = vadd.f32 %v484, %v560
    %v562 = vpop.f32.mrf.mxu0
    %v563 = vpop.f32.mrf.mxu0
    %v564 = vadd.f32 %v484, %v563
    %v565 = vpop.f32.mrf.mxu0
    %566 = vmatprep.mubr.bf16.mxu0 0
    %567 = vmatmul.mubr.bf16.gmra.mxu0 %v208
    %v568 = vpop.f32.mrf.mxu0
    %v569 = vadd.f32 %v484, %v568
    %v570 = vpop.f32.mrf.mxu0
    %v571 = vpop.f32.mrf.mxu0
    %v572 = vadd.f32 %v484, %v571
    %v573 = vpop.f32.mrf.mxu0
    %574 = vmatprep.mubr.bf16.mxu0 0
    %575 = vmatmul.mubr.bf16.gmra.mxu0 %v211
    %v576 = vpop.f32.mrf.mxu0
    %v577 = vadd.f32 %v484, %v576
    %v578 = vpop.f32.mrf.mxu0
    %v579 = vpop.f32.mrf.mxu0
    %v580 = vadd.f32 %v484, %v579
    %v581 = vpop.f32.mrf.mxu0
    %582 = vmatprep.mubr.bf16.mxu0 0
    %583 = vmatmul.mubr.bf16.gmra.mxu0 %v214
    %v584 = vpop.f32.mrf.mxu0
    %v585 = vadd.f32 %v484, %v584
    %v586 = vpop.f32.mrf.mxu0
    %v587 = vpop.f32.mrf.mxu0
    %v588 = vadd.f32 %v484, %v587
    %v589 = vpop.f32.mrf.mxu0
    %590 = vmatprep.mubr.bf16.mxu0 0
    %591 = vmatmul.mubr.bf16.gmra.mxu0 %v217
    %v592 = vpop.f32.mrf.mxu0
    %v593 = vadd.f32 %v484, %v592
    %v594 = vpop.f32.mrf.mxu0
    %v595 = vpop.f32.mrf.mxu0
    %v596 = vadd.f32 %v484, %v595
    %v597 = vpop.f32.mrf.mxu0
    %598 = vmatprep.mubr.bf16.mxu0 0
    %599 = vmatmul.mubr.bf16.gmra.mxu0 %v220
    %v600 = vpop.f32.mrf.mxu0
    %v601 = vadd.f32 %v484, %v600
    %v602 = vpop.f32.mrf.mxu0
    %v603 = vpop.f32.mrf.mxu0
    %v604 = vadd.f32 %v484, %v603
    %v605 = vpop.f32.mrf.mxu0
    %606 = vdwg.mxu0
    %v607 = vpack.c.bf16 %v548, %v545
    %v608 = vpack.c.bf16 %v556, %v553
    %v609 = vpack.c.bf16 %v564, %v561
    %v610 = vpack.c.bf16 %v572, %v569
    %v611 = vpack.c.bf16 %v580, %v577
    %v612 = vpack.c.bf16 %v588, %v585
    %v613 = vpack.c.bf16 %v596, %v593
    %v614 = vpack.c.bf16 %v604, %v601
    %619 = vrot.lane.b32.xlu0 %v319, 120
    %v620 = vpop.permute.xlu0 %619
    %621 = vrot.lane.b32.xlu0 %v320, 120
    %v622 = vpop.permute.xlu0 %621
    %623 = vrot.lane.b32.xlu0 %v321, 120
    %v624 = vpop.permute.xlu0 %623
    %625 = vrot.lane.b32.xlu0 %v322, 120
    %v626 = vpop.permute.xlu0 %625
    %627 = vrot.lane.b32.xlu0 %v319, 112
    %v628 = vpop.permute.xlu0 %627
    %629 = vrot.lane.b32.xlu0 %v320, 112
    %v630 = vpop.permute.xlu0 %629
    %631 = vrot.lane.b32.xlu0 %v321, 112
    %v632 = vpop.permute.xlu0 %631
    %633 = vrot.lane.b32.xlu0 %v322, 112
    %v634 = vpop.permute.xlu0 %633
    %635 = vrot.lane.b32.xlu0 %v319, 104
    %v636 = vpop.permute.xlu0 %635
    %637 = vrot.lane.b32.xlu0 %v320, 104
    %v638 = vpop.permute.xlu0 %637
    %639 = vrot.lane.b32.xlu0 %v321, 104
    %v640 = vpop.permute.xlu0 %639
    %641 = vrot.lane.b32.xlu0 %v322, 104
    %v642 = vpop.permute.xlu0 %641
    %643 = vrot.lane.b32.xlu0 %v319, 96
    %v644 = vpop.permute.xlu0 %643
    %645 = vrot.lane.b32.xlu0 %v320, 96
    %v646 = vpop.permute.xlu0 %645
    %647 = vrot.lane.b32.xlu0 %v321, 96
    %v648 = vpop.permute.xlu0 %647
    %649 = vrot.lane.b32.xlu0 %v322, 96
    %v650 = vpop.permute.xlu0 %649
    %651 = vrot.lane.b32.xlu0 %v319, 88
    %v652 = vpop.permute.xlu0 %651
    %653 = vrot.lane.b32.xlu0 %v320, 88
    %v654 = vpop.permute.xlu0 %653
    %655 = vrot.lane.b32.xlu0 %v321, 88
    %v656 = vpop.permute.xlu0 %655
    %657 = vrot.lane.b32.xlu0 %v322, 88
    %v658 = vpop.permute.xlu0 %657
    %659 = vrot.lane.b32.xlu0 %v319, 80
    %v660 = vpop.permute.xlu0 %659
    %661 = vrot.lane.b32.xlu0 %v320, 80
    %v662 = vpop.permute.xlu0 %661
    %663 = vrot.lane.b32.xlu0 %v321, 80
    %v664 = vpop.permute.xlu0 %663
    %665 = vrot.lane.b32.xlu0 %v322, 80
    %v666 = vpop.permute.xlu0 %665
    %667 = vrot.lane.b32.xlu0 %v319, 72
    %v668 = vpop.permute.xlu0 %667
    %669 = vrot.lane.b32.xlu0 %v320, 72
    %v670 = vpop.permute.xlu0 %669
    %671 = vrot.lane.b32.xlu0 %v321, 72
    %v672 = vpop.permute.xlu0 %671
    %673 = vrot.lane.b32.xlu0 %v322, 72
    %v674 = vpop.permute.xlu0 %673
    %679 = vrot.lane.b32.xlu0 %v463, 120
    %v680 = vpop.permute.xlu0 %679
    %681 = vrot.lane.b32.xlu0 %v464, 120
    %v682 = vpop.permute.xlu0 %681
    %683 = vrot.lane.b32.xlu0 %v465, 120
    %v684 = vpop.permute.xlu0 %683
    %685 = vrot.lane.b32.xlu0 %v466, 120
    %v686 = vpop.permute.xlu0 %685
    %691 = vrot.lane.b32.xlu0 %v463, 112
    %v692 = vpop.permute.xlu0 %691
    %693 = vrot.lane.b32.xlu0 %v464, 112
    %v694 = vpop.permute.xlu0 %693
    %695 = vrot.lane.b32.xlu0 %v465, 112
    %v696 = vpop.permute.xlu0 %695
    %697 = vrot.lane.b32.xlu0 %v466, 112
    %v698 = vpop.permute.xlu0 %697
    %703 = vrot.lane.b32.xlu0 %v463, 104
    %v704 = vpop.permute.xlu0 %703
    %705 = vrot.lane.b32.xlu0 %v464, 104
    %v706 = vpop.permute.xlu0 %705
    %707 = vrot.lane.b32.xlu0 %v465, 104
    %v708 = vpop.permute.xlu0 %707
    %709 = vrot.lane.b32.xlu0 %v466, 104
    %v710 = vpop.permute.xlu0 %709
    %715 = vrot.lane.b32.xlu0 %v463, 96
    %v716 = vpop.permute.xlu0 %715
    %717 = vrot.lane.b32.xlu0 %v464, 96
    %v718 = vpop.permute.xlu0 %717
    %719 = vrot.lane.b32.xlu0 %v465, 96
    %v720 = vpop.permute.xlu0 %719
    %721 = vrot.lane.b32.xlu0 %v466, 96
    %v722 = vpop.permute.xlu0 %721
    %727 = vrot.lane.b32.xlu0 %v463, 88
    %v728 = vpop.permute.xlu0 %727
    %729 = vrot.lane.b32.xlu0 %v464, 88
    %v730 = vpop.permute.xlu0 %729
    %731 = vrot.lane.b32.xlu0 %v465, 88
    %v732 = vpop.permute.xlu0 %731
    %733 = vrot.lane.b32.xlu0 %v466, 88
    %v734 = vpop.permute.xlu0 %733
    %739 = vrot.lane.b32.xlu0 %v463, 80
    %v740 = vpop.permute.xlu0 %739
    %741 = vrot.lane.b32.xlu0 %v464, 80
    %v742 = vpop.permute.xlu0 %741
    %743 = vrot.lane.b32.xlu0 %v465, 80
    %v744 = vpop.permute.xlu0 %743
    %745 = vrot.lane.b32.xlu0 %v466, 80
    %v746 = vpop.permute.xlu0 %745
    %751 = vrot.lane.b32.xlu0 %v463, 72
    %v752 = vpop.permute.xlu0 %751
    %753 = vrot.lane.b32.xlu0 %v464, 72
    %v754 = vpop.permute.xlu0 %753
    %755 = vrot.lane.b32.xlu0 %v465, 72
    %v756 = vpop.permute.xlu0 %755
    %757 = vrot.lane.b32.xlu0 %v466, 72
    %v758 = vpop.permute.xlu0 %757
    %767 = vrot.lane.b32.xlu0 %v607, 120
    %v768 = vpop.permute.xlu0 %767
    %769 = vrot.lane.b32.xlu0 %v608, 120
    %v770 = vpop.permute.xlu0 %769
    %771 = vrot.lane.b32.xlu0 %v609, 120
    %v772 = vpop.permute.xlu0 %771
    %773 = vrot.lane.b32.xlu0 %v610, 120
    %v774 = vpop.permute.xlu0 %773
    %779 = vrot.lane.b32.xlu0 %v607, 112
    %v780 = vpop.permute.xlu0 %779
    %781 = vrot.lane.b32.xlu0 %v608, 112
    %v782 = vpop.permute.xlu0 %781
    %783 = vrot.lane.b32.xlu0 %v609, 112
    %v784 = vpop.permute.xlu0 %783
    %785 = vrot.lane.b32.xlu0 %v610, 112
    %v786 = vpop.permute.xlu0 %785
    %791 = vrot.lane.b32.xlu0 %v607, 104
    %v792 = vpop.permute.xlu0 %791
    %793 = vrot.lane.b32.xlu0 %v608, 104
    %v794 = vpop.permute.xlu0 %793
    %795 = vrot.lane.b32.xlu0 %v609, 104
    %v796 = vpop.permute.xlu0 %795
    %797 = vrot.lane.b32.xlu0 %v610, 104
    %v798 = vpop.permute.xlu0 %797
    %803 = vrot.lane.b32.xlu0 %v607, 96
    %v804 = vpop.permute.xlu0 %803
    %805 = vrot.lane.b32.xlu0 %v608, 96
    %v806 = vpop.permute.xlu0 %805
    %807 = vrot.lane.b32.xlu0 %v609, 96
    %v808 = vpop.permute.xlu0 %807
    %809 = vrot.lane.b32.xlu0 %v610, 96
    %v810 = vpop.permute.xlu0 %809
    %815 = vrot.lane.b32.xlu0 %v607, 88
    %v816 = vpop.permute.xlu0 %815
    %817 = vrot.lane.b32.xlu0 %v608, 88
    %v818 = vpop.permute.xlu0 %817
    %819 = vrot.lane.b32.xlu0 %v609, 88
    %v820 = vpop.permute.xlu0 %819
    %821 = vrot.lane.b32.xlu0 %v610, 88
    %v822 = vpop.permute.xlu0 %821
    %827 = vrot.lane.b32.xlu0 %v607, 80
    %v828 = vpop.permute.xlu0 %827
    %829 = vrot.lane.b32.xlu0 %v608, 80
    %v830 = vpop.permute.xlu0 %829
    %831 = vrot.lane.b32.xlu0 %v609, 80
    %v832 = vpop.permute.xlu0 %831
    %833 = vrot.lane.b32.xlu0 %v610, 80
    %v834 = vpop.permute.xlu0 %833
    %839 = vrot.lane.b32.xlu0 %v607, 72
    %v840 = vpop.permute.xlu0 %839
    %841 = vrot.lane.b32.xlu0 %v608, 72
    %v842 = vpop.permute.xlu0 %841
    %843 = vrot.lane.b32.xlu0 %v609, 72
    %v844 = vpop.permute.xlu0 %843
    %845 = vrot.lane.b32.xlu0 %v610, 72
    %v846 = vpop.permute.xlu0 %845
    %851 = vxpose.xlu0.c.b16.start [1/8] %v463, 128
    %852 = vxpose.xlu0.c.b16.cont [2/8] %v464, 128
    %853 = vxpose.xlu0.c.b16.cont [3/8] %v465, 128
    %854 = vxpose.xlu0.c.b16.cont [4/8] %v466, 128
    %855 = vxpose.xlu0.c.b16.cont [5/8] 0, 128
    %856 = vxpose.xlu0.c.b16.cont [6/8] 0, 128
    %857 = vxpose.xlu0.c.b16.cont [7/8] 0, 128
    %858 = vxpose.xlu0.c.b16.end [8/8] 0, 128
    %v859 = vpop.trf.xlu0
    %v860 = vpop.trf.xlu0
    %v861 = vpop.trf.xlu0
    %v862 = vpop.trf.xlu0
    %v863 = vpop.trf.xlu0
    %v864 = vpop.trf.xlu0
    %v865 = vpop.trf.xlu0
    %v866 = vpop.trf.xlu0
    %867 = vxpose.xlu0.c.b16.start [1/8] %v680, 128
    %868 = vxpose.xlu0.c.b16.cont [2/8] %v682, 128
    %869 = vxpose.xlu0.c.b16.cont [3/8] %v684, 128
    %870 = vxpose.xlu0.c.b16.cont [4/8] %v686, 128
    %871 = vxpose.xlu0.c.b16.cont [5/8] 0, 128
    %872 = vxpose.xlu0.c.b16.cont [6/8] 0, 128
    %873 = vxpose.xlu0.c.b16.cont [7/8] 0, 128
    %874 = vxpose.xlu0.c.b16.end [8/8] 0, 128
    %v875 = vpop.trf.xlu0
    %v876 = vpop.trf.xlu0
    %v877 = vpop.trf.xlu0
    %v878 = vpop.trf.xlu0
    %v879 = vpop.trf.xlu0
    %v880 = vpop.trf.xlu0
    %v881 = vpop.trf.xlu0
    %v882 = vpop.trf.xlu0
    %883 = vxpose.xlu0.c.b16.start [1/8] %v692, 128
    %884 = vxpose.xlu0.c.b16.cont [2/8] %v694, 128
    %885 = vxpose.xlu0.c.b16.cont [3/8] %v696, 128
    %886 = vxpose.xlu0.c.b16.cont [4/8] %v698, 128
    %887 = vxpose.xlu0.c.b16.cont [5/8] 0, 128
    %888 = vxpose.xlu0.c.b16.cont [6/8] 0, 128
    %889 = vxpose.xlu0.c.b16.cont [7/8] 0, 128
    %890 = vxpose.xlu0.c.b16.end [8/8] 0, 128
    %v891 = vpop.trf.xlu0
    %v892 = vpop.trf.xlu0
    %v893 = vpop.trf.xlu0
    %v894 = vpop.trf.xlu0
    %v895 = vpop.trf.xlu0
    %v896 = vpop.trf.xlu0
    %v897 = vpop.trf.xlu0
    %v898 = vpop.trf.xlu0
    %899 = vxpose.xlu0.c.b16.start [1/8] %v704, 128
    %900 = vxpose.xlu0.c.b16.cont [2/8] %v706, 128
    %901 = vxpose.xlu0.c.b16.cont [3/8] %v708, 128
    %902 = vxpose.xlu0.c.b16.cont [4/8] %v710, 128
    %903 = vxpose.xlu0.c.b16.cont [5/8] 0, 128
    %904 = vxpose.xlu0.c.b16.cont [6/8] 0, 128
    %905 = vxpose.xlu0.c.b16.cont [7/8] 0, 128
    %906 = vxpose.xlu0.c.b16.end [8/8] 0, 128
    %v907 = vpop.trf.xlu0
    %v908 = vpop.trf.xlu0
    %v909 = vpop.trf.xlu0
    %v910 = vpop.trf.xlu0
    %v911 = vpop.trf.xlu0
    %v912 = vpop.trf.xlu0
    %v913 = vpop.trf.xlu0
    %v914 = vpop.trf.xlu0
    %915 = vxpose.xlu0.c.b16.start [1/8] %v716, 128
    %916 = vxpose.xlu0.c.b16.cont [2/8] %v718, 128
    %917 = vxpose.xlu0.c.b16.cont [3/8] %v720, 128
    %918 = vxpose.xlu0.c.b16.cont [4/8] %v722, 128
    %919 = vxpose.xlu0.c.b16.cont [5/8] 0, 128
    %920 = vxpose.xlu0.c.b16.cont [6/8] 0, 128
    %921 = vxpose.xlu0.c.b16.cont [7/8] 0, 128
    %922 = vxpose.xlu0.c.b16.end [8/8] 0, 128
    %v923 = vpop.trf.xlu0
    %v924 = vpop.trf.xlu0
    %v925 = vpop.trf.xlu0
    %v926 = vpop.trf.xlu0
    %v927 = vpop.trf.xlu0
    %v928 = vpop.trf.xlu0
    %v929 = vpop.trf.xlu0
    %v930 = vpop.trf.xlu0
    %931 = vxpose.xlu0.c.b16.start [1/8] %v728, 128
    %932 = vxpose.xlu0.c.b16.cont [2/8] %v730, 128
    %933 = vxpose.xlu0.c.b16.cont [3/8] %v732, 128
    %934 = vxpose.xlu0.c.b16.cont [4/8] %v734, 128
    %935 = vxpose.xlu0.c.b16.cont [5/8] 0, 128
    %936 = vxpose.xlu0.c.b16.cont [6/8] 0, 128
    %937 = vxpose.xlu0.c.b16.cont [7/8] 0, 128
    %938 = vxpose.xlu0.c.b16.end [8/8] 0, 128
    %v939 = vpop.trf.xlu0
    %v940 = vpop.trf.xlu0
    %v941 = vpop.trf.xlu0
    %v942 = vpop.trf.xlu0
    %v943 = vpop.trf.xlu0
    %v944 = vpop.trf.xlu0
    %v945 = vpop.trf.xlu0
    %v946 = vpop.trf.xlu0
    %947 = vxpose.xlu0.c.b16.start [1/8] %v740, 128
    %948 = vxpose.xlu0.c.b16.cont [2/8] %v742, 128
    %949 = vxpose.xlu0.c.b16.cont [3/8] %v744, 128
    %950 = vxpose.xlu0.c.b16.cont [4/8] %v746, 128
    %951 = vxpose.xlu0.c.b16.cont [5/8] 0, 128
    %952 = vxpose.xlu0.c.b16.cont [6/8] 0, 128
    %953 = vxpose.xlu0.c.b16.cont [7/8] 0, 128
    %954 = vxpose.xlu0.c.b16.end [8/8] 0, 128
    %v955 = vpop.trf.xlu0
    %v956 = vpop.trf.xlu0
    %v957 = vpop.trf.xlu0
    %v958 = vpop.trf.xlu0
    %v959 = vpop.trf.xlu0
    %v960 = vpop.trf.xlu0
    %v961 = vpop.trf.xlu0
    %v962 = vpop.trf.xlu0
    %963 = vxpose.xlu0.c.b16.start [1/8] %v752, 128
    %964 = vxpose.xlu0.c.b16.cont [2/8] %v754, 128
    %965 = vxpose.xlu0.c.b16.cont [3/8] %v756, 128
    %966 = vxpose.xlu0.c.b16.cont [4/8] %v758, 128
    %967 = vxpose.xlu0.c.b16.cont [5/8] 0, 128
    %968 = vxpose.xlu0.c.b16.cont [6/8] 0, 128
    %969 = vxpose.xlu0.c.b16.cont [7/8] 0, 128
    %970 = vxpose.xlu0.c.b16.end [8/8] 0, 128
    %v971 = vpop.trf.xlu0
    %v972 = vpop.trf.xlu0
    %v973 = vpop.trf.xlu0
    %v974 = vpop.trf.xlu0
    %v975 = vpop.trf.xlu0
    %v976 = vpop.trf.xlu0
    %v977 = vpop.trf.xlu0
    %v978 = vpop.trf.xlu0
    %vm979 = vcmask 64512
    %v981 = vsel %vm979, %v319, 0
    %v984 = vsel %vm979, %v320, 0
    %v987 = vsel %vm979, %v321, 0
    %v990 = vsel %vm979, %v322, 0
    %vm992 = vcmask 1043456
    %v994 = vsel %vm992, %v859, 0
    %996 = vmatprep.subr.bf16.mxu0 0
    %997 = vmatpush1.bf16.msra.mxu0 0
    %998 = vmatprep.subr.bf16.mxu0 0
    %999 = vmatpush1.bf16.msra.mxu0 0
    %1000 = vmatprep.subr.bf16.mxu0 0
    %1001 = vmatpush1.bf16.msra.mxu0 0
    %1002 = vmatprep.subr.bf16.mxu0 0
    %1003 = vmatpush1.bf16.msra.mxu0 0
    %1004 = vmatprep.subr.bf16.mxu0 0
    %1005 = vmatpush1.bf16.msra.mxu0 0
    %1006 = vmatprep.subr.bf16.mxu0 0
    %1007 = vmatpush1.bf16.msra.mxu0 0
    %1008 = vmatprep.subr.bf16.mxu0 0
    %1009 = vmatpush1.bf16.msra.mxu0 0
    %1010 = vmatprep.subr.bf16.mxu0 0
    %1011 = vmatpush1.bf16.msra.mxu0 %v994
    %1012 = vmatprep.subr.bf16.mxu0 0
    %1013 = vmatpush2.bf16.msra.mxu0 0
    %1014 = vmatprep.subr.bf16.mxu0 0
    %1015 = vmatpush2.bf16.msra.mxu0 0
    %1016 = vmatprep.subr.bf16.mxu0 0
    %1017 = vmatpush2.bf16.msra.mxu0 0
    %1018 = vmatprep.subr.bf16.mxu0 0
    %1019 = vmatpush2.bf16.msra.mxu0 0
    %1020 = vmatprep.subr.bf16.mxu0 0
    %1021 = vmatpush2.bf16.msra.mxu0 0
    %1022 = vmatprep.subr.bf16.mxu0 0
    %1023 = vmatpush2.bf16.msra.mxu0 0
    %1024 = vmatprep.subr.bf16.mxu0 0
    %1025 = vmatpush2.bf16.msra.mxu0 0
    %1026 = vmatprep.subr.bf16.mxu0 0
    %1027 = vmatpush2.bf16.msra.mxu0 0
    %1028 = vmatprep.mubr.bf16.mxu0 0
    %1029 = vmatmul.mubr.bf16.gmra.mxu0 %v981
    %v1030 = vpop.f32.mrf.mxu0
    %v1031 = vadd.f32 0.0, %v1030
    %v1032 = vpop.f32.mrf.mxu0
    %v1033 = vpop.f32.mrf.mxu0
    %v1034 = vadd.f32 0.0, %v1033
    %v1035 = vpop.f32.mrf.mxu0
    %1036 = vmatprep.mubr.bf16.mxu0 0
    %1037 = vmatmul.mubr.bf16.gmra.mxu0 %v984
    %v1038 = vpop.f32.mrf.mxu0
    %v1039 = vadd.f32 0.0, %v1038
    %v1040 = vpop.f32.mrf.mxu0
    %v1041 = vpop.f32.mrf.mxu0
    %v1042 = vadd.f32 0.0, %v1041
    %v1043 = vpop.f32.mrf.mxu0
    %1044 = vmatprep.mubr.bf16.mxu0 0
    %1045 = vmatmul.mubr.bf16.gmra.mxu0 %v987
    %v1046 = vpop.f32.mrf.mxu0
    %v1047 = vadd.f32 0.0, %v1046
    %v1048 = vpop.f32.mrf.mxu0
    %v1049 = vpop.f32.mrf.mxu0
    %v1050 = vadd.f32 0.0, %v1049
    %v1051 = vpop.f32.mrf.mxu0
    %1052 = vmatprep.mubr.bf16.mxu0 0
    %1053 = vmatmul.mubr.bf16.gmra.mxu0 %v990
    %v1054 = vpop.f32.mrf.mxu0
    %v1055 = vadd.f32 0.0, %v1054
    %v1056 = vpop.f32.mrf.mxu0
    %v1057 = vpop.f32.mrf.mxu0
    %v1058 = vadd.f32 0.0, %v1057
    %v1059 = vpop.f32.mrf.mxu0
    %1060 = vdwg.mxu0
    %v1062 = vsel %vm979, %v620, 0
    %v1065 = vsel %vm979, %v622, 0
    %v1068 = vsel %vm979, %v624, 0
    %v1071 = vsel %vm979, %v626, 0
    %v1074 = vsel %vm992, %v875, 0
    %1076 = vmatprep.subr.bf16.mxu0 0
    %1077 = vmatpush1.bf16.msra.mxu0 0
    %1078 = vmatprep.subr.bf16.mxu0 0
    %1079 = vmatpush1.bf16.msra.mxu0 0
    %1080 = vmatprep.subr.bf16.mxu0 0
    %1081 = vmatpush1.bf16.msra.mxu0 0
    %1082 = vmatprep.subr.bf16.mxu0 0
    %1083 = vmatpush1.bf16.msra.mxu0 0
    %1084 = vmatprep.subr.bf16.mxu0 0
    %1085 = vmatpush1.bf16.msra.mxu0 0
    %1086 = vmatprep.subr.bf16.mxu0 0
    %1087 = vmatpush1.bf16.msra.mxu0 0
    %1088 = vmatprep.subr.bf16.mxu0 0
    %1089 = vmatpush1.bf16.msra.mxu0 0
    %1090 = vmatprep.subr.bf16.mxu0 0
    %1091 = vmatpush1.bf16.msra.mxu0 %v1074
    %1092 = vmatprep.subr.bf16.mxu0 0
    %1093 = vmatpush2.bf16.msra.mxu0 0
    %1094 = vmatprep.subr.bf16.mxu0 0
    %1095 = vmatpush2.bf16.msra.mxu0 0
    %1096 = vmatprep.subr.bf16.mxu0 0
    %1097 = vmatpush2.bf16.msra.mxu0 0
    %1098 = vmatprep.subr.bf16.mxu0 0
    %1099 = vmatpush2.bf16.msra.mxu0 0
    %1100 = vmatprep.subr.bf16.mxu0 0
    %1101 = vmatpush2.bf16.msra.mxu0 0
    %1102 = vmatprep.subr.bf16.mxu0 0
    %1103 = vmatpush2.bf16.msra.mxu0 0
    %1104 = vmatprep.subr.bf16.mxu0 0
    %1105 = vmatpush2.bf16.msra.mxu0 0
    %1106 = vmatprep.subr.bf16.mxu0 0
    %1107 = vmatpush2.bf16.msra.mxu0 0
    %1108 = vmatprep.mubr.bf16.mxu0 0
    %1109 = vmatmul.mubr.bf16.gmra.mxu0 %v1062
    %v1110 = vpop.f32.mrf.mxu0
    %v1111 = vadd.f32 0.0, %v1110
    %v1112 = vpop.f32.mrf.mxu0
    %v1113 = vpop.f32.mrf.mxu0
    %v1114 = vadd.f32 0.0, %v1113
    %v1115 = vpop.f32.mrf.mxu0
    %1116 = vmatprep.mubr.bf16.mxu0 0
    %1117 = vmatmul.mubr.bf16.gmra.mxu0 %v1065
    %v1118 = vpop.f32.mrf.mxu0
    %v1119 = vadd.f32 0.0, %v1118
    %v1120 = vpop.f32.mrf.mxu0
    %v1121 = vpop.f32.mrf.mxu0
    %v1122 = vadd.f32 0.0, %v1121
    %v1123 = vpop.f32.mrf.mxu0
    %1124 = vmatprep.mubr.bf16.mxu0 0
    %1125 = vmatmul.mubr.bf16.gmra.mxu0 %v1068
    %v1126 = vpop.f32.mrf.mxu0
    %v1127 = vadd.f32 0.0, %v1126
    %v1128 = vpop.f32.mrf.mxu0
    %v1129 = vpop.f32.mrf.mxu0
    %v1130 = vadd.f32 0.0, %v1129
    %v1131 = vpop.f32.mrf.mxu0
    %1132 = vmatprep.mubr.bf16.mxu0 0
    %1133 = vmatmul.mubr.bf16.gmra.mxu0 %v1071
    %v1134 = vpop.f32.mrf.mxu0
    %v1135 = vadd.f32 0.0, %v1134
    %v1136 = vpop.f32.mrf.mxu0
    %v1137 = vpop.f32.mrf.mxu0
    %v1138 = vadd.f32 0.0, %v1137
    %v1139 = vpop.f32.mrf.mxu0
    %1140 = vdwg.mxu0
    %v1142 = vsel %vm979, %v628, 0
    %v1145 = vsel %vm979, %v630, 0
    %v1148 = vsel %vm979, %v632, 0
    %v1151 = vsel %vm979, %v634, 0
    %v1154 = vsel %vm992, %v891, 0
    %1156 = vmatprep.subr.bf16.mxu0 0
    %1157 = vmatpush1.bf16.msra.mxu0 0
    %1158 = vmatprep.subr.bf16.mxu0 0
    %1159 = vmatpush1.bf16.msra.mxu0 0
    %1160 = vmatprep.subr.bf16.mxu0 0
    %1161 = vmatpush1.bf16.msra.mxu0 0
    %1162 = vmatprep.subr.bf16.mxu0 0
    %1163 = vmatpush1.bf16.msra.mxu0 0
    %1164 = vmatprep.subr.bf16.mxu0 0
    %1165 = vmatpush1.bf16.msra.mxu0 0
    %1166 = vmatprep.subr.bf16.mxu0 0
    %1167 = vmatpush1.bf16.msra.mxu0 0
    %1168 = vmatprep.subr.bf16.mxu0 0
    %1169 = vmatpush1.bf16.msra.mxu0 0
    %1170 = vmatprep.subr.bf16.mxu0 0
    %1171 = vmatpush1.bf16.msra.mxu0 %v1154
    %1172 = vmatprep.subr.bf16.mxu0 0
    %1173 = vmatpush2.bf16.msra.mxu0 0
    %1174 = vmatprep.subr.bf16.mxu0 0
    %1175 = vmatpush2.bf16.msra.mxu0 0
    %1176 = vmatprep.subr.bf16.mxu0 0
    %1177 = vmatpush2.bf16.msra.mxu0 0
    %1178 = vmatprep.subr.bf16.mxu0 0
    %1179 = vmatpush2.bf16.msra.mxu0 0
    %1180 = vmatprep.subr.bf16.mxu0 0
    %1181 = vmatpush2.bf16.msra.mxu0 0
    %1182 = vmatprep.subr.bf16.mxu0 0
    %1183 = vmatpush2.bf16.msra.mxu0 0
    %1184 = vmatprep.subr.bf16.mxu0 0
    %1185 = vmatpush2.bf16.msra.mxu0 0
    %1186 = vmatprep.subr.bf16.mxu0 0
    %1187 = vmatpush2.bf16.msra.mxu0 0
    %1188 = vmatprep.mubr.bf16.mxu0 0
    %1189 = vmatmul.mubr.bf16.gmra.mxu0 %v1142
    %v1190 = vpop.f32.mrf.mxu0
    %v1191 = vadd.f32 0.0, %v1190
    %v1192 = vpop.f32.mrf.mxu0
    %v1193 = vpop.f32.mrf.mxu0
    %v1194 = vadd.f32 0.0, %v1193
    %v1195 = vpop.f32.mrf.mxu0
    %1196 = vmatprep.mubr.bf16.mxu0 0
    %1197 = vmatmul.mubr.bf16.gmra.mxu0 %v1145
    %v1198 = vpop.f32.mrf.mxu0
    %v1199 = vadd.f32 0.0, %v1198
    %v1200 = vpop.f32.mrf.mxu0
    %v1201 = vpop.f32.mrf.mxu0
    %v1202 = vadd.f32 0.0, %v1201
    %v1203 = vpop.f32.mrf.mxu0
    %1204 = vmatprep.mubr.bf16.mxu0 0
    %1205 = vmatmul.mubr.bf16.gmra.mxu0 %v1148
    %v1206 = vpop.f32.mrf.mxu0
    %v1207 = vadd.f32 0.0, %v1206
    %v1208 = vpop.f32.mrf.mxu0
    %v1209 = vpop.f32.mrf.mxu0
    %v1210 = vadd.f32 0.0, %v1209
    %v1211 = vpop.f32.mrf.mxu0
    %1212 = vmatprep.mubr.bf16.mxu0 0
    %1213 = vmatmul.mubr.bf16.gmra.mxu0 %v1151
    %v1214 = vpop.f32.mrf.mxu0
    %v1215 = vadd.f32 0.0, %v1214
    %v1216 = vpop.f32.mrf.mxu0
    %v1217 = vpop.f32.mrf.mxu0
    %v1218 = vadd.f32 0.0, %v1217
    %v1219 = vpop.f32.mrf.mxu0
    %1220 = vdwg.mxu0
    %v1222 = vsel %vm979, %v636, 0
    %v1225 = vsel %vm979, %v638, 0
    %v1228 = vsel %vm979, %v640, 0
    %v1231 = vsel %vm979, %v642, 0
    %v1234 = vsel %vm992, %v907, 0
    %1236 = vmatprep.subr.bf16.mxu0 0
    %1237 = vmatpush1.bf16.msra.mxu0 0
    %1238 = vmatprep.subr.bf16.mxu0 0
    %1239 = vmatpush1.bf16.msra.mxu0 0
    %1240 = vmatprep.subr.bf16.mxu0 0
    %1241 = vmatpush1.bf16.msra.mxu0 0
    %1242 = vmatprep.subr.bf16.mxu0 0
    %1243 = vmatpush1.bf16.msra.mxu0 0
    %1244 = vmatprep.subr.bf16.mxu0 0
    %1245 = vmatpush1.bf16.msra.mxu0 0
    %1246 = vmatprep.subr.bf16.mxu0 0
    %1247 = vmatpush1.bf16.msra.mxu0 0
    %1248 = vmatprep.subr.bf16.mxu0 0
    %1249 = vmatpush1.bf16.msra.mxu0 0
    %1250 = vmatprep.subr.bf16.mxu0 0
    %1251 = vmatpush1.bf16.msra.mxu0 %v1234
    %1252 = vmatprep.subr.bf16.mxu0 0
    %1253 = vmatpush2.bf16.msra.mxu0 0
    %1254 = vmatprep.subr.bf16.mxu0 0
    %1255 = vmatpush2.bf16.msra.mxu0 0
    %1256 = vmatprep.subr.bf16.mxu0 0
    %1257 = vmatpush2.bf16.msra.mxu0 0
    %1258 = vmatprep.subr.bf16.mxu0 0
    %1259 = vmatpush2.bf16.msra.mxu0 0
    %1260 = vmatprep.subr.bf16.mxu0 0
    %1261 = vmatpush2.bf16.msra.mxu0 0
    %1262 = vmatprep.subr.bf16.mxu0 0
    %1263 = vmatpush2.bf16.msra.mxu0 0
    %1264 = vmatprep.subr.bf16.mxu0 0
    %1265 = vmatpush2.bf16.msra.mxu0 0
    %1266 = vmatprep.subr.bf16.mxu0 0
    %1267 = vmatpush2.bf16.msra.mxu0 0
    %1268 = vmatprep.mubr.bf16.mxu0 0
    %1269 = vmatmul.mubr.bf16.gmra.mxu0 %v1222
    %v1270 = vpop.f32.mrf.mxu0
    %v1271 = vadd.f32 0.0, %v1270
    %v1272 = vpop.f32.mrf.mxu0
    %v1273 = vpop.f32.mrf.mxu0
    %v1274 = vadd.f32 0.0, %v1273
    %v1275 = vpop.f32.mrf.mxu0
    %1276 = vmatprep.mubr.bf16.mxu0 0
    %1277 = vmatmul.mubr.bf16.gmra.mxu0 %v1225
    %v1278 = vpop.f32.mrf.mxu0
    %v1279 = vadd.f32 0.0, %v1278
    %v1280 = vpop.f32.mrf.mxu0
    %v1281 = vpop.f32.mrf.mxu0
    %v1282 = vadd.f32 0.0, %v1281
    %v1283 = vpop.f32.mrf.mxu0
    %1284 = vmatprep.mubr.bf16.mxu0 0
    %1285 = vmatmul.mubr.bf16.gmra.mxu0 %v1228
    %v1286 = vpop.f32.mrf.mxu0
    %v1287 = vadd.f32 0.0, %v1286
    %v1288 = vpop.f32.mrf.mxu0
    %v1289 = vpop.f32.mrf.mxu0
    %v1290 = vadd.f32 0.0, %v1289
    %v1291 = vpop.f32.mrf.mxu0
    %1292 = vmatprep.mubr.bf16.mxu0 0
    %1293 = vmatmul.mubr.bf16.gmra.mxu0 %v1231
    %v1294 = vpop.f32.mrf.mxu0
    %v1295 = vadd.f32 0.0, %v1294
    %v1296 = vpop.f32.mrf.mxu0
    %v1297 = vpop.f32.mrf.mxu0
    %v1298 = vadd.f32 0.0, %v1297
    %v1299 = vpop.f32.mrf.mxu0
    %1300 = vdwg.mxu0
    %v1302 = vsel %vm979, %v644, 0
    %v1305 = vsel %vm979, %v646, 0
    %v1308 = vsel %vm979, %v648, 0
    %v1311 = vsel %vm979, %v650, 0
    %v1314 = vsel %vm992, %v923, 0
    %1316 = vmatprep.subr.bf16.mxu0 0
    %1317 = vmatpush1.bf16.msra.mxu0 0
    %1318 = vmatprep.subr.bf16.mxu0 0
    %1319 = vmatpush1.bf16.msra.mxu0 0
    %1320 = vmatprep.subr.bf16.mxu0 0
    %1321 = vmatpush1.bf16.msra.mxu0 0
    %1322 = vmatprep.subr.bf16.mxu0 0
    %1323 = vmatpush1.bf16.msra.mxu0 0
    %1324 = vmatprep.subr.bf16.mxu0 0
    %1325 = vmatpush1.bf16.msra.mxu0 0
    %1326 = vmatprep.subr.bf16.mxu0 0
    %1327 = vmatpush1.bf16.msra.mxu0 0
    %1328 = vmatprep.subr.bf16.mxu0 0
    %1329 = vmatpush1.bf16.msra.mxu0 0
    %1330 = vmatprep.subr.bf16.mxu0 0
    %1331 = vmatpush1.bf16.msra.mxu0 %v1314
    %1332 = vmatprep.subr.bf16.mxu0 0
    %1333 = vmatpush2.bf16.msra.mxu0 0
    %1334 = vmatprep.subr.bf16.mxu0 0
    %1335 = vmatpush2.bf16.msra.mxu0 0
    %1336 = vmatprep.subr.bf16.mxu0 0
    %1337 = vmatpush2.bf16.msra.mxu0 0
    %1338 = vmatprep.subr.bf16.mxu0 0
    %1339 = vmatpush2.bf16.msra.mxu0 0
    %1340 = vmatprep.subr.bf16.mxu0 0
    %1341 = vmatpush2.bf16.msra.mxu0 0
    %1342 = vmatprep.subr.bf16.mxu0 0
    %1343 = vmatpush2.bf16.msra.mxu0 0
    %1344 = vmatprep.subr.bf16.mxu0 0
    %1345 = vmatpush2.bf16.msra.mxu0 0
    %1346 = vmatprep.subr.bf16.mxu0 0
    %1347 = vmatpush2.bf16.msra.mxu0 0
    %1348 = vmatprep.mubr.bf16.mxu0 0
    %1349 = vmatmul.mubr.bf16.gmra.mxu0 %v1302
    %v1350 = vpop.f32.mrf.mxu0
    %v1351 = vadd.f32 0.0, %v1350
    %v1352 = vpop.f32.mrf.mxu0
    %v1353 = vpop.f32.mrf.mxu0
    %v1354 = vadd.f32 0.0, %v1353
    %v1355 = vpop.f32.mrf.mxu0
    %1356 = vmatprep.mubr.bf16.mxu0 0
    %1357 = vmatmul.mubr.bf16.gmra.mxu0 %v1305
    %v1358 = vpop.f32.mrf.mxu0
    %v1359 = vadd.f32 0.0, %v1358
    %v1360 = vpop.f32.mrf.mxu0
    %v1361 = vpop.f32.mrf.mxu0
    %v1362 = vadd.f32 0.0, %v1361
    %v1363 = vpop.f32.mrf.mxu0
    %1364 = vmatprep.mubr.bf16.mxu0 0
    %1365 = vmatmul.mubr.bf16.gmra.mxu0 %v1308
    %v1366 = vpop.f32.mrf.mxu0
    %v1367 = vadd.f32 0.0, %v1366
    %v1368 = vpop.f32.mrf.mxu0
    %v1369 = vpop.f32.mrf.mxu0
    %v1370 = vadd.f32 0.0, %v1369
    %v1371 = vpop.f32.mrf.mxu0
    %1372 = vmatprep.mubr.bf16.mxu0 0
    %1373 = vmatmul.mubr.bf16.gmra.mxu0 %v1311
    %v1374 = vpop.f32.mrf.mxu0
    %v1375 = vadd.f32 0.0, %v1374
    %v1376 = vpop.f32.mrf.mxu0
    %v1377 = vpop.f32.mrf.mxu0
    %v1378 = vadd.f32 0.0, %v1377
    %v1379 = vpop.f32.mrf.mxu0
    %1380 = vdwg.mxu0
    %v1382 = vsel %vm979, %v652, 0
    %v1385 = vsel %vm979, %v654, 0
    %v1388 = vsel %vm979, %v656, 0
    %v1391 = vsel %vm979, %v658, 0
    %v1394 = vsel %vm992, %v939, 0
    %1396 = vmatprep.subr.bf16.mxu0 0
    %1397 = vmatpush1.bf16.msra.mxu0 0
    %1398 = vmatprep.subr.bf16.mxu0 0
    %1399 = vmatpush1.bf16.msra.mxu0 0
    %1400 = vmatprep.subr.bf16.mxu0 0
    %1401 = vmatpush1.bf16.msra.mxu0 0
    %1402 = vmatprep.subr.bf16.mxu0 0
    %1403 = vmatpush1.bf16.msra.mxu0 0
    %1404 = vmatprep.subr.bf16.mxu0 0
    %1405 = vmatpush1.bf16.msra.mxu0 0
    %1406 = vmatprep.subr.bf16.mxu0 0
    %1407 = vmatpush1.bf16.msra.mxu0 0
    %1408 = vmatprep.subr.bf16.mxu0 0
    %1409 = vmatpush1.bf16.msra.mxu0 0
    %1410 = vmatprep.subr.bf16.mxu0 0
    %1411 = vmatpush1.bf16.msra.mxu0 %v1394
    %1412 = vmatprep.subr.bf16.mxu0 0
    %1413 = vmatpush2.bf16.msra.mxu0 0
    %1414 = vmatprep.subr.bf16.mxu0 0
    %1415 = vmatpush2.bf16.msra.mxu0 0
    %1416 = vmatprep.subr.bf16.mxu0 0
    %1417 = vmatpush2.bf16.msra.mxu0 0
    %1418 = vmatprep.subr.bf16.mxu0 0
    %1419 = vmatpush2.bf16.msra.mxu0 0
    %1420 = vmatprep.subr.bf16.mxu0 0
    %1421 = vmatpush2.bf16.msra.mxu0 0
    %1422 = vmatprep.subr.bf16.mxu0 0
    %1423 = vmatpush2.bf16.msra.mxu0 0
    %1424 = vmatprep.subr.bf16.mxu0 0
    %1425 = vmatpush2.bf16.msra.mxu0 0
    %1426 = vmatprep.subr.bf16.mxu0 0
    %1427 = vmatpush2.bf16.msra.mxu0 0
    %1428 = vmatprep.mubr.bf16.mxu0 0
    %1429 = vmatmul.mubr.bf16.gmra.mxu0 %v1382
    %v1430 = vpop.f32.mrf.mxu0
    %v1431 = vadd.f32 0.0, %v1430
    %v1432 = vpop.f32.mrf.mxu0
    %v1433 = vpop.f32.mrf.mxu0
    %v1434 = vadd.f32 0.0, %v1433
    %v1435 = vpop.f32.mrf.mxu0
    %1436 = vmatprep.mubr.bf16.mxu0 0
    %1437 = vmatmul.mubr.bf16.gmra.mxu0 %v1385
    %v1438 = vpop.f32.mrf.mxu0
    %v1439 = vadd.f32 0.0, %v1438
    %v1440 = vpop.f32.mrf.mxu0
    %v1441 = vpop.f32.mrf.mxu0
    %v1442 = vadd.f32 0.0, %v1441
    %v1443 = vpop.f32.mrf.mxu0
    %1444 = vmatprep.mubr.bf16.mxu0 0
    %1445 = vmatmul.mubr.bf16.gmra.mxu0 %v1388
    %v1446 = vpop.f32.mrf.mxu0
    %v1447 = vadd.f32 0.0, %v1446
    %v1448 = vpop.f32.mrf.mxu0
    %v1449 = vpop.f32.mrf.mxu0
    %v1450 = vadd.f32 0.0, %v1449
    %v1451 = vpop.f32.mrf.mxu0
    %1452 = vmatprep.mubr.bf16.mxu0 0
    %1453 = vmatmul.mubr.bf16.gmra.mxu0 %v1391
    %v1454 = vpop.f32.mrf.mxu0
    %v1455 = vadd.f32 0.0, %v1454
    %v1456 = vpop.f32.mrf.mxu0
    %v1457 = vpop.f32.mrf.mxu0
    %v1458 = vadd.f32 0.0, %v1457
    %v1459 = vpop.f32.mrf.mxu0
    %1460 = vdwg.mxu0
    %v1462 = vsel %vm979, %v660, 0
    %v1465 = vsel %vm979, %v662, 0
    %v1468 = vsel %vm979, %v664, 0
    %v1471 = vsel %vm979, %v666, 0
    %v1474 = vsel %vm992, %v955, 0
    %1476 = vmatprep.subr.bf16.mxu0 0
    %1477 = vmatpush1.bf16.msra.mxu0 0
    %1478 = vmatprep.subr.bf16.mxu0 0
    %1479 = vmatpush1.bf16.msra.mxu0 0
    %1480 = vmatprep.subr.bf16.mxu0 0
    %1481 = vmatpush1.bf16.msra.mxu0 0
    %1482 = vmatprep.subr.bf16.mxu0 0
    %1483 = vmatpush1.bf16.msra.mxu0 0
    %1484 = vmatprep.subr.bf16.mxu0 0
    %1485 = vmatpush1.bf16.msra.mxu0 0
    %1486 = vmatprep.subr.bf16.mxu0 0
    %1487 = vmatpush1.bf16.msra.mxu0 0
    %1488 = vmatprep.subr.bf16.mxu0 0
    %1489 = vmatpush1.bf16.msra.mxu0 0
    %1490 = vmatprep.subr.bf16.mxu0 0
    %1491 = vmatpush1.bf16.msra.mxu0 %v1474
    %1492 = vmatprep.subr.bf16.mxu0 0
    %1493 = vmatpush2.bf16.msra.mxu0 0
    %1494 = vmatprep.subr.bf16.mxu0 0
    %1495 = vmatpush2.bf16.msra.mxu0 0
    %1496 = vmatprep.subr.bf16.mxu0 0
    %1497 = vmatpush2.bf16.msra.mxu0 0
    %1498 = vmatprep.subr.bf16.mxu0 0
    %1499 = vmatpush2.bf16.msra.mxu0 0
    %1500 = vmatprep.subr.bf16.mxu0 0
    %1501 = vmatpush2.bf16.msra.mxu0 0
    %1502 = vmatprep.subr.bf16.mxu0 0
    %1503 = vmatpush2.bf16.msra.mxu0 0
    %1504 = vmatprep.subr.bf16.mxu0 0
    %1505 = vmatpush2.bf16.msra.mxu0 0
    %1506 = vmatprep.subr.bf16.mxu0 0
    %1507 = vmatpush2.bf16.msra.mxu0 0
    %1508 = vmatprep.mubr.bf16.mxu0 0
    %1509 = vmatmul.mubr.bf16.gmra.mxu0 %v1462
    %v1510 = vpop.f32.mrf.mxu0
    %v1511 = vadd.f32 0.0, %v1510
    %v1512 = vpop.f32.mrf.mxu0
    %v1513 = vpop.f32.mrf.mxu0
    %v1514 = vadd.f32 0.0, %v1513
    %v1515 = vpop.f32.mrf.mxu0
    %1516 = vmatprep.mubr.bf16.mxu0 0
    %1517 = vmatmul.mubr.bf16.gmra.mxu0 %v1465
    %v1518 = vpop.f32.mrf.mxu0
    %v1519 = vadd.f32 0.0, %v1518
    %v1520 = vpop.f32.mrf.mxu0
    %v1521 = vpop.f32.mrf.mxu0
    %v1522 = vadd.f32 0.0, %v1521
    %v1523 = vpop.f32.mrf.mxu0
    %1524 = vmatprep.mubr.bf16.mxu0 0
    %1525 = vmatmul.mubr.bf16.gmra.mxu0 %v1468
    %v1526 = vpop.f32.mrf.mxu0
    %v1527 = vadd.f32 0.0, %v1526
    %v1528 = vpop.f32.mrf.mxu0
    %v1529 = vpop.f32.mrf.mxu0
    %v1530 = vadd.f32 0.0, %v1529
    %v1531 = vpop.f32.mrf.mxu0
    %1532 = vmatprep.mubr.bf16.mxu0 0
    %1533 = vmatmul.mubr.bf16.gmra.mxu0 %v1471
    %v1534 = vpop.f32.mrf.mxu0
    %v1535 = vadd.f32 0.0, %v1534
    %v1536 = vpop.f32.mrf.mxu0
    %v1537 = vpop.f32.mrf.mxu0
    %v1538 = vadd.f32 0.0, %v1537
    %v1539 = vpop.f32.mrf.mxu0
    %1540 = vdwg.mxu0
    %v1542 = vsel %vm979, %v668, 0
    %v1545 = vsel %vm979, %v670, 0
    %v1548 = vsel %vm979, %v672, 0
    %v1551 = vsel %vm979, %v674, 0
    %v1554 = vsel %vm992, %v971, 0
    %1556 = vmatprep.subr.bf16.mxu0 0
    %1557 = vmatpush1.bf16.msra.mxu0 0
    %1558 = vmatprep.subr.bf16.mxu0 0
    %1559 = vmatpush1.bf16.msra.mxu0 0
    %1560 = vmatprep.subr.bf16.mxu0 0
    %1561 = vmatpush1.bf16.msra.mxu0 0
    %1562 = vmatprep.subr.bf16.mxu0 0
    %1563 = vmatpush1.bf16.msra.mxu0 0
    %1564 = vmatprep.subr.bf16.mxu0 0
    %1565 = vmatpush1.bf16.msra.mxu0 0
    %1566 = vmatprep.subr.bf16.mxu0 0
    %1567 = vmatpush1.bf16.msra.mxu0 0
    %1568 = vmatprep.subr.bf16.mxu0 0
    %1569 = vmatpush1.bf16.msra.mxu0 0
    %1570 = vmatprep.subr.bf16.mxu0 0
    %1571 = vmatpush1.bf16.msra.mxu0 %v1554
    %1572 = vmatprep.subr.bf16.mxu0 0
    %1573 = vmatpush2.bf16.msra.mxu0 0
    %1574 = vmatprep.subr.bf16.mxu0 0
    %1575 = vmatpush2.bf16.msra.mxu0 0
    %1576 = vmatprep.subr.bf16.mxu0 0
    %1577 = vmatpush2.bf16.msra.mxu0 0
    %1578 = vmatprep.subr.bf16.mxu0 0
    %1579 = vmatpush2.bf16.msra.mxu0 0
    %1580 = vmatprep.subr.bf16.mxu0 0
    %1581 = vmatpush2.bf16.msra.mxu0 0
    %1582 = vmatprep.subr.bf16.mxu0 0
    %1583 = vmatpush2.bf16.msra.mxu0 0
    %1584 = vmatprep.subr.bf16.mxu0 0
    %1585 = vmatpush2.bf16.msra.mxu0 0
    %1586 = vmatprep.subr.bf16.mxu0 0
    %1587 = vmatpush2.bf16.msra.mxu0 0
    %1588 = vmatprep.mubr.bf16.mxu0 0
    %1589 = vmatmul.mubr.bf16.gmra.mxu0 %v1542
    %v1590 = vpop.f32.mrf.mxu0
    %v1591 = vadd.f32 0.0, %v1590
    %v1592 = vpop.f32.mrf.mxu0
    %v1593 = vpop.f32.mrf.mxu0
    %v1594 = vadd.f32 0.0, %v1593
    %v1595 = vpop.f32.mrf.mxu0
    %1596 = vmatprep.mubr.bf16.mxu0 0
    %1597 = vmatmul.mubr.bf16.gmra.mxu0 %v1545
    %v1598 = vpop.f32.mrf.mxu0
    %v1599 = vadd.f32 0.0, %v1598
    %v1600 = vpop.f32.mrf.mxu0
    %v1601 = vpop.f32.mrf.mxu0
    %v1602 = vadd.f32 0.0, %v1601
    %v1603 = vpop.f32.mrf.mxu0
    %1604 = vmatprep.mubr.bf16.mxu0 0
    %1605 = vmatmul.mubr.bf16.gmra.mxu0 %v1548
    %v1606 = vpop.f32.mrf.mxu0
    %v1607 = vadd.f32 0.0, %v1606
    %v1608 = vpop.f32.mrf.mxu0
    %v1609 = vpop.f32.mrf.mxu0
    %v1610 = vadd.f32 0.0, %v1609
    %v1611 = vpop.f32.mrf.mxu0
    %1612 = vmatprep.mubr.bf16.mxu0 0
    %1613 = vmatmul.mubr.bf16.gmra.mxu0 %v1551
    %v1614 = vpop.f32.mrf.mxu0
    %v1615 = vadd.f32 0.0, %v1614
    %v1616 = vpop.f32.mrf.mxu0
    %v1617 = vpop.f32.mrf.mxu0
    %v1618 = vadd.f32 0.0, %v1617
    %v1619 = vpop.f32.mrf.mxu0
    %1620 = vdwg.mxu0
    %v1621 = vsel %vm197, %v1031, -inf
    %1622 = vmax.xlane.f32.xlu0 %v1621
    %v1623 = vpop.xlane.xlu0 %1622
    %v1624 = vsel %vm197, %v1034, -inf
    %1625 = vmax.xlane.f32.xlu0 %v1624
    %v1626 = vpop.xlane.xlu0 %1625
    %v1627 = vsel %vm197, %v1039, -inf
    %1628 = vmax.xlane.f32.xlu0 %v1627
    %v1629 = vpop.xlane.xlu0 %1628
    %v1630 = vsel %vm197, %v1042, -inf
    %1631 = vmax.xlane.f32.xlu0 %v1630
    %v1632 = vpop.xlane.xlu0 %1631
    %v1633 = vsel %vm197, %v1047, -inf
    %1634 = vmax.xlane.f32.xlu0 %v1633
    %v1635 = vpop.xlane.xlu0 %1634
    %v1636 = vsel %vm197, %v1050, -inf
    %1637 = vmax.xlane.f32.xlu0 %v1636
    %v1638 = vpop.xlane.xlu0 %1637
    %v1639 = vsel %vm197, %v1055, -inf
    %1640 = vmax.xlane.f32.xlu0 %v1639
    %v1641 = vpop.xlane.xlu0 %1640
    %v1642 = vsel %vm197, %v1058, -inf
    %1643 = vmax.xlane.f32.xlu0 %v1642
    %v1644 = vpop.xlane.xlu0 %1643
    %v1645 = vsel %vm197, %v1111, -inf
    %1646 = vmax.xlane.f32.xlu0 %v1645
    %v1647 = vpop.xlane.xlu0 %1646
    %v1648 = vsel %vm197, %v1114, -inf
    %1649 = vmax.xlane.f32.xlu0 %v1648
    %v1650 = vpop.xlane.xlu0 %1649
    %v1651 = vsel %vm197, %v1119, -inf
    %1652 = vmax.xlane.f32.xlu0 %v1651
    %v1653 = vpop.xlane.xlu0 %1652
    %v1654 = vsel %vm197, %v1122, -inf
    %1655 = vmax.xlane.f32.xlu0 %v1654
    %v1656 = vpop.xlane.xlu0 %1655
    %v1657 = vsel %vm197, %v1127, -inf
    %1658 = vmax.xlane.f32.xlu0 %v1657
    %v1659 = vpop.xlane.xlu0 %1658
    %v1660 = vsel %vm197, %v1130, -inf
    %1661 = vmax.xlane.f32.xlu0 %v1660
    %v1662 = vpop.xlane.xlu0 %1661
    %v1663 = vsel %vm197, %v1135, -inf
    %1664 = vmax.xlane.f32.xlu0 %v1663
    %v1665 = vpop.xlane.xlu0 %1664
    %v1666 = vsel %vm197, %v1138, -inf
    %1667 = vmax.xlane.f32.xlu0 %v1666
    %v1668 = vpop.xlane.xlu0 %1667
    %v1669 = vsel %vm197, %v1191, -inf
    %1670 = vmax.xlane.f32.xlu0 %v1669
    %v1671 = vpop.xlane.xlu0 %1670
    %v1672 = vsel %vm197, %v1194, -inf
    %1673 = vmax.xlane.f32.xlu0 %v1672
    %v1674 = vpop.xlane.xlu0 %1673
    %v1675 = vsel %vm197, %v1199, -inf
    %1676 = vmax.xlane.f32.xlu0 %v1675
    %v1677 = vpop.xlane.xlu0 %1676
    %v1678 = vsel %vm197, %v1202, -inf
    %1679 = vmax.xlane.f32.xlu0 %v1678
    %v1680 = vpop.xlane.xlu0 %1679
    %v1681 = vsel %vm197, %v1207, -inf
    %1682 = vmax.xlane.f32.xlu0 %v1681
    %v1683 = vpop.xlane.xlu0 %1682
    %v1684 = vsel %vm197, %v1210, -inf
    %1685 = vmax.xlane.f32.xlu0 %v1684
    %v1686 = vpop.xlane.xlu0 %1685
    %v1687 = vsel %vm197, %v1215, -inf
    %1688 = vmax.xlane.f32.xlu0 %v1687
    %v1689 = vpop.xlane.xlu0 %1688
    %v1690 = vsel %vm197, %v1218, -inf
    %1691 = vmax.xlane.f32.xlu0 %v1690
    %v1692 = vpop.xlane.xlu0 %1691
    %v1693 = vsel %vm197, %v1271, -inf
    %1694 = vmax.xlane.f32.xlu0 %v1693
    %v1695 = vpop.xlane.xlu0 %1694
    %v1696 = vsel %vm197, %v1274, -inf
    %1697 = vmax.xlane.f32.xlu0 %v1696
    %v1698 = vpop.xlane.xlu0 %1697
    %v1699 = vsel %vm197, %v1279, -inf
    %1700 = vmax.xlane.f32.xlu0 %v1699
    %v1701 = vpop.xlane.xlu0 %1700
    %v1702 = vsel %vm197, %v1282, -inf
    %1703 = vmax.xlane.f32.xlu0 %v1702
    %v1704 = vpop.xlane.xlu0 %1703
    %v1705 = vsel %vm197, %v1287, -inf
    %1706 = vmax.xlane.f32.xlu0 %v1705
    %v1707 = vpop.xlane.xlu0 %1706
    %v1708 = vsel %vm197, %v1290, -inf
    %1709 = vmax.xlane.f32.xlu0 %v1708
    %v1710 = vpop.xlane.xlu0 %1709
    %v1711 = vsel %vm197, %v1295, -inf
    %1712 = vmax.xlane.f32.xlu0 %v1711
    %v1713 = vpop.xlane.xlu0 %1712
    %v1714 = vsel %vm197, %v1298, -inf
    %1715 = vmax.xlane.f32.xlu0 %v1714
    %v1716 = vpop.xlane.xlu0 %1715
    %v1717 = vsel %vm197, %v1351, -inf
    %1718 = vmax.xlane.f32.xlu0 %v1717
    %v1719 = vpop.xlane.xlu0 %1718
    %v1720 = vsel %vm197, %v1354, -inf
    %1721 = vmax.xlane.f32.xlu0 %v1720
    %v1722 = vpop.xlane.xlu0 %1721
    %v1723 = vsel %vm197, %v1359, -inf
    %1724 = vmax.xlane.f32.xlu0 %v1723
    %v1725 = vpop.xlane.xlu0 %1724
    %v1726 = vsel %vm197, %v1362, -inf
    %1727 = vmax.xlane.f32.xlu0 %v1726
    %v1728 = vpop.xlane.xlu0 %1727
    %v1729 = vsel %vm197, %v1367, -inf
    %1730 = vmax.xlane.f32.xlu0 %v1729
    %v1731 = vpop.xlane.xlu0 %1730
    %v1732 = vsel %vm197, %v1370, -inf
    %1733 = vmax.xlane.f32.xlu0 %v1732
    %v1734 = vpop.xlane.xlu0 %1733
    %v1735 = vsel %vm197, %v1375, -inf
    %1736 = vmax.xlane.f32.xlu0 %v1735
    %v1737 = vpop.xlane.xlu0 %1736
    %v1738 = vsel %vm197, %v1378, -inf
    %1739 = vmax.xlane.f32.xlu0 %v1738
    %v1740 = vpop.xlane.xlu0 %1739
    %v1741 = vsel %vm197, %v1431, -inf
    %1742 = vmax.xlane.f32.xlu0 %v1741
    %v1743 = vpop.xlane.xlu0 %1742
    %v1744 = vsel %vm197, %v1434, -inf
    %1745 = vmax.xlane.f32.xlu0 %v1744
    %v1746 = vpop.xlane.xlu0 %1745
    %v1747 = vsel %vm197, %v1439, -inf
    %1748 = vmax.xlane.f32.xlu0 %v1747
    %v1749 = vpop.xlane.xlu0 %1748
    %v1750 = vsel %vm197, %v1442, -inf
    %1751 = vmax.xlane.f32.xlu0 %v1750
    %v1752 = vpop.xlane.xlu0 %1751
    %v1753 = vsel %vm197, %v1447, -inf
    %1754 = vmax.xlane.f32.xlu0 %v1753
    %v1755 = vpop.xlane.xlu0 %1754
    %v1756 = vsel %vm197, %v1450, -inf
    %1757 = vmax.xlane.f32.xlu0 %v1756
    %v1758 = vpop.xlane.xlu0 %1757
    %v1759 = vsel %vm197, %v1455, -inf
    %1760 = vmax.xlane.f32.xlu0 %v1759
    %v1761 = vpop.xlane.xlu0 %1760
    %v1762 = vsel %vm197, %v1458, -inf
    %1763 = vmax.xlane.f32.xlu0 %v1762
    %v1764 = vpop.xlane.xlu0 %1763
    %v1765 = vsel %vm197, %v1511, -inf
    %1766 = vmax.xlane.f32.xlu0 %v1765
    %v1767 = vpop.xlane.xlu0 %1766
    %v1768 = vsel %vm197, %v1514, -inf
    %1769 = vmax.xlane.f32.xlu0 %v1768
    %v1770 = vpop.xlane.xlu0 %1769
    %v1771 = vsel %vm197, %v1519, -inf
    %1772 = vmax.xlane.f32.xlu0 %v1771
    %v1773 = vpop.xlane.xlu0 %1772
    %v1774 = vsel %vm197, %v1522, -inf
    %1775 = vmax.xlane.f32.xlu0 %v1774
    %v1776 = vpop.xlane.xlu0 %1775
    %v1777 = vsel %vm197, %v1527, -inf
    %1778 = vmax.xlane.f32.xlu0 %v1777
    %v1779 = vpop.xlane.xlu0 %1778
    %v1780 = vsel %vm197, %v1530, -inf
    %1781 = vmax.xlane.f32.xlu0 %v1780
    %v1782 = vpop.xlane.xlu0 %1781
    %v1783 = vsel %vm197, %v1535, -inf
    %1784 = vmax.xlane.f32.xlu0 %v1783
    %v1785 = vpop.xlane.xlu0 %1784
    %v1786 = vsel %vm197, %v1538, -inf
    %1787 = vmax.xlane.f32.xlu0 %v1786
    %v1788 = vpop.xlane.xlu0 %1787
    %v1789 = vsel %vm197, %v1591, -inf
    %1790 = vmax.xlane.f32.xlu0 %v1789
    %v1791 = vpop.xlane.xlu0 %1790
    %v1792 = vsel %vm197, %v1594, -inf
    %1793 = vmax.xlane.f32.xlu0 %v1792
    %v1794 = vpop.xlane.xlu0 %1793
    %v1795 = vsel %vm197, %v1599, -inf
    %1796 = vmax.xlane.f32.xlu0 %v1795
    %v1797 = vpop.xlane.xlu0 %1796
    %v1798 = vsel %vm197, %v1602, -inf
    %1799 = vmax.xlane.f32.xlu0 %v1798
    %v1800 = vpop.xlane.xlu0 %1799
    %v1801 = vsel %vm197, %v1607, -inf
    %1802 = vmax.xlane.f32.xlu0 %v1801
    %v1803 = vpop.xlane.xlu0 %1802
    %v1804 = vsel %vm197, %v1610, -inf
    %1805 = vmax.xlane.f32.xlu0 %v1804
    %v1806 = vpop.xlane.xlu0 %1805
    %v1807 = vsel %vm197, %v1615, -inf
    %1808 = vmax.xlane.f32.xlu0 %v1807
    %v1809 = vpop.xlane.xlu0 %1808
    %v1810 = vsel %vm197, %v1618, -inf
    %1811 = vmax.xlane.f32.xlu0 %v1810
    %v1812 = vpop.xlane.xlu0 %1811
    %v1813 = vsub.f32 %v1031, %v1623
    %v1814 = vsub.f32 %v1034, %v1626
    %v1815 = vsub.f32 %v1039, %v1629
    %v1816 = vsub.f32 %v1042, %v1632
    %v1817 = vsub.f32 %v1047, %v1635
    %v1818 = vsub.f32 %v1050, %v1638
    %v1819 = vsub.f32 %v1055, %v1641
    %v1820 = vsub.f32 %v1058, %v1644
    %v1821 = vsub.f32 %v1111, %v1647
    %v1822 = vsub.f32 %v1114, %v1650
    %v1823 = vsub.f32 %v1119, %v1653
    %v1824 = vsub.f32 %v1122, %v1656
    %v1825 = vsub.f32 %v1127, %v1659
    %v1826 = vsub.f32 %v1130, %v1662
    %v1827 = vsub.f32 %v1135, %v1665
    %v1828 = vsub.f32 %v1138, %v1668
    %v1829 = vsub.f32 %v1191, %v1671
    %v1830 = vsub.f32 %v1194, %v1674
    %v1831 = vsub.f32 %v1199, %v1677
    %v1832 = vsub.f32 %v1202, %v1680
    %v1833 = vsub.f32 %v1207, %v1683
    %v1834 = vsub.f32 %v1210, %v1686
    %v1835 = vsub.f32 %v1215, %v1689
    %v1836 = vsub.f32 %v1218, %v1692
    %v1837 = vsub.f32 %v1271, %v1695
    %v1838 = vsub.f32 %v1274, %v1698
    %v1839 = vsub.f32 %v1279, %v1701
    %v1840 = vsub.f32 %v1282, %v1704
    %v1841 = vsub.f32 %v1287, %v1707
    %v1842 = vsub.f32 %v1290, %v1710
    %v1843 = vsub.f32 %v1295, %v1713
    %v1844 = vsub.f32 %v1298, %v1716
    %v1845 = vsub.f32 %v1351, %v1719
    %v1846 = vsub.f32 %v1354, %v1722
    %v1847 = vsub.f32 %v1359, %v1725
    %v1848 = vsub.f32 %v1362, %v1728
    %v1849 = vsub.f32 %v1367, %v1731
    %v1850 = vsub.f32 %v1370, %v1734
    %v1851 = vsub.f32 %v1375, %v1737
    %v1852 = vsub.f32 %v1378, %v1740
    %v1853 = vsub.f32 %v1431, %v1743
    %v1854 = vsub.f32 %v1434, %v1746
    %v1855 = vsub.f32 %v1439, %v1749
    %v1856 = vsub.f32 %v1442, %v1752
    %v1857 = vsub.f32 %v1447, %v1755
    %v1858 = vsub.f32 %v1450, %v1758
    %v1859 = vsub.f32 %v1455, %v1761
    %v1860 = vsub.f32 %v1458, %v1764
    %v1861 = vsub.f32 %v1511, %v1767
    %v1862 = vsub.f32 %v1514, %v1770
    %v1863 = vsub.f32 %v1519, %v1773
    %v1864 = vsub.f32 %v1522, %v1776
    %v1865 = vsub.f32 %v1527, %v1779
    %v1866 = vsub.f32 %v1530, %v1782
    %v1867 = vsub.f32 %v1535, %v1785
    %v1868 = vsub.f32 %v1538, %v1788
    %v1869 = vsub.f32 %v1591, %v1791
    %v1870 = vsub.f32 %v1594, %v1794
    %v1871 = vsub.f32 %v1599, %v1797
    %v1872 = vsub.f32 %v1602, %v1800
    %v1873 = vsub.f32 %v1607, %v1803
    %v1874 = vsub.f32 %v1610, %v1806
    %v1875 = vsub.f32 %v1615, %v1809
    %v1876 = vsub.f32 %v1618, %v1812
    %v1877 = vmul.f32 %v1813, 1.442695
    %v1878 = vpow.pop %v1877
    %v1879 = vmul.f32 %v1814, 1.442695
    %v1880 = vpow.pop %v1879
    %v1881 = vmul.f32 %v1815, 1.442695
    %v1882 = vpow.pop %v1881
    %v1883 = vmul.f32 %v1816, 1.442695
    %v1884 = vpow.pop %v1883
    %v1885 = vmul.f32 %v1817, 1.442695
    %v1886 = vpow.pop %v1885
    %v1887 = vmul.f32 %v1818, 1.442695
    %v1888 = vpow.pop %v1887
    %v1889 = vmul.f32 %v1819, 1.442695
    %v1890 = vpow.pop %v1889
    %v1891 = vmul.f32 %v1820, 1.442695
    %v1892 = vpow.pop %v1891
    %v1893 = vmul.f32 %v1821, 1.442695
    %v1894 = vpow.pop %v1893
    %v1895 = vmul.f32 %v1822, 1.442695
    %v1896 = vpow.pop %v1895
    %v1897 = vmul.f32 %v1823, 1.442695
    %v1898 = vpow.pop %v1897
    %v1899 = vmul.f32 %v1824, 1.442695
    %v1900 = vpow.pop %v1899
    %v1901 = vmul.f32 %v1825, 1.442695
    %v1902 = vpow.pop %v1901
    %v1903 = vmul.f32 %v1826, 1.442695
    %v1904 = vpow.pop %v1903
    %v1905 = vmul.f32 %v1827, 1.442695
    %v1906 = vpow.pop %v1905
    %v1907 = vmul.f32 %v1828, 1.442695
    %v1908 = vpow.pop %v1907
    %v1909 = vmul.f32 %v1829, 1.442695
    %v1910 = vpow.pop %v1909
    %v1911 = vmul.f32 %v1830, 1.442695
    %v1912 = vpow.pop %v1911
    %v1913 = vmul.f32 %v1831, 1.442695
    %v1914 = vpow.pop %v1913
    %v1915 = vmul.f32 %v1832, 1.442695
    %v1916 = vpow.pop %v1915
    %v1917 = vmul.f32 %v1833, 1.442695
    %v1918 = vpow.pop %v1917
    %v1919 = vmul.f32 %v1834, 1.442695
    %v1920 = vpow.pop %v1919
    %v1921 = vmul.f32 %v1835, 1.442695
    %v1922 = vpow.pop %v1921
    %v1923 = vmul.f32 %v1836, 1.442695
    %v1924 = vpow.pop %v1923
    %v1925 = vmul.f32 %v1837, 1.442695
    %v1926 = vpow.pop %v1925
    %v1927 = vmul.f32 %v1838, 1.442695
    %v1928 = vpow.pop %v1927
    %v1929 = vmul.f32 %v1839, 1.442695
    %v1930 = vpow.pop %v1929
    %v1931 = vmul.f32 %v1840, 1.442695
    %v1932 = vpow.pop %v1931
    %v1933 = vmul.f32 %v1841, 1.442695
    %v1934 = vpow.pop %v1933
    %v1935 = vmul.f32 %v1842, 1.442695
    %v1936 = vpow.pop %v1935
    %v1937 = vmul.f32 %v1843, 1.442695
    %v1938 = vpow.pop %v1937
    %v1939 = vmul.f32 %v1844, 1.442695
    %v1940 = vpow.pop %v1939
    %v1941 = vmul.f32 %v1845, 1.442695
    %v1942 = vpow.pop %v1941
    %v1943 = vmul.f32 %v1846, 1.442695
    %v1944 = vpow.pop %v1943
    %v1945 = vmul.f32 %v1847, 1.442695
    %v1946 = vpow.pop %v1945
    %v1947 = vmul.f32 %v1848, 1.442695
    %v1948 = vpow.pop %v1947
    %v1949 = vmul.f32 %v1849, 1.442695
    %v1950 = vpow.pop %v1949
    %v1951 = vmul.f32 %v1850, 1.442695
    %v1952 = vpow.pop %v1951
    %v1953 = vmul.f32 %v1851, 1.442695
    %v1954 = vpow.pop %v1953
    %v1955 = vmul.f32 %v1852, 1.442695
    %v1956 = vpow.pop %v1955
    %v1957 = vmul.f32 %v1853, 1.442695
    %v1958 = vpow.pop %v1957
    %v1959 = vmul.f32 %v1854, 1.442695
    %v1960 = vpow.pop %v1959
    %v1961 = vmul.f32 %v1855, 1.442695
    %v1962 = vpow.pop %v1961
    %v1963 = vmul.f32 %v1856, 1.442695
    %v1964 = vpow.pop %v1963
    %v1965 = vmul.f32 %v1857, 1.442695
    %v1966 = vpow.pop %v1965
    %v1967 = vmul.f32 %v1858, 1.442695
    %v1968 = vpow.pop %v1967
    %v1969 = vmul.f32 %v1859, 1.442695
    %v1970 = vpow.pop %v1969
    %v1971 = vmul.f32 %v1860, 1.442695
    %v1972 = vpow.pop %v1971
    %v1973 = vmul.f32 %v1861, 1.442695
    %v1974 = vpow.pop %v1973
    %v1975 = vmul.f32 %v1862, 1.442695
    %v1976 = vpow.pop %v1975
    %v1977 = vmul.f32 %v1863, 1.442695
    %v1978 = vpow.pop %v1977
    %v1979 = vmul.f32 %v1864, 1.442695
    %v1980 = vpow.pop %v1979
    %v1981 = vmul.f32 %v1865, 1.442695
    %v1982 = vpow.pop %v1981
    %v1983 = vmul.f32 %v1866, 1.442695
    %v1984 = vpow.pop %v1983
    %v1985 = vmul.f32 %v1867, 1.442695
    %v1986 = vpow.pop %v1985
    %v1987 = vmul.f32 %v1868, 1.442695
    %v1988 = vpow.pop %v1987
    %v1989 = vmul.f32 %v1869, 1.442695
    %v1990 = vpow.pop %v1989
    %v1991 = vmul.f32 %v1870, 1.442695
    %v1992 = vpow.pop %v1991
    %v1993 = vmul.f32 %v1871, 1.442695
    %v1994 = vpow.pop %v1993
    %v1995 = vmul.f32 %v1872, 1.442695
    %v1996 = vpow.pop %v1995
    %v1997 = vmul.f32 %v1873, 1.442695
    %v1998 = vpow.pop %v1997
    %v1999 = vmul.f32 %v1874, 1.442695
    %v2000 = vpow.pop %v1999
    %v2001 = vmul.f32 %v1875, 1.442695
    %v2002 = vpow.pop %v2001
    %v2003 = vmul.f32 %v1876, 1.442695
    %v2004 = vpow.pop %v2003
    %v2005 = vsel %vm197, %v1878, 0.0
    %2006 = vadd.xlane.f32.xlu0 %v2005
    %v2007 = vpop.xlane.xlu0 %2006
    %v2008 = vsel %vm197, %v1880, 0.0
    %2009 = vadd.xlane.f32.xlu0 %v2008
    %v2010 = vpop.xlane.xlu0 %2009
    %v2011 = vsel %vm197, %v1882, 0.0
    %2012 = vadd.xlane.f32.xlu0 %v2011
    %v2013 = vpop.xlane.xlu0 %2012
    %v2014 = vsel %vm197, %v1884, 0.0
    %2015 = vadd.xlane.f32.xlu0 %v2014
    %v2016 = vpop.xlane.xlu0 %2015
    %v2017 = vsel %vm197, %v1886, 0.0
    %2018 = vadd.xlane.f32.xlu0 %v2017
    %v2019 = vpop.xlane.xlu0 %2018
    %v2020 = vsel %vm197, %v1888, 0.0
    %2021 = vadd.xlane.f32.xlu0 %v2020
    %v2022 = vpop.xlane.xlu0 %2021
    %v2023 = vsel %vm197, %v1890, 0.0
    %2024 = vadd.xlane.f32.xlu0 %v2023
    %v2025 = vpop.xlane.xlu0 %2024
    %v2026 = vsel %vm197, %v1892, 0.0
    %2027 = vadd.xlane.f32.xlu0 %v2026
    %v2028 = vpop.xlane.xlu0 %2027
    %v2029 = vsel %vm197, %v1894, 0.0
    %2030 = vadd.xlane.f32.xlu0 %v2029
    %v2031 = vpop.xlane.xlu0 %2030
    %v2032 = vsel %vm197, %v1896, 0.0
    %2033 = vadd.xlane.f32.xlu0 %v2032
    %v2034 = vpop.xlane.xlu0 %2033
    %v2035 = vsel %vm197, %v1898, 0.0
    %2036 = vadd.xlane.f32.xlu0 %v2035
    %v2037 = vpop.xlane.xlu0 %2036
    %v2038 = vsel %vm197, %v1900, 0.0
    %2039 = vadd.xlane.f32.xlu0 %v2038
    %v2040 = vpop.xlane.xlu0 %2039
    %v2041 = vsel %vm197, %v1902, 0.0
    %2042 = vadd.xlane.f32.xlu0 %v2041
    %v2043 = vpop.xlane.xlu0 %2042
    %v2044 = vsel %vm197, %v1904, 0.0
    %2045 = vadd.xlane.f32.xlu0 %v2044
    %v2046 = vpop.xlane.xlu0 %2045
    %v2047 = vsel %vm197, %v1906, 0.0
    %2048 = vadd.xlane.f32.xlu0 %v2047
    %v2049 = vpop.xlane.xlu0 %2048
    %v2050 = vsel %vm197, %v1908, 0.0
    %2051 = vadd.xlane.f32.xlu0 %v2050
    %v2052 = vpop.xlane.xlu0 %2051
    %v2053 = vsel %vm197, %v1910, 0.0
    %2054 = vadd.xlane.f32.xlu0 %v2053
    %v2055 = vpop.xlane.xlu0 %2054
    %v2056 = vsel %vm197, %v1912, 0.0
    %2057 = vadd.xlane.f32.xlu0 %v2056
    %v2058 = vpop.xlane.xlu0 %2057
    %v2059 = vsel %vm197, %v1914, 0.0
    %2060 = vadd.xlane.f32.xlu0 %v2059
    %v2061 = vpop.xlane.xlu0 %2060
    %v2062 = vsel %vm197, %v1916, 0.0
    %2063 = vadd.xlane.f32.xlu0 %v2062
    %v2064 = vpop.xlane.xlu0 %2063
    %v2065 = vsel %vm197, %v1918, 0.0
    %2066 = vadd.xlane.f32.xlu0 %v2065
    %v2067 = vpop.xlane.xlu0 %2066
    %v2068 = vsel %vm197, %v1920, 0.0
    %2069 = vadd.xlane.f32.xlu0 %v2068
    %v2070 = vpop.xlane.xlu0 %2069
    %v2071 = vsel %vm197, %v1922, 0.0
    %2072 = vadd.xlane.f32.xlu0 %v2071
    %v2073 = vpop.xlane.xlu0 %2072
    %v2074 = vsel %vm197, %v1924, 0.0
    %2075 = vadd.xlane.f32.xlu0 %v2074
    %v2076 = vpop.xlane.xlu0 %2075
    %v2077 = vsel %vm197, %v1926, 0.0
    %2078 = vadd.xlane.f32.xlu0 %v2077
    %v2079 = vpop.xlane.xlu0 %2078
    %v2080 = vsel %vm197, %v1928, 0.0
    %2081 = vadd.xlane.f32.xlu0 %v2080
    %v2082 = vpop.xlane.xlu0 %2081
    %v2083 = vsel %vm197, %v1930, 0.0
    %2084 = vadd.xlane.f32.xlu0 %v2083
    %v2085 = vpop.xlane.xlu0 %2084
    %v2086 = vsel %vm197, %v1932, 0.0
    %2087 = vadd.xlane.f32.xlu0 %v2086
    %v2088 = vpop.xlane.xlu0 %2087
    %v2089 = vsel %vm197, %v1934, 0.0
    %2090 = vadd.xlane.f32.xlu0 %v2089
    %v2091 = vpop.xlane.xlu0 %2090
    %v2092 = vsel %vm197, %v1936, 0.0
    %2093 = vadd.xlane.f32.xlu0 %v2092
    %v2094 = vpop.xlane.xlu0 %2093
    %v2095 = vsel %vm197, %v1938, 0.0
    %2096 = vadd.xlane.f32.xlu0 %v2095
    %v2097 = vpop.xlane.xlu0 %2096
    %v2098 = vsel %vm197, %v1940, 0.0
    %2099 = vadd.xlane.f32.xlu0 %v2098
    %v2100 = vpop.xlane.xlu0 %2099
    %v2101 = vsel %vm197, %v1942, 0.0
    %2102 = vadd.xlane.f32.xlu0 %v2101
    %v2103 = vpop.xlane.xlu0 %2102
    %v2104 = vsel %vm197, %v1944, 0.0
    %2105 = vadd.xlane.f32.xlu0 %v2104
    %v2106 = vpop.xlane.xlu0 %2105
    %v2107 = vsel %vm197, %v1946, 0.0
    %2108 = vadd.xlane.f32.xlu0 %v2107
    %v2109 = vpop.xlane.xlu0 %2108
    %v2110 = vsel %vm197, %v1948, 0.0
    %2111 = vadd.xlane.f32.xlu0 %v2110
    %v2112 = vpop.xlane.xlu0 %2111
    %v2113 = vsel %vm197, %v1950, 0.0
    %2114 = vadd.xlane.f32.xlu0 %v2113
    %v2115 = vpop.xlane.xlu0 %2114
    %v2116 = vsel %vm197, %v1952, 0.0
    %2117 = vadd.xlane.f32.xlu0 %v2116
    %v2118 = vpop.xlane.xlu0 %2117
    %v2119 = vsel %vm197, %v1954, 0.0
    %2120 = vadd.xlane.f32.xlu0 %v2119
    %v2121 = vpop.xlane.xlu0 %2120
    %v2122 = vsel %vm197, %v1956, 0.0
    %2123 = vadd.xlane.f32.xlu0 %v2122
    %v2124 = vpop.xlane.xlu0 %2123
    %v2125 = vsel %vm197, %v1958, 0.0
    %2126 = vadd.xlane.f32.xlu0 %v2125
    %v2127 = vpop.xlane.xlu0 %2126
    %v2128 = vsel %vm197, %v1960, 0.0
    %2129 = vadd.xlane.f32.xlu0 %v2128
    %v2130 = vpop.xlane.xlu0 %2129
    %v2131 = vsel %vm197, %v1962, 0.0
    %2132 = vadd.xlane.f32.xlu0 %v2131
    %v2133 = vpop.xlane.xlu0 %2132
    %v2134 = vsel %vm197, %v1964, 0.0
    %2135 = vadd.xlane.f32.xlu0 %v2134
    %v2136 = vpop.xlane.xlu0 %2135
    %v2137 = vsel %vm197, %v1966, 0.0
    %2138 = vadd.xlane.f32.xlu0 %v2137
    %v2139 = vpop.xlane.xlu0 %2138
    %v2140 = vsel %vm197, %v1968, 0.0
    %2141 = vadd.xlane.f32.xlu0 %v2140
    %v2142 = vpop.xlane.xlu0 %2141
    %v2143 = vsel %vm197, %v1970, 0.0
    %2144 = vadd.xlane.f32.xlu0 %v2143
    %v2145 = vpop.xlane.xlu0 %2144
    %v2146 = vsel %vm197, %v1972, 0.0
    %2147 = vadd.xlane.f32.xlu0 %v2146
    %v2148 = vpop.xlane.xlu0 %2147
    %v2149 = vsel %vm197, %v1974, 0.0
    %2150 = vadd.xlane.f32.xlu0 %v2149
    %v2151 = vpop.xlane.xlu0 %2150
    %v2152 = vsel %vm197, %v1976, 0.0
    %2153 = vadd.xlane.f32.xlu0 %v2152
    %v2154 = vpop.xlane.xlu0 %2153
    %v2155 = vsel %vm197, %v1978, 0.0
    %2156 = vadd.xlane.f32.xlu0 %v2155
    %v2157 = vpop.xlane.xlu0 %2156
    %v2158 = vsel %vm197, %v1980, 0.0
    %2159 = vadd.xlane.f32.xlu0 %v2158
    %v2160 = vpop.xlane.xlu0 %2159
    %v2161 = vsel %vm197, %v1982, 0.0
    %2162 = vadd.xlane.f32.xlu0 %v2161
    %v2163 = vpop.xlane.xlu0 %2162
    %v2164 = vsel %vm197, %v1984, 0.0
    %2165 = vadd.xlane.f32.xlu0 %v2164
    %v2166 = vpop.xlane.xlu0 %2165
    %v2167 = vsel %vm197, %v1986, 0.0
    %2168 = vadd.xlane.f32.xlu0 %v2167
    %v2169 = vpop.xlane.xlu0 %2168
    %v2170 = vsel %vm197, %v1988, 0.0
    %2171 = vadd.xlane.f32.xlu0 %v2170
    %v2172 = vpop.xlane.xlu0 %2171
    %v2173 = vsel %vm197, %v1990, 0.0
    %2174 = vadd.xlane.f32.xlu0 %v2173
    %v2175 = vpop.xlane.xlu0 %2174
    %v2176 = vsel %vm197, %v1992, 0.0
    %2177 = vadd.xlane.f32.xlu0 %v2176
    %v2178 = vpop.xlane.xlu0 %2177
    %v2179 = vsel %vm197, %v1994, 0.0
    %2180 = vadd.xlane.f32.xlu0 %v2179
    %v2181 = vpop.xlane.xlu0 %2180
    %v2182 = vsel %vm197, %v1996, 0.0
    %2183 = vadd.xlane.f32.xlu0 %v2182
    %v2184 = vpop.xlane.xlu0 %2183
    %v2185 = vsel %vm197, %v1998, 0.0
    %2186 = vadd.xlane.f32.xlu0 %v2185
    %v2187 = vpop.xlane.xlu0 %2186
    %v2188 = vsel %vm197, %v2000, 0.0
    %2189 = vadd.xlane.f32.xlu0 %v2188
    %v2190 = vpop.xlane.xlu0 %2189
    %v2191 = vsel %vm197, %v2002, 0.0
    %2192 = vadd.xlane.f32.xlu0 %v2191
    %v2193 = vpop.xlane.xlu0 %2192
    %v2194 = vsel %vm197, %v2004, 0.0
    %2195 = vadd.xlane.f32.xlu0 %v2194
    %v2196 = vpop.xlane.xlu0 %2195
    %v2197 = vrcp.pop %v2007
    %v2198 = vrcp.pop %v2010
    %v2199 = vrcp.pop %v2013
    %v2200 = vrcp.pop %v2016
    %v2201 = vrcp.pop %v2019
    %v2202 = vrcp.pop %v2022
    %v2203 = vrcp.pop %v2025
    %v2204 = vrcp.pop %v2028
    %v2205 = vrcp.pop %v2031
    %v2206 = vrcp.pop %v2034
    %v2207 = vrcp.pop %v2037
    %v2208 = vrcp.pop %v2040
    %v2209 = vrcp.pop %v2043
    %v2210 = vrcp.pop %v2046
    %v2211 = vrcp.pop %v2049
    %v2212 = vrcp.pop %v2052
    %v2213 = vrcp.pop %v2055
    %v2214 = vrcp.pop %v2058
    %v2215 = vrcp.pop %v2061
    %v2216 = vrcp.pop %v2064
    %v2217 = vrcp.pop %v2067
    %v2218 = vrcp.pop %v2070
    %v2219 = vrcp.pop %v2073
    %v2220 = vrcp.pop %v2076
    %v2221 = vrcp.pop %v2079
    %v2222 = vrcp.pop %v2082
    %v2223 = vrcp.pop %v2085
    %v2224 = vrcp.pop %v2088
    %v2225 = vrcp.pop %v2091
    %v2226 = vrcp.pop %v2094
    %v2227 = vrcp.pop %v2097
    %v2228 = vrcp.pop %v2100
    %v2229 = vrcp.pop %v2103
    %v2230 = vrcp.pop %v2106
    %v2231 = vrcp.pop %v2109
    %v2232 = vrcp.pop %v2112
    %v2233 = vrcp.pop %v2115
    %v2234 = vrcp.pop %v2118
    %v2235 = vrcp.pop %v2121
    %v2236 = vrcp.pop %v2124
    %v2237 = vrcp.pop %v2127
    %v2238 = vrcp.pop %v2130
    %v2239 = vrcp.pop %v2133
    %v2240 = vrcp.pop %v2136
    %v2241 = vrcp.pop %v2139
    %v2242 = vrcp.pop %v2142
    %v2243 = vrcp.pop %v2145
    %v2244 = vrcp.pop %v2148
    %v2245 = vrcp.pop %v2151
    %v2246 = vrcp.pop %v2154
    %v2247 = vrcp.pop %v2157
    %v2248 = vrcp.pop %v2160
    %v2249 = vrcp.pop %v2163
    %v2250 = vrcp.pop %v2166
    %v2251 = vrcp.pop %v2169
    %v2252 = vrcp.pop %v2172
    %v2253 = vrcp.pop %v2175
    %v2254 = vrcp.pop %v2178
    %v2255 = vrcp.pop %v2181
    %v2256 = vrcp.pop %v2184
    %v2257 = vrcp.pop %v2187
    %v2258 = vrcp.pop %v2190
    %v2259 = vrcp.pop %v2193
    %v2260 = vrcp.pop %v2196
    %v2261 = vmul.f32 %v1878, %v2197
    %v2262 = vmul.f32 %v1880, %v2198
    %v2263 = vmul.f32 %v1882, %v2199
    %v2264 = vmul.f32 %v1884, %v2200
    %v2265 = vmul.f32 %v1886, %v2201
    %v2266 = vmul.f32 %v1888, %v2202
    %v2267 = vmul.f32 %v1890, %v2203
    %v2268 = vmul.f32 %v1892, %v2204
    %v2269 = vmul.f32 %v1894, %v2205
    %v2270 = vmul.f32 %v1896, %v2206
    %v2271 = vmul.f32 %v1898, %v2207
    %v2272 = vmul.f32 %v1900, %v2208
    %v2273 = vmul.f32 %v1902, %v2209
    %v2274 = vmul.f32 %v1904, %v2210
    %v2275 = vmul.f32 %v1906, %v2211
    %v2276 = vmul.f32 %v1908, %v2212
    %v2277 = vmul.f32 %v1910, %v2213
    %v2278 = vmul.f32 %v1912, %v2214
    %v2279 = vmul.f32 %v1914, %v2215
    %v2280 = vmul.f32 %v1916, %v2216
    %v2281 = vmul.f32 %v1918, %v2217
    %v2282 = vmul.f32 %v1920, %v2218
    %v2283 = vmul.f32 %v1922, %v2219
    %v2284 = vmul.f32 %v1924, %v2220
    %v2285 = vmul.f32 %v1926, %v2221
    %v2286 = vmul.f32 %v1928, %v2222
    %v2287 = vmul.f32 %v1930, %v2223
    %v2288 = vmul.f32 %v1932, %v2224
    %v2289 = vmul.f32 %v1934, %v2225
    %v2290 = vmul.f32 %v1936, %v2226
    %v2291 = vmul.f32 %v1938, %v2227
    %v2292 = vmul.f32 %v1940, %v2228
    %v2293 = vmul.f32 %v1942, %v2229
    %v2294 = vmul.f32 %v1944, %v2230
    %v2295 = vmul.f32 %v1946, %v2231
    %v2296 = vmul.f32 %v1948, %v2232
    %v2297 = vmul.f32 %v1950, %v2233
    %v2298 = vmul.f32 %v1952, %v2234
    %v2299 = vmul.f32 %v1954, %v2235
    %v2300 = vmul.f32 %v1956, %v2236
    %v2301 = vmul.f32 %v1958, %v2237
    %v2302 = vmul.f32 %v1960, %v2238
    %v2303 = vmul.f32 %v1962, %v2239
    %v2304 = vmul.f32 %v1964, %v2240
    %v2305 = vmul.f32 %v1966, %v2241
    %v2306 = vmul.f32 %v1968, %v2242
    %v2307 = vmul.f32 %v1970, %v2243
    %v2308 = vmul.f32 %v1972, %v2244
    %v2309 = vmul.f32 %v1974, %v2245
    %v2310 = vmul.f32 %v1976, %v2246
    %v2311 = vmul.f32 %v1978, %v2247
    %v2312 = vmul.f32 %v1980, %v2248
    %v2313 = vmul.f32 %v1982, %v2249
    %v2314 = vmul.f32 %v1984, %v2250
    %v2315 = vmul.f32 %v1986, %v2251
    %v2316 = vmul.f32 %v1988, %v2252
    %v2317 = vmul.f32 %v1990, %v2253
    %v2318 = vmul.f32 %v1992, %v2254
    %v2319 = vmul.f32 %v1994, %v2255
    %v2320 = vmul.f32 %v1996, %v2256
    %v2321 = vmul.f32 %v1998, %v2257
    %v2322 = vmul.f32 %v2000, %v2258
    %v2323 = vmul.f32 %v2002, %v2259
    %v2324 = vmul.f32 %v2004, %v2260
    %v2325 = vpack.c.bf16 %v2262, %v2261
    %v2326 = vpack.c.bf16 %v2264, %v2263
    %v2327 = vpack.c.bf16 %v2266, %v2265
    %v2328 = vpack.c.bf16 %v2268, %v2267
    %v2329 = vpack.c.bf16 %v2270, %v2269
    %v2330 = vpack.c.bf16 %v2272, %v2271
    %v2331 = vpack.c.bf16 %v2274, %v2273
    %v2332 = vpack.c.bf16 %v2276, %v2275
    %v2333 = vpack.c.bf16 %v2278, %v2277
    %v2334 = vpack.c.bf16 %v2280, %v2279
    %v2335 = vpack.c.bf16 %v2282, %v2281
    %v2336 = vpack.c.bf16 %v2284, %v2283
    %v2337 = vpack.c.bf16 %v2286, %v2285
    %v2338 = vpack.c.bf16 %v2288, %v2287
    %v2339 = vpack.c.bf16 %v2290, %v2289
    %v2340 = vpack.c.bf16 %v2292, %v2291
    %v2341 = vpack.c.bf16 %v2294, %v2293
    %v2342 = vpack.c.bf16 %v2296, %v2295
    %v2343 = vpack.c.bf16 %v2298, %v2297
    %v2344 = vpack.c.bf16 %v2300, %v2299
    %v2345 = vpack.c.bf16 %v2302, %v2301
    %v2346 = vpack.c.bf16 %v2304, %v2303
    %v2347 = vpack.c.bf16 %v2306, %v2305
    %v2348 = vpack.c.bf16 %v2308, %v2307
    %v2349 = vpack.c.bf16 %v2310, %v2309
    %v2350 = vpack.c.bf16 %v2312, %v2311
    %v2351 = vpack.c.bf16 %v2314, %v2313
    %v2352 = vpack.c.bf16 %v2316, %v2315
    %v2353 = vpack.c.bf16 %v2318, %v2317
    %v2354 = vpack.c.bf16 %v2320, %v2319
    %v2355 = vpack.c.bf16 %v2322, %v2321
    %v2356 = vpack.c.bf16 %v2324, %v2323
    %2357 = vxpose.xlu0.c.b16.start [1/8] %v607, 128
    %2358 = vxpose.xlu0.c.b16.cont [2/8] %v608, 128
    %2359 = vxpose.xlu0.c.b16.cont [3/8] %v609, 128
    %2360 = vxpose.xlu0.c.b16.cont [4/8] %v610, 128
    %2361 = vxpose.xlu0.c.b16.cont [5/8] 0, 128
    %2362 = vxpose.xlu0.c.b16.cont [6/8] 0, 128
    %2363 = vxpose.xlu0.c.b16.cont [7/8] 0, 128
    %2364 = vxpose.xlu0.c.b16.end [8/8] 0, 128
    %v2365 = vpop.trf.xlu0
    %v2366 = vpop.trf.xlu0
    %v2367 = vpop.trf.xlu0
    %v2368 = vpop.trf.xlu0
    %v2369 = vpop.trf.xlu0
    %v2370 = vpop.trf.xlu0
    %v2371 = vpop.trf.xlu0
    %v2372 = vpop.trf.xlu0
    %2373 = vxpose.xlu0.c.b16.start [1/8] %v768, 128
    %2374 = vxpose.xlu0.c.b16.cont [2/8] %v770, 128
    %2375 = vxpose.xlu0.c.b16.cont [3/8] %v772, 128
    %2376 = vxpose.xlu0.c.b16.cont [4/8] %v774, 128
    %2377 = vxpose.xlu0.c.b16.cont [5/8] 0, 128
    %2378 = vxpose.xlu0.c.b16.cont [6/8] 0, 128
    %2379 = vxpose.xlu0.c.b16.cont [7/8] 0, 128
    %2380 = vxpose.xlu0.c.b16.end [8/8] 0, 128
    %v2381 = vpop.trf.xlu0
    %v2382 = vpop.trf.xlu0
    %v2383 = vpop.trf.xlu0
    %v2384 = vpop.trf.xlu0
    %v2385 = vpop.trf.xlu0
    %v2386 = vpop.trf.xlu0
    %v2387 = vpop.trf.xlu0
    %v2388 = vpop.trf.xlu0
    %2389 = vxpose.xlu0.c.b16.start [1/8] %v780, 128
    %2390 = vxpose.xlu0.c.b16.cont [2/8] %v782, 128
    %2391 = vxpose.xlu0.c.b16.cont [3/8] %v784, 128
    %2392 = vxpose.xlu0.c.b16.cont [4/8] %v786, 128
    %2393 = vxpose.xlu0.c.b16.cont [5/8] 0, 128
    %2394 = vxpose.xlu0.c.b16.cont [6/8] 0, 128
    %2395 = vxpose.xlu0.c.b16.cont [7/8] 0, 128
    %2396 = vxpose.xlu0.c.b16.end [8/8] 0, 128
    %v2397 = vpop.trf.xlu0
    %v2398 = vpop.trf.xlu0
    %v2399 = vpop.trf.xlu0
    %v2400 = vpop.trf.xlu0
    %v2401 = vpop.trf.xlu0
    %v2402 = vpop.trf.xlu0
    %v2403 = vpop.trf.xlu0
    %v2404 = vpop.trf.xlu0
    %2405 = vxpose.xlu0.c.b16.start [1/8] %v792, 128
    %2406 = vxpose.xlu0.c.b16.cont [2/8] %v794, 128
    %2407 = vxpose.xlu0.c.b16.cont [3/8] %v796, 128
    %2408 = vxpose.xlu0.c.b16.cont [4/8] %v798, 128
    %2409 = vxpose.xlu0.c.b16.cont [5/8] 0, 128
    %2410 = vxpose.xlu0.c.b16.cont [6/8] 0, 128
    %2411 = vxpose.xlu0.c.b16.cont [7/8] 0, 128
    %2412 = vxpose.xlu0.c.b16.end [8/8] 0, 128
    %v2413 = vpop.trf.xlu0
    %v2414 = vpop.trf.xlu0
    %v2415 = vpop.trf.xlu0
    %v2416 = vpop.trf.xlu0
    %v2417 = vpop.trf.xlu0
    %v2418 = vpop.trf.xlu0
    %v2419 = vpop.trf.xlu0
    %v2420 = vpop.trf.xlu0
    %2421 = vxpose.xlu0.c.b16.start [1/8] %v804, 128
    %2422 = vxpose.xlu0.c.b16.cont [2/8] %v806, 128
    %2423 = vxpose.xlu0.c.b16.cont [3/8] %v808, 128
    %2424 = vxpose.xlu0.c.b16.cont [4/8] %v810, 128
    %2425 = vxpose.xlu0.c.b16.cont [5/8] 0, 128
    %2426 = vxpose.xlu0.c.b16.cont [6/8] 0, 128
    %2427 = vxpose.xlu0.c.b16.cont [7/8] 0, 128
    %2428 = vxpose.xlu0.c.b16.end [8/8] 0, 128
    %v2429 = vpop.trf.xlu0
    %v2430 = vpop.trf.xlu0
    %v2431 = vpop.trf.xlu0
    %v2432 = vpop.trf.xlu0
    %v2433 = vpop.trf.xlu0
    %v2434 = vpop.trf.xlu0
    %v2435 = vpop.trf.xlu0
    %v2436 = vpop.trf.xlu0
    %2437 = vxpose.xlu0.c.b16.start [1/8] %v816, 128
    %2438 = vxpose.xlu0.c.b16.cont [2/8] %v818, 128
    %2439 = vxpose.xlu0.c.b16.cont [3/8] %v820, 128
    %2440 = vxpose.xlu0.c.b16.cont [4/8] %v822, 128
    %2441 = vxpose.xlu0.c.b16.cont [5/8] 0, 128
    %2442 = vxpose.xlu0.c.b16.cont [6/8] 0, 128
    %2443 = vxpose.xlu0.c.b16.cont [7/8] 0, 128
    %2444 = vxpose.xlu0.c.b16.end [8/8] 0, 128
    %v2445 = vpop.trf.xlu0
    %v2446 = vpop.trf.xlu0
    %v2447 = vpop.trf.xlu0
    %v2448 = vpop.trf.xlu0
    %v2449 = vpop.trf.xlu0
    %v2450 = vpop.trf.xlu0
    %v2451 = vpop.trf.xlu0
    %v2452 = vpop.trf.xlu0
    %2453 = vxpose.xlu0.c.b16.start [1/8] %v828, 128
    %2454 = vxpose.xlu0.c.b16.cont [2/8] %v830, 128
    %2455 = vxpose.xlu0.c.b16.cont [3/8] %v832, 128
    %2456 = vxpose.xlu0.c.b16.cont [4/8] %v834, 128
    %2457 = vxpose.xlu0.c.b16.cont [5/8] 0, 128
    %2458 = vxpose.xlu0.c.b16.cont [6/8] 0, 128
    %2459 = vxpose.xlu0.c.b16.cont [7/8] 0, 128
    %2460 = vxpose.xlu0.c.b16.end [8/8] 0, 128
    %v2461 = vpop.trf.xlu0
    %v2462 = vpop.trf.xlu0
    %v2463 = vpop.trf.xlu0
    %v2464 = vpop.trf.xlu0
    %v2465 = vpop.trf.xlu0
    %v2466 = vpop.trf.xlu0
    %v2467 = vpop.trf.xlu0
    %v2468 = vpop.trf.xlu0
    %2469 = vxpose.xlu0.c.b16.start [1/8] %v840, 128
    %2470 = vxpose.xlu0.c.b16.cont [2/8] %v842, 128
    %2471 = vxpose.xlu0.c.b16.cont [3/8] %v844, 128
    %2472 = vxpose.xlu0.c.b16.cont [4/8] %v846, 128
    %2473 = vxpose.xlu0.c.b16.cont [5/8] 0, 128
    %2474 = vxpose.xlu0.c.b16.cont [6/8] 0, 128
    %2475 = vxpose.xlu0.c.b16.cont [7/8] 0, 128
    %2476 = vxpose.xlu0.c.b16.end [8/8] 0, 128
    %v2477 = vpop.trf.xlu0
    %v2478 = vpop.trf.xlu0
    %v2479 = vpop.trf.xlu0
    %v2480 = vpop.trf.xlu0
    %v2481 = vpop.trf.xlu0
    %v2482 = vpop.trf.xlu0
    %v2483 = vpop.trf.xlu0
    %v2484 = vpop.trf.xlu0
    %v2486 = vsel %vm197, %v2365, 0
    %v2489 = vsel %vm197, %v2325, 0
    %v2492 = vsel %vm197, %v2326, 0
    %v2495 = vsel %vm197, %v2327, 0
    %v2498 = vsel %vm197, %v2328, 0
    %2500 = vmatprep.subr.bf16.mxu0 0
    %2501 = vmatpush1.bf16.xpose.msra.mxu0 0
    %2502 = vmatprep.subr.bf16.mxu0 0
    %2503 = vmatpush1.bf16.xpose.msra.mxu0 0
    %2504 = vmatprep.subr.bf16.mxu0 0
    %2505 = vmatpush1.bf16.xpose.msra.mxu0 0
    %2506 = vmatprep.subr.bf16.mxu0 0
    %2507 = vmatpush1.bf16.xpose.msra.mxu0 0
    %2508 = vmatprep.subr.bf16.mxu0 0
    %2509 = vmatpush1.bf16.xpose.msra.mxu0 %v2498
    %2510 = vmatprep.subr.bf16.mxu0 0
    %2511 = vmatpush1.bf16.xpose.msra.mxu0 %v2495
    %2512 = vmatprep.subr.bf16.mxu0 0
    %2513 = vmatpush1.bf16.xpose.msra.mxu0 %v2492
    %2514 = vmatprep.subr.bf16.mxu0 0
    %2515 = vmatpush1.bf16.xpose.msra.mxu0 %v2489
    %2516 = vmatprep.subr.bf16.mxu0 0
    %2517 = vmatpush2.bf16.xpose.msra.mxu0 0
    %2518 = vmatprep.subr.bf16.mxu0 0
    %2519 = vmatpush2.bf16.xpose.msra.mxu0 0
    %2520 = vmatprep.subr.bf16.mxu0 0
    %2521 = vmatpush2.bf16.xpose.msra.mxu0 0
    %2522 = vmatprep.subr.bf16.mxu0 0
    %2523 = vmatpush2.bf16.xpose.msra.mxu0 0
    %2524 = vmatprep.subr.bf16.mxu0 0
    %2525 = vmatpush2.bf16.xpose.msra.mxu0 0
    %2526 = vmatprep.subr.bf16.mxu0 0
    %2527 = vmatpush2.bf16.xpose.msra.mxu0 0
    %2528 = vmatprep.subr.bf16.mxu0 0
    %2529 = vmatpush2.bf16.xpose.msra.mxu0 0
    %2530 = vmatprep.subr.bf16.mxu0 0
    %2531 = vmatpush2.bf16.xpose.msra.mxu0 0
    %2532 = vmatprep.mubr.bf16.mxu0 0
    %2533 = vmatmul.mubr.bf16.gmra.mxu0 %v2486
    %v2534 = vpop.f32.mrf.mxu0
    %v2535 = vadd.f32 0.0, %v2534
    %v2536 = vpop.f32.mrf.mxu0
    %v2537 = vpop.f32.mrf.mxu0
    %v2538 = vpop.f32.mrf.mxu0
    %2539 = vdwg.mxu0
    %v2541 = vsel %vm197, %v2381, 0
    %v2544 = vsel %vm197, %v2329, 0
    %v2547 = vsel %vm197, %v2330, 0
    %v2550 = vsel %vm197, %v2331, 0
    %v2553 = vsel %vm197, %v2332, 0
    %2555 = vmatprep.subr.bf16.mxu0 0
    %2556 = vmatpush1.bf16.xpose.msra.mxu0 0
    %2557 = vmatprep.subr.bf16.mxu0 0
    %2558 = vmatpush1.bf16.xpose.msra.mxu0 0
    %2559 = vmatprep.subr.bf16.mxu0 0
    %2560 = vmatpush1.bf16.xpose.msra.mxu0 0
    %2561 = vmatprep.subr.bf16.mxu0 0
    %2562 = vmatpush1.bf16.xpose.msra.mxu0 0
    %2563 = vmatprep.subr.bf16.mxu0 0
    %2564 = vmatpush1.bf16.xpose.msra.mxu0 %v2553
    %2565 = vmatprep.subr.bf16.mxu0 0
    %2566 = vmatpush1.bf16.xpose.msra.mxu0 %v2550
    %2567 = vmatprep.subr.bf16.mxu0 0
    %2568 = vmatpush1.bf16.xpose.msra.mxu0 %v2547
    %2569 = vmatprep.subr.bf16.mxu0 0
    %2570 = vmatpush1.bf16.xpose.msra.mxu0 %v2544
    %2571 = vmatprep.subr.bf16.mxu0 0
    %2572 = vmatpush2.bf16.xpose.msra.mxu0 0
    %2573 = vmatprep.subr.bf16.mxu0 0
    %2574 = vmatpush2.bf16.xpose.msra.mxu0 0
    %2575 = vmatprep.subr.bf16.mxu0 0
    %2576 = vmatpush2.bf16.xpose.msra.mxu0 0
    %2577 = vmatprep.subr.bf16.mxu0 0
    %2578 = vmatpush2.bf16.xpose.msra.mxu0 0
    %2579 = vmatprep.subr.bf16.mxu0 0
    %2580 = vmatpush2.bf16.xpose.msra.mxu0 0
    %2581 = vmatprep.subr.bf16.mxu0 0
    %2582 = vmatpush2.bf16.xpose.msra.mxu0 0
    %2583 = vmatprep.subr.bf16.mxu0 0
    %2584 = vmatpush2.bf16.xpose.msra.mxu0 0
    %2585 = vmatprep.subr.bf16.mxu0 0
    %2586 = vmatpush2.bf16.xpose.msra.mxu0 0
    %2587 = vmatprep.mubr.bf16.mxu0 0
    %2588 = vmatmul.mubr.bf16.gmra.mxu0 %v2541
    %v2589 = vpop.f32.mrf.mxu0
    %v2590 = vadd.f32 0.0, %v2589
    %v2591 = vpop.f32.mrf.mxu0
    %v2592 = vpop.f32.mrf.mxu0
    %v2593 = vpop.f32.mrf.mxu0
    %2594 = vdwg.mxu0
    %v2596 = vsel %vm197, %v2397, 0
    %v2599 = vsel %vm197, %v2333, 0
    %v2602 = vsel %vm197, %v2334, 0
    %v2605 = vsel %vm197, %v2335, 0
    %v2608 = vsel %vm197, %v2336, 0
    %2610 = vmatprep.subr.bf16.mxu0 0
    %2611 = vmatpush1.bf16.xpose.msra.mxu0 0
    %2612 = vmatprep.subr.bf16.mxu0 0
    %2613 = vmatpush1.bf16.xpose.msra.mxu0 0
    %2614 = vmatprep.subr.bf16.mxu0 0
    %2615 = vmatpush1.bf16.xpose.msra.mxu0 0
    %2616 = vmatprep.subr.bf16.mxu0 0
    %2617 = vmatpush1.bf16.xpose.msra.mxu0 0
    %2618 = vmatprep.subr.bf16.mxu0 0
    %2619 = vmatpush1.bf16.xpose.msra.mxu0 %v2608
    %2620 = vmatprep.subr.bf16.mxu0 0
    %2621 = vmatpush1.bf16.xpose.msra.mxu0 %v2605
    %2622 = vmatprep.subr.bf16.mxu0 0
    %2623 = vmatpush1.bf16.xpose.msra.mxu0 %v2602
    %2624 = vmatprep.subr.bf16.mxu0 0
    %2625 = vmatpush1.bf16.xpose.msra.mxu0 %v2599
    %2626 = vmatprep.subr.bf16.mxu0 0
    %2627 = vmatpush2.bf16.xpose.msra.mxu0 0
    %2628 = vmatprep.subr.bf16.mxu0 0
    %2629 = vmatpush2.bf16.xpose.msra.mxu0 0
    %2630 = vmatprep.subr.bf16.mxu0 0
    %2631 = vmatpush2.bf16.xpose.msra.mxu0 0
    %2632 = vmatprep.subr.bf16.mxu0 0
    %2633 = vmatpush2.bf16.xpose.msra.mxu0 0
    %2634 = vmatprep.subr.bf16.mxu0 0
    %2635 = vmatpush2.bf16.xpose.msra.mxu0 0
    %2636 = vmatprep.subr.bf16.mxu0 0
    %2637 = vmatpush2.bf16.xpose.msra.mxu0 0
    %2638 = vmatprep.subr.bf16.mxu0 0
    %2639 = vmatpush2.bf16.xpose.msra.mxu0 0
    %2640 = vmatprep.subr.bf16.mxu0 0
    %2641 = vmatpush2.bf16.xpose.msra.mxu0 0
    %2642 = vmatprep.mubr.bf16.mxu0 0
    %2643 = vmatmul.mubr.bf16.gmra.mxu0 %v2596
    %v2644 = vpop.f32.mrf.mxu0
    %v2645 = vadd.f32 0.0, %v2644
    %v2646 = vpop.f32.mrf.mxu0
    %v2647 = vpop.f32.mrf.mxu0
    %v2648 = vpop.f32.mrf.mxu0
    %2649 = vdwg.mxu0
    %v2651 = vsel %vm197, %v2413, 0
    %v2654 = vsel %vm197, %v2337, 0
    %v2657 = vsel %vm197, %v2338, 0
    %v2660 = vsel %vm197, %v2339, 0
    %v2663 = vsel %vm197, %v2340, 0
    %2665 = vmatprep.subr.bf16.mxu0 0
    %2666 = vmatpush1.bf16.xpose.msra.mxu0 0
    %2667 = vmatprep.subr.bf16.mxu0 0
    %2668 = vmatpush1.bf16.xpose.msra.mxu0 0
    %2669 = vmatprep.subr.bf16.mxu0 0
    %2670 = vmatpush1.bf16.xpose.msra.mxu0 0
    %2671 = vmatprep.subr.bf16.mxu0 0
    %2672 = vmatpush1.bf16.xpose.msra.mxu0 0
    %2673 = vmatprep.subr.bf16.mxu0 0
    %2674 = vmatpush1.bf16.xpose.msra.mxu0 %v2663
    %2675 = vmatprep.subr.bf16.mxu0 0
    %2676 = vmatpush1.bf16.xpose.msra.mxu0 %v2660
    %2677 = vmatprep.subr.bf16.mxu0 0
    %2678 = vmatpush1.bf16.xpose.msra.mxu0 %v2657
    %2679 = vmatprep.subr.bf16.mxu0 0
    %2680 = vmatpush1.bf16.xpose.msra.mxu0 %v2654
    %2681 = vmatprep.subr.bf16.mxu0 0
    %2682 = vmatpush2.bf16.xpose.msra.mxu0 0
    %2683 = vmatprep.subr.bf16.mxu0 0
    %2684 = vmatpush2.bf16.xpose.msra.mxu0 0
    %2685 = vmatprep.subr.bf16.mxu0 0
    %2686 = vmatpush2.bf16.xpose.msra.mxu0 0
    %2687 = vmatprep.subr.bf16.mxu0 0
    %2688 = vmatpush2.bf16.xpose.msra.mxu0 0
    %2689 = vmatprep.subr.bf16.mxu0 0
    %2690 = vmatpush2.bf16.xpose.msra.mxu0 0
    %2691 = vmatprep.subr.bf16.mxu0 0
    %2692 = vmatpush2.bf16.xpose.msra.mxu0 0
    %2693 = vmatprep.subr.bf16.mxu0 0
    %2694 = vmatpush2.bf16.xpose.msra.mxu0 0
    %2695 = vmatprep.subr.bf16.mxu0 0
    %2696 = vmatpush2.bf16.xpose.msra.mxu0 0
    %2697 = vmatprep.mubr.bf16.mxu0 0
    %2698 = vmatmul.mubr.bf16.gmra.mxu0 %v2651
    %v2699 = vpop.f32.mrf.mxu0
    %v2700 = vadd.f32 0.0, %v2699
    %v2701 = vpop.f32.mrf.mxu0
    %v2702 = vpop.f32.mrf.mxu0
    %v2703 = vpop.f32.mrf.mxu0
    %2704 = vdwg.mxu0
    %v2706 = vsel %vm197, %v2429, 0
    %v2709 = vsel %vm197, %v2341, 0
    %v2712 = vsel %vm197, %v2342, 0
    %v2715 = vsel %vm197, %v2343, 0
    %v2718 = vsel %vm197, %v2344, 0
    %2720 = vmatprep.subr.bf16.mxu0 0
    %2721 = vmatpush1.bf16.xpose.msra.mxu0 0
    %2722 = vmatprep.subr.bf16.mxu0 0
    %2723 = vmatpush1.bf16.xpose.msra.mxu0 0
    %2724 = vmatprep.subr.bf16.mxu0 0
    %2725 = vmatpush1.bf16.xpose.msra.mxu0 0
    %2726 = vmatprep.subr.bf16.mxu0 0
    %2727 = vmatpush1.bf16.xpose.msra.mxu0 0
    %2728 = vmatprep.subr.bf16.mxu0 0
    %2729 = vmatpush1.bf16.xpose.msra.mxu0 %v2718
    %2730 = vmatprep.subr.bf16.mxu0 0
    %2731 = vmatpush1.bf16.xpose.msra.mxu0 %v2715
    %2732 = vmatprep.subr.bf16.mxu0 0
    %2733 = vmatpush1.bf16.xpose.msra.mxu0 %v2712
    %2734 = vmatprep.subr.bf16.mxu0 0
    %2735 = vmatpush1.bf16.xpose.msra.mxu0 %v2709
    %2736 = vmatprep.subr.bf16.mxu0 0
    %2737 = vmatpush2.bf16.xpose.msra.mxu0 0
    %2738 = vmatprep.subr.bf16.mxu0 0
    %2739 = vmatpush2.bf16.xpose.msra.mxu0 0
    %2740 = vmatprep.subr.bf16.mxu0 0
    %2741 = vmatpush2.bf16.xpose.msra.mxu0 0
    %2742 = vmatprep.subr.bf16.mxu0 0
    %2743 = vmatpush2.bf16.xpose.msra.mxu0 0
    %2744 = vmatprep.subr.bf16.mxu0 0
    %2745 = vmatpush2.bf16.xpose.msra.mxu0 0
    %2746 = vmatprep.subr.bf16.mxu0 0
    %2747 = vmatpush2.bf16.xpose.msra.mxu0 0
    %2748 = vmatprep.subr.bf16.mxu0 0
    %2749 = vmatpush2.bf16.xpose.msra.mxu0 0
    %2750 = vmatprep.subr.bf16.mxu0 0
    %2751 = vmatpush2.bf16.xpose.msra.mxu0 0
    %2752 = vmatprep.mubr.bf16.mxu0 0
    %2753 = vmatmul.mubr.bf16.gmra.mxu0 %v2706
    %v2754 = vpop.f32.mrf.mxu0
    %v2755 = vadd.f32 0.0, %v2754
    %v2756 = vpop.f32.mrf.mxu0
    %v2757 = vpop.f32.mrf.mxu0
    %v2758 = vpop.f32.mrf.mxu0
    %2759 = vdwg.mxu0
    %v2761 = vsel %vm197, %v2445, 0
    %v2764 = vsel %vm197, %v2345, 0
    %v2767 = vsel %vm197, %v2346, 0
    %v2770 = vsel %vm197, %v2347, 0
    %v2773 = vsel %vm197, %v2348, 0
    %2775 = vmatprep.subr.bf16.mxu0 0
    %2776 = vmatpush1.bf16.xpose.msra.mxu0 0
    %2777 = vmatprep.subr.bf16.mxu0 0
    %2778 = vmatpush1.bf16.xpose.msra.mxu0 0
    %2779 = vmatprep.subr.bf16.mxu0 0
    %2780 = vmatpush1.bf16.xpose.msra.mxu0 0
    %2781 = vmatprep.subr.bf16.mxu0 0
    %2782 = vmatpush1.bf16.xpose.msra.mxu0 0
    %2783 = vmatprep.subr.bf16.mxu0 0
    %2784 = vmatpush1.bf16.xpose.msra.mxu0 %v2773
    %2785 = vmatprep.subr.bf16.mxu0 0
    %2786 = vmatpush1.bf16.xpose.msra.mxu0 %v2770
    %2787 = vmatprep.subr.bf16.mxu0 0
    %2788 = vmatpush1.bf16.xpose.msra.mxu0 %v2767
    %2789 = vmatprep.subr.bf16.mxu0 0
    %2790 = vmatpush1.bf16.xpose.msra.mxu0 %v2764
    %2791 = vmatprep.subr.bf16.mxu0 0
    %2792 = vmatpush2.bf16.xpose.msra.mxu0 0
    %2793 = vmatprep.subr.bf16.mxu0 0
    %2794 = vmatpush2.bf16.xpose.msra.mxu0 0
    %2795 = vmatprep.subr.bf16.mxu0 0
    %2796 = vmatpush2.bf16.xpose.msra.mxu0 0
    %2797 = vmatprep.subr.bf16.mxu0 0
    %2798 = vmatpush2.bf16.xpose.msra.mxu0 0
    %2799 = vmatprep.subr.bf16.mxu0 0
    %2800 = vmatpush2.bf16.xpose.msra.mxu0 0
    %2801 = vmatprep.subr.bf16.mxu0 0
    %2802 = vmatpush2.bf16.xpose.msra.mxu0 0
    %2803 = vmatprep.subr.bf16.mxu0 0
    %2804 = vmatpush2.bf16.xpose.msra.mxu0 0
    %2805 = vmatprep.subr.bf16.mxu0 0
    %2806 = vmatpush2.bf16.xpose.msra.mxu0 0
    %2807 = vmatprep.mubr.bf16.mxu0 0
    %2808 = vmatmul.mubr.bf16.gmra.mxu0 %v2761
    %v2809 = vpop.f32.mrf.mxu0
    %v2810 = vadd.f32 0.0, %v2809
    %v2811 = vpop.f32.mrf.mxu0
    %v2812 = vpop.f32.mrf.mxu0
    %v2813 = vpop.f32.mrf.mxu0
    %2814 = vdwg.mxu0
    %v2816 = vsel %vm197, %v2461, 0
    %v2819 = vsel %vm197, %v2349, 0
    %v2822 = vsel %vm197, %v2350, 0
    %v2825 = vsel %vm197, %v2351, 0
    %v2828 = vsel %vm197, %v2352, 0
    %2830 = vmatprep.subr.bf16.mxu0 0
    %2831 = vmatpush1.bf16.xpose.msra.mxu0 0
    %2832 = vmatprep.subr.bf16.mxu0 0
    %2833 = vmatpush1.bf16.xpose.msra.mxu0 0
    %2834 = vmatprep.subr.bf16.mxu0 0
    %2835 = vmatpush1.bf16.xpose.msra.mxu0 0
    %2836 = vmatprep.subr.bf16.mxu0 0
    %2837 = vmatpush1.bf16.xpose.msra.mxu0 0
    %2838 = vmatprep.subr.bf16.mxu0 0
    %2839 = vmatpush1.bf16.xpose.msra.mxu0 %v2828
    %2840 = vmatprep.subr.bf16.mxu0 0
    %2841 = vmatpush1.bf16.xpose.msra.mxu0 %v2825
    %2842 = vmatprep.subr.bf16.mxu0 0
    %2843 = vmatpush1.bf16.xpose.msra.mxu0 %v2822
    %2844 = vmatprep.subr.bf16.mxu0 0
    %2845 = vmatpush1.bf16.xpose.msra.mxu0 %v2819
    %2846 = vmatprep.subr.bf16.mxu0 0
    %2847 = vmatpush2.bf16.xpose.msra.mxu0 0
    %2848 = vmatprep.subr.bf16.mxu0 0
    %2849 = vmatpush2.bf16.xpose.msra.mxu0 0
    %2850 = vmatprep.subr.bf16.mxu0 0
    %2851 = vmatpush2.bf16.xpose.msra.mxu0 0
    %2852 = vmatprep.subr.bf16.mxu0 0
    %2853 = vmatpush2.bf16.xpose.msra.mxu0 0
    %2854 = vmatprep.subr.bf16.mxu0 0
    %2855 = vmatpush2.bf16.xpose.msra.mxu0 0
    %2856 = vmatprep.subr.bf16.mxu0 0
    %2857 = vmatpush2.bf16.xpose.msra.mxu0 0
    %2858 = vmatprep.subr.bf16.mxu0 0
    %2859 = vmatpush2.bf16.xpose.msra.mxu0 0
    %2860 = vmatprep.subr.bf16.mxu0 0
    %2861 = vmatpush2.bf16.xpose.msra.mxu0 0
    %2862 = vmatprep.mubr.bf16.mxu0 0
    %2863 = vmatmul.mubr.bf16.gmra.mxu0 %v2816
    %v2864 = vpop.f32.mrf.mxu0
    %v2865 = vadd.f32 0.0, %v2864
    %v2866 = vpop.f32.mrf.mxu0
    %v2867 = vpop.f32.mrf.mxu0
    %v2868 = vpop.f32.mrf.mxu0
    %2869 = vdwg.mxu0
    %v2871 = vsel %vm197, %v2477, 0
    %v2874 = vsel %vm197, %v2353, 0
    %v2877 = vsel %vm197, %v2354, 0
    %v2880 = vsel %vm197, %v2355, 0
    %v2883 = vsel %vm197, %v2356, 0
    %2885 = vmatprep.subr.bf16.mxu0 0
    %2886 = vmatpush1.bf16.xpose.msra.mxu0 0
    %2887 = vmatprep.subr.bf16.mxu0 0
    %2888 = vmatpush1.bf16.xpose.msra.mxu0 0
    %2889 = vmatprep.subr.bf16.mxu0 0
    %2890 = vmatpush1.bf16.xpose.msra.mxu0 0
    %2891 = vmatprep.subr.bf16.mxu0 0
    %2892 = vmatpush1.bf16.xpose.msra.mxu0 0
    %2893 = vmatprep.subr.bf16.mxu0 0
    %2894 = vmatpush1.bf16.xpose.msra.mxu0 %v2883
    %2895 = vmatprep.subr.bf16.mxu0 0
    %2896 = vmatpush1.bf16.xpose.msra.mxu0 %v2880
    %2897 = vmatprep.subr.bf16.mxu0 0
    %2898 = vmatpush1.bf16.xpose.msra.mxu0 %v2877
    %2899 = vmatprep.subr.bf16.mxu0 0
    %2900 = vmatpush1.bf16.xpose.msra.mxu0 %v2874
    %2901 = vmatprep.subr.bf16.mxu0 0
    %2902 = vmatpush2.bf16.xpose.msra.mxu0 0
    %2903 = vmatprep.subr.bf16.mxu0 0
    %2904 = vmatpush2.bf16.xpose.msra.mxu0 0
    %2905 = vmatprep.subr.bf16.mxu0 0
    %2906 = vmatpush2.bf16.xpose.msra.mxu0 0
    %2907 = vmatprep.subr.bf16.mxu0 0
    %2908 = vmatpush2.bf16.xpose.msra.mxu0 0
    %2909 = vmatprep.subr.bf16.mxu0 0
    %2910 = vmatpush2.bf16.xpose.msra.mxu0 0
    %2911 = vmatprep.subr.bf16.mxu0 0
    %2912 = vmatpush2.bf16.xpose.msra.mxu0 0
    %2913 = vmatprep.subr.bf16.mxu0 0
    %2914 = vmatpush2.bf16.xpose.msra.mxu0 0
    %2915 = vmatprep.subr.bf16.mxu0 0
    %2916 = vmatpush2.bf16.xpose.msra.mxu0 0
    %2917 = vmatprep.mubr.bf16.mxu0 0
    %2918 = vmatmul.mubr.bf16.gmra.mxu0 %v2871
    %v2919 = vpop.f32.mrf.mxu0
    %v2920 = vadd.f32 0.0, %v2919
    %v2921 = vpop.f32.mrf.mxu0
    %v2922 = vpop.f32.mrf.mxu0
    %v2923 = vpop.f32.mrf.mxu0
    %2924 = vdwg.mxu0
    %2925 = vxpose.xlu0.b32.start [1/16] %v2535, 128
    %2926 = vxpose.xlu0.b32.cont [2/16] 0.0, 128
    %2927 = vxpose.xlu0.b32.cont [3/16] 0.0, 128
    %2928 = vxpose.xlu0.b32.cont [4/16] 0.0, 128
    %2929 = vxpose.xlu0.b32.cont [5/16] 0.0, 128
    %2930 = vxpose.xlu0.b32.cont [6/16] 0.0, 128
    %2931 = vxpose.xlu0.b32.cont [7/16] 0.0, 128
    %2932 = vxpose.xlu0.b32.cont [8/16] 0.0, 128
    %2933 = vxpose.xlu0.b32.cont [9/16] 0.0, 128
    %2934 = vxpose.xlu0.b32.cont [10/16] 0.0, 128
    %2935 = vxpose.xlu0.b32.cont [11/16] 0.0, 128
    %2936 = vxpose.xlu0.b32.cont [12/16] 0.0, 128
    %2937 = vxpose.xlu0.b32.cont [13/16] 0.0, 128
    %2938 = vxpose.xlu0.b32.cont [14/16] 0.0, 128
    %2939 = vxpose.xlu0.b32.cont [15/16] 0.0, 128
    %2940 = vxpose.xlu0.b32.end [16/16] 0.0, 128
    %v2941 = vpop.trf.xlu0
    %v2942 = vpop.trf.xlu0
    %v2943 = vpop.trf.xlu0
    %v2944 = vpop.trf.xlu0
    %v2945 = vpop.trf.xlu0
    %v2946 = vpop.trf.xlu0
    %v2947 = vpop.trf.xlu0
    %v2948 = vpop.trf.xlu0
    %v2949 = vpop.trf.xlu0
    %v2950 = vpop.trf.xlu0
    %v2951 = vpop.trf.xlu0
    %v2952 = vpop.trf.xlu0
    %v2953 = vpop.trf.xlu0
    %v2954 = vpop.trf.xlu0
    %v2955 = vpop.trf.xlu0
    %v2956 = vpop.trf.xlu0
    %2957 = vxpose.xlu0.b32.start [1/16] %v2590, 128
    %2958 = vxpose.xlu0.b32.cont [2/16] 0.0, 128
    %2959 = vxpose.xlu0.b32.cont [3/16] 0.0, 128
    %2960 = vxpose.xlu0.b32.cont [4/16] 0.0, 128
    %2961 = vxpose.xlu0.b32.cont [5/16] 0.0, 128
    %2962 = vxpose.xlu0.b32.cont [6/16] 0.0, 128
    %2963 = vxpose.xlu0.b32.cont [7/16] 0.0, 128
    %2964 = vxpose.xlu0.b32.cont [8/16] 0.0, 128
    %2965 = vxpose.xlu0.b32.cont [9/16] 0.0, 128
    %2966 = vxpose.xlu0.b32.cont [10/16] 0.0, 128
    %2967 = vxpose.xlu0.b32.cont [11/16] 0.0, 128
    %2968 = vxpose.xlu0.b32.cont [12/16] 0.0, 128
    %2969 = vxpose.xlu0.b32.cont [13/16] 0.0, 128
    %2970 = vxpose.xlu0.b32.cont [14/16] 0.0, 128
    %2971 = vxpose.xlu0.b32.cont [15/16] 0.0, 128
    %2972 = vxpose.xlu0.b32.end [16/16] 0.0, 128
    %v2973 = vpop.trf.xlu0
    %v2974 = vpop.trf.xlu0
    %v2975 = vpop.trf.xlu0
    %v2976 = vpop.trf.xlu0
    %v2977 = vpop.trf.xlu0
    %v2978 = vpop.trf.xlu0
    %v2979 = vpop.trf.xlu0
    %v2980 = vpop.trf.xlu0
    %v2981 = vpop.trf.xlu0
    %v2982 = vpop.trf.xlu0
    %v2983 = vpop.trf.xlu0
    %v2984 = vpop.trf.xlu0
    %v2985 = vpop.trf.xlu0
    %v2986 = vpop.trf.xlu0
    %v2987 = vpop.trf.xlu0
    %v2988 = vpop.trf.xlu0
    %2989 = vxpose.xlu0.b32.start [1/16] %v2645, 128
    %2990 = vxpose.xlu0.b32.cont [2/16] 0.0, 128
    %2991 = vxpose.xlu0.b32.cont [3/16] 0.0, 128
    %2992 = vxpose.xlu0.b32.cont [4/16] 0.0, 128
    %2993 = vxpose.xlu0.b32.cont [5/16] 0.0, 128
    %2994 = vxpose.xlu0.b32.cont [6/16] 0.0, 128
    %2995 = vxpose.xlu0.b32.cont [7/16] 0.0, 128
    %2996 = vxpose.xlu0.b32.cont [8/16] 0.0, 128
    %2997 = vxpose.xlu0.b32.cont [9/16] 0.0, 128
    %2998 = vxpose.xlu0.b32.cont [10/16] 0.0, 128
    %2999 = vxpose.xlu0.b32.cont [11/16] 0.0, 128
    %3000 = vxpose.xlu0.b32.cont [12/16] 0.0, 128
    %3001 = vxpose.xlu0.b32.cont [13/16] 0.0, 128
    %3002 = vxpose.xlu0.b32.cont [14/16] 0.0, 128
    %3003 = vxpose.xlu0.b32.cont [15/16] 0.0, 128
    %3004 = vxpose.xlu0.b32.end [16/16] 0.0, 128
    %v3005 = vpop.trf.xlu0
    %v3006 = vpop.trf.xlu0
    %v3007 = vpop.trf.xlu0
    %v3008 = vpop.trf.xlu0
    %v3009 = vpop.trf.xlu0
    %v3010 = vpop.trf.xlu0
    %v3011 = vpop.trf.xlu0
    %v3012 = vpop.trf.xlu0
    %v3013 = vpop.trf.xlu0
    %v3014 = vpop.trf.xlu0
    %v3015 = vpop.trf.xlu0
    %v3016 = vpop.trf.xlu0
    %v3017 = vpop.trf.xlu0
    %v3018 = vpop.trf.xlu0
    %v3019 = vpop.trf.xlu0
    %v3020 = vpop.trf.xlu0
    %3021 = vxpose.xlu0.b32.start [1/16] %v2700, 128
    %3022 = vxpose.xlu0.b32.cont [2/16] 0.0, 128
    %3023 = vxpose.xlu0.b32.cont [3/16] 0.0, 128
    %3024 = vxpose.xlu0.b32.cont [4/16] 0.0, 128
    %3025 = vxpose.xlu0.b32.cont [5/16] 0.0, 128
    %3026 = vxpose.xlu0.b32.cont [6/16] 0.0, 128
    %3027 = vxpose.xlu0.b32.cont [7/16] 0.0, 128
    %3028 = vxpose.xlu0.b32.cont [8/16] 0.0, 128
    %3029 = vxpose.xlu0.b32.cont [9/16] 0.0, 128
    %3030 = vxpose.xlu0.b32.cont [10/16] 0.0, 128
    %3031 = vxpose.xlu0.b32.cont [11/16] 0.0, 128
    %3032 = vxpose.xlu0.b32.cont [12/16] 0.0, 128
    %3033 = vxpose.xlu0.b32.cont [13/16] 0.0, 128
    %3034 = vxpose.xlu0.b32.cont [14/16] 0.0, 128
    %3035 = vxpose.xlu0.b32.cont [15/16] 0.0, 128
    %3036 = vxpose.xlu0.b32.end [16/16] 0.0, 128
    %v3037 = vpop.trf.xlu0
    %v3038 = vpop.trf.xlu0
    %v3039 = vpop.trf.xlu0
    %v3040 = vpop.trf.xlu0
    %v3041 = vpop.trf.xlu0
    %v3042 = vpop.trf.xlu0
    %v3043 = vpop.trf.xlu0
    %v3044 = vpop.trf.xlu0
    %v3045 = vpop.trf.xlu0
    %v3046 = vpop.trf.xlu0
    %v3047 = vpop.trf.xlu0
    %v3048 = vpop.trf.xlu0
    %v3049 = vpop.trf.xlu0
    %v3050 = vpop.trf.xlu0
    %v3051 = vpop.trf.xlu0
    %v3052 = vpop.trf.xlu0
    %3053 = vxpose.xlu0.b32.start [1/16] %v2755, 128
    %3054 = vxpose.xlu0.b32.cont [2/16] 0.0, 128
    %3055 = vxpose.xlu0.b32.cont [3/16] 0.0, 128
    %3056 = vxpose.xlu0.b32.cont [4/16] 0.0, 128
    %3057 = vxpose.xlu0.b32.cont [5/16] 0.0, 128
    %3058 = vxpose.xlu0.b32.cont [6/16] 0.0, 128
    %3059 = vxpose.xlu0.b32.cont [7/16] 0.0, 128
    %3060 = vxpose.xlu0.b32.cont [8/16] 0.0, 128
    %3061 = vxpose.xlu0.b32.cont [9/16] 0.0, 128
    %3062 = vxpose.xlu0.b32.cont [10/16] 0.0, 128
    %3063 = vxpose.xlu0.b32.cont [11/16] 0.0, 128
    %3064 = vxpose.xlu0.b32.cont [12/16] 0.0, 128
    %3065 = vxpose.xlu0.b32.cont [13/16] 0.0, 128
    %3066 = vxpose.xlu0.b32.cont [14/16] 0.0, 128
    %3067 = vxpose.xlu0.b32.cont [15/16] 0.0, 128
    %3068 = vxpose.xlu0.b32.end [16/16] 0.0, 128
    %v3069 = vpop.trf.xlu0
    %v3070 = vpop.trf.xlu0
    %v3071 = vpop.trf.xlu0
    %v3072 = vpop.trf.xlu0
    %v3073 = vpop.trf.xlu0
    %v3074 = vpop.trf.xlu0
    %v3075 = vpop.trf.xlu0
    %v3076 = vpop.trf.xlu0
    %v3077 = vpop.trf.xlu0
    %v3078 = vpop.trf.xlu0
    %v3079 = vpop.trf.xlu0
    %v3080 = vpop.trf.xlu0
    %v3081 = vpop.trf.xlu0
    %v3082 = vpop.trf.xlu0
    %v3083 = vpop.trf.xlu0
    %v3084 = vpop.trf.xlu0
    %3085 = vxpose.xlu0.b32.start [1/16] %v2810, 128
    %3086 = vxpose.xlu0.b32.cont [2/16] 0.0, 128
    %3087 = vxpose.xlu0.b32.cont [3/16] 0.0, 128
    %3088 = vxpose.xlu0.b32.cont [4/16] 0.0, 128
    %3089 = vxpose.xlu0.b32.cont [5/16] 0.0, 128
    %3090 = vxpose.xlu0.b32.cont [6/16] 0.0, 128
    %3091 = vxpose.xlu0.b32.cont [7/16] 0.0, 128
    %3092 = vxpose.xlu0.b32.cont [8/16] 0.0, 128
    %3093 = vxpose.xlu0.b32.cont [9/16] 0.0, 128
    %3094 = vxpose.xlu0.b32.cont [10/16] 0.0, 128
    %3095 = vxpose.xlu0.b32.cont [11/16] 0.0, 128
    %3096 = vxpose.xlu0.b32.cont [12/16] 0.0, 128
    %3097 = vxpose.xlu0.b32.cont [13/16] 0.0, 128
    %3098 = vxpose.xlu0.b32.cont [14/16] 0.0, 128
    %3099 = vxpose.xlu0.b32.cont [15/16] 0.0, 128
    %3100 = vxpose.xlu0.b32.end [16/16] 0.0, 128
    %v3101 = vpop.trf.xlu0
    %v3102 = vpop.trf.xlu0
    %v3103 = vpop.trf.xlu0
    %v3104 = vpop.trf.xlu0
    %v3105 = vpop.trf.xlu0
    %v3106 = vpop.trf.xlu0
    %v3107 = vpop.trf.xlu0
    %v3108 = vpop.trf.xlu0
    %v3109 = vpop.trf.xlu0
    %v3110 = vpop.trf.xlu0
    %v3111 = vpop.trf.xlu0
    %v3112 = vpop.trf.xlu0
    %v3113 = vpop.trf.xlu0
    %v3114 = vpop.trf.xlu0
    %v3115 = vpop.trf.xlu0
    %v3116 = vpop.trf.xlu0
    %3117 = vxpose.xlu0.b32.start [1/16] %v2865, 128
    %3118 = vxpose.xlu0.b32.cont [2/16] 0.0, 128
    %3119 = vxpose.xlu0.b32.cont [3/16] 0.0, 128
    %3120 = vxpose.xlu0.b32.cont [4/16] 0.0, 128
    %3121 = vxpose.xlu0.b32.cont [5/16] 0.0, 128
    %3122 = vxpose.xlu0.b32.cont [6/16] 0.0, 128
    %3123 = vxpose.xlu0.b32.cont [7/16] 0.0, 128
    %3124 = vxpose.xlu0.b32.cont [8/16] 0.0, 128
    %3125 = vxpose.xlu0.b32.cont [9/16] 0.0, 128
    %3126 = vxpose.xlu0.b32.cont [10/16] 0.0, 128
    %3127 = vxpose.xlu0.b32.cont [11/16] 0.0, 128
    %3128 = vxpose.xlu0.b32.cont [12/16] 0.0, 128
    %3129 = vxpose.xlu0.b32.cont [13/16] 0.0, 128
    %3130 = vxpose.xlu0.b32.cont [14/16] 0.0, 128
    %3131 = vxpose.xlu0.b32.cont [15/16] 0.0, 128
    %3132 = vxpose.xlu0.b32.end [16/16] 0.0, 128
    %v3133 = vpop.trf.xlu0
    %v3134 = vpop.trf.xlu0
    %v3135 = vpop.trf.xlu0
    %v3136 = vpop.trf.xlu0
    %v3137 = vpop.trf.xlu0
    %v3138 = vpop.trf.xlu0
    %v3139 = vpop.trf.xlu0
    %v3140 = vpop.trf.xlu0
    %v3141 = vpop.trf.xlu0
    %v3142 = vpop.trf.xlu0
    %v3143 = vpop.trf.xlu0
    %v3144 = vpop.trf.xlu0
    %v3145 = vpop.trf.xlu0
    %v3146 = vpop.trf.xlu0
    %v3147 = vpop.trf.xlu0
    %v3148 = vpop.trf.xlu0
    %3149 = vxpose.xlu0.b32.start [1/16] %v2920, 128
    %3150 = vxpose.xlu0.b32.cont [2/16] 0.0, 128
    %3151 = vxpose.xlu0.b32.cont [3/16] 0.0, 128
    %3152 = vxpose.xlu0.b32.cont [4/16] 0.0, 128
    %3153 = vxpose.xlu0.b32.cont [5/16] 0.0, 128
    %3154 = vxpose.xlu0.b32.cont [6/16] 0.0, 128
    %3155 = vxpose.xlu0.b32.cont [7/16] 0.0, 128
    %3156 = vxpose.xlu0.b32.cont [8/16] 0.0, 128
    %3157 = vxpose.xlu0.b32.cont [9/16] 0.0, 128
    %3158 = vxpose.xlu0.b32.cont [10/16] 0.0, 128
    %3159 = vxpose.xlu0.b32.cont [11/16] 0.0, 128
    %3160 = vxpose.xlu0.b32.cont [12/16] 0.0, 128
    %3161 = vxpose.xlu0.b32.cont [13/16] 0.0, 128
    %3162 = vxpose.xlu0.b32.cont [14/16] 0.0, 128
    %3163 = vxpose.xlu0.b32.cont [15/16] 0.0, 128
    %3164 = vxpose.xlu0.b32.end [16/16] 0.0, 128
    %v3165 = vpop.trf.xlu0
    %v3166 = vpop.trf.xlu0
    %v3167 = vpop.trf.xlu0
    %v3168 = vpop.trf.xlu0
    %v3169 = vpop.trf.xlu0
    %v3170 = vpop.trf.xlu0
    %v3171 = vpop.trf.xlu0
    %v3172 = vpop.trf.xlu0
    %v3173 = vpop.trf.xlu0
    %v3174 = vpop.trf.xlu0
    %v3175 = vpop.trf.xlu0
    %v3176 = vpop.trf.xlu0
    %v3177 = vpop.trf.xlu0
    %v3178 = vpop.trf.xlu0
    %v3179 = vpop.trf.xlu0
    %v3180 = vpop.trf.xlu0
    %v3181 = vcombine.low %v2941, %v3005
    %v3182 = vcombine.high %v2941, %v3005
    %v3184 = vunpack.c.l.s4 1983009808
    %v3185 = vunpack.c.0.s8 %v3184
    %v3186 = vlaneseq
    %v3187 = vshrl.u32 %v3186, 7
    %v3188 = vsub.s32 %v3185, %v3187
    %v3189 = vrot.slane %v3181, %v3188
    %v3191 = vunpack.c.l.s4 1983009808
    %v3192 = vunpack.c.0.s8 %v3191
    %v3193 = vlaneseq
    %v3194 = vshrl.u32 %v3193, 7
    %v3195 = vsub.s32 %v3192, %v3194
    %v3196 = vrot.slane %v3182, %v3195
    %v3197 = vcombine.low %v2973, %v3037
    %v3198 = vcombine.high %v2973, %v3037
    %v3200 = vunpack.c.l.s4 1983009808
    %v3201 = vunpack.c.0.s8 %v3200
    %v3202 = vlaneseq
    %v3203 = vshrl.u32 %v3202, 7
    %v3204 = vsub.s32 %v3201, %v3203
    %v3205 = vrot.slane %v3197, %v3204
    %v3207 = vunpack.c.l.s4 1983009808
    %v3208 = vunpack.c.0.s8 %v3207
    %v3209 = vlaneseq
    %v3210 = vshrl.u32 %v3209, 7
    %v3211 = vsub.s32 %v3208, %v3210
    %v3212 = vrot.slane %v3198, %v3211
    %v3213 = vcombine.low %v3069, %v3133
    %v3214 = vcombine.high %v3069, %v3133
    %v3216 = vunpack.c.l.s4 1983009808
    %v3217 = vunpack.c.0.s8 %v3216
    %v3218 = vlaneseq
    %v3219 = vshrl.u32 %v3218, 7
    %v3220 = vsub.s32 %v3217, %v3219
    %v3221 = vrot.slane %v3213, %v3220
    %v3223 = vunpack.c.l.s4 1983009808
    %v3224 = vunpack.c.0.s8 %v3223
    %v3225 = vlaneseq
    %v3226 = vshrl.u32 %v3225, 7
    %v3227 = vsub.s32 %v3224, %v3226
    %v3228 = vrot.slane %v3214, %v3227
    %v3229 = vcombine.low %v3101, %v3165
    %v3230 = vcombine.high %v3101, %v3165
    %v3232 = vunpack.c.l.s4 1983009808
    %v3233 = vunpack.c.0.s8 %v3232
    %v3234 = vlaneseq
    %v3235 = vshrl.u32 %v3234, 7
    %v3236 = vsub.s32 %v3233, %v3235
    %v3237 = vrot.slane %v3229, %v3236
    %v3239 = vunpack.c.l.s4 1983009808
    %v3240 = vunpack.c.0.s8 %v3239
    %v3241 = vlaneseq
    %v3242 = vshrl.u32 %v3241, 7
    %v3243 = vsub.s32 %v3240, %v3242
    %v3244 = vrot.slane %v3230, %v3243
    %v3245 = vcombine.low %v3189, %v3205
    %v3246 = vcombine.high %v3189, %v3205
    %v3248 = vunpack.c.l.s4 1934713408
    %v3249 = vunpack.c.0.s8 %v3248
    %v3250 = vlaneseq
    %v3251 = vshrl.u32 %v3250, 7
    %v3252 = vsub.s32 %v3249, %v3251
    %v3253 = vrot.slane %v3245, %v3252
    %v3255 = vunpack.c.l.s4 1934713408
    %v3256 = vunpack.c.0.s8 %v3255
    %v3257 = vlaneseq
    %v3258 = vshrl.u32 %v3257, 7
    %v3259 = vsub.s32 %v3256, %v3258
    %v3260 = vrot.slane %v3246, %v3259
    %v3261 = vcombine.low %v3196, %v3212
    %v3262 = vcombine.high %v3196, %v3212
    %v3264 = vunpack.c.l.s4 1934713408
    %v3265 = vunpack.c.0.s8 %v3264
    %v3266 = vlaneseq
    %v3267 = vshrl.u32 %v3266, 7
    %v3268 = vsub.s32 %v3265, %v3267
    %v3269 = vrot.slane %v3261, %v3268
    %v3271 = vunpack.c.l.s4 1934713408
    %v3272 = vunpack.c.0.s8 %v3271
    %v3273 = vlaneseq
    %v3274 = vshrl.u32 %v3273, 7
    %v3275 = vsub.s32 %v3272, %v3274
    %v3276 = vrot.slane %v3262, %v3275
    %v3277 = vcombine.low %v3221, %v3237
    %v3278 = vcombine.high %v3221, %v3237
    %v3280 = vunpack.c.l.s4 1934713408
    %v3281 = vunpack.c.0.s8 %v3280
    %v3282 = vlaneseq
    %v3283 = vshrl.u32 %v3282, 7
    %v3284 = vsub.s32 %v3281, %v3283
    %v3285 = vrot.slane %v3277, %v3284
    %v3287 = vunpack.c.l.s4 1934713408
    %v3288 = vunpack.c.0.s8 %v3287
    %v3289 = vlaneseq
    %v3290 = vshrl.u32 %v3289, 7
    %v3291 = vsub.s32 %v3288, %v3290
    %v3292 = vrot.slane %v3278, %v3291
    %v3293 = vcombine.low %v3228, %v3244
    %v3294 = vcombine.high %v3228, %v3244
    %v3296 = vunpack.c.l.s4 1934713408
    %v3297 = vunpack.c.0.s8 %v3296
    %v3298 = vlaneseq
    %v3299 = vshrl.u32 %v3298, 7
    %v3300 = vsub.s32 %v3297, %v3299
    %v3301 = vrot.slane %v3293, %v3300
    %v3303 = vunpack.c.l.s4 1934713408
    %v3304 = vunpack.c.0.s8 %v3303
    %v3305 = vlaneseq
    %v3306 = vshrl.u32 %v3305, 7
    %v3307 = vsub.s32 %v3304, %v3306
    %v3308 = vrot.slane %v3294, %v3307
    %v3309 = vcombine.low %v3253, %v3285
    %v3310 = vcombine.high %v3253, %v3285
    %v3311 = vcombine.low %v3260, %v3292
    %v3312 = vcombine.high %v3260, %v3292
    %v3313 = vcombine.low %v3269, %v3301
    %v3314 = vcombine.high %v3269, %v3301
    %v3315 = vcombine.low %v3276, %v3308
    %v3316 = vcombine.high %v3276, %v3308
    %v3317 = vcombine.low %v2942, %v3006
    %v3318 = vcombine.high %v2942, %v3006
    %v3320 = vunpack.c.l.s4 1983009808
    %v3321 = vunpack.c.0.s8 %v3320
    %v3322 = vlaneseq
    %v3323 = vshrl.u32 %v3322, 7
    %v3324 = vsub.s32 %v3321, %v3323
    %v3325 = vrot.slane %v3317, %v3324
    %v3327 = vunpack.c.l.s4 1983009808
    %v3328 = vunpack.c.0.s8 %v3327
    %v3329 = vlaneseq
    %v3330 = vshrl.u32 %v3329, 7
    %v3331 = vsub.s32 %v3328, %v3330
    %v3332 = vrot.slane %v3318, %v3331
    %v3333 = vcombine.low %v2974, %v3038
    %v3334 = vcombine.high %v2974, %v3038
    %v3336 = vunpack.c.l.s4 1983009808
    %v3337 = vunpack.c.0.s8 %v3336
    %v3338 = vlaneseq
    %v3339 = vshrl.u32 %v3338, 7
    %v3340 = vsub.s32 %v3337, %v3339
    %v3341 = vrot.slane %v3333, %v3340
    %v3343 = vunpack.c.l.s4 1983009808
    %v3344 = vunpack.c.0.s8 %v3343
    %v3345 = vlaneseq
    %v3346 = vshrl.u32 %v3345, 7
    %v3347 = vsub.s32 %v3344, %v3346
    %v3348 = vrot.slane %v3334, %v3347
    %v3349 = vcombine.low %v3070, %v3134
    %v3350 = vcombine.high %v3070, %v3134
    %v3352 = vunpack.c.l.s4 1983009808
    %v3353 = vunpack.c.0.s8 %v3352
    %v3354 = vlaneseq
    %v3355 = vshrl.u32 %v3354, 7
    %v3356 = vsub.s32 %v3353, %v3355
    %v3357 = vrot.slane %v3349, %v3356
    %v3359 = vunpack.c.l.s4 1983009808
    %v3360 = vunpack.c.0.s8 %v3359
    %v3361 = vlaneseq
    %v3362 = vshrl.u32 %v3361, 7
    %v3363 = vsub.s32 %v3360, %v3362
    %v3364 = vrot.slane %v3350, %v3363
    %v3365 = vcombine.low %v3102, %v3166
    %v3366 = vcombine.high %v3102, %v3166
    %v3368 = vunpack.c.l.s4 1983009808
    %v3369 = vunpack.c.0.s8 %v3368
    %v3370 = vlaneseq
    %v3371 = vshrl.u32 %v3370, 7
    %v3372 = vsub.s32 %v3369, %v3371
    %v3373 = vrot.slane %v3365, %v3372
    %v3375 = vunpack.c.l.s4 1983009808
    %v3376 = vunpack.c.0.s8 %v3375
    %v3377 = vlaneseq
    %v3378 = vshrl.u32 %v3377, 7
    %v3379 = vsub.s32 %v3376, %v3378
    %v3380 = vrot.slane %v3366, %v3379
    %v3381 = vcombine.low %v3325, %v3341
    %v3382 = vcombine.high %v3325, %v3341
    %v3384 = vunpack.c.l.s4 1934713408
    %v3385 = vunpack.c.0.s8 %v3384
    %v3386 = vlaneseq
    %v3387 = vshrl.u32 %v3386, 7
    %v3388 = vsub.s32 %v3385, %v3387
    %v3389 = vrot.slane %v3381, %v3388
    %v3391 = vunpack.c.l.s4 1934713408
    %v3392 = vunpack.c.0.s8 %v3391
    %v3393 = vlaneseq
    %v3394 = vshrl.u32 %v3393, 7
    %v3395 = vsub.s32 %v3392, %v3394
    %v3396 = vrot.slane %v3382, %v3395
    %v3397 = vcombine.low %v3332, %v3348
    %v3398 = vcombine.high %v3332, %v3348
    %v3400 = vunpack.c.l.s4 1934713408
    %v3401 = vunpack.c.0.s8 %v3400
    %v3402 = vlaneseq
    %v3403 = vshrl.u32 %v3402, 7
    %v3404 = vsub.s32 %v3401, %v3403
    %v3405 = vrot.slane %v3397, %v3404
    %v3407 = vunpack.c.l.s4 1934713408
    %v3408 = vunpack.c.0.s8 %v3407
    %v3409 = vlaneseq
    %v3410 = vshrl.u32 %v3409, 7
    %v3411 = vsub.s32 %v3408, %v3410
    %v3412 = vrot.slane %v3398, %v3411
    %v3413 = vcombine.low %v3357, %v3373
    %v3414 = vcombine.high %v3357, %v3373
    %v3416 = vunpack.c.l.s4 1934713408
    %v3417 = vunpack.c.0.s8 %v3416
    %v3418 = vlaneseq
    %v3419 = vshrl.u32 %v3418, 7
    %v3420 = vsub.s32 %v3417, %v3419
    %v3421 = vrot.slane %v3413, %v3420
    %v3423 = vunpack.c.l.s4 1934713408
    %v3424 = vunpack.c.0.s8 %v3423
    %v3425 = vlaneseq
    %v3426 = vshrl.u32 %v3425, 7
    %v3427 = vsub.s32 %v3424, %v3426
    %v3428 = vrot.slane %v3414, %v3427
    %v3429 = vcombine.low %v3364, %v3380
    %v3430 = vcombine.high %v3364, %v3380
    %v3432 = vunpack.c.l.s4 1934713408
    %v3433 = vunpack.c.0.s8 %v3432
    %v3434 = vlaneseq
    %v3435 = vshrl.u32 %v3434, 7
    %v3436 = vsub.s32 %v3433, %v3435
    %v3437 = vrot.slane %v3429, %v3436
    %v3439 = vunpack.c.l.s4 1934713408
    %v3440 = vunpack.c.0.s8 %v3439
    %v3441 = vlaneseq
    %v3442 = vshrl.u32 %v3441, 7
    %v3443 = vsub.s32 %v3440, %v3442
    %v3444 = vrot.slane %v3430, %v3443
    %v3445 = vcombine.low %v3389, %v3421
    %v3446 = vcombine.high %v3389, %v3421
    %v3447 = vcombine.low %v3396, %v3428
    %v3448 = vcombine.high %v3396, %v3428
    %v3449 = vcombine.low %v3405, %v3437
    %v3450 = vcombine.high %v3405, %v3437
    %v3451 = vcombine.low %v3412, %v3444
    %v3452 = vcombine.high %v3412, %v3444
    %v3453 = vcombine.low %v2943, %v3007
    %v3454 = vcombine.high %v2943, %v3007
    %v3456 = vunpack.c.l.s4 1983009808
    %v3457 = vunpack.c.0.s8 %v3456
    %v3458 = vlaneseq
    %v3459 = vshrl.u32 %v3458, 7
    %v3460 = vsub.s32 %v3457, %v3459
    %v3461 = vrot.slane %v3453, %v3460
    %v3463 = vunpack.c.l.s4 1983009808
    %v3464 = vunpack.c.0.s8 %v3463
    %v3465 = vlaneseq
    %v3466 = vshrl.u32 %v3465, 7
    %v3467 = vsub.s32 %v3464, %v3466
    %v3468 = vrot.slane %v3454, %v3467
    %v3469 = vcombine.low %v2975, %v3039
    %v3470 = vcombine.high %v2975, %v3039
    %v3472 = vunpack.c.l.s4 1983009808
    %v3473 = vunpack.c.0.s8 %v3472
    %v3474 = vlaneseq
    %v3475 = vshrl.u32 %v3474, 7
    %v3476 = vsub.s32 %v3473, %v3475
    %v3477 = vrot.slane %v3469, %v3476
    %v3479 = vunpack.c.l.s4 1983009808
    %v3480 = vunpack.c.0.s8 %v3479
    %v3481 = vlaneseq
    %v3482 = vshrl.u32 %v3481, 7
    %v3483 = vsub.s32 %v3480, %v3482
    %v3484 = vrot.slane %v3470, %v3483
    %v3485 = vcombine.low %v3071, %v3135
    %v3486 = vcombine.high %v3071, %v3135
    %v3488 = vunpack.c.l.s4 1983009808
    %v3489 = vunpack.c.0.s8 %v3488
    %v3490 = vlaneseq
    %v3491 = vshrl.u32 %v3490, 7
    %v3492 = vsub.s32 %v3489, %v3491
    %v3493 = vrot.slane %v3485, %v3492
    %v3495 = vunpack.c.l.s4 1983009808
    %v3496 = vunpack.c.0.s8 %v3495
    %v3497 = vlaneseq
    %v3498 = vshrl.u32 %v3497, 7
    %v3499 = vsub.s32 %v3496, %v3498
    %v3500 = vrot.slane %v3486, %v3499
    %v3501 = vcombine.low %v3103, %v3167
    %v3502 = vcombine.high %v3103, %v3167
    %v3504 = vunpack.c.l.s4 1983009808
    %v3505 = vunpack.c.0.s8 %v3504
    %v3506 = vlaneseq
    %v3507 = vshrl.u32 %v3506, 7
    %v3508 = vsub.s32 %v3505, %v3507
    %v3509 = vrot.slane %v3501, %v3508
    %v3511 = vunpack.c.l.s4 1983009808
    %v3512 = vunpack.c.0.s8 %v3511
    %v3513 = vlaneseq
    %v3514 = vshrl.u32 %v3513, 7
    %v3515 = vsub.s32 %v3512, %v3514
    %v3516 = vrot.slane %v3502, %v3515
    %v3517 = vcombine.low %v3461, %v3477
    %v3518 = vcombine.high %v3461, %v3477
    %v3520 = vunpack.c.l.s4 1934713408
    %v3521 = vunpack.c.0.s8 %v3520
    %v3522 = vlaneseq
    %v3523 = vshrl.u32 %v3522, 7
    %v3524 = vsub.s32 %v3521, %v3523
    %v3525 = vrot.slane %v3517, %v3524
    %v3527 = vunpack.c.l.s4 1934713408
    %v3528 = vunpack.c.0.s8 %v3527
    %v3529 = vlaneseq
    %v3530 = vshrl.u32 %v3529, 7
    %v3531 = vsub.s32 %v3528, %v3530
    %v3532 = vrot.slane %v3518, %v3531
    %v3533 = vcombine.low %v3468, %v3484
    %v3534 = vcombine.high %v3468, %v3484
    %v3536 = vunpack.c.l.s4 1934713408
    %v3537 = vunpack.c.0.s8 %v3536
    %v3538 = vlaneseq
    %v3539 = vshrl.u32 %v3538, 7
    %v3540 = vsub.s32 %v3537, %v3539
    %v3541 = vrot.slane %v3533, %v3540
    %v3543 = vunpack.c.l.s4 1934713408
    %v3544 = vunpack.c.0.s8 %v3543
    %v3545 = vlaneseq
    %v3546 = vshrl.u32 %v3545, 7
    %v3547 = vsub.s32 %v3544, %v3546
    %v3548 = vrot.slane %v3534, %v3547
    %v3549 = vcombine.low %v3493, %v3509
    %v3550 = vcombine.high %v3493, %v3509
    %v3552 = vunpack.c.l.s4 1934713408
    %v3553 = vunpack.c.0.s8 %v3552
    %v3554 = vlaneseq
    %v3555 = vshrl.u32 %v3554, 7
    %v3556 = vsub.s32 %v3553, %v3555
    %v3557 = vrot.slane %v3549, %v3556
    %v3559 = vunpack.c.l.s4 1934713408
    %v3560 = vunpack.c.0.s8 %v3559
    %v3561 = vlaneseq
    %v3562 = vshrl.u32 %v3561, 7
    %v3563 = vsub.s32 %v3560, %v3562
    %v3564 = vrot.slane %v3550, %v3563
    %v3565 = vcombine.low %v3500, %v3516
    %v3566 = vcombine.high %v3500, %v3516
    %v3568 = vunpack.c.l.s4 1934713408
    %v3569 = vunpack.c.0.s8 %v3568
    %v3570 = vlaneseq
    %v3571 = vshrl.u32 %v3570, 7
    %v3572 = vsub.s32 %v3569, %v3571
    %v3573 = vrot.slane %v3565, %v3572
    %v3575 = vunpack.c.l.s4 1934713408
    %v3576 = vunpack.c.0.s8 %v3575
    %v3577 = vlaneseq
    %v3578 = vshrl.u32 %v3577, 7
    %v3579 = vsub.s32 %v3576, %v3578
    %v3580 = vrot.slane %v3566, %v3579
    %v3581 = vcombine.low %v3525, %v3557
    %v3582 = vcombine.high %v3525, %v3557
    %v3583 = vcombine.low %v3532, %v3564
    %v3584 = vcombine.high %v3532, %v3564
    %v3585 = vcombine.low %v3541, %v3573
    %v3586 = vcombine.high %v3541, %v3573
    %v3587 = vcombine.low %v3548, %v3580
    %v3588 = vcombine.high %v3548, %v3580
    %v3589 = vcombine.low %v2944, %v3008
    %v3590 = vcombine.high %v2944, %v3008
    %v3592 = vunpack.c.l.s4 1983009808
    %v3593 = vunpack.c.0.s8 %v3592
    %v3594 = vlaneseq
    %v3595 = vshrl.u32 %v3594, 7
    %v3596 = vsub.s32 %v3593, %v3595
    %v3597 = vrot.slane %v3589, %v3596
    %v3599 = vunpack.c.l.s4 1983009808
    %v3600 = vunpack.c.0.s8 %v3599
    %v3601 = vlaneseq
    %v3602 = vshrl.u32 %v3601, 7
    %v3603 = vsub.s32 %v3600, %v3602
    %v3604 = vrot.slane %v3590, %v3603
    %v3605 = vcombine.low %v2976, %v3040
    %v3606 = vcombine.high %v2976, %v3040
    %v3608 = vunpack.c.l.s4 1983009808
    %v3609 = vunpack.c.0.s8 %v3608
    %v3610 = vlaneseq
    %v3611 = vshrl.u32 %v3610, 7
    %v3612 = vsub.s32 %v3609, %v3611
    %v3613 = vrot.slane %v3605, %v3612
    %v3615 = vunpack.c.l.s4 1983009808
    %v3616 = vunpack.c.0.s8 %v3615
    %v3617 = vlaneseq
    %v3618 = vshrl.u32 %v3617, 7
    %v3619 = vsub.s32 %v3616, %v3618
    %v3620 = vrot.slane %v3606, %v3619
    %v3621 = vcombine.low %v3072, %v3136
    %v3622 = vcombine.high %v3072, %v3136
    %v3624 = vunpack.c.l.s4 1983009808
    %v3625 = vunpack.c.0.s8 %v3624
    %v3626 = vlaneseq
    %v3627 = vshrl.u32 %v3626, 7
    %v3628 = vsub.s32 %v3625, %v3627
    %v3629 = vrot.slane %v3621, %v3628
    %v3631 = vunpack.c.l.s4 1983009808
    %v3632 = vunpack.c.0.s8 %v3631
    %v3633 = vlaneseq
    %v3634 = vshrl.u32 %v3633, 7
    %v3635 = vsub.s32 %v3632, %v3634
    %v3636 = vrot.slane %v3622, %v3635
    %v3637 = vcombine.low %v3104, %v3168
    %v3638 = vcombine.high %v3104, %v3168
    %v3640 = vunpack.c.l.s4 1983009808
    %v3641 = vunpack.c.0.s8 %v3640
    %v3642 = vlaneseq
    %v3643 = vshrl.u32 %v3642, 7
    %v3644 = vsub.s32 %v3641, %v3643
    %v3645 = vrot.slane %v3637, %v3644
    %v3647 = vunpack.c.l.s4 1983009808
    %v3648 = vunpack.c.0.s8 %v3647
    %v3649 = vlaneseq
    %v3650 = vshrl.u32 %v3649, 7
    %v3651 = vsub.s32 %v3648, %v3650
    %v3652 = vrot.slane %v3638, %v3651
    %v3653 = vcombine.low %v3597, %v3613
    %v3654 = vcombine.high %v3597, %v3613
    %v3656 = vunpack.c.l.s4 1934713408
    %v3657 = vunpack.c.0.s8 %v3656
    %v3658 = vlaneseq
    %v3659 = vshrl.u32 %v3658, 7
    %v3660 = vsub.s32 %v3657, %v3659
    %v3661 = vrot.slane %v3653, %v3660
    %v3663 = vunpack.c.l.s4 1934713408
    %v3664 = vunpack.c.0.s8 %v3663
    %v3665 = vlaneseq
    %v3666 = vshrl.u32 %v3665, 7
    %v3667 = vsub.s32 %v3664, %v3666
    %v3668 = vrot.slane %v3654, %v3667
    %v3669 = vcombine.low %v3604, %v3620
    %v3670 = vcombine.high %v3604, %v3620
    %v3672 = vunpack.c.l.s4 1934713408
    %v3673 = vunpack.c.0.s8 %v3672
    %v3674 = vlaneseq
    %v3675 = vshrl.u32 %v3674, 7
    %v3676 = vsub.s32 %v3673, %v3675
    %v3677 = vrot.slane %v3669, %v3676
    %v3679 = vunpack.c.l.s4 1934713408
    %v3680 = vunpack.c.0.s8 %v3679
    %v3681 = vlaneseq
    %v3682 = vshrl.u32 %v3681, 7
    %v3683 = vsub.s32 %v3680, %v3682
    %v3684 = vrot.slane %v3670, %v3683
    %v3685 = vcombine.low %v3629, %v3645
    %v3686 = vcombine.high %v3629, %v3645
    %v3688 = vunpack.c.l.s4 1934713408
    %v3689 = vunpack.c.0.s8 %v3688
    %v3690 = vlaneseq
    %v3691 = vshrl.u32 %v3690, 7
    %v3692 = vsub.s32 %v3689, %v3691
    %v3693 = vrot.slane %v3685, %v3692
    %v3695 = vunpack.c.l.s4 1934713408
    %v3696 = vunpack.c.0.s8 %v3695
    %v3697 = vlaneseq
    %v3698 = vshrl.u32 %v3697, 7
    %v3699 = vsub.s32 %v3696, %v3698
    %v3700 = vrot.slane %v3686, %v3699
    %v3701 = vcombine.low %v3636, %v3652
    %v3702 = vcombine.high %v3636, %v3652
    %v3704 = vunpack.c.l.s4 1934713408
    %v3705 = vunpack.c.0.s8 %v3704
    %v3706 = vlaneseq
    %v3707 = vshrl.u32 %v3706, 7
    %v3708 = vsub.s32 %v3705, %v3707
    %v3709 = vrot.slane %v3701, %v3708
    %v3711 = vunpack.c.l.s4 1934713408
    %v3712 = vunpack.c.0.s8 %v3711
    %v3713 = vlaneseq
    %v3714 = vshrl.u32 %v3713, 7
    %v3715 = vsub.s32 %v3712, %v3714
    %v3716 = vrot.slane %v3702, %v3715
    %v3717 = vcombine.low %v3661, %v3693
    %v3718 = vcombine.high %v3661, %v3693
    %v3719 = vcombine.low %v3668, %v3700
    %v3720 = vcombine.high %v3668, %v3700
    %v3721 = vcombine.low %v3677, %v3709
    %v3722 = vcombine.high %v3677, %v3709
    %v3723 = vcombine.low %v3684, %v3716
    %v3724 = vcombine.high %v3684, %v3716
    %v3725 = vcombine.low %v2945, %v3009
    %v3726 = vcombine.high %v2945, %v3009
    %v3728 = vunpack.c.l.s4 1983009808
    %v3729 = vunpack.c.0.s8 %v3728
    %v3730 = vlaneseq
    %v3731 = vshrl.u32 %v3730, 7
    %v3732 = vsub.s32 %v3729, %v3731
    %v3733 = vrot.slane %v3725, %v3732
    %v3735 = vunpack.c.l.s4 1983009808
    %v3736 = vunpack.c.0.s8 %v3735
    %v3737 = vlaneseq
    %v3738 = vshrl.u32 %v3737, 7
    %v3739 = vsub.s32 %v3736, %v3738
    %v3740 = vrot.slane %v3726, %v3739
    %v3741 = vcombine.low %v2977, %v3041
    %v3742 = vcombine.high %v2977, %v3041
    %v3744 = vunpack.c.l.s4 1983009808
    %v3745 = vunpack.c.0.s8 %v3744
    %v3746 = vlaneseq
    %v3747 = vshrl.u32 %v3746, 7
    %v3748 = vsub.s32 %v3745, %v3747
    %v3749 = vrot.slane %v3741, %v3748
    %v3751 = vunpack.c.l.s4 1983009808
    %v3752 = vunpack.c.0.s8 %v3751
    %v3753 = vlaneseq
    %v3754 = vshrl.u32 %v3753, 7
    %v3755 = vsub.s32 %v3752, %v3754
    %v3756 = vrot.slane %v3742, %v3755
    %v3757 = vcombine.low %v3073, %v3137
    %v3758 = vcombine.high %v3073, %v3137
    %v3760 = vunpack.c.l.s4 1983009808
    %v3761 = vunpack.c.0.s8 %v3760
    %v3762 = vlaneseq
    %v3763 = vshrl.u32 %v3762, 7
    %v3764 = vsub.s32 %v3761, %v3763
    %v3765 = vrot.slane %v3757, %v3764
    %v3767 = vunpack.c.l.s4 1983009808
    %v3768 = vunpack.c.0.s8 %v3767
    %v3769 = vlaneseq
    %v3770 = vshrl.u32 %v3769, 7
    %v3771 = vsub.s32 %v3768, %v3770
    %v3772 = vrot.slane %v3758, %v3771
    %v3773 = vcombine.low %v3105, %v3169
    %v3774 = vcombine.high %v3105, %v3169
    %v3776 = vunpack.c.l.s4 1983009808
    %v3777 = vunpack.c.0.s8 %v3776
    %v3778 = vlaneseq
    %v3779 = vshrl.u32 %v3778, 7
    %v3780 = vsub.s32 %v3777, %v3779
    %v3781 = vrot.slane %v3773, %v3780
    %v3783 = vunpack.c.l.s4 1983009808
    %v3784 = vunpack.c.0.s8 %v3783
    %v3785 = vlaneseq
    %v3786 = vshrl.u32 %v3785, 7
    %v3787 = vsub.s32 %v3784, %v3786
    %v3788 = vrot.slane %v3774, %v3787
    %v3789 = vcombine.low %v3733, %v3749
    %v3790 = vcombine.high %v3733, %v3749
    %v3792 = vunpack.c.l.s4 1934713408
    %v3793 = vunpack.c.0.s8 %v3792
    %v3794 = vlaneseq
    %v3795 = vshrl.u32 %v3794, 7
    %v3796 = vsub.s32 %v3793, %v3795
    %v3797 = vrot.slane %v3789, %v3796
    %v3799 = vunpack.c.l.s4 1934713408
    %v3800 = vunpack.c.0.s8 %v3799
    %v3801 = vlaneseq
    %v3802 = vshrl.u32 %v3801, 7
    %v3803 = vsub.s32 %v3800, %v3802
    %v3804 = vrot.slane %v3790, %v3803
    %v3805 = vcombine.low %v3740, %v3756
    %v3806 = vcombine.high %v3740, %v3756
    %v3808 = vunpack.c.l.s4 1934713408
    %v3809 = vunpack.c.0.s8 %v3808
    %v3810 = vlaneseq
    %v3811 = vshrl.u32 %v3810, 7
    %v3812 = vsub.s32 %v3809, %v3811
    %v3813 = vrot.slane %v3805, %v3812
    %v3815 = vunpack.c.l.s4 1934713408
    %v3816 = vunpack.c.0.s8 %v3815
    %v3817 = vlaneseq
    %v3818 = vshrl.u32 %v3817, 7
    %v3819 = vsub.s32 %v3816, %v3818
    %v3820 = vrot.slane %v3806, %v3819
    %v3821 = vcombine.low %v3765, %v3781
    %v3822 = vcombine.high %v3765, %v3781
    %v3824 = vunpack.c.l.s4 1934713408
    %v3825 = vunpack.c.0.s8 %v3824
    %v3826 = vlaneseq
    %v3827 = vshrl.u32 %v3826, 7
    %v3828 = vsub.s32 %v3825, %v3827
    %v3829 = vrot.slane %v3821, %v3828
    %v3831 = vunpack.c.l.s4 1934713408
    %v3832 = vunpack.c.0.s8 %v3831
    %v3833 = vlaneseq
    %v3834 = vshrl.u32 %v3833, 7
    %v3835 = vsub.s32 %v3832, %v3834
    %v3836 = vrot.slane %v3822, %v3835
    %v3837 = vcombine.low %v3772, %v3788
    %v3838 = vcombine.high %v3772, %v3788
    %v3840 = vunpack.c.l.s4 1934713408
    %v3841 = vunpack.c.0.s8 %v3840
    %v3842 = vlaneseq
    %v3843 = vshrl.u32 %v3842, 7
    %v3844 = vsub.s32 %v3841, %v3843
    %v3845 = vrot.slane %v3837, %v3844
    %v3847 = vunpack.c.l.s4 1934713408
    %v3848 = vunpack.c.0.s8 %v3847
    %v3849 = vlaneseq
    %v3850 = vshrl.u32 %v3849, 7
    %v3851 = vsub.s32 %v3848, %v3850
    %v3852 = vrot.slane %v3838, %v3851
    %v3853 = vcombine.low %v3797, %v3829
    %v3854 = vcombine.high %v3797, %v3829
    %v3855 = vcombine.low %v3804, %v3836
    %v3856 = vcombine.high %v3804, %v3836
    %v3857 = vcombine.low %v3813, %v3845
    %v3858 = vcombine.high %v3813, %v3845
    %v3859 = vcombine.low %v3820, %v3852
    %v3860 = vcombine.high %v3820, %v3852
    %v3861 = vcombine.low %v2946, %v3010
    %v3862 = vcombine.high %v2946, %v3010
    %v3864 = vunpack.c.l.s4 1983009808
    %v3865 = vunpack.c.0.s8 %v3864
    %v3866 = vlaneseq
    %v3867 = vshrl.u32 %v3866, 7
    %v3868 = vsub.s32 %v3865, %v3867
    %v3869 = vrot.slane %v3861, %v3868
    %v3871 = vunpack.c.l.s4 1983009808
    %v3872 = vunpack.c.0.s8 %v3871
    %v3873 = vlaneseq
    %v3874 = vshrl.u32 %v3873, 7
    %v3875 = vsub.s32 %v3872, %v3874
    %v3876 = vrot.slane %v3862, %v3875
    %v3877 = vcombine.low %v2978, %v3042
    %v3878 = vcombine.high %v2978, %v3042
    %v3880 = vunpack.c.l.s4 1983009808
    %v3881 = vunpack.c.0.s8 %v3880
    %v3882 = vlaneseq
    %v3883 = vshrl.u32 %v3882, 7
    %v3884 = vsub.s32 %v3881, %v3883
    %v3885 = vrot.slane %v3877, %v3884
    %v3887 = vunpack.c.l.s4 1983009808
    %v3888 = vunpack.c.0.s8 %v3887
    %v3889 = vlaneseq
    %v3890 = vshrl.u32 %v3889, 7
    %v3891 = vsub.s32 %v3888, %v3890
    %v3892 = vrot.slane %v3878, %v3891
    %v3893 = vcombine.low %v3074, %v3138
    %v3894 = vcombine.high %v3074, %v3138
    %v3896 = vunpack.c.l.s4 1983009808
    %v3897 = vunpack.c.0.s8 %v3896
    %v3898 = vlaneseq
    %v3899 = vshrl.u32 %v3898, 7
    %v3900 = vsub.s32 %v3897, %v3899
    %v3901 = vrot.slane %v3893, %v3900
    %v3903 = vunpack.c.l.s4 1983009808
    %v3904 = vunpack.c.0.s8 %v3903
    %v3905 = vlaneseq
    %v3906 = vshrl.u32 %v3905, 7
    %v3907 = vsub.s32 %v3904, %v3906
    %v3908 = vrot.slane %v3894, %v3907
    %v3909 = vcombine.low %v3106, %v3170
    %v3910 = vcombine.high %v3106, %v3170
    %v3912 = vunpack.c.l.s4 1983009808
    %v3913 = vunpack.c.0.s8 %v3912
    %v3914 = vlaneseq
    %v3915 = vshrl.u32 %v3914, 7
    %v3916 = vsub.s32 %v3913, %v3915
    %v3917 = vrot.slane %v3909, %v3916
    %v3919 = vunpack.c.l.s4 1983009808
    %v3920 = vunpack.c.0.s8 %v3919
    %v3921 = vlaneseq
    %v3922 = vshrl.u32 %v3921, 7
    %v3923 = vsub.s32 %v3920, %v3922
    %v3924 = vrot.slane %v3910, %v3923
    %v3925 = vcombine.low %v3869, %v3885
    %v3926 = vcombine.high %v3869, %v3885
    %v3928 = vunpack.c.l.s4 1934713408
    %v3929 = vunpack.c.0.s8 %v3928
    %v3930 = vlaneseq
    %v3931 = vshrl.u32 %v3930, 7
    %v3932 = vsub.s32 %v3929, %v3931
    %v3933 = vrot.slane %v3925, %v3932
    %v3935 = vunpack.c.l.s4 1934713408
    %v3936 = vunpack.c.0.s8 %v3935
    %v3937 = vlaneseq
    %v3938 = vshrl.u32 %v3937, 7
    %v3939 = vsub.s32 %v3936, %v3938
    %v3940 = vrot.slane %v3926, %v3939
    %v3941 = vcombine.low %v3876, %v3892
    %v3942 = vcombine.high %v3876, %v3892
    %v3944 = vunpack.c.l.s4 1934713408
    %v3945 = vunpack.c.0.s8 %v3944
    %v3946 = vlaneseq
    %v3947 = vshrl.u32 %v3946, 7
    %v3948 = vsub.s32 %v3945, %v3947
    %v3949 = vrot.slane %v3941, %v3948
    %v3951 = vunpack.c.l.s4 1934713408
    %v3952 = vunpack.c.0.s8 %v3951
    %v3953 = vlaneseq
    %v3954 = vshrl.u32 %v3953, 7
    %v3955 = vsub.s32 %v3952, %v3954
    %v3956 = vrot.slane %v3942, %v3955
    %v3957 = vcombine.low %v3901, %v3917
    %v3958 = vcombine.high %v3901, %v3917
    %v3960 = vunpack.c.l.s4 1934713408
    %v3961 = vunpack.c.0.s8 %v3960
    %v3962 = vlaneseq
    %v3963 = vshrl.u32 %v3962, 7
    %v3964 = vsub.s32 %v3961, %v3963
    %v3965 = vrot.slane %v3957, %v3964
    %v3967 = vunpack.c.l.s4 1934713408
    %v3968 = vunpack.c.0.s8 %v3967
    %v3969 = vlaneseq
    %v3970 = vshrl.u32 %v3969, 7
    %v3971 = vsub.s32 %v3968, %v3970
    %v3972 = vrot.slane %v3958, %v3971
    %v3973 = vcombine.low %v3908, %v3924
    %v3974 = vcombine.high %v3908, %v3924
    %v3976 = vunpack.c.l.s4 1934713408
    %v3977 = vunpack.c.0.s8 %v3976
    %v3978 = vlaneseq
    %v3979 = vshrl.u32 %v3978, 7
    %v3980 = vsub.s32 %v3977, %v3979
    %v3981 = vrot.slane %v3973, %v3980
    %v3983 = vunpack.c.l.s4 1934713408
    %v3984 = vunpack.c.0.s8 %v3983
    %v3985 = vlaneseq
    %v3986 = vshrl.u32 %v3985, 7
    %v3987 = vsub.s32 %v3984, %v3986
    %v3988 = vrot.slane %v3974, %v3987
    %v3989 = vcombine.low %v3933, %v3965
    %v3990 = vcombine.high %v3933, %v3965
    %v3991 = vcombine.low %v3940, %v3972
    %v3992 = vcombine.high %v3940, %v3972
    %v3993 = vcombine.low %v3949, %v3981
    %v3994 = vcombine.high %v3949, %v3981
    %v3995 = vcombine.low %v3956, %v3988
    %v3996 = vcombine.high %v3956, %v3988
    %v3997 = vcombine.low %v2947, %v3011
    %v3998 = vcombine.high %v2947, %v3011
    %v4000 = vunpack.c.l.s4 1983009808
    %v4001 = vunpack.c.0.s8 %v4000
    %v4002 = vlaneseq
    %v4003 = vshrl.u32 %v4002, 7
    %v4004 = vsub.s32 %v4001, %v4003
    %v4005 = vrot.slane %v3997, %v4004
    %v4007 = vunpack.c.l.s4 1983009808
    %v4008 = vunpack.c.0.s8 %v4007
    %v4009 = vlaneseq
    %v4010 = vshrl.u32 %v4009, 7
    %v4011 = vsub.s32 %v4008, %v4010
    %v4012 = vrot.slane %v3998, %v4011
    %v4013 = vcombine.low %v2979, %v3043
    %v4014 = vcombine.high %v2979, %v3043
    %v4016 = vunpack.c.l.s4 1983009808
    %v4017 = vunpack.c.0.s8 %v4016
    %v4018 = vlaneseq
    %v4019 = vshrl.u32 %v4018, 7
    %v4020 = vsub.s32 %v4017, %v4019
    %v4021 = vrot.slane %v4013, %v4020
    %v4023 = vunpack.c.l.s4 1983009808
    %v4024 = vunpack.c.0.s8 %v4023
    %v4025 = vlaneseq
    %v4026 = vshrl.u32 %v4025, 7
    %v4027 = vsub.s32 %v4024, %v4026
    %v4028 = vrot.slane %v4014, %v4027
    %v4029 = vcombine.low %v3075, %v3139
    %v4030 = vcombine.high %v3075, %v3139
    %v4032 = vunpack.c.l.s4 1983009808
    %v4033 = vunpack.c.0.s8 %v4032
    %v4034 = vlaneseq
    %v4035 = vshrl.u32 %v4034, 7
    %v4036 = vsub.s32 %v4033, %v4035
    %v4037 = vrot.slane %v4029, %v4036
    %v4039 = vunpack.c.l.s4 1983009808
    %v4040 = vunpack.c.0.s8 %v4039
    %v4041 = vlaneseq
    %v4042 = vshrl.u32 %v4041, 7
    %v4043 = vsub.s32 %v4040, %v4042
    %v4044 = vrot.slane %v4030, %v4043
    %v4045 = vcombine.low %v3107, %v3171
    %v4046 = vcombine.high %v3107, %v3171
    %v4048 = vunpack.c.l.s4 1983009808
    %v4049 = vunpack.c.0.s8 %v4048
    %v4050 = vlaneseq
    %v4051 = vshrl.u32 %v4050, 7
    %v4052 = vsub.s32 %v4049, %v4051
    %v4053 = vrot.slane %v4045, %v4052
    %v4055 = vunpack.c.l.s4 1983009808
    %v4056 = vunpack.c.0.s8 %v4055
    %v4057 = vlaneseq
    %v4058 = vshrl.u32 %v4057, 7
    %v4059 = vsub.s32 %v4056, %v4058
    %v4060 = vrot.slane %v4046, %v4059
    %v4061 = vcombine.low %v4005, %v4021
    %v4062 = vcombine.high %v4005, %v4021
    %v4064 = vunpack.c.l.s4 1934713408
    %v4065 = vunpack.c.0.s8 %v4064
    %v4066 = vlaneseq
    %v4067 = vshrl.u32 %v4066, 7
    %v4068 = vsub.s32 %v4065, %v4067
    %v4069 = vrot.slane %v4061, %v4068
    %v4071 = vunpack.c.l.s4 1934713408
    %v4072 = vunpack.c.0.s8 %v4071
    %v4073 = vlaneseq
    %v4074 = vshrl.u32 %v4073, 7
    %v4075 = vsub.s32 %v4072, %v4074
    %v4076 = vrot.slane %v4062, %v4075
    %v4077 = vcombine.low %v4012, %v4028
    %v4078 = vcombine.high %v4012, %v4028
    %v4080 = vunpack.c.l.s4 1934713408
    %v4081 = vunpack.c.0.s8 %v4080
    %v4082 = vlaneseq
    %v4083 = vshrl.u32 %v4082, 7
    %v4084 = vsub.s32 %v4081, %v4083
    %v4085 = vrot.slane %v4077, %v4084
    %v4087 = vunpack.c.l.s4 1934713408
    %v4088 = vunpack.c.0.s8 %v4087
    %v4089 = vlaneseq
    %v4090 = vshrl.u32 %v4089, 7
    %v4091 = vsub.s32 %v4088, %v4090
    %v4092 = vrot.slane %v4078, %v4091
    %v4093 = vcombine.low %v4037, %v4053
    %v4094 = vcombine.high %v4037, %v4053
    %v4096 = vunpack.c.l.s4 1934713408
    %v4097 = vunpack.c.0.s8 %v4096
    %v4098 = vlaneseq
    %v4099 = vshrl.u32 %v4098, 7
    %v4100 = vsub.s32 %v4097, %v4099
    %v4101 = vrot.slane %v4093, %v4100
    %v4103 = vunpack.c.l.s4 1934713408
    %v4104 = vunpack.c.0.s8 %v4103
    %v4105 = vlaneseq
    %v4106 = vshrl.u32 %v4105, 7
    %v4107 = vsub.s32 %v4104, %v4106
    %v4108 = vrot.slane %v4094, %v4107
    %v4109 = vcombine.low %v4044, %v4060
    %v4110 = vcombine.high %v4044, %v4060
    %v4112 = vunpack.c.l.s4 1934713408
    %v4113 = vunpack.c.0.s8 %v4112
    %v4114 = vlaneseq
    %v4115 = vshrl.u32 %v4114, 7
    %v4116 = vsub.s32 %v4113, %v4115
    %v4117 = vrot.slane %v4109, %v4116
    %v4119 = vunpack.c.l.s4 1934713408
    %v4120 = vunpack.c.0.s8 %v4119
    %v4121 = vlaneseq
    %v4122 = vshrl.u32 %v4121, 7
    %v4123 = vsub.s32 %v4120, %v4122
    %v4124 = vrot.slane %v4110, %v4123
    %v4125 = vcombine.low %v4069, %v4101
    %v4126 = vcombine.high %v4069, %v4101
    %v4127 = vcombine.low %v4076, %v4108
    %v4128 = vcombine.high %v4076, %v4108
    %v4129 = vcombine.low %v4085, %v4117
    %v4130 = vcombine.high %v4085, %v4117
    %v4131 = vcombine.low %v4092, %v4124
    %v4132 = vcombine.high %v4092, %v4124
    %v4133 = vcombine.low %v2948, %v3012
    %v4134 = vcombine.high %v2948, %v3012
    %v4136 = vunpack.c.l.s4 1983009808
    %v4137 = vunpack.c.0.s8 %v4136
    %v4138 = vlaneseq
    %v4139 = vshrl.u32 %v4138, 7
    %v4140 = vsub.s32 %v4137, %v4139
    %v4141 = vrot.slane %v4133, %v4140
    %v4143 = vunpack.c.l.s4 1983009808
    %v4144 = vunpack.c.0.s8 %v4143
    %v4145 = vlaneseq
    %v4146 = vshrl.u32 %v4145, 7
    %v4147 = vsub.s32 %v4144, %v4146
    %v4148 = vrot.slane %v4134, %v4147
    %v4149 = vcombine.low %v2980, %v3044
    %v4150 = vcombine.high %v2980, %v3044
    %v4152 = vunpack.c.l.s4 1983009808
    %v4153 = vunpack.c.0.s8 %v4152
    %v4154 = vlaneseq
    %v4155 = vshrl.u32 %v4154, 7
    %v4156 = vsub.s32 %v4153, %v4155
    %v4157 = vrot.slane %v4149, %v4156
    %v4159 = vunpack.c.l.s4 1983009808
    %v4160 = vunpack.c.0.s8 %v4159
    %v4161 = vlaneseq
    %v4162 = vshrl.u32 %v4161, 7
    %v4163 = vsub.s32 %v4160, %v4162
    %v4164 = vrot.slane %v4150, %v4163
    %v4165 = vcombine.low %v3076, %v3140
    %v4166 = vcombine.high %v3076, %v3140
    %v4168 = vunpack.c.l.s4 1983009808
    %v4169 = vunpack.c.0.s8 %v4168
    %v4170 = vlaneseq
    %v4171 = vshrl.u32 %v4170, 7
    %v4172 = vsub.s32 %v4169, %v4171
    %v4173 = vrot.slane %v4165, %v4172
    %v4175 = vunpack.c.l.s4 1983009808
    %v4176 = vunpack.c.0.s8 %v4175
    %v4177 = vlaneseq
    %v4178 = vshrl.u32 %v4177, 7
    %v4179 = vsub.s32 %v4176, %v4178
    %v4180 = vrot.slane %v4166, %v4179
    %v4181 = vcombine.low %v3108, %v3172
    %v4182 = vcombine.high %v3108, %v3172
    %v4184 = vunpack.c.l.s4 1983009808
    %v4185 = vunpack.c.0.s8 %v4184
    %v4186 = vlaneseq
    %v4187 = vshrl.u32 %v4186, 7
    %v4188 = vsub.s32 %v4185, %v4187
    %v4189 = vrot.slane %v4181, %v4188
    %v4191 = vunpack.c.l.s4 1983009808
    %v4192 = vunpack.c.0.s8 %v4191
    %v4193 = vlaneseq
    %v4194 = vshrl.u32 %v4193, 7
    %v4195 = vsub.s32 %v4192, %v4194
    %v4196 = vrot.slane %v4182, %v4195
    %v4197 = vcombine.low %v4141, %v4157
    %v4198 = vcombine.high %v4141, %v4157
    %v4200 = vunpack.c.l.s4 1934713408
    %v4201 = vunpack.c.0.s8 %v4200
    %v4202 = vlaneseq
    %v4203 = vshrl.u32 %v4202, 7
    %v4204 = vsub.s32 %v4201, %v4203
    %v4205 = vrot.slane %v4197, %v4204
    %v4207 = vunpack.c.l.s4 1934713408
    %v4208 = vunpack.c.0.s8 %v4207
    %v4209 = vlaneseq
    %v4210 = vshrl.u32 %v4209, 7
    %v4211 = vsub.s32 %v4208, %v4210
    %v4212 = vrot.slane %v4198, %v4211
    %v4213 = vcombine.low %v4148, %v4164
    %v4214 = vcombine.high %v4148, %v4164
    %v4216 = vunpack.c.l.s4 1934713408
    %v4217 = vunpack.c.0.s8 %v4216
    %v4218 = vlaneseq
    %v4219 = vshrl.u32 %v4218, 7
    %v4220 = vsub.s32 %v4217, %v4219
    %v4221 = vrot.slane %v4213, %v4220
    %v4223 = vunpack.c.l.s4 1934713408
    %v4224 = vunpack.c.0.s8 %v4223
    %v4225 = vlaneseq
    %v4226 = vshrl.u32 %v4225, 7
    %v4227 = vsub.s32 %v4224, %v4226
    %v4228 = vrot.slane %v4214, %v4227
    %v4229 = vcombine.low %v4173, %v4189
    %v4230 = vcombine.high %v4173, %v4189
    %v4232 = vunpack.c.l.s4 1934713408
    %v4233 = vunpack.c.0.s8 %v4232
    %v4234 = vlaneseq
    %v4235 = vshrl.u32 %v4234, 7
    %v4236 = vsub.s32 %v4233, %v4235
    %v4237 = vrot.slane %v4229, %v4236
    %v4239 = vunpack.c.l.s4 1934713408
    %v4240 = vunpack.c.0.s8 %v4239
    %v4241 = vlaneseq
    %v4242 = vshrl.u32 %v4241, 7
    %v4243 = vsub.s32 %v4240, %v4242
    %v4244 = vrot.slane %v4230, %v4243
    %v4245 = vcombine.low %v4180, %v4196
    %v4246 = vcombine.high %v4180, %v4196
    %v4248 = vunpack.c.l.s4 1934713408
    %v4249 = vunpack.c.0.s8 %v4248
    %v4250 = vlaneseq
    %v4251 = vshrl.u32 %v4250, 7
    %v4252 = vsub.s32 %v4249, %v4251
    %v4253 = vrot.slane %v4245, %v4252
    %v4255 = vunpack.c.l.s4 1934713408
    %v4256 = vunpack.c.0.s8 %v4255
    %v4257 = vlaneseq
    %v4258 = vshrl.u32 %v4257, 7
    %v4259 = vsub.s32 %v4256, %v4258
    %v4260 = vrot.slane %v4246, %v4259
    %v4261 = vcombine.low %v4205, %v4237
    %v4262 = vcombine.high %v4205, %v4237
    %v4263 = vcombine.low %v4212, %v4244
    %v4264 = vcombine.high %v4212, %v4244
    %v4265 = vcombine.low %v4221, %v4253
    %v4266 = vcombine.high %v4221, %v4253
    %v4267 = vcombine.low %v4228, %v4260
    %v4268 = vcombine.high %v4228, %v4260
    %v4269 = vcombine.low %v3309, %v3311
    %v4270 = vcombine.high %v3309, %v3311
    %v4272 = vunpack.c.l.s4 1983009808
    %v4273 = vunpack.c.0.s8 %v4272
    %v4274 = vlaneseq
    %v4275 = vshrl.u32 %v4274, 7
    %v4276 = vsub.s32 %v4273, %v4275
    %v4277 = vrot.slane %v4269, %v4276
    %v4279 = vunpack.c.l.s4 1983009808
    %v4280 = vunpack.c.0.s8 %v4279
    %v4281 = vlaneseq
    %v4282 = vshrl.u32 %v4281, 7
    %v4283 = vsub.s32 %v4280, %v4282
    %v4284 = vrot.slane %v4270, %v4283
    %v4285 = vcombine.low %v3310, %v3312
    %v4286 = vcombine.high %v3310, %v3312
    %v4288 = vunpack.c.l.s4 1983009808
    %v4289 = vunpack.c.0.s8 %v4288
    %v4290 = vlaneseq
    %v4291 = vshrl.u32 %v4290, 7
    %v4292 = vsub.s32 %v4289, %v4291
    %v4293 = vrot.slane %v4285, %v4292
    %v4295 = vunpack.c.l.s4 1983009808
    %v4296 = vunpack.c.0.s8 %v4295
    %v4297 = vlaneseq
    %v4298 = vshrl.u32 %v4297, 7
    %v4299 = vsub.s32 %v4296, %v4298
    %v4300 = vrot.slane %v4286, %v4299
    %v4301 = vcombine.low %v3313, %v3315
    %v4302 = vcombine.high %v3313, %v3315
    %v4304 = vunpack.c.l.s4 1983009808
    %v4305 = vunpack.c.0.s8 %v4304
    %v4306 = vlaneseq
    %v4307 = vshrl.u32 %v4306, 7
    %v4308 = vsub.s32 %v4305, %v4307
    %v4309 = vrot.slane %v4301, %v4308
    %v4311 = vunpack.c.l.s4 1983009808
    %v4312 = vunpack.c.0.s8 %v4311
    %v4313 = vlaneseq
    %v4314 = vshrl.u32 %v4313, 7
    %v4315 = vsub.s32 %v4312, %v4314
    %v4316 = vrot.slane %v4302, %v4315
    %v4317 = vcombine.low %v3314, %v3316
    %v4318 = vcombine.high %v3314, %v3316
    %v4320 = vunpack.c.l.s4 1983009808
    %v4321 = vunpack.c.0.s8 %v4320
    %v4322 = vlaneseq
    %v4323 = vshrl.u32 %v4322, 7
    %v4324 = vsub.s32 %v4321, %v4323
    %v4325 = vrot.slane %v4317, %v4324
    %v4327 = vunpack.c.l.s4 1983009808
    %v4328 = vunpack.c.0.s8 %v4327
    %v4329 = vlaneseq
    %v4330 = vshrl.u32 %v4329, 7
    %v4331 = vsub.s32 %v4328, %v4330
    %v4332 = vrot.slane %v4318, %v4331
    %v4333 = vcombine.low %v4277, %v4293
    %v4334 = vcombine.high %v4277, %v4293
    %v4336 = vunpack.c.l.s4 1934713408
    %v4337 = vunpack.c.0.s8 %v4336
    %v4338 = vlaneseq
    %v4339 = vshrl.u32 %v4338, 7
    %v4340 = vsub.s32 %v4337, %v4339
    %v4341 = vrot.slane %v4333, %v4340
    %v4343 = vunpack.c.l.s4 1934713408
    %v4344 = vunpack.c.0.s8 %v4343
    %v4345 = vlaneseq
    %v4346 = vshrl.u32 %v4345, 7
    %v4347 = vsub.s32 %v4344, %v4346
    %v4348 = vrot.slane %v4334, %v4347
    %v4349 = vcombine.low %v4284, %v4300
    %v4350 = vcombine.high %v4284, %v4300
    %v4352 = vunpack.c.l.s4 1934713408
    %v4353 = vunpack.c.0.s8 %v4352
    %v4354 = vlaneseq
    %v4355 = vshrl.u32 %v4354, 7
    %v4356 = vsub.s32 %v4353, %v4355
    %v4357 = vrot.slane %v4349, %v4356
    %v4359 = vunpack.c.l.s4 1934713408
    %v4360 = vunpack.c.0.s8 %v4359
    %v4361 = vlaneseq
    %v4362 = vshrl.u32 %v4361, 7
    %v4363 = vsub.s32 %v4360, %v4362
    %v4364 = vrot.slane %v4350, %v4363
    %v4365 = vcombine.low %v4309, %v4325
    %v4366 = vcombine.high %v4309, %v4325
    %v4368 = vunpack.c.l.s4 1934713408
    %v4369 = vunpack.c.0.s8 %v4368
    %v4370 = vlaneseq
    %v4371 = vshrl.u32 %v4370, 7
    %v4372 = vsub.s32 %v4369, %v4371
    %v4373 = vrot.slane %v4365, %v4372
    %v4375 = vunpack.c.l.s4 1934713408
    %v4376 = vunpack.c.0.s8 %v4375
    %v4377 = vlaneseq
    %v4378 = vshrl.u32 %v4377, 7
    %v4379 = vsub.s32 %v4376, %v4378
    %v4380 = vrot.slane %v4366, %v4379
    %v4381 = vcombine.low %v4316, %v4332
    %v4382 = vcombine.high %v4316, %v4332
    %v4384 = vunpack.c.l.s4 1934713408
    %v4385 = vunpack.c.0.s8 %v4384
    %v4386 = vlaneseq
    %v4387 = vshrl.u32 %v4386, 7
    %v4388 = vsub.s32 %v4385, %v4387
    %v4389 = vrot.slane %v4381, %v4388
    %v4391 = vunpack.c.l.s4 1934713408
    %v4392 = vunpack.c.0.s8 %v4391
    %v4393 = vlaneseq
    %v4394 = vshrl.u32 %v4393, 7
    %v4395 = vsub.s32 %v4392, %v4394
    %v4396 = vrot.slane %v4382, %v4395
    %v4397 = vcombine.low %v4341, %v4373
    %v4398 = vcombine.high %v4341, %v4373
    %v4399 = vcombine.low %v4348, %v4380
    %v4400 = vcombine.high %v4348, %v4380
    %v4401 = vcombine.low %v4357, %v4389
    %v4402 = vcombine.high %v4357, %v4389
    %v4403 = vcombine.low %v4364, %v4396
    %v4404 = vcombine.high %v4364, %v4396
    %v4405 = vcombine.low %v3445, %v3447
    %v4406 = vcombine.high %v3445, %v3447
    %v4408 = vunpack.c.l.s4 1983009808
    %v4409 = vunpack.c.0.s8 %v4408
    %v4410 = vlaneseq
    %v4411 = vshrl.u32 %v4410, 7
    %v4412 = vsub.s32 %v4409, %v4411
    %v4413 = vrot.slane %v4405, %v4412
    %v4415 = vunpack.c.l.s4 1983009808
    %v4416 = vunpack.c.0.s8 %v4415
    %v4417 = vlaneseq
    %v4418 = vshrl.u32 %v4417, 7
    %v4419 = vsub.s32 %v4416, %v4418
    %v4420 = vrot.slane %v4406, %v4419
    %v4421 = vcombine.low %v3446, %v3448
    %v4422 = vcombine.high %v3446, %v3448
    %v4424 = vunpack.c.l.s4 1983009808
    %v4425 = vunpack.c.0.s8 %v4424
    %v4426 = vlaneseq
    %v4427 = vshrl.u32 %v4426, 7
    %v4428 = vsub.s32 %v4425, %v4427
    %v4429 = vrot.slane %v4421, %v4428
    %v4431 = vunpack.c.l.s4 1983009808
    %v4432 = vunpack.c.0.s8 %v4431
    %v4433 = vlaneseq
    %v4434 = vshrl.u32 %v4433, 7
    %v4435 = vsub.s32 %v4432, %v4434
    %v4436 = vrot.slane %v4422, %v4435
    %v4437 = vcombine.low %v3449, %v3451
    %v4438 = vcombine.high %v3449, %v3451
    %v4440 = vunpack.c.l.s4 1983009808
    %v4441 = vunpack.c.0.s8 %v4440
    %v4442 = vlaneseq
    %v4443 = vshrl.u32 %v4442, 7
    %v4444 = vsub.s32 %v4441, %v4443
    %v4445 = vrot.slane %v4437, %v4444
    %v4447 = vunpack.c.l.s4 1983009808
    %v4448 = vunpack.c.0.s8 %v4447
    %v4449 = vlaneseq
    %v4450 = vshrl.u32 %v4449, 7
    %v4451 = vsub.s32 %v4448, %v4450
    %v4452 = vrot.slane %v4438, %v4451
    %v4453 = vcombine.low %v3450, %v3452
    %v4454 = vcombine.high %v3450, %v3452
    %v4456 = vunpack.c.l.s4 1983009808
    %v4457 = vunpack.c.0.s8 %v4456
    %v4458 = vlaneseq
    %v4459 = vshrl.u32 %v4458, 7
    %v4460 = vsub.s32 %v4457, %v4459
    %v4461 = vrot.slane %v4453, %v4460
    %v4463 = vunpack.c.l.s4 1983009808
    %v4464 = vunpack.c.0.s8 %v4463
    %v4465 = vlaneseq
    %v4466 = vshrl.u32 %v4465, 7
    %v4467 = vsub.s32 %v4464, %v4466
    %v4468 = vrot.slane %v4454, %v4467
    %v4469 = vcombine.low %v4413, %v4429
    %v4470 = vcombine.high %v4413, %v4429
    %v4472 = vunpack.c.l.s4 1934713408
    %v4473 = vunpack.c.0.s8 %v4472
    %v4474 = vlaneseq
    %v4475 = vshrl.u32 %v4474, 7
    %v4476 = vsub.s32 %v4473, %v4475
    %v4477 = vrot.slane %v4469, %v4476
    %v4479 = vunpack.c.l.s4 1934713408
    %v4480 = vunpack.c.0.s8 %v4479
    %v4481 = vlaneseq
    %v4482 = vshrl.u32 %v4481, 7
    %v4483 = vsub.s32 %v4480, %v4482
    %v4484 = vrot.slane %v4470, %v4483
    %v4485 = vcombine.low %v4420, %v4436
    %v4486 = vcombine.high %v4420, %v4436
    %v4488 = vunpack.c.l.s4 1934713408
    %v4489 = vunpack.c.0.s8 %v4488
    %v4490 = vlaneseq
    %v4491 = vshrl.u32 %v4490, 7
    %v4492 = vsub.s32 %v4489, %v4491
    %v4493 = vrot.slane %v4485, %v4492
    %v4495 = vunpack.c.l.s4 1934713408
    %v4496 = vunpack.c.0.s8 %v4495
    %v4497 = vlaneseq
    %v4498 = vshrl.u32 %v4497, 7
    %v4499 = vsub.s32 %v4496, %v4498
    %v4500 = vrot.slane %v4486, %v4499
    %v4501 = vcombine.low %v4445, %v4461
    %v4502 = vcombine.high %v4445, %v4461
    %v4504 = vunpack.c.l.s4 1934713408
    %v4505 = vunpack.c.0.s8 %v4504
    %v4506 = vlaneseq
    %v4507 = vshrl.u32 %v4506, 7
    %v4508 = vsub.s32 %v4505, %v4507
    %v4509 = vrot.slane %v4501, %v4508
    %v4511 = vunpack.c.l.s4 1934713408
    %v4512 = vunpack.c.0.s8 %v4511
    %v4513 = vlaneseq
    %v4514 = vshrl.u32 %v4513, 7
    %v4515 = vsub.s32 %v4512, %v4514
    %v4516 = vrot.slane %v4502, %v4515
    %v4517 = vcombine.low %v4452, %v4468
    %v4518 = vcombine.high %v4452, %v4468
    %v4520 = vunpack.c.l.s4 1934713408
    %v4521 = vunpack.c.0.s8 %v4520
    %v4522 = vlaneseq
    %v4523 = vshrl.u32 %v4522, 7
    %v4524 = vsub.s32 %v4521, %v4523
    %v4525 = vrot.slane %v4517, %v4524
    %v4527 = vunpack.c.l.s4 1934713408
    %v4528 = vunpack.c.0.s8 %v4527
    %v4529 = vlaneseq
    %v4530 = vshrl.u32 %v4529, 7
    %v4531 = vsub.s32 %v4528, %v4530
    %v4532 = vrot.slane %v4518, %v4531
    %v4533 = vcombine.low %v4477, %v4509
    %v4534 = vcombine.high %v4477, %v4509
    %v4535 = vcombine.low %v4484, %v4516
    %v4536 = vcombine.high %v4484, %v4516
    %v4537 = vcombine.low %v4493, %v4525
    %v4538 = vcombine.high %v4493, %v4525
    %v4539 = vcombine.low %v4500, %v4532
    %v4540 = vcombine.high %v4500, %v4532
    %v4541 = vcombine.low %v3581, %v3583
    %v4542 = vcombine.high %v3581, %v3583
    %v4544 = vunpack.c.l.s4 1983009808
    %v4545 = vunpack.c.0.s8 %v4544
    %v4546 = vlaneseq
    %v4547 = vshrl.u32 %v4546, 7
    %v4548 = vsub.s32 %v4545, %v4547
    %v4549 = vrot.slane %v4541, %v4548
    %v4551 = vunpack.c.l.s4 1983009808
    %v4552 = vunpack.c.0.s8 %v4551
    %v4553 = vlaneseq
    %v4554 = vshrl.u32 %v4553, 7
    %v4555 = vsub.s32 %v4552, %v4554
    %v4556 = vrot.slane %v4542, %v4555
    %v4557 = vcombine.low %v3582, %v3584
    %v4558 = vcombine.high %v3582, %v3584
    %v4560 = vunpack.c.l.s4 1983009808
    %v4561 = vunpack.c.0.s8 %v4560
    %v4562 = vlaneseq
    %v4563 = vshrl.u32 %v4562, 7
    %v4564 = vsub.s32 %v4561, %v4563
    %v4565 = vrot.slane %v4557, %v4564
    %v4567 = vunpack.c.l.s4 1983009808
    %v4568 = vunpack.c.0.s8 %v4567
    %v4569 = vlaneseq
    %v4570 = vshrl.u32 %v4569, 7
    %v4571 = vsub.s32 %v4568, %v4570
    %v4572 = vrot.slane %v4558, %v4571
    %v4573 = vcombine.low %v3585, %v3587
    %v4574 = vcombine.high %v3585, %v3587
    %v4576 = vunpack.c.l.s4 1983009808
    %v4577 = vunpack.c.0.s8 %v4576
    %v4578 = vlaneseq
    %v4579 = vshrl.u32 %v4578, 7
    %v4580 = vsub.s32 %v4577, %v4579
    %v4581 = vrot.slane %v4573, %v4580
    %v4583 = vunpack.c.l.s4 1983009808
    %v4584 = vunpack.c.0.s8 %v4583
    %v4585 = vlaneseq
    %v4586 = vshrl.u32 %v4585, 7
    %v4587 = vsub.s32 %v4584, %v4586
    %v4588 = vrot.slane %v4574, %v4587
    %v4589 = vcombine.low %v3586, %v3588
    %v4590 = vcombine.high %v3586, %v3588
    %v4592 = vunpack.c.l.s4 1983009808
    %v4593 = vunpack.c.0.s8 %v4592
    %v4594 = vlaneseq
    %v4595 = vshrl.u32 %v4594, 7
    %v4596 = vsub.s32 %v4593, %v4595
    %v4597 = vrot.slane %v4589, %v4596
    %v4599 = vunpack.c.l.s4 1983009808
    %v4600 = vunpack.c.0.s8 %v4599
    %v4601 = vlaneseq
    %v4602 = vshrl.u32 %v4601, 7
    %v4603 = vsub.s32 %v4600, %v4602
    %v4604 = vrot.slane %v4590, %v4603
    %v4605 = vcombine.low %v4549, %v4565
    %v4606 = vcombine.high %v4549, %v4565
    %v4608 = vunpack.c.l.s4 1934713408
    %v4609 = vunpack.c.0.s8 %v4608
    %v4610 = vlaneseq
    %v4611 = vshrl.u32 %v4610, 7
    %v4612 = vsub.s32 %v4609, %v4611
    %v4613 = vrot.slane %v4605, %v4612
    %v4615 = vunpack.c.l.s4 1934713408
    %v4616 = vunpack.c.0.s8 %v4615
    %v4617 = vlaneseq
    %v4618 = vshrl.u32 %v4617, 7
    %v4619 = vsub.s32 %v4616, %v4618
    %v4620 = vrot.slane %v4606, %v4619
    %v4621 = vcombine.low %v4556, %v4572
    %v4622 = vcombine.high %v4556, %v4572
    %v4624 = vunpack.c.l.s4 1934713408
    %v4625 = vunpack.c.0.s8 %v4624
    %v4626 = vlaneseq
    %v4627 = vshrl.u32 %v4626, 7
    %v4628 = vsub.s32 %v4625, %v4627
    %v4629 = vrot.slane %v4621, %v4628
    %v4631 = vunpack.c.l.s4 1934713408
    %v4632 = vunpack.c.0.s8 %v4631
    %v4633 = vlaneseq
    %v4634 = vshrl.u32 %v4633, 7
    %v4635 = vsub.s32 %v4632, %v4634
    %v4636 = vrot.slane %v4622, %v4635
    %v4637 = vcombine.low %v4581, %v4597
    %v4638 = vcombine.high %v4581, %v4597
    %v4640 = vunpack.c.l.s4 1934713408
    %v4641 = vunpack.c.0.s8 %v4640
    %v4642 = vlaneseq
    %v4643 = vshrl.u32 %v4642, 7
    %v4644 = vsub.s32 %v4641, %v4643
    %v4645 = vrot.slane %v4637, %v4644
    %v4647 = vunpack.c.l.s4 1934713408
    %v4648 = vunpack.c.0.s8 %v4647
    %v4649 = vlaneseq
    %v4650 = vshrl.u32 %v4649, 7
    %v4651 = vsub.s32 %v4648, %v4650
    %v4652 = vrot.slane %v4638, %v4651
    %v4653 = vcombine.low %v4588, %v4604
    %v4654 = vcombine.high %v4588, %v4604
    %v4656 = vunpack.c.l.s4 1934713408
    %v4657 = vunpack.c.0.s8 %v4656
    %v4658 = vlaneseq
    %v4659 = vshrl.u32 %v4658, 7
    %v4660 = vsub.s32 %v4657, %v4659
    %v4661 = vrot.slane %v4653, %v4660
    %v4663 = vunpack.c.l.s4 1934713408
    %v4664 = vunpack.c.0.s8 %v4663
    %v4665 = vlaneseq
    %v4666 = vshrl.u32 %v4665, 7
    %v4667 = vsub.s32 %v4664, %v4666
    %v4668 = vrot.slane %v4654, %v4667
    %v4669 = vcombine.low %v4613, %v4645
    %v4670 = vcombine.high %v4613, %v4645
    %v4671 = vcombine.low %v4620, %v4652
    %v4672 = vcombine.high %v4620, %v4652
    %v4673 = vcombine.low %v4629, %v4661
    %v4674 = vcombine.high %v4629, %v4661
    %v4675 = vcombine.low %v4636, %v4668
    %v4676 = vcombine.high %v4636, %v4668
    %v4677 = vcombine.low %v3717, %v3719
    %v4678 = vcombine.high %v3717, %v3719
    %v4680 = vunpack.c.l.s4 1983009808
    %v4681 = vunpack.c.0.s8 %v4680
    %v4682 = vlaneseq
    %v4683 = vshrl.u32 %v4682, 7
    %v4684 = vsub.s32 %v4681, %v4683
    %v4685 = vrot.slane %v4677, %v4684
    %v4687 = vunpack.c.l.s4 1983009808
    %v4688 = vunpack.c.0.s8 %v4687
    %v4689 = vlaneseq
    %v4690 = vshrl.u32 %v4689, 7
    %v4691 = vsub.s32 %v4688, %v4690
    %v4692 = vrot.slane %v4678, %v4691
    %v4693 = vcombine.low %v3718, %v3720
    %v4694 = vcombine.high %v3718, %v3720
    %v4696 = vunpack.c.l.s4 1983009808
    %v4697 = vunpack.c.0.s8 %v4696
    %v4698 = vlaneseq
    %v4699 = vshrl.u32 %v4698, 7
    %v4700 = vsub.s32 %v4697, %v4699
    %v4701 = vrot.slane %v4693, %v4700
    %v4703 = vunpack.c.l.s4 1983009808
    %v4704 = vunpack.c.0.s8 %v4703
    %v4705 = vlaneseq
    %v4706 = vshrl.u32 %v4705, 7
    %v4707 = vsub.s32 %v4704, %v4706
    %v4708 = vrot.slane %v4694, %v4707
    %v4709 = vcombine.low %v3721, %v3723
    %v4710 = vcombine.high %v3721, %v3723
    %v4712 = vunpack.c.l.s4 1983009808
    %v4713 = vunpack.c.0.s8 %v4712
    %v4714 = vlaneseq
    %v4715 = vshrl.u32 %v4714, 7
    %v4716 = vsub.s32 %v4713, %v4715
    %v4717 = vrot.slane %v4709, %v4716
    %v4719 = vunpack.c.l.s4 1983009808
    %v4720 = vunpack.c.0.s8 %v4719
    %v4721 = vlaneseq
    %v4722 = vshrl.u32 %v4721, 7
    %v4723 = vsub.s32 %v4720, %v4722
    %v4724 = vrot.slane %v4710, %v4723
    %v4725 = vcombine.low %v3722, %v3724
    %v4726 = vcombine.high %v3722, %v3724
    %v4728 = vunpack.c.l.s4 1983009808
    %v4729 = vunpack.c.0.s8 %v4728
    %v4730 = vlaneseq
    %v4731 = vshrl.u32 %v4730, 7
    %v4732 = vsub.s32 %v4729, %v4731
    %v4733 = vrot.slane %v4725, %v4732
    %v4735 = vunpack.c.l.s4 1983009808
    %v4736 = vunpack.c.0.s8 %v4735
    %v4737 = vlaneseq
    %v4738 = vshrl.u32 %v4737, 7
    %v4739 = vsub.s32 %v4736, %v4738
    %v4740 = vrot.slane %v4726, %v4739
    %v4741 = vcombine.low %v4685, %v4701
    %v4742 = vcombine.high %v4685, %v4701
    %v4744 = vunpack.c.l.s4 1934713408
    %v4745 = vunpack.c.0.s8 %v4744
    %v4746 = vlaneseq
    %v4747 = vshrl.u32 %v4746, 7
    %v4748 = vsub.s32 %v4745, %v4747
    %v4749 = vrot.slane %v4741, %v4748
    %v4751 = vunpack.c.l.s4 1934713408
    %v4752 = vunpack.c.0.s8 %v4751
    %v4753 = vlaneseq
    %v4754 = vshrl.u32 %v4753, 7
    %v4755 = vsub.s32 %v4752, %v4754
    %v4756 = vrot.slane %v4742, %v4755
    %v4757 = vcombine.low %v4692, %v4708
    %v4758 = vcombine.high %v4692, %v4708
    %v4760 = vunpack.c.l.s4 1934713408
    %v4761 = vunpack.c.0.s8 %v4760
    %v4762 = vlaneseq
    %v4763 = vshrl.u32 %v4762, 7
    %v4764 = vsub.s32 %v4761, %v4763
    %v4765 = vrot.slane %v4757, %v4764
    %v4767 = vunpack.c.l.s4 1934713408
    %v4768 = vunpack.c.0.s8 %v4767
    %v4769 = vlaneseq
    %v4770 = vshrl.u32 %v4769, 7
    %v4771 = vsub.s32 %v4768, %v4770
    %v4772 = vrot.slane %v4758, %v4771
    %v4773 = vcombine.low %v4717, %v4733
    %v4774 = vcombine.high %v4717, %v4733
    %v4776 = vunpack.c.l.s4 1934713408
    %v4777 = vunpack.c.0.s8 %v4776
    %v4778 = vlaneseq
    %v4779 = vshrl.u32 %v4778, 7
    %v4780 = vsub.s32 %v4777, %v4779
    %v4781 = vrot.slane %v4773, %v4780
    %v4783 = vunpack.c.l.s4 1934713408
    %v4784 = vunpack.c.0.s8 %v4783
    %v4785 = vlaneseq
    %v4786 = vshrl.u32 %v4785, 7
    %v4787 = vsub.s32 %v4784, %v4786
    %v4788 = vrot.slane %v4774, %v4787
    %v4789 = vcombine.low %v4724, %v4740
    %v4790 = vcombine.high %v4724, %v4740
    %v4792 = vunpack.c.l.s4 1934713408
    %v4793 = vunpack.c.0.s8 %v4792
    %v4794 = vlaneseq
    %v4795 = vshrl.u32 %v4794, 7
    %v4796 = vsub.s32 %v4793, %v4795
    %v4797 = vrot.slane %v4789, %v4796
    %v4799 = vunpack.c.l.s4 1934713408
    %v4800 = vunpack.c.0.s8 %v4799
    %v4801 = vlaneseq
    %v4802 = vshrl.u32 %v4801, 7
    %v4803 = vsub.s32 %v4800, %v4802
    %v4804 = vrot.slane %v4790, %v4803
    %v4805 = vcombine.low %v4749, %v4781
    %v4806 = vcombine.high %v4749, %v4781
    %v4807 = vcombine.low %v4756, %v4788
    %v4808 = vcombine.high %v4756, %v4788
    %v4809 = vcombine.low %v4765, %v4797
    %v4810 = vcombine.high %v4765, %v4797
    %v4811 = vcombine.low %v4772, %v4804
    %v4812 = vcombine.high %v4772, %v4804
    %v4813 = vcombine.low %v3853, %v3855
    %v4814 = vcombine.high %v3853, %v3855
    %v4816 = vunpack.c.l.s4 1983009808
    %v4817 = vunpack.c.0.s8 %v4816
    %v4818 = vlaneseq
    %v4819 = vshrl.u32 %v4818, 7
    %v4820 = vsub.s32 %v4817, %v4819
    %v4821 = vrot.slane %v4813, %v4820
    %v4823 = vunpack.c.l.s4 1983009808
    %v4824 = vunpack.c.0.s8 %v4823
    %v4825 = vlaneseq
    %v4826 = vshrl.u32 %v4825, 7
    %v4827 = vsub.s32 %v4824, %v4826
    %v4828 = vrot.slane %v4814, %v4827
    %v4829 = vcombine.low %v3854, %v3856
    %v4830 = vcombine.high %v3854, %v3856
    %v4832 = vunpack.c.l.s4 1983009808
    %v4833 = vunpack.c.0.s8 %v4832
    %v4834 = vlaneseq
    %v4835 = vshrl.u32 %v4834, 7
    %v4836 = vsub.s32 %v4833, %v4835
    %v4837 = vrot.slane %v4829, %v4836
    %v4839 = vunpack.c.l.s4 1983009808
    %v4840 = vunpack.c.0.s8 %v4839
    %v4841 = vlaneseq
    %v4842 = vshrl.u32 %v4841, 7
    %v4843 = vsub.s32 %v4840, %v4842
    %v4844 = vrot.slane %v4830, %v4843
    %v4845 = vcombine.low %v3857, %v3859
    %v4846 = vcombine.high %v3857, %v3859
    %v4848 = vunpack.c.l.s4 1983009808
    %v4849 = vunpack.c.0.s8 %v4848
    %v4850 = vlaneseq
    %v4851 = vshrl.u32 %v4850, 7
    %v4852 = vsub.s32 %v4849, %v4851
    %v4853 = vrot.slane %v4845, %v4852
    %v4855 = vunpack.c.l.s4 1983009808
    %v4856 = vunpack.c.0.s8 %v4855
    %v4857 = vlaneseq
    %v4858 = vshrl.u32 %v4857, 7
    %v4859 = vsub.s32 %v4856, %v4858
    %v4860 = vrot.slane %v4846, %v4859
    %v4861 = vcombine.low %v3858, %v3860
    %v4862 = vcombine.high %v3858, %v3860
    %v4864 = vunpack.c.l.s4 1983009808
    %v4865 = vunpack.c.0.s8 %v4864
    %v4866 = vlaneseq
    %v4867 = vshrl.u32 %v4866, 7
    %v4868 = vsub.s32 %v4865, %v4867
    %v4869 = vrot.slane %v4861, %v4868
    %v4871 = vunpack.c.l.s4 1983009808
    %v4872 = vunpack.c.0.s8 %v4871
    %v4873 = vlaneseq
    %v4874 = vshrl.u32 %v4873, 7
    %v4875 = vsub.s32 %v4872, %v4874
    %v4876 = vrot.slane %v4862, %v4875
    %v4877 = vcombine.low %v4821, %v4837
    %v4878 = vcombine.high %v4821, %v4837
    %v4880 = vunpack.c.l.s4 1934713408
    %v4881 = vunpack.c.0.s8 %v4880
    %v4882 = vlaneseq
    %v4883 = vshrl.u32 %v4882, 7
    %v4884 = vsub.s32 %v4881, %v4883
    %v4885 = vrot.slane %v4877, %v4884
    %v4887 = vunpack.c.l.s4 1934713408
    %v4888 = vunpack.c.0.s8 %v4887
    %v4889 = vlaneseq
    %v4890 = vshrl.u32 %v4889, 7
    %v4891 = vsub.s32 %v4888, %v4890
    %v4892 = vrot.slane %v4878, %v4891
    %v4893 = vcombine.low %v4828, %v4844
    %v4894 = vcombine.high %v4828, %v4844
    %v4896 = vunpack.c.l.s4 1934713408
    %v4897 = vunpack.c.0.s8 %v4896
    %v4898 = vlaneseq
    %v4899 = vshrl.u32 %v4898, 7
    %v4900 = vsub.s32 %v4897, %v4899
    %v4901 = vrot.slane %v4893, %v4900
    %v4903 = vunpack.c.l.s4 1934713408
    %v4904 = vunpack.c.0.s8 %v4903
    %v4905 = vlaneseq
    %v4906 = vshrl.u32 %v4905, 7
    %v4907 = vsub.s32 %v4904, %v4906
    %v4908 = vrot.slane %v4894, %v4907
    %v4909 = vcombine.low %v4853, %v4869
    %v4910 = vcombine.high %v4853, %v4869
    %v4912 = vunpack.c.l.s4 1934713408
    %v4913 = vunpack.c.0.s8 %v4912
    %v4914 = vlaneseq
    %v4915 = vshrl.u32 %v4914, 7
    %v4916 = vsub.s32 %v4913, %v4915
    %v4917 = vrot.slane %v4909, %v4916
    %v4919 = vunpack.c.l.s4 1934713408
    %v4920 = vunpack.c.0.s8 %v4919
    %v4921 = vlaneseq
    %v4922 = vshrl.u32 %v4921, 7
    %v4923 = vsub.s32 %v4920, %v4922
    %v4924 = vrot.slane %v4910, %v4923
    %v4925 = vcombine.low %v4860, %v4876
    %v4926 = vcombine.high %v4860, %v4876
    %v4928 = vunpack.c.l.s4 1934713408
    %v4929 = vunpack.c.0.s8 %v4928
    %v4930 = vlaneseq
    %v4931 = vshrl.u32 %v4930, 7
    %v4932 = vsub.s32 %v4929, %v4931
    %v4933 = vrot.slane %v4925, %v4932
    %v4935 = vunpack.c.l.s4 1934713408
    %v4936 = vunpack.c.0.s8 %v4935
    %v4937 = vlaneseq
    %v4938 = vshrl.u32 %v4937, 7
    %v4939 = vsub.s32 %v4936, %v4938
    %v4940 = vrot.slane %v4926, %v4939
    %v4941 = vcombine.low %v4885, %v4917
    %v4942 = vcombine.high %v4885, %v4917
    %v4943 = vcombine.low %v4892, %v4924
    %v4944 = vcombine.high %v4892, %v4924
    %v4945 = vcombine.low %v4901, %v4933
    %v4946 = vcombine.high %v4901, %v4933
    %v4947 = vcombine.low %v4908, %v4940
    %v4948 = vcombine.high %v4908, %v4940
    %v4949 = vcombine.low %v3989, %v3991
    %v4950 = vcombine.high %v3989, %v3991
    %v4952 = vunpack.c.l.s4 1983009808
    %v4953 = vunpack.c.0.s8 %v4952
    %v4954 = vlaneseq
    %v4955 = vshrl.u32 %v4954, 7
    %v4956 = vsub.s32 %v4953, %v4955
    %v4957 = vrot.slane %v4949, %v4956
    %v4959 = vunpack.c.l.s4 1983009808
    %v4960 = vunpack.c.0.s8 %v4959
    %v4961 = vlaneseq
    %v4962 = vshrl.u32 %v4961, 7
    %v4963 = vsub.s32 %v4960, %v4962
    %v4964 = vrot.slane %v4950, %v4963
    %v4965 = vcombine.low %v3990, %v3992
    %v4966 = vcombine.high %v3990, %v3992
    %v4968 = vunpack.c.l.s4 1983009808
    %v4969 = vunpack.c.0.s8 %v4968
    %v4970 = vlaneseq
    %v4971 = vshrl.u32 %v4970, 7
    %v4972 = vsub.s32 %v4969, %v4971
    %v4973 = vrot.slane %v4965, %v4972
    %v4975 = vunpack.c.l.s4 1983009808
    %v4976 = vunpack.c.0.s8 %v4975
    %v4977 = vlaneseq
    %v4978 = vshrl.u32 %v4977, 7
    %v4979 = vsub.s32 %v4976, %v4978
    %v4980 = vrot.slane %v4966, %v4979
    %v4981 = vcombine.low %v3993, %v3995
    %v4982 = vcombine.high %v3993, %v3995
    %v4984 = vunpack.c.l.s4 1983009808
    %v4985 = vunpack.c.0.s8 %v4984
    %v4986 = vlaneseq
    %v4987 = vshrl.u32 %v4986, 7
    %v4988 = vsub.s32 %v4985, %v4987
    %v4989 = vrot.slane %v4981, %v4988
    %v4991 = vunpack.c.l.s4 1983009808
    %v4992 = vunpack.c.0.s8 %v4991
    %v4993 = vlaneseq
    %v4994 = vshrl.u32 %v4993, 7
    %v4995 = vsub.s32 %v4992, %v4994
    %v4996 = vrot.slane %v4982, %v4995
    %v4997 = vcombine.low %v3994, %v3996
    %v4998 = vcombine.high %v3994, %v3996
    %v5000 = vunpack.c.l.s4 1983009808
    %v5001 = vunpack.c.0.s8 %v5000
    %v5002 = vlaneseq
    %v5003 = vshrl.u32 %v5002, 7
    %v5004 = vsub.s32 %v5001, %v5003
    %v5005 = vrot.slane %v4997, %v5004
    %v5007 = vunpack.c.l.s4 1983009808
    %v5008 = vunpack.c.0.s8 %v5007
    %v5009 = vlaneseq
    %v5010 = vshrl.u32 %v5009, 7
    %v5011 = vsub.s32 %v5008, %v5010
    %v5012 = vrot.slane %v4998, %v5011
    %v5013 = vcombine.low %v4957, %v4973
    %v5014 = vcombine.high %v4957, %v4973
    %v5016 = vunpack.c.l.s4 1934713408
    %v5017 = vunpack.c.0.s8 %v5016
    %v5018 = vlaneseq
    %v5019 = vshrl.u32 %v5018, 7
    %v5020 = vsub.s32 %v5017, %v5019
    %v5021 = vrot.slane %v5013, %v5020
    %v5023 = vunpack.c.l.s4 1934713408
    %v5024 = vunpack.c.0.s8 %v5023
    %v5025 = vlaneseq
    %v5026 = vshrl.u32 %v5025, 7
    %v5027 = vsub.s32 %v5024, %v5026
    %v5028 = vrot.slane %v5014, %v5027
    %v5029 = vcombine.low %v4964, %v4980
    %v5030 = vcombine.high %v4964, %v4980
    %v5032 = vunpack.c.l.s4 1934713408
    %v5033 = vunpack.c.0.s8 %v5032
    %v5034 = vlaneseq
    %v5035 = vshrl.u32 %v5034, 7
    %v5036 = vsub.s32 %v5033, %v5035
    %v5037 = vrot.slane %v5029, %v5036
    %v5039 = vunpack.c.l.s4 1934713408
    %v5040 = vunpack.c.0.s8 %v5039
    %v5041 = vlaneseq
    %v5042 = vshrl.u32 %v5041, 7
    %v5043 = vsub.s32 %v5040, %v5042
    %v5044 = vrot.slane %v5030, %v5043
    %v5045 = vcombine.low %v4989, %v5005
    %v5046 = vcombine.high %v4989, %v5005
    %v5048 = vunpack.c.l.s4 1934713408
    %v5049 = vunpack.c.0.s8 %v5048
    %v5050 = vlaneseq
    %v5051 = vshrl.u32 %v5050, 7
    %v5052 = vsub.s32 %v5049, %v5051
    %v5053 = vrot.slane %v5045, %v5052
    %v5055 = vunpack.c.l.s4 1934713408
    %v5056 = vunpack.c.0.s8 %v5055
    %v5057 = vlaneseq
    %v5058 = vshrl.u32 %v5057, 7
    %v5059 = vsub.s32 %v5056, %v5058
    %v5060 = vrot.slane %v5046, %v5059
    %v5061 = vcombine.low %v4996, %v5012
    %v5062 = vcombine.high %v4996, %v5012
    %v5064 = vunpack.c.l.s4 1934713408
    %v5065 = vunpack.c.0.s8 %v5064
    %v5066 = vlaneseq
    %v5067 = vshrl.u32 %v5066, 7
    %v5068 = vsub.s32 %v5065, %v5067
    %v5069 = vrot.slane %v5061, %v5068
    %v5071 = vunpack.c.l.s4 1934713408
    %v5072 = vunpack.c.0.s8 %v5071
    %v5073 = vlaneseq
    %v5074 = vshrl.u32 %v5073, 7
    %v5075 = vsub.s32 %v5072, %v5074
    %v5076 = vrot.slane %v5062, %v5075
    %v5077 = vcombine.low %v5021, %v5053
    %v5078 = vcombine.high %v5021, %v5053
    %v5079 = vcombine.low %v5028, %v5060
    %v5080 = vcombine.high %v5028, %v5060
    %v5081 = vcombine.low %v5037, %v5069
    %v5082 = vcombine.high %v5037, %v5069
    %v5083 = vcombine.low %v5044, %v5076
    %v5084 = vcombine.high %v5044, %v5076
    %v5085 = vcombine.low %v4125, %v4127
    %v5086 = vcombine.high %v4125, %v4127
    %v5088 = vunpack.c.l.s4 1983009808
    %v5089 = vunpack.c.0.s8 %v5088
    %v5090 = vlaneseq
    %v5091 = vshrl.u32 %v5090, 7
    %v5092 = vsub.s32 %v5089, %v5091
    %v5093 = vrot.slane %v5085, %v5092
    %v5095 = vunpack.c.l.s4 1983009808
    %v5096 = vunpack.c.0.s8 %v5095
    %v5097 = vlaneseq
    %v5098 = vshrl.u32 %v5097, 7
    %v5099 = vsub.s32 %v5096, %v5098
    %v5100 = vrot.slane %v5086, %v5099
    %v5101 = vcombine.low %v4126, %v4128
    %v5102 = vcombine.high %v4126, %v4128
    %v5104 = vunpack.c.l.s4 1983009808
    %v5105 = vunpack.c.0.s8 %v5104
    %v5106 = vlaneseq
    %v5107 = vshrl.u32 %v5106, 7
    %v5108 = vsub.s32 %v5105, %v5107
    %v5109 = vrot.slane %v5101, %v5108
    %v5111 = vunpack.c.l.s4 1983009808
    %v5112 = vunpack.c.0.s8 %v5111
    %v5113 = vlaneseq
    %v5114 = vshrl.u32 %v5113, 7
    %v5115 = vsub.s32 %v5112, %v5114
    %v5116 = vrot.slane %v5102, %v5115
    %v5117 = vcombine.low %v4129, %v4131
    %v5118 = vcombine.high %v4129, %v4131
    %v5120 = vunpack.c.l.s4 1983009808
    %v5121 = vunpack.c.0.s8 %v5120
    %v5122 = vlaneseq
    %v5123 = vshrl.u32 %v5122, 7
    %v5124 = vsub.s32 %v5121, %v5123
    %v5125 = vrot.slane %v5117, %v5124
    %v5127 = vunpack.c.l.s4 1983009808
    %v5128 = vunpack.c.0.s8 %v5127
    %v5129 = vlaneseq
    %v5130 = vshrl.u32 %v5129, 7
    %v5131 = vsub.s32 %v5128, %v5130
    %v5132 = vrot.slane %v5118, %v5131
    %v5133 = vcombine.low %v4130, %v4132
    %v5134 = vcombine.high %v4130, %v4132
    %v5136 = vunpack.c.l.s4 1983009808
    %v5137 = vunpack.c.0.s8 %v5136
    %v5138 = vlaneseq
    %v5139 = vshrl.u32 %v5138, 7
    %v5140 = vsub.s32 %v5137, %v5139
    %v5141 = vrot.slane %v5133, %v5140
    %v5143 = vunpack.c.l.s4 1983009808
    %v5144 = vunpack.c.0.s8 %v5143
    %v5145 = vlaneseq
    %v5146 = vshrl.u32 %v5145, 7
    %v5147 = vsub.s32 %v5144, %v5146
    %v5148 = vrot.slane %v5134, %v5147
    %v5149 = vcombine.low %v5093, %v5109
    %v5150 = vcombine.high %v5093, %v5109
    %v5152 = vunpack.c.l.s4 1934713408
    %v5153 = vunpack.c.0.s8 %v5152
    %v5154 = vlaneseq
    %v5155 = vshrl.u32 %v5154, 7
    %v5156 = vsub.s32 %v5153, %v5155
    %v5157 = vrot.slane %v5149, %v5156
    %v5159 = vunpack.c.l.s4 1934713408
    %v5160 = vunpack.c.0.s8 %v5159
    %v5161 = vlaneseq
    %v5162 = vshrl.u32 %v5161, 7
    %v5163 = vsub.s32 %v5160, %v5162
    %v5164 = vrot.slane %v5150, %v5163
    %v5165 = vcombine.low %v5100, %v5116
    %v5166 = vcombine.high %v5100, %v5116
    %v5168 = vunpack.c.l.s4 1934713408
    %v5169 = vunpack.c.0.s8 %v5168
    %v5170 = vlaneseq
    %v5171 = vshrl.u32 %v5170, 7
    %v5172 = vsub.s32 %v5169, %v5171
    %v5173 = vrot.slane %v5165, %v5172
    %v5175 = vunpack.c.l.s4 1934713408
    %v5176 = vunpack.c.0.s8 %v5175
    %v5177 = vlaneseq
    %v5178 = vshrl.u32 %v5177, 7
    %v5179 = vsub.s32 %v5176, %v5178
    %v5180 = vrot.slane %v5166, %v5179
    %v5181 = vcombine.low %v5125, %v5141
    %v5182 = vcombine.high %v5125, %v5141
    %v5184 = vunpack.c.l.s4 1934713408
    %v5185 = vunpack.c.0.s8 %v5184
    %v5186 = vlaneseq
    %v5187 = vshrl.u32 %v5186, 7
    %v5188 = vsub.s32 %v5185, %v5187
    %v5189 = vrot.slane %v5181, %v5188
    %v5191 = vunpack.c.l.s4 1934713408
    %v5192 = vunpack.c.0.s8 %v5191
    %v5193 = vlaneseq
    %v5194 = vshrl.u32 %v5193, 7
    %v5195 = vsub.s32 %v5192, %v5194
    %v5196 = vrot.slane %v5182, %v5195
    %v5197 = vcombine.low %v5132, %v5148
    %v5198 = vcombine.high %v5132, %v5148
    %v5200 = vunpack.c.l.s4 1934713408
    %v5201 = vunpack.c.0.s8 %v5200
    %v5202 = vlaneseq
    %v5203 = vshrl.u32 %v5202, 7
    %v5204 = vsub.s32 %v5201, %v5203
    %v5205 = vrot.slane %v5197, %v5204
    %v5207 = vunpack.c.l.s4 1934713408
    %v5208 = vunpack.c.0.s8 %v5207
    %v5209 = vlaneseq
    %v5210 = vshrl.u32 %v5209, 7
    %v5211 = vsub.s32 %v5208, %v5210
    %v5212 = vrot.slane %v5198, %v5211
    %v5213 = vcombine.low %v5157, %v5189
    %v5214 = vcombine.high %v5157, %v5189
    %v5215 = vcombine.low %v5164, %v5196
    %v5216 = vcombine.high %v5164, %v5196
    %v5217 = vcombine.low %v5173, %v5205
    %v5218 = vcombine.high %v5173, %v5205
    %v5219 = vcombine.low %v5180, %v5212
    %v5220 = vcombine.high %v5180, %v5212
    %v5221 = vcombine.low %v4261, %v4263
    %v5222 = vcombine.high %v4261, %v4263
    %v5224 = vunpack.c.l.s4 1983009808
    %v5225 = vunpack.c.0.s8 %v5224
    %v5226 = vlaneseq
    %v5227 = vshrl.u32 %v5226, 7
    %v5228 = vsub.s32 %v5225, %v5227
    %v5229 = vrot.slane %v5221, %v5228
    %v5231 = vunpack.c.l.s4 1983009808
    %v5232 = vunpack.c.0.s8 %v5231
    %v5233 = vlaneseq
    %v5234 = vshrl.u32 %v5233, 7
    %v5235 = vsub.s32 %v5232, %v5234
    %v5236 = vrot.slane %v5222, %v5235
    %v5237 = vcombine.low %v4262, %v4264
    %v5238 = vcombine.high %v4262, %v4264
    %v5240 = vunpack.c.l.s4 1983009808
    %v5241 = vunpack.c.0.s8 %v5240
    %v5242 = vlaneseq
    %v5243 = vshrl.u32 %v5242, 7
    %v5244 = vsub.s32 %v5241, %v5243
    %v5245 = vrot.slane %v5237, %v5244
    %v5247 = vunpack.c.l.s4 1983009808
    %v5248 = vunpack.c.0.s8 %v5247
    %v5249 = vlaneseq
    %v5250 = vshrl.u32 %v5249, 7
    %v5251 = vsub.s32 %v5248, %v5250
    %v5252 = vrot.slane %v5238, %v5251
    %v5253 = vcombine.low %v4265, %v4267
    %v5254 = vcombine.high %v4265, %v4267
    %v5256 = vunpack.c.l.s4 1983009808
    %v5257 = vunpack.c.0.s8 %v5256
    %v5258 = vlaneseq
    %v5259 = vshrl.u32 %v5258, 7
    %v5260 = vsub.s32 %v5257, %v5259
    %v5261 = vrot.slane %v5253, %v5260
    %v5263 = vunpack.c.l.s4 1983009808
    %v5264 = vunpack.c.0.s8 %v5263
    %v5265 = vlaneseq
    %v5266 = vshrl.u32 %v5265, 7
    %v5267 = vsub.s32 %v5264, %v5266
    %v5268 = vrot.slane %v5254, %v5267
    %v5269 = vcombine.low %v4266, %v4268
    %v5270 = vcombine.high %v4266, %v4268
    %v5272 = vunpack.c.l.s4 1983009808
    %v5273 = vunpack.c.0.s8 %v5272
    %v5274 = vlaneseq
    %v5275 = vshrl.u32 %v5274, 7
    %v5276 = vsub.s32 %v5273, %v5275
    %v5277 = vrot.slane %v5269, %v5276
    %v5279 = vunpack.c.l.s4 1983009808
    %v5280 = vunpack.c.0.s8 %v5279
    %v5281 = vlaneseq
    %v5282 = vshrl.u32 %v5281, 7
    %v5283 = vsub.s32 %v5280, %v5282
    %v5284 = vrot.slane %v5270, %v5283
    %v5285 = vcombine.low %v5229, %v5245
    %v5286 = vcombine.high %v5229, %v5245
    %v5288 = vunpack.c.l.s4 1934713408
    %v5289 = vunpack.c.0.s8 %v5288
    %v5290 = vlaneseq
    %v5291 = vshrl.u32 %v5290, 7
    %v5292 = vsub.s32 %v5289, %v5291
    %v5293 = vrot.slane %v5285, %v5292
    %v5295 = vunpack.c.l.s4 1934713408
    %v5296 = vunpack.c.0.s8 %v5295
    %v5297 = vlaneseq
    %v5298 = vshrl.u32 %v5297, 7
    %v5299 = vsub.s32 %v5296, %v5298
    %v5300 = vrot.slane %v5286, %v5299
    %v5301 = vcombine.low %v5236, %v5252
    %v5302 = vcombine.high %v5236, %v5252
    %v5304 = vunpack.c.l.s4 1934713408
    %v5305 = vunpack.c.0.s8 %v5304
    %v5306 = vlaneseq
    %v5307 = vshrl.u32 %v5306, 7
    %v5308 = vsub.s32 %v5305, %v5307
    %v5309 = vrot.slane %v5301, %v5308
    %v5311 = vunpack.c.l.s4 1934713408
    %v5312 = vunpack.c.0.s8 %v5311
    %v5313 = vlaneseq
    %v5314 = vshrl.u32 %v5313, 7
    %v5315 = vsub.s32 %v5312, %v5314
    %v5316 = vrot.slane %v5302, %v5315
    %v5317 = vcombine.low %v5261, %v5277
    %v5318 = vcombine.high %v5261, %v5277
    %v5320 = vunpack.c.l.s4 1934713408
    %v5321 = vunpack.c.0.s8 %v5320
    %v5322 = vlaneseq
    %v5323 = vshrl.u32 %v5322, 7
    %v5324 = vsub.s32 %v5321, %v5323
    %v5325 = vrot.slane %v5317, %v5324
    %v5327 = vunpack.c.l.s4 1934713408
    %v5328 = vunpack.c.0.s8 %v5327
    %v5329 = vlaneseq
    %v5330 = vshrl.u32 %v5329, 7
    %v5331 = vsub.s32 %v5328, %v5330
    %v5332 = vrot.slane %v5318, %v5331
    %v5333 = vcombine.low %v5268, %v5284
    %v5334 = vcombine.high %v5268, %v5284
    %v5336 = vunpack.c.l.s4 1934713408
    %v5337 = vunpack.c.0.s8 %v5336
    %v5338 = vlaneseq
    %v5339 = vshrl.u32 %v5338, 7
    %v5340 = vsub.s32 %v5337, %v5339
    %v5341 = vrot.slane %v5333, %v5340
    %v5343 = vunpack.c.l.s4 1934713408
    %v5344 = vunpack.c.0.s8 %v5343
    %v5345 = vlaneseq
    %v5346 = vshrl.u32 %v5345, 7
    %v5347 = vsub.s32 %v5344, %v5346
    %v5348 = vrot.slane %v5334, %v5347
    %v5349 = vcombine.low %v5293, %v5325
    %v5350 = vcombine.high %v5293, %v5325
    %v5351 = vcombine.low %v5300, %v5332
    %v5352 = vcombine.high %v5300, %v5332
    %v5353 = vcombine.low %v5309, %v5341
    %v5354 = vcombine.high %v5309, %v5341
    %v5355 = vcombine.low %v5316, %v5348
    %v5356 = vcombine.high %v5316, %v5348
    %5365 = vrot.lane.b32.xlu0 %v4398, 8
    %v5366 = vpop.permute.xlu0 %5365
    %5367 = vrot.lane.b32.xlu0 %v4534, 8
    %v5368 = vpop.permute.xlu0 %5367
    %5369 = vrot.lane.b32.xlu0 %v4670, 8
    %v5370 = vpop.permute.xlu0 %5369
    %5371 = vrot.lane.b32.xlu0 %v4806, 8
    %v5372 = vpop.permute.xlu0 %5371
    %5373 = vrot.lane.b32.xlu0 %v4942, 8
    %v5374 = vpop.permute.xlu0 %5373
    %5375 = vrot.lane.b32.xlu0 %v5078, 8
    %v5376 = vpop.permute.xlu0 %5375
    %5377 = vrot.lane.b32.xlu0 %v5214, 8
    %v5378 = vpop.permute.xlu0 %5377
    %5379 = vrot.lane.b32.xlu0 %v5350, 8
    %v5380 = vpop.permute.xlu0 %5379
    %5397 = vrot.lane.b32.xlu0 %v4399, 16
    %v5398 = vpop.permute.xlu0 %5397
    %5399 = vrot.lane.b32.xlu0 %v4535, 16
    %v5400 = vpop.permute.xlu0 %5399
    %5401 = vrot.lane.b32.xlu0 %v4671, 16
    %v5402 = vpop.permute.xlu0 %5401
    %5403 = vrot.lane.b32.xlu0 %v4807, 16
    %v5404 = vpop.permute.xlu0 %5403
    %5405 = vrot.lane.b32.xlu0 %v4943, 16
    %v5406 = vpop.permute.xlu0 %5405
    %5407 = vrot.lane.b32.xlu0 %v5079, 16
    %v5408 = vpop.permute.xlu0 %5407
    %5409 = vrot.lane.b32.xlu0 %v5215, 16
    %v5410 = vpop.permute.xlu0 %5409
    %5411 = vrot.lane.b32.xlu0 %v5351, 16
    %v5412 = vpop.permute.xlu0 %5411
    %5429 = vrot.lane.b32.xlu0 %v4400, 24
    %v5430 = vpop.permute.xlu0 %5429
    %5431 = vrot.lane.b32.xlu0 %v4536, 24
    %v5432 = vpop.permute.xlu0 %5431
    %5433 = vrot.lane.b32.xlu0 %v4672, 24
    %v5434 = vpop.permute.xlu0 %5433
    %5435 = vrot.lane.b32.xlu0 %v4808, 24
    %v5436 = vpop.permute.xlu0 %5435
    %5437 = vrot.lane.b32.xlu0 %v4944, 24
    %v5438 = vpop.permute.xlu0 %5437
    %5439 = vrot.lane.b32.xlu0 %v5080, 24
    %v5440 = vpop.permute.xlu0 %5439
    %5441 = vrot.lane.b32.xlu0 %v5216, 24
    %v5442 = vpop.permute.xlu0 %5441
    %5443 = vrot.lane.b32.xlu0 %v5352, 24
    %v5444 = vpop.permute.xlu0 %5443
    %5461 = vrot.lane.b32.xlu0 %v4401, 32
    %v5462 = vpop.permute.xlu0 %5461
    %5463 = vrot.lane.b32.xlu0 %v4537, 32
    %v5464 = vpop.permute.xlu0 %5463
    %5465 = vrot.lane.b32.xlu0 %v4673, 32
    %v5466 = vpop.permute.xlu0 %5465
    %5467 = vrot.lane.b32.xlu0 %v4809, 32
    %v5468 = vpop.permute.xlu0 %5467
    %5469 = vrot.lane.b32.xlu0 %v4945, 32
    %v5470 = vpop.permute.xlu0 %5469
    %5471 = vrot.lane.b32.xlu0 %v5081, 32
    %v5472 = vpop.permute.xlu0 %5471
    %5473 = vrot.lane.b32.xlu0 %v5217, 32
    %v5474 = vpop.permute.xlu0 %5473
    %5475 = vrot.lane.b32.xlu0 %v5353, 32
    %v5476 = vpop.permute.xlu0 %5475
    %5493 = vrot.lane.b32.xlu0 %v4402, 40
    %v5494 = vpop.permute.xlu0 %5493
    %5495 = vrot.lane.b32.xlu0 %v4538, 40
    %v5496 = vpop.permute.xlu0 %5495
    %5497 = vrot.lane.b32.xlu0 %v4674, 40
    %v5498 = vpop.permute.xlu0 %5497
    %5499 = vrot.lane.b32.xlu0 %v4810, 40
    %v5500 = vpop.permute.xlu0 %5499
    %5501 = vrot.lane.b32.xlu0 %v4946, 40
    %v5502 = vpop.permute.xlu0 %5501
    %5503 = vrot.lane.b32.xlu0 %v5082, 40
    %v5504 = vpop.permute.xlu0 %5503
    %5505 = vrot.lane.b32.xlu0 %v5218, 40
    %v5506 = vpop.permute.xlu0 %5505
    %5507 = vrot.lane.b32.xlu0 %v5354, 40
    %v5508 = vpop.permute.xlu0 %5507
    %5525 = vrot.lane.b32.xlu0 %v4403, 48
    %v5526 = vpop.permute.xlu0 %5525
    %5527 = vrot.lane.b32.xlu0 %v4539, 48
    %v5528 = vpop.permute.xlu0 %5527
    %5529 = vrot.lane.b32.xlu0 %v4675, 48
    %v5530 = vpop.permute.xlu0 %5529
    %5531 = vrot.lane.b32.xlu0 %v4811, 48
    %v5532 = vpop.permute.xlu0 %5531
    %5533 = vrot.lane.b32.xlu0 %v4947, 48
    %v5534 = vpop.permute.xlu0 %5533
    %5535 = vrot.lane.b32.xlu0 %v5083, 48
    %v5536 = vpop.permute.xlu0 %5535
    %5537 = vrot.lane.b32.xlu0 %v5219, 48
    %v5538 = vpop.permute.xlu0 %5537
    %5539 = vrot.lane.b32.xlu0 %v5355, 48
    %v5540 = vpop.permute.xlu0 %5539
    %5557 = vrot.lane.b32.xlu0 %v4404, 56
    %v5558 = vpop.permute.xlu0 %5557
    %5559 = vrot.lane.b32.xlu0 %v4540, 56
    %v5560 = vpop.permute.xlu0 %5559
    %5561 = vrot.lane.b32.xlu0 %v4676, 56
    %v5562 = vpop.permute.xlu0 %5561
    %5563 = vrot.lane.b32.xlu0 %v4812, 56
    %v5564 = vpop.permute.xlu0 %5563
    %5565 = vrot.lane.b32.xlu0 %v4948, 56
    %v5566 = vpop.permute.xlu0 %5565
    %5567 = vrot.lane.b32.xlu0 %v5084, 56
    %v5568 = vpop.permute.xlu0 %5567
    %5569 = vrot.lane.b32.xlu0 %v5220, 56
    %v5570 = vpop.permute.xlu0 %5569
    %5571 = vrot.lane.b32.xlu0 %v5356, 56
    %v5572 = vpop.permute.xlu0 %5571
    %v5581 = vsel %vm979, %v4397, %v5366
    %v5582 = vsel %vm979, %v4533, %v5368
    %v5583 = vsel %vm979, %v4669, %v5370
    %v5584 = vsel %vm979, %v4805, %v5372
    %v5585 = vsel %vm979, %v4941, %v5374
    %v5586 = vsel %vm979, %v5077, %v5376
    %v5587 = vsel %vm979, %v5213, %v5378
    %v5588 = vsel %vm979, %v5349, %v5380
    %vm5589 = vcmask 130048
    %v5590 = vsel %vm5589, %v5581, %v5398
    %v5591 = vsel %vm5589, %v5582, %v5400
    %v5592 = vsel %vm5589, %v5583, %v5402
    %v5593 = vsel %vm5589, %v5584, %v5404
    %v5594 = vsel %vm5589, %v5585, %v5406
    %v5595 = vsel %vm5589, %v5586, %v5408
    %v5596 = vsel %vm5589, %v5587, %v5410
    %v5597 = vsel %vm5589, %v5588, %v5412
    %vm5598 = vcmask 195584
    %v5599 = vsel %vm5598, %v5590, %v5430
    %v5600 = vsel %vm5598, %v5591, %v5432
    %v5601 = vsel %vm5598, %v5592, %v5434
    %v5602 = vsel %vm5598, %v5593, %v5436
    %v5603 = vsel %vm5598, %v5594, %v5438
    %v5604 = vsel %vm5598, %v5595, %v5440
    %v5605 = vsel %vm5598, %v5596, %v5442
    %v5606 = vsel %vm5598, %v5597, %v5444
    %vm5607 = vcmask 261120
    %v5608 = vsel %vm5607, %v5599, %v5462
    %v5609 = vsel %vm5607, %v5600, %v5464
    %v5610 = vsel %vm5607, %v5601, %v5466
    %v5611 = vsel %vm5607, %v5602, %v5468
    %v5612 = vsel %vm5607, %v5603, %v5470
    %v5613 = vsel %vm5607, %v5604, %v5472
    %v5614 = vsel %vm5607, %v5605, %v5474
    %v5615 = vsel %vm5607, %v5606, %v5476
    %vm5616 = vcmask 326656
    %v5617 = vsel %vm5616, %v5608, %v5494
    %v5618 = vsel %vm5616, %v5609, %v5496
    %v5619 = vsel %vm5616, %v5610, %v5498
    %v5620 = vsel %vm5616, %v5611, %v5500
    %v5621 = vsel %vm5616, %v5612, %v5502
    %v5622 = vsel %vm5616, %v5613, %v5504
    %v5623 = vsel %vm5616, %v5614, %v5506
    %v5624 = vsel %vm5616, %v5615, %v5508
    %vm5625 = vcmask 392192
    %v5626 = vsel %vm5625, %v5617, %v5526
    %v5627 = vsel %vm5625, %v5618, %v5528
    %v5628 = vsel %vm5625, %v5619, %v5530
    %v5629 = vsel %vm5625, %v5620, %v5532
    %v5630 = vsel %vm5625, %v5621, %v5534
    %v5631 = vsel %vm5625, %v5622, %v5536
    %v5632 = vsel %vm5625, %v5623, %v5538
    %v5633 = vsel %vm5625, %v5624, %v5540
    %vm5634 = vcmask 457728
    %v5635 = vsel %vm5634, %v5626, %v5558
    %v5636 = vsel %vm5634, %v5627, %v5560
    %v5637 = vsel %vm5634, %v5628, %v5562
    %v5638 = vsel %vm5634, %v5629, %v5564
    %v5639 = vsel %vm5634, %v5630, %v5566
    %v5640 = vsel %vm5634, %v5631, %v5568
    %v5641 = vsel %vm5634, %v5632, %v5570
    %v5642 = vsel %vm5634, %v5633, %v5572
    %v5643 = vpack.c.bf16 %v5636, %v5635
    %v5644 = vpack.c.bf16 %v5638, %v5637
    %v5645 = vpack.c.bf16 %v5640, %v5639
    %v5646 = vpack.c.bf16 %v5642, %v5641
    %v5647 = vld [vmem:[#allocation10] sm:$0xf]
    %v5648 = vld [vmem:[#allocation10 + $0x4] sm:$0xf]
    %v5649 = vld [vmem:[#allocation10 + $0x8] sm:$0xf]
    %v5650 = vld [vmem:[#allocation10 + $0xc] sm:$0xf]
    %v5651 = vld [vmem:[#allocation10 + $0x10] sm:$0xf]
    %v5652 = vld [vmem:[#allocation10 + $0x14] sm:$0xf]
    %v5653 = vld [vmem:[#allocation10 + $0x18] sm:$0xf]
    %v5654 = vld [vmem:[#allocation10 + $0x1c] sm:$0xf]
    %v5655 = vld [vmem:[%s8] sm:$0x1]
    %v5657 = vlaneseq
    %v5658 = vshrl.u32 %v5657, 7
    %v5659 = vsub.s32 0, %v5658
    %v5660 = vrot.slane %v5655, %v5659
    %v5670 = vunpack.c.l.b16 %v5647
    %v5671 = vunpack.c.l.b16 %v5648
    %v5672 = vunpack.c.l.b16 %v5649
    %v5673 = vunpack.c.l.b16 %v5650
    %v5674 = vunpack.c.l.b16 %v5651
    %v5675 = vunpack.c.l.b16 %v5652
    %v5676 = vunpack.c.l.b16 %v5653
    %v5677 = vunpack.c.l.b16 %v5654
    %v5678 = vpack.c.b16 %v5671, %v5670
    %v5679 = vpack.c.b16 %v5673, %v5672
    %v5680 = vpack.c.b16 %v5675, %v5674
    %v5681 = vpack.c.b16 %v5677, %v5676
    %v5687 = vsel %vm197, %v5643, 0
    %v5690 = vsel %vm197, %v5644, 0
    %v5693 = vsel %vm197, %v5645, 0
    %v5696 = vsel %vm197, %v5646, 0
    %5698 = vmatprep.subr.bf16.mxu0 0
    %5699 = vmatpush1.bf16.msra.mxu0 0
    %5700 = vmatprep.subr.bf16.mxu0 0
    %5701 = vmatpush1.bf16.msra.mxu0 0
    %5702 = vmatprep.subr.bf16.mxu0 0
    %5703 = vmatpush1.bf16.msra.mxu0 0
    %5704 = vmatprep.subr.bf16.mxu0 0
    %5705 = vmatpush1.bf16.msra.mxu0 0
    %5706 = vmatprep.subr.bf16.mxu0 0
    %5707 = vmatpush1.bf16.msra.mxu0 %v5681
    %5708 = vmatprep.subr.bf16.mxu0 0
    %5709 = vmatpush1.bf16.msra.mxu0 %v5680
    %5710 = vmatprep.subr.bf16.mxu0 0
    %5711 = vmatpush1.bf16.msra.mxu0 %v5679
    %5712 = vmatprep.subr.bf16.mxu0 0
    %5713 = vmatpush1.bf16.msra.mxu0 %v5678
    %5714 = vmatprep.subr.bf16.mxu0 0
    %5715 = vmatpush2.bf16.msra.mxu0 0
    %5716 = vmatprep.subr.bf16.mxu0 0
    %5717 = vmatpush2.bf16.msra.mxu0 0
    %5718 = vmatprep.subr.bf16.mxu0 0
    %5719 = vmatpush2.bf16.msra.mxu0 0
    %5720 = vmatprep.subr.bf16.mxu0 0
    %5721 = vmatpush2.bf16.msra.mxu0 0
    %5722 = vmatprep.subr.bf16.mxu0 0
    %5723 = vmatpush2.bf16.msra.mxu0 0
    %5724 = vmatprep.subr.bf16.mxu0 0
    %5725 = vmatpush2.bf16.msra.mxu0 0
    %5726 = vmatprep.subr.bf16.mxu0 0
    %5727 = vmatpush2.bf16.msra.mxu0 0
    %5728 = vmatprep.subr.bf16.mxu0 0
    %5729 = vmatpush2.bf16.msra.mxu0 0
    %5730 = vmatprep.mubr.bf16.mxu0 0
    %5731 = vmatmul.mubr.bf16.gmra.mxu0 %v5687
    %v5732 = vpop.f32.mrf.mxu0
    %v5733 = vadd.f32 %v5660, %v5732
    %v5734 = vpop.f32.mrf.mxu0
    %v5735 = vpop.f32.mrf.mxu0
    %v5736 = vadd.f32 %v5660, %v5735
    %v5737 = vpop.f32.mrf.mxu0
    %5738 = vmatprep.mubr.bf16.mxu0 0
    %5739 = vmatmul.mubr.bf16.gmra.mxu0 %v5690
    %v5740 = vpop.f32.mrf.mxu0
    %v5741 = vadd.f32 %v5660, %v5740
    %v5742 = vpop.f32.mrf.mxu0
    %v5743 = vpop.f32.mrf.mxu0
    %v5744 = vadd.f32 %v5660, %v5743
    %v5745 = vpop.f32.mrf.mxu0
    %5746 = vmatprep.mubr.bf16.mxu0 0
    %5747 = vmatmul.mubr.bf16.gmra.mxu0 %v5693
    %v5748 = vpop.f32.mrf.mxu0
    %v5749 = vadd.f32 %v5660, %v5748
    %v5750 = vpop.f32.mrf.mxu0
    %v5751 = vpop.f32.mrf.mxu0
    %v5752 = vadd.f32 %v5660, %v5751
    %v5753 = vpop.f32.mrf.mxu0
    %5754 = vmatprep.mubr.bf16.mxu0 0
    %5755 = vmatmul.mubr.bf16.gmra.mxu0 %v5696
    %v5756 = vpop.f32.mrf.mxu0
    %v5757 = vadd.f32 %v5660, %v5756
    %v5758 = vpop.f32.mrf.mxu0
    %v5759 = vpop.f32.mrf.mxu0
    %v5760 = vadd.f32 %v5660, %v5759
    %v5761 = vpop.f32.mrf.mxu0
    %5762 = vdwg.mxu0
    %5763 = vst.msk [vmem:[#allocation11] sm:$0xff] %vm197, %v5733
    %5764 = vst.msk [vmem:[#allocation11 + $0x8] sm:$0xff] %vm197, %v5736
    %5765 = vst.msk [vmem:[#allocation11 + $0x10] sm:$0xff] %vm197, %v5741
    %5766 = vst.msk [vmem:[#allocation11 + $0x18] sm:$0xff] %vm197, %v5744
    %5767 = vst.msk [vmem:[#allocation11 + $0x20] sm:$0xff] %vm197, %v5749
    %5768 = vst.msk [vmem:[#allocation11 + $0x28] sm:$0xff] %vm197, %v5752
    %5769 = vst.msk [vmem:[#allocation11 + $0x30] sm:$0xff] %vm197, %v5757
    %5770 = vst.msk [vmem:[#allocation11 + $0x38] sm:$0xff] %vm197, %v5760
    %5775 = vrot.lane.b32.xlu0 %v323, 120
    %v5776 = vpop.permute.xlu0 %5775
    %5777 = vrot.lane.b32.xlu0 %v324, 120
    %v5778 = vpop.permute.xlu0 %5777
    %5779 = vrot.lane.b32.xlu0 %v325, 120
    %v5780 = vpop.permute.xlu0 %5779
    %5781 = vrot.lane.b32.xlu0 %v326, 120
    %v5782 = vpop.permute.xlu0 %5781
    %5783 = vrot.lane.b32.xlu0 %v323, 112
    %v5784 = vpop.permute.xlu0 %5783
    %5785 = vrot.lane.b32.xlu0 %v324, 112
    %v5786 = vpop.permute.xlu0 %5785
    %5787 = vrot.lane.b32.xlu0 %v325, 112
    %v5788 = vpop.permute.xlu0 %5787
    %5789 = vrot.lane.b32.xlu0 %v326, 112
    %v5790 = vpop.permute.xlu0 %5789
    %5791 = vrot.lane.b32.xlu0 %v323, 104
    %v5792 = vpop.permute.xlu0 %5791
    %5793 = vrot.lane.b32.xlu0 %v324, 104
    %v5794 = vpop.permute.xlu0 %5793
    %5795 = vrot.lane.b32.xlu0 %v325, 104
    %v5796 = vpop.permute.xlu0 %5795
    %5797 = vrot.lane.b32.xlu0 %v326, 104
    %v5798 = vpop.permute.xlu0 %5797
    %5799 = vrot.lane.b32.xlu0 %v323, 96
    %v5800 = vpop.permute.xlu0 %5799
    %5801 = vrot.lane.b32.xlu0 %v324, 96
    %v5802 = vpop.permute.xlu0 %5801
    %5803 = vrot.lane.b32.xlu0 %v325, 96
    %v5804 = vpop.permute.xlu0 %5803
    %5805 = vrot.lane.b32.xlu0 %v326, 96
    %v5806 = vpop.permute.xlu0 %5805
    %5807 = vrot.lane.b32.xlu0 %v323, 88
    %v5808 = vpop.permute.xlu0 %5807
    %5809 = vrot.lane.b32.xlu0 %v324, 88
    %v5810 = vpop.permute.xlu0 %5809
    %5811 = vrot.lane.b32.xlu0 %v325, 88
    %v5812 = vpop.permute.xlu0 %5811
    %5813 = vrot.lane.b32.xlu0 %v326, 88
    %v5814 = vpop.permute.xlu0 %5813
    %5815 = vrot.lane.b32.xlu0 %v323, 80
    %v5816 = vpop.permute.xlu0 %5815
    %5817 = vrot.lane.b32.xlu0 %v324, 80
    %v5818 = vpop.permute.xlu0 %5817
    %5819 = vrot.lane.b32.xlu0 %v325, 80
    %v5820 = vpop.permute.xlu0 %5819
    %5821 = vrot.lane.b32.xlu0 %v326, 80
    %v5822 = vpop.permute.xlu0 %5821
    %5823 = vrot.lane.b32.xlu0 %v323, 72
    %v5824 = vpop.permute.xlu0 %5823
    %5825 = vrot.lane.b32.xlu0 %v324, 72
    %v5826 = vpop.permute.xlu0 %5825
    %5827 = vrot.lane.b32.xlu0 %v325, 72
    %v5828 = vpop.permute.xlu0 %5827
    %5829 = vrot.lane.b32.xlu0 %v326, 72
    %v5830 = vpop.permute.xlu0 %5829
    %5835 = vrot.lane.b32.xlu0 %v467, 120
    %v5836 = vpop.permute.xlu0 %5835
    %5837 = vrot.lane.b32.xlu0 %v468, 120
    %v5838 = vpop.permute.xlu0 %5837
    %5839 = vrot.lane.b32.xlu0 %v469, 120
    %v5840 = vpop.permute.xlu0 %5839
    %5841 = vrot.lane.b32.xlu0 %v470, 120
    %v5842 = vpop.permute.xlu0 %5841
    %5847 = vrot.lane.b32.xlu0 %v467, 112
    %v5848 = vpop.permute.xlu0 %5847
    %5849 = vrot.lane.b32.xlu0 %v468, 112
    %v5850 = vpop.permute.xlu0 %5849
    %5851 = vrot.lane.b32.xlu0 %v469, 112
    %v5852 = vpop.permute.xlu0 %5851
    %5853 = vrot.lane.b32.xlu0 %v470, 112
    %v5854 = vpop.permute.xlu0 %5853
    %5859 = vrot.lane.b32.xlu0 %v467, 104
    %v5860 = vpop.permute.xlu0 %5859
    %5861 = vrot.lane.b32.xlu0 %v468, 104
    %v5862 = vpop.permute.xlu0 %5861
    %5863 = vrot.lane.b32.xlu0 %v469, 104
    %v5864 = vpop.permute.xlu0 %5863
    %5865 = vrot.lane.b32.xlu0 %v470, 104
    %v5866 = vpop.permute.xlu0 %5865
    %5871 = vrot.lane.b32.xlu0 %v467, 96
    %v5872 = vpop.permute.xlu0 %5871
    %5873 = vrot.lane.b32.xlu0 %v468, 96
    %v5874 = vpop.permute.xlu0 %5873
    %5875 = vrot.lane.b32.xlu0 %v469, 96
    %v5876 = vpop.permute.xlu0 %5875
    %5877 = vrot.lane.b32.xlu0 %v470, 96
    %v5878 = vpop.permute.xlu0 %5877
    %5883 = vrot.lane.b32.xlu0 %v467, 88
    %v5884 = vpop.permute.xlu0 %5883
    %5885 = vrot.lane.b32.xlu0 %v468, 88
    %v5886 = vpop.permute.xlu0 %5885
    %5887 = vrot.lane.b32.xlu0 %v469, 88
    %v5888 = vpop.permute.xlu0 %5887
    %5889 = vrot.lane.b32.xlu0 %v470, 88
    %v5890 = vpop.permute.xlu0 %5889
    %5895 = vrot.lane.b32.xlu0 %v467, 80
    %v5896 = vpop.permute.xlu0 %5895
    %5897 = vrot.lane.b32.xlu0 %v468, 80
    %v5898 = vpop.permute.xlu0 %5897
    %5899 = vrot.lane.b32.xlu0 %v469, 80
    %v5900 = vpop.permute.xlu0 %5899
    %5901 = vrot.lane.b32.xlu0 %v470, 80
    %v5902 = vpop.permute.xlu0 %5901
    %5907 = vrot.lane.b32.xlu0 %v467, 72
    %v5908 = vpop.permute.xlu0 %5907
    %5909 = vrot.lane.b32.xlu0 %v468, 72
    %v5910 = vpop.permute.xlu0 %5909
    %5911 = vrot.lane.b32.xlu0 %v469, 72
    %v5912 = vpop.permute.xlu0 %5911
    %5913 = vrot.lane.b32.xlu0 %v470, 72
    %v5914 = vpop.permute.xlu0 %5913
    %5923 = vrot.lane.b32.xlu0 %v611, 120
    %v5924 = vpop.permute.xlu0 %5923
    %5925 = vrot.lane.b32.xlu0 %v612, 120
    %v5926 = vpop.permute.xlu0 %5925
    %5927 = vrot.lane.b32.xlu0 %v613, 120
    %v5928 = vpop.permute.xlu0 %5927
    %5929 = vrot.lane.b32.xlu0 %v614, 120
    %v5930 = vpop.permute.xlu0 %5929
    %5935 = vrot.lane.b32.xlu0 %v611, 112
    %v5936 = vpop.permute.xlu0 %5935
    %5937 = vrot.lane.b32.xlu0 %v612, 112
    %v5938 = vpop.permute.xlu0 %5937
    %5939 = vrot.lane.b32.xlu0 %v613, 112
    %v5940 = vpop.permute.xlu0 %5939
    %5941 = vrot.lane.b32.xlu0 %v614, 112
    %v5942 = vpop.permute.xlu0 %5941
    %5947 = vrot.lane.b32.xlu0 %v611, 104
    %v5948 = vpop.permute.xlu0 %5947
    %5949 = vrot.lane.b32.xlu0 %v612, 104
    %v5950 = vpop.permute.xlu0 %5949
    %5951 = vrot.lane.b32.xlu0 %v613, 104
    %v5952 = vpop.permute.xlu0 %5951
    %5953 = vrot.lane.b32.xlu0 %v614, 104
    %v5954 = vpop.permute.xlu0 %5953
    %5959 = vrot.lane.b32.xlu0 %v611, 96
    %v5960 = vpop.permute.xlu0 %5959
    %5961 = vrot.lane.b32.xlu0 %v612, 96
    %v5962 = vpop.permute.xlu0 %5961
    %5963 = vrot.lane.b32.xlu0 %v613, 96
    %v5964 = vpop.permute.xlu0 %5963
    %5965 = vrot.lane.b32.xlu0 %v614, 96
    %v5966 = vpop.permute.xlu0 %5965
    %5971 = vrot.lane.b32.xlu0 %v611, 88
    %v5972 = vpop.permute.xlu0 %5971
    %5973 = vrot.lane.b32.xlu0 %v612, 88
    %v5974 = vpop.permute.xlu0 %5973
    %5975 = vrot.lane.b32.xlu0 %v613, 88
    %v5976 = vpop.permute.xlu0 %5975
    %5977 = vrot.lane.b32.xlu0 %v614, 88
    %v5978 = vpop.permute.xlu0 %5977
    %5983 = vrot.lane.b32.xlu0 %v611, 80
    %v5984 = vpop.permute.xlu0 %5983
    %5985 = vrot.lane.b32.xlu0 %v612, 80
    %v5986 = vpop.permute.xlu0 %5985
    %5987 = vrot.lane.b32.xlu0 %v613, 80
    %v5988 = vpop.permute.xlu0 %5987
    %5989 = vrot.lane.b32.xlu0 %v614, 80
    %v5990 = vpop.permute.xlu0 %5989
    %5995 = vrot.lane.b32.xlu0 %v611, 72
    %v5996 = vpop.permute.xlu0 %5995
    %5997 = vrot.lane.b32.xlu0 %v612, 72
    %v5998 = vpop.permute.xlu0 %5997
    %5999 = vrot.lane.b32.xlu0 %v613, 72
    %v6000 = vpop.permute.xlu0 %5999
    %6001 = vrot.lane.b32.xlu0 %v614, 72
    %v6002 = vpop.permute.xlu0 %6001
    %6007 = vxpose.xlu0.c.b16.start [1/8] %v467, 128
    %6008 = vxpose.xlu0.c.b16.cont [2/8] %v468, 128
    %6009 = vxpose.xlu0.c.b16.cont [3/8] %v469, 128
    %6010 = vxpose.xlu0.c.b16.cont [4/8] %v470, 128
    %6011 = vxpose.xlu0.c.b16.cont [5/8] 0, 128
    %6012 = vxpose.xlu0.c.b16.cont [6/8] 0, 128
    %6013 = vxpose.xlu0.c.b16.cont [7/8] 0, 128
    %6014 = vxpose.xlu0.c.b16.end [8/8] 0, 128
    %v6015 = vpop.trf.xlu0
    %v6016 = vpop.trf.xlu0
    %v6017 = vpop.trf.xlu0
    %v6018 = vpop.trf.xlu0
    %v6019 = vpop.trf.xlu0
    %v6020 = vpop.trf.xlu0
    %v6021 = vpop.trf.xlu0
    %v6022 = vpop.trf.xlu0
    %6023 = vxpose.xlu0.c.b16.start [1/8] %v5836, 128
    %6024 = vxpose.xlu0.c.b16.cont [2/8] %v5838, 128
    %6025 = vxpose.xlu0.c.b16.cont [3/8] %v5840, 128
    %6026 = vxpose.xlu0.c.b16.cont [4/8] %v5842, 128
    %6027 = vxpose.xlu0.c.b16.cont [5/8] 0, 128
    %6028 = vxpose.xlu0.c.b16.cont [6/8] 0, 128
    %6029 = vxpose.xlu0.c.b16.cont [7/8] 0, 128
    %6030 = vxpose.xlu0.c.b16.end [8/8] 0, 128
    %v6031 = vpop.trf.xlu0
    %v6032 = vpop.trf.xlu0
    %v6033 = vpop.trf.xlu0
    %v6034 = vpop.trf.xlu0
    %v6035 = vpop.trf.xlu0
    %v6036 = vpop.trf.xlu0
    %v6037 = vpop.trf.xlu0
    %v6038 = vpop.trf.xlu0
    %6039 = vxpose.xlu0.c.b16.start [1/8] %v5848, 128
    %6040 = vxpose.xlu0.c.b16.cont [2/8] %v5850, 128
    %6041 = vxpose.xlu0.c.b16.cont [3/8] %v5852, 128
    %6042 = vxpose.xlu0.c.b16.cont [4/8] %v5854, 128
    %6043 = vxpose.xlu0.c.b16.cont [5/8] 0, 128
    %6044 = vxpose.xlu0.c.b16.cont [6/8] 0, 128
    %6045 = vxpose.xlu0.c.b16.cont [7/8] 0, 128
    %6046 = vxpose.xlu0.c.b16.end [8/8] 0, 128
    %v6047 = vpop.trf.xlu0
    %v6048 = vpop.trf.xlu0
    %v6049 = vpop.trf.xlu0
    %v6050 = vpop.trf.xlu0
    %v6051 = vpop.trf.xlu0
    %v6052 = vpop.trf.xlu0
    %v6053 = vpop.trf.xlu0
    %v6054 = vpop.trf.xlu0
    %6055 = vxpose.xlu0.c.b16.start [1/8] %v5860, 128
    %6056 = vxpose.xlu0.c.b16.cont [2/8] %v5862, 128
    %6057 = vxpose.xlu0.c.b16.cont [3/8] %v5864, 128
    %6058 = vxpose.xlu0.c.b16.cont [4/8] %v5866, 128
    %6059 = vxpose.xlu0.c.b16.cont [5/8] 0, 128
    %6060 = vxpose.xlu0.c.b16.cont [6/8] 0, 128
    %6061 = vxpose.xlu0.c.b16.cont [7/8] 0, 128
    %6062 = vxpose.xlu0.c.b16.end [8/8] 0, 128
    %v6063 = vpop.trf.xlu0
    %v6064 = vpop.trf.xlu0
    %v6065 = vpop.trf.xlu0
    %v6066 = vpop.trf.xlu0
    %v6067 = vpop.trf.xlu0
    %v6068 = vpop.trf.xlu0
    %v6069 = vpop.trf.xlu0
    %v6070 = vpop.trf.xlu0
    %6071 = vxpose.xlu0.c.b16.start [1/8] %v5872, 128
    %6072 = vxpose.xlu0.c.b16.cont [2/8] %v5874, 128
    %6073 = vxpose.xlu0.c.b16.cont [3/8] %v5876, 128
    %6074 = vxpose.xlu0.c.b16.cont [4/8] %v5878, 128
    %6075 = vxpose.xlu0.c.b16.cont [5/8] 0, 128
    %6076 = vxpose.xlu0.c.b16.cont [6/8] 0, 128
    %6077 = vxpose.xlu0.c.b16.cont [7/8] 0, 128
    %6078 = vxpose.xlu0.c.b16.end [8/8] 0, 128
    %v6079 = vpop.trf.xlu0
    %v6080 = vpop.trf.xlu0
    %v6081 = vpop.trf.xlu0
    %v6082 = vpop.trf.xlu0
    %v6083 = vpop.trf.xlu0
    %v6084 = vpop.trf.xlu0
    %v6085 = vpop.trf.xlu0
    %v6086 = vpop.trf.xlu0
    %6087 = vxpose.xlu0.c.b16.start [1/8] %v5884, 128
    %6088 = vxpose.xlu0.c.b16.cont [2/8] %v5886, 128
    %6089 = vxpose.xlu0.c.b16.cont [3/8] %v5888, 128
    %6090 = vxpose.xlu0.c.b16.cont [4/8] %v5890, 128
    %6091 = vxpose.xlu0.c.b16.cont [5/8] 0, 128
    %6092 = vxpose.xlu0.c.b16.cont [6/8] 0, 128
    %6093 = vxpose.xlu0.c.b16.cont [7/8] 0, 128
    %6094 = vxpose.xlu0.c.b16.end [8/8] 0, 128
    %v6095 = vpop.trf.xlu0
    %v6096 = vpop.trf.xlu0
    %v6097 = vpop.trf.xlu0
    %v6098 = vpop.trf.xlu0
    %v6099 = vpop.trf.xlu0
    %v6100 = vpop.trf.xlu0
    %v6101 = vpop.trf.xlu0
    %v6102 = vpop.trf.xlu0
    %6103 = vxpose.xlu0.c.b16.start [1/8] %v5896, 128
    %6104 = vxpose.xlu0.c.b16.cont [2/8] %v5898, 128
    %6105 = vxpose.xlu0.c.b16.cont [3/8] %v5900, 128
    %6106 = vxpose.xlu0.c.b16.cont [4/8] %v5902, 128
    %6107 = vxpose.xlu0.c.b16.cont [5/8] 0, 128
    %6108 = vxpose.xlu0.c.b16.cont [6/8] 0, 128
    %6109 = vxpose.xlu0.c.b16.cont [7/8] 0, 128
    %6110 = vxpose.xlu0.c.b16.end [8/8] 0, 128
    %v6111 = vpop.trf.xlu0
    %v6112 = vpop.trf.xlu0
    %v6113 = vpop.trf.xlu0
    %v6114 = vpop.trf.xlu0
    %v6115 = vpop.trf.xlu0
    %v6116 = vpop.trf.xlu0
    %v6117 = vpop.trf.xlu0
    %v6118 = vpop.trf.xlu0
    %6119 = vxpose.xlu0.c.b16.start [1/8] %v5908, 128
    %6120 = vxpose.xlu0.c.b16.cont [2/8] %v5910, 128
    %6121 = vxpose.xlu0.c.b16.cont [3/8] %v5912, 128
    %6122 = vxpose.xlu0.c.b16.cont [4/8] %v5914, 128
    %6123 = vxpose.xlu0.c.b16.cont [5/8] 0, 128
    %6124 = vxpose.xlu0.c.b16.cont [6/8] 0, 128
    %6125 = vxpose.xlu0.c.b16.cont [7/8] 0, 128
    %6126 = vxpose.xlu0.c.b16.end [8/8] 0, 128
    %v6127 = vpop.trf.xlu0
    %v6128 = vpop.trf.xlu0
    %v6129 = vpop.trf.xlu0
    %v6130 = vpop.trf.xlu0
    %v6131 = vpop.trf.xlu0
    %v6132 = vpop.trf.xlu0
    %v6133 = vpop.trf.xlu0
    %v6134 = vpop.trf.xlu0
    %v6136 = vsel %vm979, %v323, 0
    %v6139 = vsel %vm979, %v324, 0
    %v6142 = vsel %vm979, %v325, 0
    %v6145 = vsel %vm979, %v326, 0
    %v6148 = vsel %vm992, %v6015, 0
    %6150 = vmatprep.subr.bf16.mxu0 0
    %6151 = vmatpush1.bf16.msra.mxu0 0
    %6152 = vmatprep.subr.bf16.mxu0 0
    %6153 = vmatpush1.bf16.msra.mxu0 0
    %6154 = vmatprep.subr.bf16.mxu0 0
    %6155 = vmatpush1.bf16.msra.mxu0 0
    %6156 = vmatprep.subr.bf16.mxu0 0
    %6157 = vmatpush1.bf16.msra.mxu0 0
    %6158 = vmatprep.subr.bf16.mxu0 0
    %6159 = vmatpush1.bf16.msra.mxu0 0
    %6160 = vmatprep.subr.bf16.mxu0 0
    %6161 = vmatpush1.bf16.msra.mxu0 0
    %6162 = vmatprep.subr.bf16.mxu0 0
    %6163 = vmatpush1.bf16.msra.mxu0 0
    %6164 = vmatprep.subr.bf16.mxu0 0
    %6165 = vmatpush1.bf16.msra.mxu0 %v6148
    %6166 = vmatprep.subr.bf16.mxu0 0
    %6167 = vmatpush2.bf16.msra.mxu0 0
    %6168 = vmatprep.subr.bf16.mxu0 0
    %6169 = vmatpush2.bf16.msra.mxu0 0
    %6170 = vmatprep.subr.bf16.mxu0 0
    %6171 = vmatpush2.bf16.msra.mxu0 0
    %6172 = vmatprep.subr.bf16.mxu0 0
    %6173 = vmatpush2.bf16.msra.mxu0 0
    %6174 = vmatprep.subr.bf16.mxu0 0
    %6175 = vmatpush2.bf16.msra.mxu0 0
    %6176 = vmatprep.subr.bf16.mxu0 0
    %6177 = vmatpush2.bf16.msra.mxu0 0
    %6178 = vmatprep.subr.bf16.mxu0 0
    %6179 = vmatpush2.bf16.msra.mxu0 0
    %6180 = vmatprep.subr.bf16.mxu0 0
    %6181 = vmatpush2.bf16.msra.mxu0 0
    %6182 = vmatprep.mubr.bf16.mxu0 0
    %6183 = vmatmul.mubr.bf16.gmra.mxu0 %v6136
    %v6184 = vpop.f32.mrf.mxu0
    %v6185 = vadd.f32 0.0, %v6184
    %v6186 = vpop.f32.mrf.mxu0
    %v6187 = vpop.f32.mrf.mxu0
    %v6188 = vadd.f32 0.0, %v6187
    %v6189 = vpop.f32.mrf.mxu0
    %6190 = vmatprep.mubr.bf16.mxu0 0
    %6191 = vmatmul.mubr.bf16.gmra.mxu0 %v6139
    %v6192 = vpop.f32.mrf.mxu0
    %v6193 = vadd.f32 0.0, %v6192
    %v6194 = vpop.f32.mrf.mxu0
    %v6195 = vpop.f32.mrf.mxu0
    %v6196 = vadd.f32 0.0, %v6195
    %v6197 = vpop.f32.mrf.mxu0
    %6198 = vmatprep.mubr.bf16.mxu0 0
    %6199 = vmatmul.mubr.bf16.gmra.mxu0 %v6142
    %v6200 = vpop.f32.mrf.mxu0
    %v6201 = vadd.f32 0.0, %v6200
    %v6202 = vpop.f32.mrf.mxu0
    %v6203 = vpop.f32.mrf.mxu0
    %v6204 = vadd.f32 0.0, %v6203
    %v6205 = vpop.f32.mrf.mxu0
    %6206 = vmatprep.mubr.bf16.mxu0 0
    %6207 = vmatmul.mubr.bf16.gmra.mxu0 %v6145
    %v6208 = vpop.f32.mrf.mxu0
    %v6209 = vadd.f32 0.0, %v6208
    %v6210 = vpop.f32.mrf.mxu0
    %v6211 = vpop.f32.mrf.mxu0
    %v6212 = vadd.f32 0.0, %v6211
    %v6213 = vpop.f32.mrf.mxu0
    %6214 = vdwg.mxu0
    %v6216 = vsel %vm979, %v5776, 0
    %v6219 = vsel %vm979, %v5778, 0
    %v6222 = vsel %vm979, %v5780, 0
    %v6225 = vsel %vm979, %v5782, 0
    %v6228 = vsel %vm992, %v6031, 0
    %6230 = vmatprep.subr.bf16.mxu0 0
    %6231 = vmatpush1.bf16.msra.mxu0 0
    %6232 = vmatprep.subr.bf16.mxu0 0
    %6233 = vmatpush1.bf16.msra.mxu0 0
    %6234 = vmatprep.subr.bf16.mxu0 0
    %6235 = vmatpush1.bf16.msra.mxu0 0
    %6236 = vmatprep.subr.bf16.mxu0 0
    %6237 = vmatpush1.bf16.msra.mxu0 0
    %6238 = vmatprep.subr.bf16.mxu0 0
    %6239 = vmatpush1.bf16.msra.mxu0 0
    %6240 = vmatprep.subr.bf16.mxu0 0
    %6241 = vmatpush1.bf16.msra.mxu0 0
    %6242 = vmatprep.subr.bf16.mxu0 0
    %6243 = vmatpush1.bf16.msra.mxu0 0
    %6244 = vmatprep.subr.bf16.mxu0 0
    %6245 = vmatpush1.bf16.msra.mxu0 %v6228
    %6246 = vmatprep.subr.bf16.mxu0 0
    %6247 = vmatpush2.bf16.msra.mxu0 0
    %6248 = vmatprep.subr.bf16.mxu0 0
    %6249 = vmatpush2.bf16.msra.mxu0 0
    %6250 = vmatprep.subr.bf16.mxu0 0
    %6251 = vmatpush2.bf16.msra.mxu0 0
    %6252 = vmatprep.subr.bf16.mxu0 0
    %6253 = vmatpush2.bf16.msra.mxu0 0
    %6254 = vmatprep.subr.bf16.mxu0 0
    %6255 = vmatpush2.bf16.msra.mxu0 0
    %6256 = vmatprep.subr.bf16.mxu0 0
    %6257 = vmatpush2.bf16.msra.mxu0 0
    %6258 = vmatprep.subr.bf16.mxu0 0
    %6259 = vmatpush2.bf16.msra.mxu0 0
    %6260 = vmatprep.subr.bf16.mxu0 0
    %6261 = vmatpush2.bf16.msra.mxu0 0
    %6262 = vmatprep.mubr.bf16.mxu0 0
    %6263 = vmatmul.mubr.bf16.gmra.mxu0 %v6216
    %v6264 = vpop.f32.mrf.mxu0
    %v6265 = vadd.f32 0.0, %v6264
    %v6266 = vpop.f32.mrf.mxu0
    %v6267 = vpop.f32.mrf.mxu0
    %v6268 = vadd.f32 0.0, %v6267
    %v6269 = vpop.f32.mrf.mxu0
    %6270 = vmatprep.mubr.bf16.mxu0 0
    %6271 = vmatmul.mubr.bf16.gmra.mxu0 %v6219
    %v6272 = vpop.f32.mrf.mxu0
    %v6273 = vadd.f32 0.0, %v6272
    %v6274 = vpop.f32.mrf.mxu0
    %v6275 = vpop.f32.mrf.mxu0
    %v6276 = vadd.f32 0.0, %v6275
    %v6277 = vpop.f32.mrf.mxu0
    %6278 = vmatprep.mubr.bf16.mxu0 0
    %6279 = vmatmul.mubr.bf16.gmra.mxu0 %v6222
    %v6280 = vpop.f32.mrf.mxu0
    %v6281 = vadd.f32 0.0, %v6280
    %v6282 = vpop.f32.mrf.mxu0
    %v6283 = vpop.f32.mrf.mxu0
    %v6284 = vadd.f32 0.0, %v6283
    %v6285 = vpop.f32.mrf.mxu0
    %6286 = vmatprep.mubr.bf16.mxu0 0
    %6287 = vmatmul.mubr.bf16.gmra.mxu0 %v6225
    %v6288 = vpop.f32.mrf.mxu0
    %v6289 = vadd.f32 0.0, %v6288
    %v6290 = vpop.f32.mrf.mxu0
    %v6291 = vpop.f32.mrf.mxu0
    %v6292 = vadd.f32 0.0, %v6291
    %v6293 = vpop.f32.mrf.mxu0
    %6294 = vdwg.mxu0
    %v6296 = vsel %vm979, %v5784, 0
    %v6299 = vsel %vm979, %v5786, 0
    %v6302 = vsel %vm979, %v5788, 0
    %v6305 = vsel %vm979, %v5790, 0
    %v6308 = vsel %vm992, %v6047, 0
    %6310 = vmatprep.subr.bf16.mxu0 0
    %6311 = vmatpush1.bf16.msra.mxu0 0
    %6312 = vmatprep.subr.bf16.mxu0 0
    %6313 = vmatpush1.bf16.msra.mxu0 0
    %6314 = vmatprep.subr.bf16.mxu0 0
    %6315 = vmatpush1.bf16.msra.mxu0 0
    %6316 = vmatprep.subr.bf16.mxu0 0
    %6317 = vmatpush1.bf16.msra.mxu0 0
    %6318 = vmatprep.subr.bf16.mxu0 0
    %6319 = vmatpush1.bf16.msra.mxu0 0
    %6320 = vmatprep.subr.bf16.mxu0 0
    %6321 = vmatpush1.bf16.msra.mxu0 0
    %6322 = vmatprep.subr.bf16.mxu0 0
    %6323 = vmatpush1.bf16.msra.mxu0 0
    %6324 = vmatprep.subr.bf16.mxu0 0
    %6325 = vmatpush1.bf16.msra.mxu0 %v6308
    %6326 = vmatprep.subr.bf16.mxu0 0
    %6327 = vmatpush2.bf16.msra.mxu0 0
    %6328 = vmatprep.subr.bf16.mxu0 0
    %6329 = vmatpush2.bf16.msra.mxu0 0
    %6330 = vmatprep.subr.bf16.mxu0 0
    %6331 = vmatpush2.bf16.msra.mxu0 0
    %6332 = vmatprep.subr.bf16.mxu0 0
    %6333 = vmatpush2.bf16.msra.mxu0 0
    %6334 = vmatprep.subr.bf16.mxu0 0
    %6335 = vmatpush2.bf16.msra.mxu0 0
    %6336 = vmatprep.subr.bf16.mxu0 0
    %6337 = vmatpush2.bf16.msra.mxu0 0
    %6338 = vmatprep.subr.bf16.mxu0 0
    %6339 = vmatpush2.bf16.msra.mxu0 0
    %6340 = vmatprep.subr.bf16.mxu0 0
    %6341 = vmatpush2.bf16.msra.mxu0 0
    %6342 = vmatprep.mubr.bf16.mxu0 0
    %6343 = vmatmul.mubr.bf16.gmra.mxu0 %v6296
    %v6344 = vpop.f32.mrf.mxu0
    %v6345 = vadd.f32 0.0, %v6344
    %v6346 = vpop.f32.mrf.mxu0
    %v6347 = vpop.f32.mrf.mxu0
    %v6348 = vadd.f32 0.0, %v6347
    %v6349 = vpop.f32.mrf.mxu0
    %6350 = vmatprep.mubr.bf16.mxu0 0
    %6351 = vmatmul.mubr.bf16.gmra.mxu0 %v6299
    %v6352 = vpop.f32.mrf.mxu0
    %v6353 = vadd.f32 0.0, %v6352
    %v6354 = vpop.f32.mrf.mxu0
    %v6355 = vpop.f32.mrf.mxu0
    %v6356 = vadd.f32 0.0, %v6355
    %v6357 = vpop.f32.mrf.mxu0
    %6358 = vmatprep.mubr.bf16.mxu0 0
    %6359 = vmatmul.mubr.bf16.gmra.mxu0 %v6302
    %v6360 = vpop.f32.mrf.mxu0
    %v6361 = vadd.f32 0.0, %v6360
    %v6362 = vpop.f32.mrf.mxu0
    %v6363 = vpop.f32.mrf.mxu0
    %v6364 = vadd.f32 0.0, %v6363
    %v6365 = vpop.f32.mrf.mxu0
    %6366 = vmatprep.mubr.bf16.mxu0 0
    %6367 = vmatmul.mubr.bf16.gmra.mxu0 %v6305
    %v6368 = vpop.f32.mrf.mxu0
    %v6369 = vadd.f32 0.0, %v6368
    %v6370 = vpop.f32.mrf.mxu0
    %v6371 = vpop.f32.mrf.mxu0
    %v6372 = vadd.f32 0.0, %v6371
    %v6373 = vpop.f32.mrf.mxu0
    %6374 = vdwg.mxu0
    %v6376 = vsel %vm979, %v5792, 0
    %v6379 = vsel %vm979, %v5794, 0
    %v6382 = vsel %vm979, %v5796, 0
    %v6385 = vsel %vm979, %v5798, 0
    %v6388 = vsel %vm992, %v6063, 0
    %6390 = vmatprep.subr.bf16.mxu0 0
    %6391 = vmatpush1.bf16.msra.mxu0 0
    %6392 = vmatprep.subr.bf16.mxu0 0
    %6393 = vmatpush1.bf16.msra.mxu0 0
    %6394 = vmatprep.subr.bf16.mxu0 0
    %6395 = vmatpush1.bf16.msra.mxu0 0
    %6396 = vmatprep.subr.bf16.mxu0 0
    %6397 = vmatpush1.bf16.msra.mxu0 0
    %6398 = vmatprep.subr.bf16.mxu0 0
    %6399 = vmatpush1.bf16.msra.mxu0 0
    %6400 = vmatprep.subr.bf16.mxu0 0
    %6401 = vmatpush1.bf16.msra.mxu0 0
    %6402 = vmatprep.subr.bf16.mxu0 0
    %6403 = vmatpush1.bf16.msra.mxu0 0
    %6404 = vmatprep.subr.bf16.mxu0 0
    %6405 = vmatpush1.bf16.msra.mxu0 %v6388
    %6406 = vmatprep.subr.bf16.mxu0 0
    %6407 = vmatpush2.bf16.msra.mxu0 0
    %6408 = vmatprep.subr.bf16.mxu0 0
    %6409 = vmatpush2.bf16.msra.mxu0 0
    %6410 = vmatprep.subr.bf16.mxu0 0
    %6411 = vmatpush2.bf16.msra.mxu0 0
    %6412 = vmatprep.subr.bf16.mxu0 0
    %6413 = vmatpush2.bf16.msra.mxu0 0
    %6414 = vmatprep.subr.bf16.mxu0 0
    %6415 = vmatpush2.bf16.msra.mxu0 0
    %6416 = vmatprep.subr.bf16.mxu0 0
    %6417 = vmatpush2.bf16.msra.mxu0 0
    %6418 = vmatprep.subr.bf16.mxu0 0
    %6419 = vmatpush2.bf16.msra.mxu0 0
    %6420 = vmatprep.subr.bf16.mxu0 0
    %6421 = vmatpush2.bf16.msra.mxu0 0
    %6422 = vmatprep.mubr.bf16.mxu0 0
    %6423 = vmatmul.mubr.bf16.gmra.mxu0 %v6376
    %v6424 = vpop.f32.mrf.mxu0
    %v6425 = vadd.f32 0.0, %v6424
    %v6426 = vpop.f32.mrf.mxu0
    %v6427 = vpop.f32.mrf.mxu0
    %v6428 = vadd.f32 0.0, %v6427
    %v6429 = vpop.f32.mrf.mxu0
    %6430 = vmatprep.mubr.bf16.mxu0 0
    %6431 = vmatmul.mubr.bf16.gmra.mxu0 %v6379
    %v6432 = vpop.f32.mrf.mxu0
    %v6433 = vadd.f32 0.0, %v6432
    %v6434 = vpop.f32.mrf.mxu0
    %v6435 = vpop.f32.mrf.mxu0
    %v6436 = vadd.f32 0.0, %v6435
    %v6437 = vpop.f32.mrf.mxu0
    %6438 = vmatprep.mubr.bf16.mxu0 0
    %6439 = vmatmul.mubr.bf16.gmra.mxu0 %v6382
    %v6440 = vpop.f32.mrf.mxu0
    %v6441 = vadd.f32 0.0, %v6440
    %v6442 = vpop.f32.mrf.mxu0
    %v6443 = vpop.f32.mrf.mxu0
    %v6444 = vadd.f32 0.0, %v6443
    %v6445 = vpop.f32.mrf.mxu0
    %6446 = vmatprep.mubr.bf16.mxu0 0
    %6447 = vmatmul.mubr.bf16.gmra.mxu0 %v6385
    %v6448 = vpop.f32.mrf.mxu0
    %v6449 = vadd.f32 0.0, %v6448
    %v6450 = vpop.f32.mrf.mxu0
    %v6451 = vpop.f32.mrf.mxu0
    %v6452 = vadd.f32 0.0, %v6451
    %v6453 = vpop.f32.mrf.mxu0
    %6454 = vdwg.mxu0
    %v6456 = vsel %vm979, %v5800, 0
    %v6459 = vsel %vm979, %v5802, 0
    %v6462 = vsel %vm979, %v5804, 0
    %v6465 = vsel %vm979, %v5806, 0
    %v6468 = vsel %vm992, %v6079, 0
    %6470 = vmatprep.subr.bf16.mxu0 0
    %6471 = vmatpush1.bf16.msra.mxu0 0
    %6472 = vmatprep.subr.bf16.mxu0 0
    %6473 = vmatpush1.bf16.msra.mxu0 0
    %6474 = vmatprep.subr.bf16.mxu0 0
    %6475 = vmatpush1.bf16.msra.mxu0 0
    %6476 = vmatprep.subr.bf16.mxu0 0
    %6477 = vmatpush1.bf16.msra.mxu0 0
    %6478 = vmatprep.subr.bf16.mxu0 0
    %6479 = vmatpush1.bf16.msra.mxu0 0
    %6480 = vmatprep.subr.bf16.mxu0 0
    %6481 = vmatpush1.bf16.msra.mxu0 0
    %6482 = vmatprep.subr.bf16.mxu0 0
    %6483 = vmatpush1.bf16.msra.mxu0 0
    %6484 = vmatprep.subr.bf16.mxu0 0
    %6485 = vmatpush1.bf16.msra.mxu0 %v6468
    %6486 = vmatprep.subr.bf16.mxu0 0
    %6487 = vmatpush2.bf16.msra.mxu0 0
    %6488 = vmatprep.subr.bf16.mxu0 0
    %6489 = vmatpush2.bf16.msra.mxu0 0
    %6490 = vmatprep.subr.bf16.mxu0 0
    %6491 = vmatpush2.bf16.msra.mxu0 0
    %6492 = vmatprep.subr.bf16.mxu0 0
    %6493 = vmatpush2.bf16.msra.mxu0 0
    %6494 = vmatprep.subr.bf16.mxu0 0
    %6495 = vmatpush2.bf16.msra.mxu0 0
    %6496 = vmatprep.subr.bf16.mxu0 0
    %6497 = vmatpush2.bf16.msra.mxu0 0
    %6498 = vmatprep.subr.bf16.mxu0 0
    %6499 = vmatpush2.bf16.msra.mxu0 0
    %6500 = vmatprep.subr.bf16.mxu0 0
    %6501 = vmatpush2.bf16.msra.mxu0 0
    %6502 = vmatprep.mubr.bf16.mxu0 0
    %6503 = vmatmul.mubr.bf16.gmra.mxu0 %v6456
    %v6504 = vpop.f32.mrf.mxu0
    %v6505 = vadd.f32 0.0, %v6504
    %v6506 = vpop.f32.mrf.mxu0
    %v6507 = vpop.f32.mrf.mxu0
    %v6508 = vadd.f32 0.0, %v6507
    %v6509 = vpop.f32.mrf.mxu0
    %6510 = vmatprep.mubr.bf16.mxu0 0
    %6511 = vmatmul.mubr.bf16.gmra.mxu0 %v6459
    %v6512 = vpop.f32.mrf.mxu0
    %v6513 = vadd.f32 0.0, %v6512
    %v6514 = vpop.f32.mrf.mxu0
    %v6515 = vpop.f32.mrf.mxu0
    %v6516 = vadd.f32 0.0, %v6515
    %v6517 = vpop.f32.mrf.mxu0
    %6518 = vmatprep.mubr.bf16.mxu0 0
    %6519 = vmatmul.mubr.bf16.gmra.mxu0 %v6462
    %v6520 = vpop.f32.mrf.mxu0
    %v6521 = vadd.f32 0.0, %v6520
    %v6522 = vpop.f32.mrf.mxu0
    %v6523 = vpop.f32.mrf.mxu0
    %v6524 = vadd.f32 0.0, %v6523
    %v6525 = vpop.f32.mrf.mxu0
    %6526 = vmatprep.mubr.bf16.mxu0 0
    %6527 = vmatmul.mubr.bf16.gmra.mxu0 %v6465
    %v6528 = vpop.f32.mrf.mxu0
    %v6529 = vadd.f32 0.0, %v6528
    %v6530 = vpop.f32.mrf.mxu0
    %v6531 = vpop.f32.mrf.mxu0
    %v6532 = vadd.f32 0.0, %v6531
    %v6533 = vpop.f32.mrf.mxu0
    %6534 = vdwg.mxu0
    %v6536 = vsel %vm979, %v5808, 0
    %v6539 = vsel %vm979, %v5810, 0
    %v6542 = vsel %vm979, %v5812, 0
    %v6545 = vsel %vm979, %v5814, 0
    %v6548 = vsel %vm992, %v6095, 0
    %6550 = vmatprep.subr.bf16.mxu0 0
    %6551 = vmatpush1.bf16.msra.mxu0 0
    %6552 = vmatprep.subr.bf16.mxu0 0
    %6553 = vmatpush1.bf16.msra.mxu0 0
    %6554 = vmatprep.subr.bf16.mxu0 0
    %6555 = vmatpush1.bf16.msra.mxu0 0
    %6556 = vmatprep.subr.bf16.mxu0 0
    %6557 = vmatpush1.bf16.msra.mxu0 0
    %6558 = vmatprep.subr.bf16.mxu0 0
    %6559 = vmatpush1.bf16.msra.mxu0 0
    %6560 = vmatprep.subr.bf16.mxu0 0
    %6561 = vmatpush1.bf16.msra.mxu0 0
    %6562 = vmatprep.subr.bf16.mxu0 0
    %6563 = vmatpush1.bf16.msra.mxu0 0
    %6564 = vmatprep.subr.bf16.mxu0 0
    %6565 = vmatpush1.bf16.msra.mxu0 %v6548
    %6566 = vmatprep.subr.bf16.mxu0 0
    %6567 = vmatpush2.bf16.msra.mxu0 0
    %6568 = vmatprep.subr.bf16.mxu0 0
    %6569 = vmatpush2.bf16.msra.mxu0 0
    %6570 = vmatprep.subr.bf16.mxu0 0
    %6571 = vmatpush2.bf16.msra.mxu0 0
    %6572 = vmatprep.subr.bf16.mxu0 0
    %6573 = vmatpush2.bf16.msra.mxu0 0
    %6574 = vmatprep.subr.bf16.mxu0 0
    %6575 = vmatpush2.bf16.msra.mxu0 0
    %6576 = vmatprep.subr.bf16.mxu0 0
    %6577 = vmatpush2.bf16.msra.mxu0 0
    %6578 = vmatprep.subr.bf16.mxu0 0
    %6579 = vmatpush2.bf16.msra.mxu0 0
    %6580 = vmatprep.subr.bf16.mxu0 0
    %6581 = vmatpush2.bf16.msra.mxu0 0
    %6582 = vmatprep.mubr.bf16.mxu0 0
    %6583 = vmatmul.mubr.bf16.gmra.mxu0 %v6536
    %v6584 = vpop.f32.mrf.mxu0
    %v6585 = vadd.f32 0.0, %v6584
    %v6586 = vpop.f32.mrf.mxu0
    %v6587 = vpop.f32.mrf.mxu0
    %v6588 = vadd.f32 0.0, %v6587
    %v6589 = vpop.f32.mrf.mxu0
    %6590 = vmatprep.mubr.bf16.mxu0 0
    %6591 = vmatmul.mubr.bf16.gmra.mxu0 %v6539
    %v6592 = vpop.f32.mrf.mxu0
    %v6593 = vadd.f32 0.0, %v6592
    %v6594 = vpop.f32.mrf.mxu0
    %v6595 = vpop.f32.mrf.mxu0
    %v6596 = vadd.f32 0.0, %v6595
    %v6597 = vpop.f32.mrf.mxu0
    %6598 = vmatprep.mubr.bf16.mxu0 0
    %6599 = vmatmul.mubr.bf16.gmra.mxu0 %v6542
    %v6600 = vpop.f32.mrf.mxu0
    %v6601 = vadd.f32 0.0, %v6600
    %v6602 = vpop.f32.mrf.mxu0
    %v6603 = vpop.f32.mrf.mxu0
    %v6604 = vadd.f32 0.0, %v6603
    %v6605 = vpop.f32.mrf.mxu0
    %6606 = vmatprep.mubr.bf16.mxu0 0
    %6607 = vmatmul.mubr.bf16.gmra.mxu0 %v6545
    %v6608 = vpop.f32.mrf.mxu0
    %v6609 = vadd.f32 0.0, %v6608
    %v6610 = vpop.f32.mrf.mxu0
    %v6611 = vpop.f32.mrf.mxu0
    %v6612 = vadd.f32 0.0, %v6611
    %v6613 = vpop.f32.mrf.mxu0
    %6614 = vdwg.mxu0
    %v6616 = vsel %vm979, %v5816, 0
    %v6619 = vsel %vm979, %v5818, 0
    %v6622 = vsel %vm979, %v5820, 0
    %v6625 = vsel %vm979, %v5822, 0
    %v6628 = vsel %vm992, %v6111, 0
    %6630 = vmatprep.subr.bf16.mxu0 0
    %6631 = vmatpush1.bf16.msra.mxu0 0
    %6632 = vmatprep.subr.bf16.mxu0 0
    %6633 = vmatpush1.bf16.msra.mxu0 0
    %6634 = vmatprep.subr.bf16.mxu0 0
    %6635 = vmatpush1.bf16.msra.mxu0 0
    %6636 = vmatprep.subr.bf16.mxu0 0
    %6637 = vmatpush1.bf16.msra.mxu0 0
    %6638 = vmatprep.subr.bf16.mxu0 0
    %6639 = vmatpush1.bf16.msra.mxu0 0
    %6640 = vmatprep.subr.bf16.mxu0 0
    %6641 = vmatpush1.bf16.msra.mxu0 0
    %6642 = vmatprep.subr.bf16.mxu0 0
    %6643 = vmatpush1.bf16.msra.mxu0 0
    %6644 = vmatprep.subr.bf16.mxu0 0
    %6645 = vmatpush1.bf16.msra.mxu0 %v6628
    %6646 = vmatprep.subr.bf16.mxu0 0
    %6647 = vmatpush2.bf16.msra.mxu0 0
    %6648 = vmatprep.subr.bf16.mxu0 0
    %6649 = vmatpush2.bf16.msra.mxu0 0
    %6650 = vmatprep.subr.bf16.mxu0 0
    %6651 = vmatpush2.bf16.msra.mxu0 0
    %6652 = vmatprep.subr.bf16.mxu0 0
    %6653 = vmatpush2.bf16.msra.mxu0 0
    %6654 = vmatprep.subr.bf16.mxu0 0
    %6655 = vmatpush2.bf16.msra.mxu0 0
    %6656 = vmatprep.subr.bf16.mxu0 0
    %6657 = vmatpush2.bf16.msra.mxu0 0
    %6658 = vmatprep.subr.bf16.mxu0 0
    %6659 = vmatpush2.bf16.msra.mxu0 0
    %6660 = vmatprep.subr.bf16.mxu0 0
    %6661 = vmatpush2.bf16.msra.mxu0 0
    %6662 = vmatprep.mubr.bf16.mxu0 0
    %6663 = vmatmul.mubr.bf16.gmra.mxu0 %v6616
    %v6664 = vpop.f32.mrf.mxu0
    %v6665 = vadd.f32 0.0, %v6664
    %v6666 = vpop.f32.mrf.mxu0
    %v6667 = vpop.f32.mrf.mxu0
    %v6668 = vadd.f32 0.0, %v6667
    %v6669 = vpop.f32.mrf.mxu0
    %6670 = vmatprep.mubr.bf16.mxu0 0
    %6671 = vmatmul.mubr.bf16.gmra.mxu0 %v6619
    %v6672 = vpop.f32.mrf.mxu0
    %v6673 = vadd.f32 0.0, %v6672
    %v6674 = vpop.f32.mrf.mxu0
    %v6675 = vpop.f32.mrf.mxu0
    %v6676 = vadd.f32 0.0, %v6675
    %v6677 = vpop.f32.mrf.mxu0
    %6678 = vmatprep.mubr.bf16.mxu0 0
    %6679 = vmatmul.mubr.bf16.gmra.mxu0 %v6622
    %v6680 = vpop.f32.mrf.mxu0
    %v6681 = vadd.f32 0.0, %v6680
    %v6682 = vpop.f32.mrf.mxu0
    %v6683 = vpop.f32.mrf.mxu0
    %v6684 = vadd.f32 0.0, %v6683
    %v6685 = vpop.f32.mrf.mxu0
    %6686 = vmatprep.mubr.bf16.mxu0 0
    %6687 = vmatmul.mubr.bf16.gmra.mxu0 %v6625
    %v6688 = vpop.f32.mrf.mxu0
    %v6689 = vadd.f32 0.0, %v6688
    %v6690 = vpop.f32.mrf.mxu0
    %v6691 = vpop.f32.mrf.mxu0
    %v6692 = vadd.f32 0.0, %v6691
    %v6693 = vpop.f32.mrf.mxu0
    %6694 = vdwg.mxu0
    %v6696 = vsel %vm979, %v5824, 0
    %v6699 = vsel %vm979, %v5826, 0
    %v6702 = vsel %vm979, %v5828, 0
    %v6705 = vsel %vm979, %v5830, 0
    %v6708 = vsel %vm992, %v6127, 0
    %6710 = vmatprep.subr.bf16.mxu0 0
    %6711 = vmatpush1.bf16.msra.mxu0 0
    %6712 = vmatprep.subr.bf16.mxu0 0
    %6713 = vmatpush1.bf16.msra.mxu0 0
    %6714 = vmatprep.subr.bf16.mxu0 0
    %6715 = vmatpush1.bf16.msra.mxu0 0
    %6716 = vmatprep.subr.bf16.mxu0 0
    %6717 = vmatpush1.bf16.msra.mxu0 0
    %6718 = vmatprep.subr.bf16.mxu0 0
    %6719 = vmatpush1.bf16.msra.mxu0 0
    %6720 = vmatprep.subr.bf16.mxu0 0
    %6721 = vmatpush1.bf16.msra.mxu0 0
    %6722 = vmatprep.subr.bf16.mxu0 0
    %6723 = vmatpush1.bf16.msra.mxu0 0
    %6724 = vmatprep.subr.bf16.mxu0 0
    %6725 = vmatpush1.bf16.msra.mxu0 %v6708
    %6726 = vmatprep.subr.bf16.mxu0 0
    %6727 = vmatpush2.bf16.msra.mxu0 0
    %6728 = vmatprep.subr.bf16.mxu0 0
    %6729 = vmatpush2.bf16.msra.mxu0 0
    %6730 = vmatprep.subr.bf16.mxu0 0
    %6731 = vmatpush2.bf16.msra.mxu0 0
    %6732 = vmatprep.subr.bf16.mxu0 0
    %6733 = vmatpush2.bf16.msra.mxu0 0
    %6734 = vmatprep.subr.bf16.mxu0 0
    %6735 = vmatpush2.bf16.msra.mxu0 0
    %6736 = vmatprep.subr.bf16.mxu0 0
    %6737 = vmatpush2.bf16.msra.mxu0 0
    %6738 = vmatprep.subr.bf16.mxu0 0
    %6739 = vmatpush2.bf16.msra.mxu0 0
    %6740 = vmatprep.subr.bf16.mxu0 0
    %6741 = vmatpush2.bf16.msra.mxu0 0
    %6742 = vmatprep.mubr.bf16.mxu0 0
    %6743 = vmatmul.mubr.bf16.gmra.mxu0 %v6696
    %v6744 = vpop.f32.mrf.mxu0
    %v6745 = vadd.f32 0.0, %v6744
    %v6746 = vpop.f32.mrf.mxu0
    %v6747 = vpop.f32.mrf.mxu0
    %v6748 = vadd.f32 0.0, %v6747
    %v6749 = vpop.f32.mrf.mxu0
    %6750 = vmatprep.mubr.bf16.mxu0 0
    %6751 = vmatmul.mubr.bf16.gmra.mxu0 %v6699
    %v6752 = vpop.f32.mrf.mxu0
    %v6753 = vadd.f32 0.0, %v6752
    %v6754 = vpop.f32.mrf.mxu0
    %v6755 = vpop.f32.mrf.mxu0
    %v6756 = vadd.f32 0.0, %v6755
    %v6757 = vpop.f32.mrf.mxu0
    %6758 = vmatprep.mubr.bf16.mxu0 0
    %6759 = vmatmul.mubr.bf16.gmra.mxu0 %v6702
    %v6760 = vpop.f32.mrf.mxu0
    %v6761 = vadd.f32 0.0, %v6760
    %v6762 = vpop.f32.mrf.mxu0
    %v6763 = vpop.f32.mrf.mxu0
    %v6764 = vadd.f32 0.0, %v6763
    %v6765 = vpop.f32.mrf.mxu0
    %6766 = vmatprep.mubr.bf16.mxu0 0
    %6767 = vmatmul.mubr.bf16.gmra.mxu0 %v6705
    %v6768 = vpop.f32.mrf.mxu0
    %v6769 = vadd.f32 0.0, %v6768
    %v6770 = vpop.f32.mrf.mxu0
    %v6771 = vpop.f32.mrf.mxu0
    %v6772 = vadd.f32 0.0, %v6771
    %v6773 = vpop.f32.mrf.mxu0
    %6774 = vdwg.mxu0
    %v6775 = vsel %vm197, %v6185, -inf
    %6776 = vmax.xlane.f32.xlu0 %v6775
    %v6777 = vpop.xlane.xlu0 %6776
    %v6778 = vsel %vm197, %v6188, -inf
    %6779 = vmax.xlane.f32.xlu0 %v6778
    %v6780 = vpop.xlane.xlu0 %6779
    %v6781 = vsel %vm197, %v6193, -inf
    %6782 = vmax.xlane.f32.xlu0 %v6781
    %v6783 = vpop.xlane.xlu0 %6782
    %v6784 = vsel %vm197, %v6196, -inf
    %6785 = vmax.xlane.f32.xlu0 %v6784
    %v6786 = vpop.xlane.xlu0 %6785
    %v6787 = vsel %vm197, %v6201, -inf
    %6788 = vmax.xlane.f32.xlu0 %v6787
    %v6789 = vpop.xlane.xlu0 %6788
    %v6790 = vsel %vm197, %v6204, -inf
    %6791 = vmax.xlane.f32.xlu0 %v6790
    %v6792 = vpop.xlane.xlu0 %6791
    %v6793 = vsel %vm197, %v6209, -inf
    %6794 = vmax.xlane.f32.xlu0 %v6793
    %v6795 = vpop.xlane.xlu0 %6794
    %v6796 = vsel %vm197, %v6212, -inf
    %6797 = vmax.xlane.f32.xlu0 %v6796
    %v6798 = vpop.xlane.xlu0 %6797
    %v6799 = vsel %vm197, %v6265, -inf
    %6800 = vmax.xlane.f32.xlu0 %v6799
    %v6801 = vpop.xlane.xlu0 %6800
    %v6802 = vsel %vm197, %v6268, -inf
    %6803 = vmax.xlane.f32.xlu0 %v6802
    %v6804 = vpop.xlane.xlu0 %6803
    %v6805 = vsel %vm197, %v6273, -inf
    %6806 = vmax.xlane.f32.xlu0 %v6805
    %v6807 = vpop.xlane.xlu0 %6806
    %v6808 = vsel %vm197, %v6276, -inf
    %6809 = vmax.xlane.f32.xlu0 %v6808
    %v6810 = vpop.xlane.xlu0 %6809
    %v6811 = vsel %vm197, %v6281, -inf
    %6812 = vmax.xlane.f32.xlu0 %v6811
    %v6813 = vpop.xlane.xlu0 %6812
    %v6814 = vsel %vm197, %v6284, -inf
    %6815 = vmax.xlane.f32.xlu0 %v6814
    %v6816 = vpop.xlane.xlu0 %6815
    %v6817 = vsel %vm197, %v6289, -inf
    %6818 = vmax.xlane.f32.xlu0 %v6817
    %v6819 = vpop.xlane.xlu0 %6818
    %v6820 = vsel %vm197, %v6292, -inf
    %6821 = vmax.xlane.f32.xlu0 %v6820
    %v6822 = vpop.xlane.xlu0 %6821
    %v6823 = vsel %vm197, %v6345, -inf
    %6824 = vmax.xlane.f32.xlu0 %v6823
    %v6825 = vpop.xlane.xlu0 %6824
    %v6826 = vsel %vm197, %v6348, -inf
    %6827 = vmax.xlane.f32.xlu0 %v6826
    %v6828 = vpop.xlane.xlu0 %6827
    %v6829 = vsel %vm197, %v6353, -inf
    %6830 = vmax.xlane.f32.xlu0 %v6829
    %v6831 = vpop.xlane.xlu0 %6830
    %v6832 = vsel %vm197, %v6356, -inf
    %6833 = vmax.xlane.f32.xlu0 %v6832
    %v6834 = vpop.xlane.xlu0 %6833
    %v6835 = vsel %vm197, %v6361, -inf
    %6836 = vmax.xlane.f32.xlu0 %v6835
    %v6837 = vpop.xlane.xlu0 %6836
    %v6838 = vsel %vm197, %v6364, -inf
    %6839 = vmax.xlane.f32.xlu0 %v6838
    %v6840 = vpop.xlane.xlu0 %6839
    %v6841 = vsel %vm197, %v6369, -inf
    %6842 = vmax.xlane.f32.xlu0 %v6841
    %v6843 = vpop.xlane.xlu0 %6842
    %v6844 = vsel %vm197, %v6372, -inf
    %6845 = vmax.xlane.f32.xlu0 %v6844
    %v6846 = vpop.xlane.xlu0 %6845
    %v6847 = vsel %vm197, %v6425, -inf
    %6848 = vmax.xlane.f32.xlu0 %v6847
    %v6849 = vpop.xlane.xlu0 %6848
    %v6850 = vsel %vm197, %v6428, -inf
    %6851 = vmax.xlane.f32.xlu0 %v6850
    %v6852 = vpop.xlane.xlu0 %6851
    %v6853 = vsel %vm197, %v6433, -inf
    %6854 = vmax.xlane.f32.xlu0 %v6853
    %v6855 = vpop.xlane.xlu0 %6854
    %v6856 = vsel %vm197, %v6436, -inf
    %6857 = vmax.xlane.f32.xlu0 %v6856
    %v6858 = vpop.xlane.xlu0 %6857
    %v6859 = vsel %vm197, %v6441, -inf
    %6860 = vmax.xlane.f32.xlu0 %v6859
    %v6861 = vpop.xlane.xlu0 %6860
    %v6862 = vsel %vm197, %v6444, -inf
    %6863 = vmax.xlane.f32.xlu0 %v6862
    %v6864 = vpop.xlane.xlu0 %6863
    %v6865 = vsel %vm197, %v6449, -inf
    %6866 = vmax.xlane.f32.xlu0 %v6865
    %v6867 = vpop.xlane.xlu0 %6866
    %v6868 = vsel %vm197, %v6452, -inf
    %6869 = vmax.xlane.f32.xlu0 %v6868
    %v6870 = vpop.xlane.xlu0 %6869
    %v6871 = vsel %vm197, %v6505, -inf
    %6872 = vmax.xlane.f32.xlu0 %v6871
    %v6873 = vpop.xlane.xlu0 %6872
    %v6874 = vsel %vm197, %v6508, -inf
    %6875 = vmax.xlane.f32.xlu0 %v6874
    %v6876 = vpop.xlane.xlu0 %6875
    %v6877 = vsel %vm197, %v6513, -inf
    %6878 = vmax.xlane.f32.xlu0 %v6877
    %v6879 = vpop.xlane.xlu0 %6878
    %v6880 = vsel %vm197, %v6516, -inf
    %6881 = vmax.xlane.f32.xlu0 %v6880
    %v6882 = vpop.xlane.xlu0 %6881
    %v6883 = vsel %vm197, %v6521, -inf
    %6884 = vmax.xlane.f32.xlu0 %v6883
    %v6885 = vpop.xlane.xlu0 %6884
    %v6886 = vsel %vm197, %v6524, -inf
    %6887 = vmax.xlane.f32.xlu0 %v6886
    %v6888 = vpop.xlane.xlu0 %6887
    %v6889 = vsel %vm197, %v6529, -inf
    %6890 = vmax.xlane.f32.xlu0 %v6889
    %v6891 = vpop.xlane.xlu0 %6890
    %v6892 = vsel %vm197, %v6532, -inf
    %6893 = vmax.xlane.f32.xlu0 %v6892
    %v6894 = vpop.xlane.xlu0 %6893
    %v6895 = vsel %vm197, %v6585, -inf
    %6896 = vmax.xlane.f32.xlu0 %v6895
    %v6897 = vpop.xlane.xlu0 %6896
    %v6898 = vsel %vm197, %v6588, -inf
    %6899 = vmax.xlane.f32.xlu0 %v6898
    %v6900 = vpop.xlane.xlu0 %6899
    %v6901 = vsel %vm197, %v6593, -inf
    %6902 = vmax.xlane.f32.xlu0 %v6901
    %v6903 = vpop.xlane.xlu0 %6902
    %v6904 = vsel %vm197, %v6596, -inf
    %6905 = vmax.xlane.f32.xlu0 %v6904
    %v6906 = vpop.xlane.xlu0 %6905
    %v6907 = vsel %vm197, %v6601, -inf
    %6908 = vmax.xlane.f32.xlu0 %v6907
    %v6909 = vpop.xlane.xlu0 %6908
    %v6910 = vsel %vm197, %v6604, -inf
    %6911 = vmax.xlane.f32.xlu0 %v6910
    %v6912 = vpop.xlane.xlu0 %6911
    %v6913 = vsel %vm197, %v6609, -inf
    %6914 = vmax.xlane.f32.xlu0 %v6913
    %v6915 = vpop.xlane.xlu0 %6914
    %v6916 = vsel %vm197, %v6612, -inf
    %6917 = vmax.xlane.f32.xlu0 %v6916
    %v6918 = vpop.xlane.xlu0 %6917
    %v6919 = vsel %vm197, %v6665, -inf
    %6920 = vmax.xlane.f32.xlu0 %v6919
    %v6921 = vpop.xlane.xlu0 %6920
    %v6922 = vsel %vm197, %v6668, -inf
    %6923 = vmax.xlane.f32.xlu0 %v6922
    %v6924 = vpop.xlane.xlu0 %6923
    %v6925 = vsel %vm197, %v6673, -inf
    %6926 = vmax.xlane.f32.xlu0 %v6925
    %v6927 = vpop.xlane.xlu0 %6926
    %v6928 = vsel %vm197, %v6676, -inf
    %6929 = vmax.xlane.f32.xlu0 %v6928
    %v6930 = vpop.xlane.xlu0 %6929
    %v6931 = vsel %vm197, %v6681, -inf
    %6932 = vmax.xlane.f32.xlu0 %v6931
    %v6933 = vpop.xlane.xlu0 %6932
    %v6934 = vsel %vm197, %v6684, -inf
    %6935 = vmax.xlane.f32.xlu0 %v6934
    %v6936 = vpop.xlane.xlu0 %6935
    %v6937 = vsel %vm197, %v6689, -inf
    %6938 = vmax.xlane.f32.xlu0 %v6937
    %v6939 = vpop.xlane.xlu0 %6938
    %v6940 = vsel %vm197, %v6692, -inf
    %6941 = vmax.xlane.f32.xlu0 %v6940
    %v6942 = vpop.xlane.xlu0 %6941
    %v6943 = vsel %vm197, %v6745, -inf
    %6944 = vmax.xlane.f32.xlu0 %v6943
    %v6945 = vpop.xlane.xlu0 %6944
    %v6946 = vsel %vm197, %v6748, -inf
    %6947 = vmax.xlane.f32.xlu0 %v6946
    %v6948 = vpop.xlane.xlu0 %6947
    %v6949 = vsel %vm197, %v6753, -inf
    %6950 = vmax.xlane.f32.xlu0 %v6949
    %v6951 = vpop.xlane.xlu0 %6950
    %v6952 = vsel %vm197, %v6756, -inf
    %6953 = vmax.xlane.f32.xlu0 %v6952
    %v6954 = vpop.xlane.xlu0 %6953
    %v6955 = vsel %vm197, %v6761, -inf
    %6956 = vmax.xlane.f32.xlu0 %v6955
    %v6957 = vpop.xlane.xlu0 %6956
    %v6958 = vsel %vm197, %v6764, -inf
    %6959 = vmax.xlane.f32.xlu0 %v6958
    %v6960 = vpop.xlane.xlu0 %6959
    %v6961 = vsel %vm197, %v6769, -inf
    %6962 = vmax.xlane.f32.xlu0 %v6961
    %v6963 = vpop.xlane.xlu0 %6962
    %v6964 = vsel %vm197, %v6772, -inf
    %6965 = vmax.xlane.f32.xlu0 %v6964
    %v6966 = vpop.xlane.xlu0 %6965
    %v6967 = vsub.f32 %v6185, %v6777
    %v6968 = vsub.f32 %v6188, %v6780
    %v6969 = vsub.f32 %v6193, %v6783
    %v6970 = vsub.f32 %v6196, %v6786
    %v6971 = vsub.f32 %v6201, %v6789
    %v6972 = vsub.f32 %v6204, %v6792
    %v6973 = vsub.f32 %v6209, %v6795
    %v6974 = vsub.f32 %v6212, %v6798
    %v6975 = vsub.f32 %v6265, %v6801
    %v6976 = vsub.f32 %v6268, %v6804
    %v6977 = vsub.f32 %v6273, %v6807
    %v6978 = vsub.f32 %v6276, %v6810
    %v6979 = vsub.f32 %v6281, %v6813
    %v6980 = vsub.f32 %v6284, %v6816
    %v6981 = vsub.f32 %v6289, %v6819
    %v6982 = vsub.f32 %v6292, %v6822
    %v6983 = vsub.f32 %v6345, %v6825
    %v6984 = vsub.f32 %v6348, %v6828
    %v6985 = vsub.f32 %v6353, %v6831
    %v6986 = vsub.f32 %v6356, %v6834
    %v6987 = vsub.f32 %v6361, %v6837
    %v6988 = vsub.f32 %v6364, %v6840
    %v6989 = vsub.f32 %v6369, %v6843
    %v6990 = vsub.f32 %v6372, %v6846
    %v6991 = vsub.f32 %v6425, %v6849
    %v6992 = vsub.f32 %v6428, %v6852
    %v6993 = vsub.f32 %v6433, %v6855
    %v6994 = vsub.f32 %v6436, %v6858
    %v6995 = vsub.f32 %v6441, %v6861
    %v6996 = vsub.f32 %v6444, %v6864
    %v6997 = vsub.f32 %v6449, %v6867
    %v6998 = vsub.f32 %v6452, %v6870
    %v6999 = vsub.f32 %v6505, %v6873
    %v7000 = vsub.f32 %v6508, %v6876
    %v7001 = vsub.f32 %v6513, %v6879
    %v7002 = vsub.f32 %v6516, %v6882
    %v7003 = vsub.f32 %v6521, %v6885
    %v7004 = vsub.f32 %v6524, %v6888
    %v7005 = vsub.f32 %v6529, %v6891
    %v7006 = vsub.f32 %v6532, %v6894
    %v7007 = vsub.f32 %v6585, %v6897
    %v7008 = vsub.f32 %v6588, %v6900
    %v7009 = vsub.f32 %v6593, %v6903
    %v7010 = vsub.f32 %v6596, %v6906
    %v7011 = vsub.f32 %v6601, %v6909
    %v7012 = vsub.f32 %v6604, %v6912
    %v7013 = vsub.f32 %v6609, %v6915
    %v7014 = vsub.f32 %v6612, %v6918
    %v7015 = vsub.f32 %v6665, %v6921
    %v7016 = vsub.f32 %v6668, %v6924
    %v7017 = vsub.f32 %v6673, %v6927
    %v7018 = vsub.f32 %v6676, %v6930
    %v7019 = vsub.f32 %v6681, %v6933
    %v7020 = vsub.f32 %v6684, %v6936
    %v7021 = vsub.f32 %v6689, %v6939
    %v7022 = vsub.f32 %v6692, %v6942
    %v7023 = vsub.f32 %v6745, %v6945
    %v7024 = vsub.f32 %v6748, %v6948
    %v7025 = vsub.f32 %v6753, %v6951
    %v7026 = vsub.f32 %v6756, %v6954
    %v7027 = vsub.f32 %v6761, %v6957
    %v7028 = vsub.f32 %v6764, %v6960
    %v7029 = vsub.f32 %v6769, %v6963
    %v7030 = vsub.f32 %v6772, %v6966
    %v7031 = vmul.f32 %v6967, 1.442695
    %v7032 = vpow.pop %v7031
    %v7033 = vmul.f32 %v6968, 1.442695
    %v7034 = vpow.pop %v7033
    %v7035 = vmul.f32 %v6969, 1.442695
    %v7036 = vpow.pop %v7035
    %v7037 = vmul.f32 %v6970, 1.442695
    %v7038 = vpow.pop %v7037
    %v7039 = vmul.f32 %v6971, 1.442695
    %v7040 = vpow.pop %v7039
    %v7041 = vmul.f32 %v6972, 1.442695
    %v7042 = vpow.pop %v7041
    %v7043 = vmul.f32 %v6973, 1.442695
    %v7044 = vpow.pop %v7043
    %v7045 = vmul.f32 %v6974, 1.442695
    %v7046 = vpow.pop %v7045
    %v7047 = vmul.f32 %v6975, 1.442695
    %v7048 = vpow.pop %v7047
    %v7049 = vmul.f32 %v6976, 1.442695
    %v7050 = vpow.pop %v7049
    %v7051 = vmul.f32 %v6977, 1.442695
    %v7052 = vpow.pop %v7051
    %v7053 = vmul.f32 %v6978, 1.442695
    %v7054 = vpow.pop %v7053
    %v7055 = vmul.f32 %v6979, 1.442695
    %v7056 = vpow.pop %v7055
    %v7057 = vmul.f32 %v6980, 1.442695
    %v7058 = vpow.pop %v7057
    %v7059 = vmul.f32 %v6981, 1.442695
    %v7060 = vpow.pop %v7059
    %v7061 = vmul.f32 %v6982, 1.442695
    %v7062 = vpow.pop %v7061
    %v7063 = vmul.f32 %v6983, 1.442695
    %v7064 = vpow.pop %v7063
    %v7065 = vmul.f32 %v6984, 1.442695
    %v7066 = vpow.pop %v7065
    %v7067 = vmul.f32 %v6985, 1.442695
    %v7068 = vpow.pop %v7067
    %v7069 = vmul.f32 %v6986, 1.442695
    %v7070 = vpow.pop %v7069
    %v7071 = vmul.f32 %v6987, 1.442695
    %v7072 = vpow.pop %v7071
    %v7073 = vmul.f32 %v6988, 1.442695
    %v7074 = vpow.pop %v7073
    %v7075 = vmul.f32 %v6989, 1.442695
    %v7076 = vpow.pop %v7075
    %v7077 = vmul.f32 %v6990, 1.442695
    %v7078 = vpow.pop %v7077
    %v7079 = vmul.f32 %v6991, 1.442695
    %v7080 = vpow.pop %v7079
    %v7081 = vmul.f32 %v6992, 1.442695
    %v7082 = vpow.pop %v7081
    %v7083 = vmul.f32 %v6993, 1.442695
    %v7084 = vpow.pop %v7083
    %v7085 = vmul.f32 %v6994, 1.442695
    %v7086 = vpow.pop %v7085
    %v7087 = vmul.f32 %v6995, 1.442695
    %v7088 = vpow.pop %v7087
    %v7089 = vmul.f32 %v6996, 1.442695
    %v7090 = vpow.pop %v7089
    %v7091 = vmul.f32 %v6997, 1.442695
    %v7092 = vpow.pop %v7091
    %v7093 = vmul.f32 %v6998, 1.442695
    %v7094 = vpow.pop %v7093
    %v7095 = vmul.f32 %v6999, 1.442695
    %v7096 = vpow.pop %v7095
    %v7097 = vmul.f32 %v7000, 1.442695
    %v7098 = vpow.pop %v7097
    %v7099 = vmul.f32 %v7001, 1.442695
    %v7100 = vpow.pop %v7099
    %v7101 = vmul.f32 %v7002, 1.442695
    %v7102 = vpow.pop %v7101
    %v7103 = vmul.f32 %v7003, 1.442695
    %v7104 = vpow.pop %v7103
    %v7105 = vmul.f32 %v7004, 1.442695
    %v7106 = vpow.pop %v7105
    %v7107 = vmul.f32 %v7005, 1.442695
    %v7108 = vpow.pop %v7107
    %v7109 = vmul.f32 %v7006, 1.442695
    %v7110 = vpow.pop %v7109
    %v7111 = vmul.f32 %v7007, 1.442695
    %v7112 = vpow.pop %v7111
    %v7113 = vmul.f32 %v7008, 1.442695
    %v7114 = vpow.pop %v7113
    %v7115 = vmul.f32 %v7009, 1.442695
    %v7116 = vpow.pop %v7115
    %v7117 = vmul.f32 %v7010, 1.442695
    %v7118 = vpow.pop %v7117
    %v7119 = vmul.f32 %v7011, 1.442695
    %v7120 = vpow.pop %v7119
    %v7121 = vmul.f32 %v7012, 1.442695
    %v7122 = vpow.pop %v7121
    %v7123 = vmul.f32 %v7013, 1.442695
    %v7124 = vpow.pop %v7123
    %v7125 = vmul.f32 %v7014, 1.442695
    %v7126 = vpow.pop %v7125
    %v7127 = vmul.f32 %v7015, 1.442695
    %v7128 = vpow.pop %v7127
    %v7129 = vmul.f32 %v7016, 1.442695
    %v7130 = vpow.pop %v7129
    %v7131 = vmul.f32 %v7017, 1.442695
    %v7132 = vpow.pop %v7131
    %v7133 = vmul.f32 %v7018, 1.442695
    %v7134 = vpow.pop %v7133
    %v7135 = vmul.f32 %v7019, 1.442695
    %v7136 = vpow.pop %v7135
    %v7137 = vmul.f32 %v7020, 1.442695
    %v7138 = vpow.pop %v7137
    %v7139 = vmul.f32 %v7021, 1.442695
    %v7140 = vpow.pop %v7139
    %v7141 = vmul.f32 %v7022, 1.442695
    %v7142 = vpow.pop %v7141
    %v7143 = vmul.f32 %v7023, 1.442695
    %v7144 = vpow.pop %v7143
    %v7145 = vmul.f32 %v7024, 1.442695
    %v7146 = vpow.pop %v7145
    %v7147 = vmul.f32 %v7025, 1.442695
    %v7148 = vpow.pop %v7147
    %v7149 = vmul.f32 %v7026, 1.442695
    %v7150 = vpow.pop %v7149
    %v7151 = vmul.f32 %v7027, 1.442695
    %v7152 = vpow.pop %v7151
    %v7153 = vmul.f32 %v7028, 1.442695
    %v7154 = vpow.pop %v7153
    %v7155 = vmul.f32 %v7029, 1.442695
    %v7156 = vpow.pop %v7155
    %v7157 = vmul.f32 %v7030, 1.442695
    %v7158 = vpow.pop %v7157
    %v7159 = vsel %vm197, %v7032, 0.0
    %7160 = vadd.xlane.f32.xlu0 %v7159
    %v7161 = vpop.xlane.xlu0 %7160
    %v7162 = vsel %vm197, %v7034, 0.0
    %7163 = vadd.xlane.f32.xlu0 %v7162
    %v7164 = vpop.xlane.xlu0 %7163
    %v7165 = vsel %vm197, %v7036, 0.0
    %7166 = vadd.xlane.f32.xlu0 %v7165
    %v7167 = vpop.xlane.xlu0 %7166
    %v7168 = vsel %vm197, %v7038, 0.0
    %7169 = vadd.xlane.f32.xlu0 %v7168
    %v7170 = vpop.xlane.xlu0 %7169
    %v7171 = vsel %vm197, %v7040, 0.0
    %7172 = vadd.xlane.f32.xlu0 %v7171
    %v7173 = vpop.xlane.xlu0 %7172
    %v7174 = vsel %vm197, %v7042, 0.0
    %7175 = vadd.xlane.f32.xlu0 %v7174
    %v7176 = vpop.xlane.xlu0 %7175
    %v7177 = vsel %vm197, %v7044, 0.0
    %7178 = vadd.xlane.f32.xlu0 %v7177
    %v7179 = vpop.xlane.xlu0 %7178
    %v7180 = vsel %vm197, %v7046, 0.0
    %7181 = vadd.xlane.f32.xlu0 %v7180
    %v7182 = vpop.xlane.xlu0 %7181
    %v7183 = vsel %vm197, %v7048, 0.0
    %7184 = vadd.xlane.f32.xlu0 %v7183
    %v7185 = vpop.xlane.xlu0 %7184
    %v7186 = vsel %vm197, %v7050, 0.0
    %7187 = vadd.xlane.f32.xlu0 %v7186
    %v7188 = vpop.xlane.xlu0 %7187
    %v7189 = vsel %vm197, %v7052, 0.0
    %7190 = vadd.xlane.f32.xlu0 %v7189
    %v7191 = vpop.xlane.xlu0 %7190
    %v7192 = vsel %vm197, %v7054, 0.0
    %7193 = vadd.xlane.f32.xlu0 %v7192
    %v7194 = vpop.xlane.xlu0 %7193
    %v7195 = vsel %vm197, %v7056, 0.0
    %7196 = vadd.xlane.f32.xlu0 %v7195
    %v7197 = vpop.xlane.xlu0 %7196
    %v7198 = vsel %vm197, %v7058, 0.0
    %7199 = vadd.xlane.f32.xlu0 %v7198
    %v7200 = vpop.xlane.xlu0 %7199
    %v7201 = vsel %vm197, %v7060, 0.0
    %7202 = vadd.xlane.f32.xlu0 %v7201
    %v7203 = vpop.xlane.xlu0 %7202
    %v7204 = vsel %vm197, %v7062, 0.0
    %7205 = vadd.xlane.f32.xlu0 %v7204
    %v7206 = vpop.xlane.xlu0 %7205
    %v7207 = vsel %vm197, %v7064, 0.0
    %7208 = vadd.xlane.f32.xlu0 %v7207
    %v7209 = vpop.xlane.xlu0 %7208
    %v7210 = vsel %vm197, %v7066, 0.0
    %7211 = vadd.xlane.f32.xlu0 %v7210
    %v7212 = vpop.xlane.xlu0 %7211
    %v7213 = vsel %vm197, %v7068, 0.0
    %7214 = vadd.xlane.f32.xlu0 %v7213
    %v7215 = vpop.xlane.xlu0 %7214
    %v7216 = vsel %vm197, %v7070, 0.0
    %7217 = vadd.xlane.f32.xlu0 %v7216
    %v7218 = vpop.xlane.xlu0 %7217
    %v7219 = vsel %vm197, %v7072, 0.0
    %7220 = vadd.xlane.f32.xlu0 %v7219
    %v7221 = vpop.xlane.xlu0 %7220
    %v7222 = vsel %vm197, %v7074, 0.0
    %7223 = vadd.xlane.f32.xlu0 %v7222
    %v7224 = vpop.xlane.xlu0 %7223
    %v7225 = vsel %vm197, %v7076, 0.0
    %7226 = vadd.xlane.f32.xlu0 %v7225
    %v7227 = vpop.xlane.xlu0 %7226
    %v7228 = vsel %vm197, %v7078, 0.0
    %7229 = vadd.xlane.f32.xlu0 %v7228
    %v7230 = vpop.xlane.xlu0 %7229
    %v7231 = vsel %vm197, %v7080, 0.0
    %7232 = vadd.xlane.f32.xlu0 %v7231
    %v7233 = vpop.xlane.xlu0 %7232
    %v7234 = vsel %vm197, %v7082, 0.0
    %7235 = vadd.xlane.f32.xlu0 %v7234
    %v7236 = vpop.xlane.xlu0 %7235
    %v7237 = vsel %vm197, %v7084, 0.0
    %7238 = vadd.xlane.f32.xlu0 %v7237
    %v7239 = vpop.xlane.xlu0 %7238
    %v7240 = vsel %vm197, %v7086, 0.0
    %7241 = vadd.xlane.f32.xlu0 %v7240
    %v7242 = vpop.xlane.xlu0 %7241
    %v7243 = vsel %vm197, %v7088, 0.0
    %7244 = vadd.xlane.f32.xlu0 %v7243
    %v7245 = vpop.xlane.xlu0 %7244
    %v7246 = vsel %vm197, %v7090, 0.0
    %7247 = vadd.xlane.f32.xlu0 %v7246
    %v7248 = vpop.xlane.xlu0 %7247
    %v7249 = vsel %vm197, %v7092, 0.0
    %7250 = vadd.xlane.f32.xlu0 %v7249
    %v7251 = vpop.xlane.xlu0 %7250
    %v7252 = vsel %vm197, %v7094, 0.0
    %7253 = vadd.xlane.f32.xlu0 %v7252
    %v7254 = vpop.xlane.xlu0 %7253
    %v7255 = vsel %vm197, %v7096, 0.0
    %7256 = vadd.xlane.f32.xlu0 %v7255
    %v7257 = vpop.xlane.xlu0 %7256
    %v7258 = vsel %vm197, %v7098, 0.0
    %7259 = vadd.xlane.f32.xlu0 %v7258
    %v7260 = vpop.xlane.xlu0 %7259
    %v7261 = vsel %vm197, %v7100, 0.0
    %7262 = vadd.xlane.f32.xlu0 %v7261
    %v7263 = vpop.xlane.xlu0 %7262
    %v7264 = vsel %vm197, %v7102, 0.0
    %7265 = vadd.xlane.f32.xlu0 %v7264
    %v7266 = vpop.xlane.xlu0 %7265
    %v7267 = vsel %vm197, %v7104, 0.0
    %7268 = vadd.xlane.f32.xlu0 %v7267
    %v7269 = vpop.xlane.xlu0 %7268
    %v7270 = vsel %vm197, %v7106, 0.0
    %7271 = vadd.xlane.f32.xlu0 %v7270
    %v7272 = vpop.xlane.xlu0 %7271
    %v7273 = vsel %vm197, %v7108, 0.0
    %7274 = vadd.xlane.f32.xlu0 %v7273
    %v7275 = vpop.xlane.xlu0 %7274
    %v7276 = vsel %vm197, %v7110, 0.0
    %7277 = vadd.xlane.f32.xlu0 %v7276
    %v7278 = vpop.xlane.xlu0 %7277
    %v7279 = vsel %vm197, %v7112, 0.0
    %7280 = vadd.xlane.f32.xlu0 %v7279
    %v7281 = vpop.xlane.xlu0 %7280
    %v7282 = vsel %vm197, %v7114, 0.0
    %7283 = vadd.xlane.f32.xlu0 %v7282
    %v7284 = vpop.xlane.xlu0 %7283
    %v7285 = vsel %vm197, %v7116, 0.0
    %7286 = vadd.xlane.f32.xlu0 %v7285
    %v7287 = vpop.xlane.xlu0 %7286
    %v7288 = vsel %vm197, %v7118, 0.0
    %7289 = vadd.xlane.f32.xlu0 %v7288
    %v7290 = vpop.xlane.xlu0 %7289
    %v7291 = vsel %vm197, %v7120, 0.0
    %7292 = vadd.xlane.f32.xlu0 %v7291
    %v7293 = vpop.xlane.xlu0 %7292
    %v7294 = vsel %vm197, %v7122, 0.0
    %7295 = vadd.xlane.f32.xlu0 %v7294
    %v7296 = vpop.xlane.xlu0 %7295
    %v7297 = vsel %vm197, %v7124, 0.0
    %7298 = vadd.xlane.f32.xlu0 %v7297
    %v7299 = vpop.xlane.xlu0 %7298
    %v7300 = vsel %vm197, %v7126, 0.0
    %7301 = vadd.xlane.f32.xlu0 %v7300
    %v7302 = vpop.xlane.xlu0 %7301
    %v7303 = vsel %vm197, %v7128, 0.0
    %7304 = vadd.xlane.f32.xlu0 %v7303
    %v7305 = vpop.xlane.xlu0 %7304
    %v7306 = vsel %vm197, %v7130, 0.0
    %7307 = vadd.xlane.f32.xlu0 %v7306
    %v7308 = vpop.xlane.xlu0 %7307
    %v7309 = vsel %vm197, %v7132, 0.0
    %7310 = vadd.xlane.f32.xlu0 %v7309
    %v7311 = vpop.xlane.xlu0 %7310
    %v7312 = vsel %vm197, %v7134, 0.0
    %7313 = vadd.xlane.f32.xlu0 %v7312
    %v7314 = vpop.xlane.xlu0 %7313
    %v7315 = vsel %vm197, %v7136, 0.0
    %7316 = vadd.xlane.f32.xlu0 %v7315
    %v7317 = vpop.xlane.xlu0 %7316
    %v7318 = vsel %vm197, %v7138, 0.0
    %7319 = vadd.xlane.f32.xlu0 %v7318
    %v7320 = vpop.xlane.xlu0 %7319
    %v7321 = vsel %vm197, %v7140, 0.0
    %7322 = vadd.xlane.f32.xlu0 %v7321
    %v7323 = vpop.xlane.xlu0 %7322
    %v7324 = vsel %vm197, %v7142, 0.0
    %7325 = vadd.xlane.f32.xlu0 %v7324
    %v7326 = vpop.xlane.xlu0 %7325
    %v7327 = vsel %vm197, %v7144, 0.0
    %7328 = vadd.xlane.f32.xlu0 %v7327
    %v7329 = vpop.xlane.xlu0 %7328
    %v7330 = vsel %vm197, %v7146, 0.0
    %7331 = vadd.xlane.f32.xlu0 %v7330
    %v7332 = vpop.xlane.xlu0 %7331
    %v7333 = vsel %vm197, %v7148, 0.0
    %7334 = vadd.xlane.f32.xlu0 %v7333
    %v7335 = vpop.xlane.xlu0 %7334
    %v7336 = vsel %vm197, %v7150, 0.0
    %7337 = vadd.xlane.f32.xlu0 %v7336
    %v7338 = vpop.xlane.xlu0 %7337
    %v7339 = vsel %vm197, %v7152, 0.0
    %7340 = vadd.xlane.f32.xlu0 %v7339
    %v7341 = vpop.xlane.xlu0 %7340
    %v7342 = vsel %vm197, %v7154, 0.0
    %7343 = vadd.xlane.f32.xlu0 %v7342
    %v7344 = vpop.xlane.xlu0 %7343
    %v7345 = vsel %vm197, %v7156, 0.0
    %7346 = vadd.xlane.f32.xlu0 %v7345
    %v7347 = vpop.xlane.xlu0 %7346
    %v7348 = vsel %vm197, %v7158, 0.0
    %7349 = vadd.xlane.f32.xlu0 %v7348
    %v7350 = vpop.xlane.xlu0 %7349
    %v7351 = vrcp.pop %v7161
    %v7352 = vrcp.pop %v7164
    %v7353 = vrcp.pop %v7167
    %v7354 = vrcp.pop %v7170
    %v7355 = vrcp.pop %v7173
    %v7356 = vrcp.pop %v7176
    %v7357 = vrcp.pop %v7179
    %v7358 = vrcp.pop %v7182
    %v7359 = vrcp.pop %v7185
    %v7360 = vrcp.pop %v7188
    %v7361 = vrcp.pop %v7191
    %v7362 = vrcp.pop %v7194
    %v7363 = vrcp.pop %v7197
    %v7364 = vrcp.pop %v7200
    %v7365 = vrcp.pop %v7203
    %v7366 = vrcp.pop %v7206
    %v7367 = vrcp.pop %v7209
    %v7368 = vrcp.pop %v7212
    %v7369 = vrcp.pop %v7215
    %v7370 = vrcp.pop %v7218
    %v7371 = vrcp.pop %v7221
    %v7372 = vrcp.pop %v7224
    %v7373 = vrcp.pop %v7227
    %v7374 = vrcp.pop %v7230
    %v7375 = vrcp.pop %v7233
    %v7376 = vrcp.pop %v7236
    %v7377 = vrcp.pop %v7239
    %v7378 = vrcp.pop %v7242
    %v7379 = vrcp.pop %v7245
    %v7380 = vrcp.pop %v7248
    %v7381 = vrcp.pop %v7251
    %v7382 = vrcp.pop %v7254
    %v7383 = vrcp.pop %v7257
    %v7384 = vrcp.pop %v7260
    %v7385 = vrcp.pop %v7263
    %v7386 = vrcp.pop %v7266
    %v7387 = vrcp.pop %v7269
    %v7388 = vrcp.pop %v7272
    %v7389 = vrcp.pop %v7275
    %v7390 = vrcp.pop %v7278
    %v7391 = vrcp.pop %v7281
    %v7392 = vrcp.pop %v7284
    %v7393 = vrcp.pop %v7287
    %v7394 = vrcp.pop %v7290
    %v7395 = vrcp.pop %v7293
    %v7396 = vrcp.pop %v7296
    %v7397 = vrcp.pop %v7299
    %v7398 = vrcp.pop %v7302
    %v7399 = vrcp.pop %v7305
    %v7400 = vrcp.pop %v7308
    %v7401 = vrcp.pop %v7311
    %v7402 = vrcp.pop %v7314
    %v7403 = vrcp.pop %v7317
    %v7404 = vrcp.pop %v7320
    %v7405 = vrcp.pop %v7323
    %v7406 = vrcp.pop %v7326
    %v7407 = vrcp.pop %v7329
    %v7408 = vrcp.pop %v7332
    %v7409 = vrcp.pop %v7335
    %v7410 = vrcp.pop %v7338
    %v7411 = vrcp.pop %v7341
    %v7412 = vrcp.pop %v7344
    %v7413 = vrcp.pop %v7347
    %v7414 = vrcp.pop %v7350
    %v7415 = vmul.f32 %v7032, %v7351
    %v7416 = vmul.f32 %v7034, %v7352
    %v7417 = vmul.f32 %v7036, %v7353
    %v7418 = vmul.f32 %v7038, %v7354
    %v7419 = vmul.f32 %v7040, %v7355
    %v7420 = vmul.f32 %v7042, %v7356
    %v7421 = vmul.f32 %v7044, %v7357
    %v7422 = vmul.f32 %v7046, %v7358
    %v7423 = vmul.f32 %v7048, %v7359
    %v7424 = vmul.f32 %v7050, %v7360
    %v7425 = vmul.f32 %v7052, %v7361
    %v7426 = vmul.f32 %v7054, %v7362
    %v7427 = vmul.f32 %v7056, %v7363
    %v7428 = vmul.f32 %v7058, %v7364
    %v7429 = vmul.f32 %v7060, %v7365
    %v7430 = vmul.f32 %v7062, %v7366
    %v7431 = vmul.f32 %v7064, %v7367
    %v7432 = vmul.f32 %v7066, %v7368
    %v7433 = vmul.f32 %v7068, %v7369
    %v7434 = vmul.f32 %v7070, %v7370
    %v7435 = vmul.f32 %v7072, %v7371
    %v7436 = vmul.f32 %v7074, %v7372
    %v7437 = vmul.f32 %v7076, %v7373
    %v7438 = vmul.f32 %v7078, %v7374
    %v7439 = vmul.f32 %v7080, %v7375
    %v7440 = vmul.f32 %v7082, %v7376
    %v7441 = vmul.f32 %v7084, %v7377
    %v7442 = vmul.f32 %v7086, %v7378
    %v7443 = vmul.f32 %v7088, %v7379
    %v7444 = vmul.f32 %v7090, %v7380
    %v7445 = vmul.f32 %v7092, %v7381
    %v7446 = vmul.f32 %v7094, %v7382
    %v7447 = vmul.f32 %v7096, %v7383
    %v7448 = vmul.f32 %v7098, %v7384
    %v7449 = vmul.f32 %v7100, %v7385
    %v7450 = vmul.f32 %v7102, %v7386
    %v7451 = vmul.f32 %v7104, %v7387
    %v7452 = vmul.f32 %v7106, %v7388
    %v7453 = vmul.f32 %v7108, %v7389
    %v7454 = vmul.f32 %v7110, %v7390
    %v7455 = vmul.f32 %v7112, %v7391
    %v7456 = vmul.f32 %v7114, %v7392
    %v7457 = vmul.f32 %v7116, %v7393
    %v7458 = vmul.f32 %v7118, %v7394
    %v7459 = vmul.f32 %v7120, %v7395
    %v7460 = vmul.f32 %v7122, %v7396
    %v7461 = vmul.f32 %v7124, %v7397
    %v7462 = vmul.f32 %v7126, %v7398
    %v7463 = vmul.f32 %v7128, %v7399
    %v7464 = vmul.f32 %v7130, %v7400
    %v7465 = vmul.f32 %v7132, %v7401
    %v7466 = vmul.f32 %v7134, %v7402
    %v7467 = vmul.f32 %v7136, %v7403
    %v7468 = vmul.f32 %v7138, %v7404
    %v7469 = vmul.f32 %v7140, %v7405
    %v7470 = vmul.f32 %v7142, %v7406
    %v7471 = vmul.f32 %v7144, %v7407
    %v7472 = vmul.f32 %v7146, %v7408
    %v7473 = vmul.f32 %v7148, %v7409
    %v7474 = vmul.f32 %v7150, %v7410
    %v7475 = vmul.f32 %v7152, %v7411
    %v7476 = vmul.f32 %v7154, %v7412
    %v7477 = vmul.f32 %v7156, %v7413
    %v7478 = vmul.f32 %v7158, %v7414
    %v7479 = vpack.c.bf16 %v7416, %v7415
    %v7480 = vpack.c.bf16 %v7418, %v7417
    %v7481 = vpack.c.bf16 %v7420, %v7419
    %v7482 = vpack.c.bf16 %v7422, %v7421
    %v7483 = vpack.c.bf16 %v7424, %v7423
    %v7484 = vpack.c.bf16 %v7426, %v7425
    %v7485 = vpack.c.bf16 %v7428, %v7427
    %v7486 = vpack.c.bf16 %v7430, %v7429
    %v7487 = vpack.c.bf16 %v7432, %v7431
    %v7488 = vpack.c.bf16 %v7434, %v7433
    %v7489 = vpack.c.bf16 %v7436, %v7435
    %v7490 = vpack.c.bf16 %v7438, %v7437
    %v7491 = vpack.c.bf16 %v7440, %v7439
    %v7492 = vpack.c.bf16 %v7442, %v7441
    %v7493 = vpack.c.bf16 %v7444, %v7443
    %v7494 = vpack.c.bf16 %v7446, %v7445
    %v7495 = vpack.c.bf16 %v7448, %v7447
    %v7496 = vpack.c.bf16 %v7450, %v7449
    %v7497 = vpack.c.bf16 %v7452, %v7451
    %v7498 = vpack.c.bf16 %v7454, %v7453
    %v7499 = vpack.c.bf16 %v7456, %v7455
    %v7500 = vpack.c.bf16 %v7458, %v7457
    %v7501 = vpack.c.bf16 %v7460, %v7459
    %v7502 = vpack.c.bf16 %v7462, %v7461
    %v7503 = vpack.c.bf16 %v7464, %v7463
    %v7504 = vpack.c.bf16 %v7466, %v7465
    %v7505 = vpack.c.bf16 %v7468, %v7467
    %v7506 = vpack.c.bf16 %v7470, %v7469
    %v7507 = vpack.c.bf16 %v7472, %v7471
    %v7508 = vpack.c.bf16 %v7474, %v7473
    %v7509 = vpack.c.bf16 %v7476, %v7475
    %v7510 = vpack.c.bf16 %v7478, %v7477
    %7511 = vxpose.xlu0.c.b16.start [1/8] %v611, 128
    %7512 = vxpose.xlu0.c.b16.cont [2/8] %v612, 128
    %7513 = vxpose.xlu0.c.b16.cont [3/8] %v613, 128
    %7514 = vxpose.xlu0.c.b16.cont [4/8] %v614, 128
    %7515 = vxpose.xlu0.c.b16.cont [5/8] 0, 128
    %7516 = vxpose.xlu0.c.b16.cont [6/8] 0, 128
    %7517 = vxpose.xlu0.c.b16.cont [7/8] 0, 128
    %7518 = vxpose.xlu0.c.b16.end [8/8] 0, 128
    %v7519 = vpop.trf.xlu0
    %v7520 = vpop.trf.xlu0
    %v7521 = vpop.trf.xlu0
    %v7522 = vpop.trf.xlu0
    %v7523 = vpop.trf.xlu0
    %v7524 = vpop.trf.xlu0
    %v7525 = vpop.trf.xlu0
    %v7526 = vpop.trf.xlu0
    %7527 = vxpose.xlu0.c.b16.start [1/8] %v5924, 128
    %7528 = vxpose.xlu0.c.b16.cont [2/8] %v5926, 128
    %7529 = vxpose.xlu0.c.b16.cont [3/8] %v5928, 128
    %7530 = vxpose.xlu0.c.b16.cont [4/8] %v5930, 128
    %7531 = vxpose.xlu0.c.b16.cont [5/8] 0, 128
    %7532 = vxpose.xlu0.c.b16.cont [6/8] 0, 128
    %7533 = vxpose.xlu0.c.b16.cont [7/8] 0, 128
    %7534 = vxpose.xlu0.c.b16.end [8/8] 0, 128
    %v7535 = vpop.trf.xlu0
    %v7536 = vpop.trf.xlu0
    %v7537 = vpop.trf.xlu0
    %v7538 = vpop.trf.xlu0
    %v7539 = vpop.trf.xlu0
    %v7540 = vpop.trf.xlu0
    %v7541 = vpop.trf.xlu0
    %v7542 = vpop.trf.xlu0
    %7543 = vxpose.xlu0.c.b16.start [1/8] %v5936, 128
    %7544 = vxpose.xlu0.c.b16.cont [2/8] %v5938, 128
    %7545 = vxpose.xlu0.c.b16.cont [3/8] %v5940, 128
    %7546 = vxpose.xlu0.c.b16.cont [4/8] %v5942, 128
    %7547 = vxpose.xlu0.c.b16.cont [5/8] 0, 128
    %7548 = vxpose.xlu0.c.b16.cont [6/8] 0, 128
    %7549 = vxpose.xlu0.c.b16.cont [7/8] 0, 128
    %7550 = vxpose.xlu0.c.b16.end [8/8] 0, 128
    %v7551 = vpop.trf.xlu0
    %v7552 = vpop.trf.xlu0
    %v7553 = vpop.trf.xlu0
    %v7554 = vpop.trf.xlu0
    %v7555 = vpop.trf.xlu0
    %v7556 = vpop.trf.xlu0
    %v7557 = vpop.trf.xlu0
    %v7558 = vpop.trf.xlu0
    %7559 = vxpose.xlu0.c.b16.start [1/8] %v5948, 128
    %7560 = vxpose.xlu0.c.b16.cont [2/8] %v5950, 128
    %7561 = vxpose.xlu0.c.b16.cont [3/8] %v5952, 128
    %7562 = vxpose.xlu0.c.b16.cont [4/8] %v5954, 128
    %7563 = vxpose.xlu0.c.b16.cont [5/8] 0, 128
    %7564 = vxpose.xlu0.c.b16.cont [6/8] 0, 128
    %7565 = vxpose.xlu0.c.b16.cont [7/8] 0, 128
    %7566 = vxpose.xlu0.c.b16.end [8/8] 0, 128
    %v7567 = vpop.trf.xlu0
    %v7568 = vpop.trf.xlu0
    %v7569 = vpop.trf.xlu0
    %v7570 = vpop.trf.xlu0
    %v7571 = vpop.trf.xlu0
    %v7572 = vpop.trf.xlu0
    %v7573 = vpop.trf.xlu0
    %v7574 = vpop.trf.xlu0
    %7575 = vxpose.xlu0.c.b16.start [1/8] %v5960, 128
    %7576 = vxpose.xlu0.c.b16.cont [2/8] %v5962, 128
    %7577 = vxpose.xlu0.c.b16.cont [3/8] %v5964, 128
    %7578 = vxpose.xlu0.c.b16.cont [4/8] %v5966, 128
    %7579 = vxpose.xlu0.c.b16.cont [5/8] 0, 128
    %7580 = vxpose.xlu0.c.b16.cont [6/8] 0, 128
    %7581 = vxpose.xlu0.c.b16.cont [7/8] 0, 128
    %7582 = vxpose.xlu0.c.b16.end [8/8] 0, 128
    %v7583 = vpop.trf.xlu0
    %v7584 = vpop.trf.xlu0
    %v7585 = vpop.trf.xlu0
    %v7586 = vpop.trf.xlu0
    %v7587 = vpop.trf.xlu0
    %v7588 = vpop.trf.xlu0
    %v7589 = vpop.trf.xlu0
    %v7590 = vpop.trf.xlu0
    %7591 = vxpose.xlu0.c.b16.start [1/8] %v5972, 128
    %7592 = vxpose.xlu0.c.b16.cont [2/8] %v5974, 128
    %7593 = vxpose.xlu0.c.b16.cont [3/8] %v5976, 128
    %7594 = vxpose.xlu0.c.b16.cont [4/8] %v5978, 128
    %7595 = vxpose.xlu0.c.b16.cont [5/8] 0, 128
    %7596 = vxpose.xlu0.c.b16.cont [6/8] 0, 128
    %7597 = vxpose.xlu0.c.b16.cont [7/8] 0, 128
    %7598 = vxpose.xlu0.c.b16.end [8/8] 0, 128
    %v7599 = vpop.trf.xlu0
    %v7600 = vpop.trf.xlu0
    %v7601 = vpop.trf.xlu0
    %v7602 = vpop.trf.xlu0
    %v7603 = vpop.trf.xlu0
    %v7604 = vpop.trf.xlu0
    %v7605 = vpop.trf.xlu0
    %v7606 = vpop.trf.xlu0
    %7607 = vxpose.xlu0.c.b16.start [1/8] %v5984, 128
    %7608 = vxpose.xlu0.c.b16.cont [2/8] %v5986, 128
    %7609 = vxpose.xlu0.c.b16.cont [3/8] %v5988, 128
    %7610 = vxpose.xlu0.c.b16.cont [4/8] %v5990, 128
    %7611 = vxpose.xlu0.c.b16.cont [5/8] 0, 128
    %7612 = vxpose.xlu0.c.b16.cont [6/8] 0, 128
    %7613 = vxpose.xlu0.c.b16.cont [7/8] 0, 128
    %7614 = vxpose.xlu0.c.b16.end [8/8] 0, 128
    %v7615 = vpop.trf.xlu0
    %v7616 = vpop.trf.xlu0
    %v7617 = vpop.trf.xlu0
    %v7618 = vpop.trf.xlu0
    %v7619 = vpop.trf.xlu0
    %v7620 = vpop.trf.xlu0
    %v7621 = vpop.trf.xlu0
    %v7622 = vpop.trf.xlu0
    %7623 = vxpose.xlu0.c.b16.start [1/8] %v5996, 128
    %7624 = vxpose.xlu0.c.b16.cont [2/8] %v5998, 128
    %7625 = vxpose.xlu0.c.b16.cont [3/8] %v6000, 128
    %7626 = vxpose.xlu0.c.b16.cont [4/8] %v6002, 128
    %7627 = vxpose.xlu0.c.b16.cont [5/8] 0, 128
    %7628 = vxpose.xlu0.c.b16.cont [6/8] 0, 128
    %7629 = vxpose.xlu0.c.b16.cont [7/8] 0, 128
    %7630 = vxpose.xlu0.c.b16.end [8/8] 0, 128
    %v7631 = vpop.trf.xlu0
    %v7632 = vpop.trf.xlu0
    %v7633 = vpop.trf.xlu0
    %v7634 = vpop.trf.xlu0
    %v7635 = vpop.trf.xlu0
    %v7636 = vpop.trf.xlu0
    %v7637 = vpop.trf.xlu0
    %v7638 = vpop.trf.xlu0
    %v7640 = vsel %vm197, %v7519, 0
    %v7643 = vsel %vm197, %v7479, 0
    %v7646 = vsel %vm197, %v7480, 0
    %v7649 = vsel %vm197, %v7481, 0
    %v7652 = vsel %vm197, %v7482, 0
    %7654 = vmatprep.subr.bf16.mxu0 0
    %7655 = vmatpush1.bf16.xpose.msra.mxu0 0
    %7656 = vmatprep.subr.bf16.mxu0 0
    %7657 = vmatpush1.bf16.xpose.msra.mxu0 0
    %7658 = vmatprep.subr.bf16.mxu0 0
    %7659 = vmatpush1.bf16.xpose.msra.mxu0 0
    %7660 = vmatprep.subr.bf16.mxu0 0
    %7661 = vmatpush1.bf16.xpose.msra.mxu0 0
    %7662 = vmatprep.subr.bf16.mxu0 0
    %7663 = vmatpush1.bf16.xpose.msra.mxu0 %v7652
    %7664 = vmatprep.subr.bf16.mxu0 0
    %7665 = vmatpush1.bf16.xpose.msra.mxu0 %v7649
    %7666 = vmatprep.subr.bf16.mxu0 0
    %7667 = vmatpush1.bf16.xpose.msra.mxu0 %v7646
    %7668 = vmatprep.subr.bf16.mxu0 0
    %7669 = vmatpush1.bf16.xpose.msra.mxu0 %v7643
    %7670 = vmatprep.subr.bf16.mxu0 0
    %7671 = vmatpush2.bf16.xpose.msra.mxu0 0
    %7672 = vmatprep.subr.bf16.mxu0 0
    %7673 = vmatpush2.bf16.xpose.msra.mxu0 0
    %7674 = vmatprep.subr.bf16.mxu0 0
    %7675 = vmatpush2.bf16.xpose.msra.mxu0 0
    %7676 = vmatprep.subr.bf16.mxu0 0
    %7677 = vmatpush2.bf16.xpose.msra.mxu0 0
    %7678 = vmatprep.subr.bf16.mxu0 0
    %7679 = vmatpush2.bf16.xpose.msra.mxu0 0
    %7680 = vmatprep.subr.bf16.mxu0 0
    %7681 = vmatpush2.bf16.xpose.msra.mxu0 0
    %7682 = vmatprep.subr.bf16.mxu0 0
    %7683 = vmatpush2.bf16.xpose.msra.mxu0 0
    %7684 = vmatprep.subr.bf16.mxu0 0
    %7685 = vmatpush2.bf16.xpose.msra.mxu0 0
    %7686 = vmatprep.mubr.bf16.mxu0 0
    %7687 = vmatmul.mubr.bf16.gmra.mxu0 %v7640
    %v7688 = vpop.f32.mrf.mxu0
    %v7689 = vadd.f32 0.0, %v7688
    %v7690 = vpop.f32.mrf.mxu0
    %v7691 = vpop.f32.mrf.mxu0
    %v7692 = vpop.f32.mrf.mxu0
    %7693 = vdwg.mxu0
    %v7695 = vsel %vm197, %v7535, 0
    %v7698 = vsel %vm197, %v7483, 0
    %v7701 = vsel %vm197, %v7484, 0
    %v7704 = vsel %vm197, %v7485, 0
    %v7707 = vsel %vm197, %v7486, 0
    %7709 = vmatprep.subr.bf16.mxu0 0
    %7710 = vmatpush1.bf16.xpose.msra.mxu0 0
    %7711 = vmatprep.subr.bf16.mxu0 0
    %7712 = vmatpush1.bf16.xpose.msra.mxu0 0
    %7713 = vmatprep.subr.bf16.mxu0 0
    %7714 = vmatpush1.bf16.xpose.msra.mxu0 0
    %7715 = vmatprep.subr.bf16.mxu0 0
    %7716 = vmatpush1.bf16.xpose.msra.mxu0 0
    %7717 = vmatprep.subr.bf16.mxu0 0
    %7718 = vmatpush1.bf16.xpose.msra.mxu0 %v7707
    %7719 = vmatprep.subr.bf16.mxu0 0
    %7720 = vmatpush1.bf16.xpose.msra.mxu0 %v7704
    %7721 = vmatprep.subr.bf16.mxu0 0
    %7722 = vmatpush1.bf16.xpose.msra.mxu0 %v7701
    %7723 = vmatprep.subr.bf16.mxu0 0
    %7724 = vmatpush1.bf16.xpose.msra.mxu0 %v7698
    %7725 = vmatprep.subr.bf16.mxu0 0
    %7726 = vmatpush2.bf16.xpose.msra.mxu0 0
    %7727 = vmatprep.subr.bf16.mxu0 0
    %7728 = vmatpush2.bf16.xpose.msra.mxu0 0
    %7729 = vmatprep.subr.bf16.mxu0 0
    %7730 = vmatpush2.bf16.xpose.msra.mxu0 0
    %7731 = vmatprep.subr.bf16.mxu0 0
    %7732 = vmatpush2.bf16.xpose.msra.mxu0 0
    %7733 = vmatprep.subr.bf16.mxu0 0
    %7734 = vmatpush2.bf16.xpose.msra.mxu0 0
    %7735 = vmatprep.subr.bf16.mxu0 0
    %7736 = vmatpush2.bf16.xpose.msra.mxu0 0
    %7737 = vmatprep.subr.bf16.mxu0 0
    %7738 = vmatpush2.bf16.xpose.msra.mxu0 0
    %7739 = vmatprep.subr.bf16.mxu0 0
    %7740 = vmatpush2.bf16.xpose.msra.mxu0 0
    %7741 = vmatprep.mubr.bf16.mxu0 0
    %7742 = vmatmul.mubr.bf16.gmra.mxu0 %v7695
    %v7743 = vpop.f32.mrf.mxu0
    %v7744 = vadd.f32 0.0, %v7743
    %v7745 = vpop.f32.mrf.mxu0
    %v7746 = vpop.f32.mrf.mxu0
    %v7747 = vpop.f32.mrf.mxu0
    %7748 = vdwg.mxu0
    %v7750 = vsel %vm197, %v7551, 0
    %v7753 = vsel %vm197, %v7487, 0
    %v7756 = vsel %vm197, %v7488, 0
    %v7759 = vsel %vm197, %v7489, 0
    %v7762 = vsel %vm197, %v7490, 0
    %7764 = vmatprep.subr.bf16.mxu0 0
    %7765 = vmatpush1.bf16.xpose.msra.mxu0 0
    %7766 = vmatprep.subr.bf16.mxu0 0
    %7767 = vmatpush1.bf16.xpose.msra.mxu0 0
    %7768 = vmatprep.subr.bf16.mxu0 0
    %7769 = vmatpush1.bf16.xpose.msra.mxu0 0
    %7770 = vmatprep.subr.bf16.mxu0 0
    %7771 = vmatpush1.bf16.xpose.msra.mxu0 0
    %7772 = vmatprep.subr.bf16.mxu0 0
    %7773 = vmatpush1.bf16.xpose.msra.mxu0 %v7762
    %7774 = vmatprep.subr.bf16.mxu0 0
    %7775 = vmatpush1.bf16.xpose.msra.mxu0 %v7759
    %7776 = vmatprep.subr.bf16.mxu0 0
    %7777 = vmatpush1.bf16.xpose.msra.mxu0 %v7756
    %7778 = vmatprep.subr.bf16.mxu0 0
    %7779 = vmatpush1.bf16.xpose.msra.mxu0 %v7753
    %7780 = vmatprep.subr.bf16.mxu0 0
    %7781 = vmatpush2.bf16.xpose.msra.mxu0 0
    %7782 = vmatprep.subr.bf16.mxu0 0
    %7783 = vmatpush2.bf16.xpose.msra.mxu0 0
    %7784 = vmatprep.subr.bf16.mxu0 0
    %7785 = vmatpush2.bf16.xpose.msra.mxu0 0
    %7786 = vmatprep.subr.bf16.mxu0 0
    %7787 = vmatpush2.bf16.xpose.msra.mxu0 0
    %7788 = vmatprep.subr.bf16.mxu0 0
    %7789 = vmatpush2.bf16.xpose.msra.mxu0 0
    %7790 = vmatprep.subr.bf16.mxu0 0
    %7791 = vmatpush2.bf16.xpose.msra.mxu0 0
    %7792 = vmatprep.subr.bf16.mxu0 0
    %7793 = vmatpush2.bf16.xpose.msra.mxu0 0
    %7794 = vmatprep.subr.bf16.mxu0 0
    %7795 = vmatpush2.bf16.xpose.msra.mxu0 0
    %7796 = vmatprep.mubr.bf16.mxu0 0
    %7797 = vmatmul.mubr.bf16.gmra.mxu0 %v7750
    %v7798 = vpop.f32.mrf.mxu0
    %v7799 = vadd.f32 0.0, %v7798
    %v7800 = vpop.f32.mrf.mxu0
    %v7801 = vpop.f32.mrf.mxu0
    %v7802 = vpop.f32.mrf.mxu0
    %7803 = vdwg.mxu0
    %v7805 = vsel %vm197, %v7567, 0
    %v7808 = vsel %vm197, %v7491, 0
    %v7811 = vsel %vm197, %v7492, 0
    %v7814 = vsel %vm197, %v7493, 0
    %v7817 = vsel %vm197, %v7494, 0
    %7819 = vmatprep.subr.bf16.mxu0 0
    %7820 = vmatpush1.bf16.xpose.msra.mxu0 0
    %7821 = vmatprep.subr.bf16.mxu0 0
    %7822 = vmatpush1.bf16.xpose.msra.mxu0 0
    %7823 = vmatprep.subr.bf16.mxu0 0
    %7824 = vmatpush1.bf16.xpose.msra.mxu0 0
    %7825 = vmatprep.subr.bf16.mxu0 0
    %7826 = vmatpush1.bf16.xpose.msra.mxu0 0
    %7827 = vmatprep.subr.bf16.mxu0 0
    %7828 = vmatpush1.bf16.xpose.msra.mxu0 %v7817
    %7829 = vmatprep.subr.bf16.mxu0 0
    %7830 = vmatpush1.bf16.xpose.msra.mxu0 %v7814
    %7831 = vmatprep.subr.bf16.mxu0 0
    %7832 = vmatpush1.bf16.xpose.msra.mxu0 %v7811
    %7833 = vmatprep.subr.bf16.mxu0 0
    %7834 = vmatpush1.bf16.xpose.msra.mxu0 %v7808
    %7835 = vmatprep.subr.bf16.mxu0 0
    %7836 = vmatpush2.bf16.xpose.msra.mxu0 0
    %7837 = vmatprep.subr.bf16.mxu0 0
    %7838 = vmatpush2.bf16.xpose.msra.mxu0 0
    %7839 = vmatprep.subr.bf16.mxu0 0
    %7840 = vmatpush2.bf16.xpose.msra.mxu0 0
    %7841 = vmatprep.subr.bf16.mxu0 0
    %7842 = vmatpush2.bf16.xpose.msra.mxu0 0
    %7843 = vmatprep.subr.bf16.mxu0 0
    %7844 = vmatpush2.bf16.xpose.msra.mxu0 0
    %7845 = vmatprep.subr.bf16.mxu0 0
    %7846 = vmatpush2.bf16.xpose.msra.mxu0 0
    %7847 = vmatprep.subr.bf16.mxu0 0
    %7848 = vmatpush2.bf16.xpose.msra.mxu0 0
    %7849 = vmatprep.subr.bf16.mxu0 0
    %7850 = vmatpush2.bf16.xpose.msra.mxu0 0
    %7851 = vmatprep.mubr.bf16.mxu0 0
    %7852 = vmatmul.mubr.bf16.gmra.mxu0 %v7805
    %v7853 = vpop.f32.mrf.mxu0
    %v7854 = vadd.f32 0.0, %v7853
    %v7855 = vpop.f32.mrf.mxu0
    %v7856 = vpop.f32.mrf.mxu0
    %v7857 = vpop.f32.mrf.mxu0
    %7858 = vdwg.mxu0
    %v7860 = vsel %vm197, %v7583, 0
    %v7863 = vsel %vm197, %v7495, 0
    %v7866 = vsel %vm197, %v7496, 0
    %v7869 = vsel %vm197, %v7497, 0
    %v7872 = vsel %vm197, %v7498, 0
    %7874 = vmatprep.subr.bf16.mxu0 0
    %7875 = vmatpush1.bf16.xpose.msra.mxu0 0
    %7876 = vmatprep.subr.bf16.mxu0 0
    %7877 = vmatpush1.bf16.xpose.msra.mxu0 0
    %7878 = vmatprep.subr.bf16.mxu0 0
    %7879 = vmatpush1.bf16.xpose.msra.mxu0 0
    %7880 = vmatprep.subr.bf16.mxu0 0
    %7881 = vmatpush1.bf16.xpose.msra.mxu0 0
    %7882 = vmatprep.subr.bf16.mxu0 0
    %7883 = vmatpush1.bf16.xpose.msra.mxu0 %v7872
    %7884 = vmatprep.subr.bf16.mxu0 0
    %7885 = vmatpush1.bf16.xpose.msra.mxu0 %v7869
    %7886 = vmatprep.subr.bf16.mxu0 0
    %7887 = vmatpush1.bf16.xpose.msra.mxu0 %v7866
    %7888 = vmatprep.subr.bf16.mxu0 0
    %7889 = vmatpush1.bf16.xpose.msra.mxu0 %v7863
    %7890 = vmatprep.subr.bf16.mxu0 0
    %7891 = vmatpush2.bf16.xpose.msra.mxu0 0
    %7892 = vmatprep.subr.bf16.mxu0 0
    %7893 = vmatpush2.bf16.xpose.msra.mxu0 0
    %7894 = vmatprep.subr.bf16.mxu0 0
    %7895 = vmatpush2.bf16.xpose.msra.mxu0 0
    %7896 = vmatprep.subr.bf16.mxu0 0
    %7897 = vmatpush2.bf16.xpose.msra.mxu0 0
    %7898 = vmatprep.subr.bf16.mxu0 0
    %7899 = vmatpush2.bf16.xpose.msra.mxu0 0
    %7900 = vmatprep.subr.bf16.mxu0 0
    %7901 = vmatpush2.bf16.xpose.msra.mxu0 0
    %7902 = vmatprep.subr.bf16.mxu0 0
    %7903 = vmatpush2.bf16.xpose.msra.mxu0 0
    %7904 = vmatprep.subr.bf16.mxu0 0
    %7905 = vmatpush2.bf16.xpose.msra.mxu0 0
    %7906 = vmatprep.mubr.bf16.mxu0 0
    %7907 = vmatmul.mubr.bf16.gmra.mxu0 %v7860
    %v7908 = vpop.f32.mrf.mxu0
    %v7909 = vadd.f32 0.0, %v7908
    %v7910 = vpop.f32.mrf.mxu0
    %v7911 = vpop.f32.mrf.mxu0
    %v7912 = vpop.f32.mrf.mxu0
    %7913 = vdwg.mxu0
    %v7915 = vsel %vm197, %v7599, 0
    %v7918 = vsel %vm197, %v7499, 0
    %v7921 = vsel %vm197, %v7500, 0
    %v7924 = vsel %vm197, %v7501, 0
    %v7927 = vsel %vm197, %v7502, 0
    %7929 = vmatprep.subr.bf16.mxu0 0
    %7930 = vmatpush1.bf16.xpose.msra.mxu0 0
    %7931 = vmatprep.subr.bf16.mxu0 0
    %7932 = vmatpush1.bf16.xpose.msra.mxu0 0
    %7933 = vmatprep.subr.bf16.mxu0 0
    %7934 = vmatpush1.bf16.xpose.msra.mxu0 0
    %7935 = vmatprep.subr.bf16.mxu0 0
    %7936 = vmatpush1.bf16.xpose.msra.mxu0 0
    %7937 = vmatprep.subr.bf16.mxu0 0
    %7938 = vmatpush1.bf16.xpose.msra.mxu0 %v7927
    %7939 = vmatprep.subr.bf16.mxu0 0
    %7940 = vmatpush1.bf16.xpose.msra.mxu0 %v7924
    %7941 = vmatprep.subr.bf16.mxu0 0
    %7942 = vmatpush1.bf16.xpose.msra.mxu0 %v7921
    %7943 = vmatprep.subr.bf16.mxu0 0
    %7944 = vmatpush1.bf16.xpose.msra.mxu0 %v7918
    %7945 = vmatprep.subr.bf16.mxu0 0
    %7946 = vmatpush2.bf16.xpose.msra.mxu0 0
    %7947 = vmatprep.subr.bf16.mxu0 0
    %7948 = vmatpush2.bf16.xpose.msra.mxu0 0
    %7949 = vmatprep.subr.bf16.mxu0 0
    %7950 = vmatpush2.bf16.xpose.msra.mxu0 0
    %7951 = vmatprep.subr.bf16.mxu0 0
    %7952 = vmatpush2.bf16.xpose.msra.mxu0 0
    %7953 = vmatprep.subr.bf16.mxu0 0
    %7954 = vmatpush2.bf16.xpose.msra.mxu0 0
    %7955 = vmatprep.subr.bf16.mxu0 0
    %7956 = vmatpush2.bf16.xpose.msra.mxu0 0
    %7957 = vmatprep.subr.bf16.mxu0 0
    %7958 = vmatpush2.bf16.xpose.msra.mxu0 0
    %7959 = vmatprep.subr.bf16.mxu0 0
    %7960 = vmatpush2.bf16.xpose.msra.mxu0 0
    %7961 = vmatprep.mubr.bf16.mxu0 0
    %7962 = vmatmul.mubr.bf16.gmra.mxu0 %v7915
    %v7963 = vpop.f32.mrf.mxu0
    %v7964 = vadd.f32 0.0, %v7963
    %v7965 = vpop.f32.mrf.mxu0
    %v7966 = vpop.f32.mrf.mxu0
    %v7967 = vpop.f32.mrf.mxu0
    %7968 = vdwg.mxu0
    %v7970 = vsel %vm197, %v7615, 0
    %v7973 = vsel %vm197, %v7503, 0
    %v7976 = vsel %vm197, %v7504, 0
    %v7979 = vsel %vm197, %v7505, 0
    %v7982 = vsel %vm197, %v7506, 0
    %7984 = vmatprep.subr.bf16.mxu0 0
    %7985 = vmatpush1.bf16.xpose.msra.mxu0 0
    %7986 = vmatprep.subr.bf16.mxu0 0
    %7987 = vmatpush1.bf16.xpose.msra.mxu0 0
    %7988 = vmatprep.subr.bf16.mxu0 0
    %7989 = vmatpush1.bf16.xpose.msra.mxu0 0
    %7990 = vmatprep.subr.bf16.mxu0 0
    %7991 = vmatpush1.bf16.xpose.msra.mxu0 0
    %7992 = vmatprep.subr.bf16.mxu0 0
    %7993 = vmatpush1.bf16.xpose.msra.mxu0 %v7982
    %7994 = vmatprep.subr.bf16.mxu0 0
    %7995 = vmatpush1.bf16.xpose.msra.mxu0 %v7979
    %7996 = vmatprep.subr.bf16.mxu0 0
    %7997 = vmatpush1.bf16.xpose.msra.mxu0 %v7976
    %7998 = vmatprep.subr.bf16.mxu0 0
    %7999 = vmatpush1.bf16.xpose.msra.mxu0 %v7973
    %8000 = vmatprep.subr.bf16.mxu0 0
    %8001 = vmatpush2.bf16.xpose.msra.mxu0 0
    %8002 = vmatprep.subr.bf16.mxu0 0
    %8003 = vmatpush2.bf16.xpose.msra.mxu0 0
    %8004 = vmatprep.subr.bf16.mxu0 0
    %8005 = vmatpush2.bf16.xpose.msra.mxu0 0
    %8006 = vmatprep.subr.bf16.mxu0 0
    %8007 = vmatpush2.bf16.xpose.msra.mxu0 0
    %8008 = vmatprep.subr.bf16.mxu0 0
    %8009 = vmatpush2.bf16.xpose.msra.mxu0 0
    %8010 = vmatprep.subr.bf16.mxu0 0
    %8011 = vmatpush2.bf16.xpose.msra.mxu0 0
    %8012 = vmatprep.subr.bf16.mxu0 0
    %8013 = vmatpush2.bf16.xpose.msra.mxu0 0
    %8014 = vmatprep.subr.bf16.mxu0 0
    %8015 = vmatpush2.bf16.xpose.msra.mxu0 0
    %8016 = vmatprep.mubr.bf16.mxu0 0
    %8017 = vmatmul.mubr.bf16.gmra.mxu0 %v7970
    %v8018 = vpop.f32.mrf.mxu0
    %v8019 = vadd.f32 0.0, %v8018
    %v8020 = vpop.f32.mrf.mxu0
    %v8021 = vpop.f32.mrf.mxu0
    %v8022 = vpop.f32.mrf.mxu0
    %8023 = vdwg.mxu0
    %v8025 = vsel %vm197, %v7631, 0
    %v8028 = vsel %vm197, %v7507, 0
    %v8031 = vsel %vm197, %v7508, 0
    %v8034 = vsel %vm197, %v7509, 0
    %v8037 = vsel %vm197, %v7510, 0
    %8039 = vmatprep.subr.bf16.mxu0 0
    %8040 = vmatpush1.bf16.xpose.msra.mxu0 0
    %8041 = vmatprep.subr.bf16.mxu0 0
    %8042 = vmatpush1.bf16.xpose.msra.mxu0 0
    %8043 = vmatprep.subr.bf16.mxu0 0
    %8044 = vmatpush1.bf16.xpose.msra.mxu0 0
    %8045 = vmatprep.subr.bf16.mxu0 0
    %8046 = vmatpush1.bf16.xpose.msra.mxu0 0
    %8047 = vmatprep.subr.bf16.mxu0 0
    %8048 = vmatpush1.bf16.xpose.msra.mxu0 %v8037
    %8049 = vmatprep.subr.bf16.mxu0 0
    %8050 = vmatpush1.bf16.xpose.msra.mxu0 %v8034
    %8051 = vmatprep.subr.bf16.mxu0 0
    %8052 = vmatpush1.bf16.xpose.msra.mxu0 %v8031
    %8053 = vmatprep.subr.bf16.mxu0 0
    %8054 = vmatpush1.bf16.xpose.msra.mxu0 %v8028
    %8055 = vmatprep.subr.bf16.mxu0 0
    %8056 = vmatpush2.bf16.xpose.msra.mxu0 0
    %8057 = vmatprep.subr.bf16.mxu0 0
    %8058 = vmatpush2.bf16.xpose.msra.mxu0 0
    %8059 = vmatprep.subr.bf16.mxu0 0
    %8060 = vmatpush2.bf16.xpose.msra.mxu0 0
    %8061 = vmatprep.subr.bf16.mxu0 0
    %8062 = vmatpush2.bf16.xpose.msra.mxu0 0
    %8063 = vmatprep.subr.bf16.mxu0 0
    %8064 = vmatpush2.bf16.xpose.msra.mxu0 0
    %8065 = vmatprep.subr.bf16.mxu0 0
    %8066 = vmatpush2.bf16.xpose.msra.mxu0 0
    %8067 = vmatprep.subr.bf16.mxu0 0
    %8068 = vmatpush2.bf16.xpose.msra.mxu0 0
    %8069 = vmatprep.subr.bf16.mxu0 0
    %8070 = vmatpush2.bf16.xpose.msra.mxu0 0
    %8071 = vmatprep.mubr.bf16.mxu0 0
    %8072 = vmatmul.mubr.bf16.gmra.mxu0 %v8025
    %v8073 = vpop.f32.mrf.mxu0
    %v8074 = vadd.f32 0.0, %v8073
    %v8075 = vpop.f32.mrf.mxu0
    %v8076 = vpop.f32.mrf.mxu0
    %v8077 = vpop.f32.mrf.mxu0
    %8078 = vdwg.mxu0
    %8079 = vxpose.xlu0.b32.start [1/16] %v7689, 128
    %8080 = vxpose.xlu0.b32.cont [2/16] 0.0, 128
    %8081 = vxpose.xlu0.b32.cont [3/16] 0.0, 128
    %8082 = vxpose.xlu0.b32.cont [4/16] 0.0, 128
    %8083 = vxpose.xlu0.b32.cont [5/16] 0.0, 128
    %8084 = vxpose.xlu0.b32.cont [6/16] 0.0, 128
    %8085 = vxpose.xlu0.b32.cont [7/16] 0.0, 128
    %8086 = vxpose.xlu0.b32.cont [8/16] 0.0, 128
    %8087 = vxpose.xlu0.b32.cont [9/16] 0.0, 128
    %8088 = vxpose.xlu0.b32.cont [10/16] 0.0, 128
    %8089 = vxpose.xlu0.b32.cont [11/16] 0.0, 128
    %8090 = vxpose.xlu0.b32.cont [12/16] 0.0, 128
    %8091 = vxpose.xlu0.b32.cont [13/16] 0.0, 128
    %8092 = vxpose.xlu0.b32.cont [14/16] 0.0, 128
    %8093 = vxpose.xlu0.b32.cont [15/16] 0.0, 128
    %8094 = vxpose.xlu0.b32.end [16/16] 0.0, 128
    %v8095 = vpop.trf.xlu0
    %v8096 = vpop.trf.xlu0
    %v8097 = vpop.trf.xlu0
    %v8098 = vpop.trf.xlu0
    %v8099 = vpop.trf.xlu0
    %v8100 = vpop.trf.xlu0
    %v8101 = vpop.trf.xlu0
    %v8102 = vpop.trf.xlu0
    %v8103 = vpop.trf.xlu0
    %v8104 = vpop.trf.xlu0
    %v8105 = vpop.trf.xlu0
    %v8106 = vpop.trf.xlu0
    %v8107 = vpop.trf.xlu0
    %v8108 = vpop.trf.xlu0
    %v8109 = vpop.trf.xlu0
    %v8110 = vpop.trf.xlu0
    %8111 = vxpose.xlu0.b32.start [1/16] %v7744, 128
    %8112 = vxpose.xlu0.b32.cont [2/16] 0.0, 128
    %8113 = vxpose.xlu0.b32.cont [3/16] 0.0, 128
    %8114 = vxpose.xlu0.b32.cont [4/16] 0.0, 128
    %8115 = vxpose.xlu0.b32.cont [5/16] 0.0, 128
    %8116 = vxpose.xlu0.b32.cont [6/16] 0.0, 128
    %8117 = vxpose.xlu0.b32.cont [7/16] 0.0, 128
    %8118 = vxpose.xlu0.b32.cont [8/16] 0.0, 128
    %8119 = vxpose.xlu0.b32.cont [9/16] 0.0, 128
    %8120 = vxpose.xlu0.b32.cont [10/16] 0.0, 128
    %8121 = vxpose.xlu0.b32.cont [11/16] 0.0, 128
    %8122 = vxpose.xlu0.b32.cont [12/16] 0.0, 128
    %8123 = vxpose.xlu0.b32.cont [13/16] 0.0, 128
    %8124 = vxpose.xlu0.b32.cont [14/16] 0.0, 128
    %8125 = vxpose.xlu0.b32.cont [15/16] 0.0, 128
    %8126 = vxpose.xlu0.b32.end [16/16] 0.0, 128
    %v8127 = vpop.trf.xlu0
    %v8128 = vpop.trf.xlu0
    %v8129 = vpop.trf.xlu0
    %v8130 = vpop.trf.xlu0
    %v8131 = vpop.trf.xlu0
    %v8132 = vpop.trf.xlu0
    %v8133 = vpop.trf.xlu0
    %v8134 = vpop.trf.xlu0
    %v8135 = vpop.trf.xlu0
    %v8136 = vpop.trf.xlu0
    %v8137 = vpop.trf.xlu0
    %v8138 = vpop.trf.xlu0
    %v8139 = vpop.trf.xlu0
    %v8140 = vpop.trf.xlu0
    %v8141 = vpop.trf.xlu0
    %v8142 = vpop.trf.xlu0
    %8143 = vxpose.xlu0.b32.start [1/16] %v7799, 128
    %8144 = vxpose.xlu0.b32.cont [2/16] 0.0, 128
    %8145 = vxpose.xlu0.b32.cont [3/16] 0.0, 128
    %8146 = vxpose.xlu0.b32.cont [4/16] 0.0, 128
    %8147 = vxpose.xlu0.b32.cont [5/16] 0.0, 128
    %8148 = vxpose.xlu0.b32.cont [6/16] 0.0, 128
    %8149 = vxpose.xlu0.b32.cont [7/16] 0.0, 128
    %8150 = vxpose.xlu0.b32.cont [8/16] 0.0, 128
    %8151 = vxpose.xlu0.b32.cont [9/16] 0.0, 128
    %8152 = vxpose.xlu0.b32.cont [10/16] 0.0, 128
    %8153 = vxpose.xlu0.b32.cont [11/16] 0.0, 128
    %8154 = vxpose.xlu0.b32.cont [12/16] 0.0, 128
    %8155 = vxpose.xlu0.b32.cont [13/16] 0.0, 128
    %8156 = vxpose.xlu0.b32.cont [14/16] 0.0, 128
    %8157 = vxpose.xlu0.b32.cont [15/16] 0.0, 128
    %8158 = vxpose.xlu0.b32.end [16/16] 0.0, 128
    %v8159 = vpop.trf.xlu0
    %v8160 = vpop.trf.xlu0
    %v8161 = vpop.trf.xlu0
    %v8162 = vpop.trf.xlu0
    %v8163 = vpop.trf.xlu0
    %v8164 = vpop.trf.xlu0
    %v8165 = vpop.trf.xlu0
    %v8166 = vpop.trf.xlu0
    %v8167 = vpop.trf.xlu0
    %v8168 = vpop.trf.xlu0
    %v8169 = vpop.trf.xlu0
    %v8170 = vpop.trf.xlu0
    %v8171 = vpop.trf.xlu0
    %v8172 = vpop.trf.xlu0
    %v8173 = vpop.trf.xlu0
    %v8174 = vpop.trf.xlu0
    %8175 = vxpose.xlu0.b32.start [1/16] %v7854, 128
    %8176 = vxpose.xlu0.b32.cont [2/16] 0.0, 128
    %8177 = vxpose.xlu0.b32.cont [3/16] 0.0, 128
    %8178 = vxpose.xlu0.b32.cont [4/16] 0.0, 128
    %8179 = vxpose.xlu0.b32.cont [5/16] 0.0, 128
    %8180 = vxpose.xlu0.b32.cont [6/16] 0.0, 128
    %8181 = vxpose.xlu0.b32.cont [7/16] 0.0, 128
    %8182 = vxpose.xlu0.b32.cont [8/16] 0.0, 128
    %8183 = vxpose.xlu0.b32.cont [9/16] 0.0, 128
    %8184 = vxpose.xlu0.b32.cont [10/16] 0.0, 128
    %8185 = vxpose.xlu0.b32.cont [11/16] 0.0, 128
    %8186 = vxpose.xlu0.b32.cont [12/16] 0.0, 128
    %8187 = vxpose.xlu0.b32.cont [13/16] 0.0, 128
    %8188 = vxpose.xlu0.b32.cont [14/16] 0.0, 128
    %8189 = vxpose.xlu0.b32.cont [15/16] 0.0, 128
    %8190 = vxpose.xlu0.b32.end [16/16] 0.0, 128
    %v8191 = vpop.trf.xlu0
    %v8192 = vpop.trf.xlu0
    %v8193 = vpop.trf.xlu0
    %v8194 = vpop.trf.xlu0
    %v8195 = vpop.trf.xlu0
    %v8196 = vpop.trf.xlu0
    %v8197 = vpop.trf.xlu0
    %v8198 = vpop.trf.xlu0
    %v8199 = vpop.trf.xlu0
    %v8200 = vpop.trf.xlu0
    %v8201 = vpop.trf.xlu0
    %v8202 = vpop.trf.xlu0
    %v8203 = vpop.trf.xlu0
    %v8204 = vpop.trf.xlu0
    %v8205 = vpop.trf.xlu0
    %v8206 = vpop.trf.xlu0
    %8207 = vxpose.xlu0.b32.start [1/16] %v7909, 128
    %8208 = vxpose.xlu0.b32.cont [2/16] 0.0, 128
    %8209 = vxpose.xlu0.b32.cont [3/16] 0.0, 128
    %8210 = vxpose.xlu0.b32.cont [4/16] 0.0, 128
    %8211 = vxpose.xlu0.b32.cont [5/16] 0.0, 128
    %8212 = vxpose.xlu0.b32.cont [6/16] 0.0, 128
    %8213 = vxpose.xlu0.b32.cont [7/16] 0.0, 128
    %8214 = vxpose.xlu0.b32.cont [8/16] 0.0, 128
    %8215 = vxpose.xlu0.b32.cont [9/16] 0.0, 128
    %8216 = vxpose.xlu0.b32.cont [10/16] 0.0, 128
    %8217 = vxpose.xlu0.b32.cont [11/16] 0.0, 128
    %8218 = vxpose.xlu0.b32.cont [12/16] 0.0, 128
    %8219 = vxpose.xlu0.b32.cont [13/16] 0.0, 128
    %8220 = vxpose.xlu0.b32.cont [14/16] 0.0, 128
    %8221 = vxpose.xlu0.b32.cont [15/16] 0.0, 128
    %8222 = vxpose.xlu0.b32.end [16/16] 0.0, 128
    %v8223 = vpop.trf.xlu0
    %v8224 = vpop.trf.xlu0
    %v8225 = vpop.trf.xlu0
    %v8226 = vpop.trf.xlu0
    %v8227 = vpop.trf.xlu0
    %v8228 = vpop.trf.xlu0
    %v8229 = vpop.trf.xlu0
    %v8230 = vpop.trf.xlu0
    %v8231 = vpop.trf.xlu0
    %v8232 = vpop.trf.xlu0
    %v8233 = vpop.trf.xlu0
    %v8234 = vpop.trf.xlu0
    %v8235 = vpop.trf.xlu0
    %v8236 = vpop.trf.xlu0
    %v8237 = vpop.trf.xlu0
    %v8238 = vpop.trf.xlu0
    %8239 = vxpose.xlu0.b32.start [1/16] %v7964, 128
    %8240 = vxpose.xlu0.b32.cont [2/16] 0.0, 128
    %8241 = vxpose.xlu0.b32.cont [3/16] 0.0, 128
    %8242 = vxpose.xlu0.b32.cont [4/16] 0.0, 128
    %8243 = vxpose.xlu0.b32.cont [5/16] 0.0, 128
    %8244 = vxpose.xlu0.b32.cont [6/16] 0.0, 128
    %8245 = vxpose.xlu0.b32.cont [7/16] 0.0, 128
    %8246 = vxpose.xlu0.b32.cont [8/16] 0.0, 128
    %8247 = vxpose.xlu0.b32.cont [9/16] 0.0, 128
    %8248 = vxpose.xlu0.b32.cont [10/16] 0.0, 128
    %8249 = vxpose.xlu0.b32.cont [11/16] 0.0, 128
    %8250 = vxpose.xlu0.b32.cont [12/16] 0.0, 128
    %8251 = vxpose.xlu0.b32.cont [13/16] 0.0, 128
    %8252 = vxpose.xlu0.b32.cont [14/16] 0.0, 128
    %8253 = vxpose.xlu0.b32.cont [15/16] 0.0, 128
    %8254 = vxpose.xlu0.b32.end [16/16] 0.0, 128
    %v8255 = vpop.trf.xlu0
    %v8256 = vpop.trf.xlu0
    %v8257 = vpop.trf.xlu0
    %v8258 = vpop.trf.xlu0
    %v8259 = vpop.trf.xlu0
    %v8260 = vpop.trf.xlu0
    %v8261 = vpop.trf.xlu0
    %v8262 = vpop.trf.xlu0
    %v8263 = vpop.trf.xlu0
    %v8264 = vpop.trf.xlu0
    %v8265 = vpop.trf.xlu0
    %v8266 = vpop.trf.xlu0
    %v8267 = vpop.trf.xlu0
    %v8268 = vpop.trf.xlu0
    %v8269 = vpop.trf.xlu0
    %v8270 = vpop.trf.xlu0
    %8271 = vxpose.xlu0.b32.start [1/16] %v8019, 128
    %8272 = vxpose.xlu0.b32.cont [2/16] 0.0, 128
    %8273 = vxpose.xlu0.b32.cont [3/16] 0.0, 128
    %8274 = vxpose.xlu0.b32.cont [4/16] 0.0, 128
    %8275 = vxpose.xlu0.b32.cont [5/16] 0.0, 128
    %8276 = vxpose.xlu0.b32.cont [6/16] 0.0, 128
    %8277 = vxpose.xlu0.b32.cont [7/16] 0.0, 128
    %8278 = vxpose.xlu0.b32.cont [8/16] 0.0, 128
    %8279 = vxpose.xlu0.b32.cont [9/16] 0.0, 128
    %8280 = vxpose.xlu0.b32.cont [10/16] 0.0, 128
    %8281 = vxpose.xlu0.b32.cont [11/16] 0.0, 128
    %8282 = vxpose.xlu0.b32.cont [12/16] 0.0, 128
    %8283 = vxpose.xlu0.b32.cont [13/16] 0.0, 128
    %8284 = vxpose.xlu0.b32.cont [14/16] 0.0, 128
    %8285 = vxpose.xlu0.b32.cont [15/16] 0.0, 128
    %8286 = vxpose.xlu0.b32.end [16/16] 0.0, 128
    %v8287 = vpop.trf.xlu0
    %v8288 = vpop.trf.xlu0
    %v8289 = vpop.trf.xlu0
    %v8290 = vpop.trf.xlu0
    %v8291 = vpop.trf.xlu0
    %v8292 = vpop.trf.xlu0
    %v8293 = vpop.trf.xlu0
    %v8294 = vpop.trf.xlu0
    %v8295 = vpop.trf.xlu0
    %v8296 = vpop.trf.xlu0
    %v8297 = vpop.trf.xlu0
    %v8298 = vpop.trf.xlu0
    %v8299 = vpop.trf.xlu0
    %v8300 = vpop.trf.xlu0
    %v8301 = vpop.trf.xlu0
    %v8302 = vpop.trf.xlu0
    %8303 = vxpose.xlu0.b32.start [1/16] %v8074, 128
    %8304 = vxpose.xlu0.b32.cont [2/16] 0.0, 128
    %8305 = vxpose.xlu0.b32.cont [3/16] 0.0, 128
    %8306 = vxpose.xlu0.b32.cont [4/16] 0.0, 128
    %8307 = vxpose.xlu0.b32.cont [5/16] 0.0, 128
    %8308 = vxpose.xlu0.b32.cont [6/16] 0.0, 128
    %8309 = vxpose.xlu0.b32.cont [7/16] 0.0, 128
    %8310 = vxpose.xlu0.b32.cont [8/16] 0.0, 128
    %8311 = vxpose.xlu0.b32.cont [9/16] 0.0, 128
    %8312 = vxpose.xlu0.b32.cont [10/16] 0.0, 128
    %8313 = vxpose.xlu0.b32.cont [11/16] 0.0, 128
    %8314 = vxpose.xlu0.b32.cont [12/16] 0.0, 128
    %8315 = vxpose.xlu0.b32.cont [13/16] 0.0, 128
    %8316 = vxpose.xlu0.b32.cont [14/16] 0.0, 128
    %8317 = vxpose.xlu0.b32.cont [15/16] 0.0, 128
    %8318 = vxpose.xlu0.b32.end [16/16] 0.0, 128
    %v8319 = vpop.trf.xlu0
    %v8320 = vpop.trf.xlu0
    %v8321 = vpop.trf.xlu0
    %v8322 = vpop.trf.xlu0
    %v8323 = vpop.trf.xlu0
    %v8324 = vpop.trf.xlu0
    %v8325 = vpop.trf.xlu0
    %v8326 = vpop.trf.xlu0
    %v8327 = vpop.trf.xlu0
    %v8328 = vpop.trf.xlu0
    %v8329 = vpop.trf.xlu0
    %v8330 = vpop.trf.xlu0
    %v8331 = vpop.trf.xlu0
    %v8332 = vpop.trf.xlu0
    %v8333 = vpop.trf.xlu0
    %v8334 = vpop.trf.xlu0
    %v8335 = vcombine.low %v8095, %v8159
    %v8336 = vcombine.high %v8095, %v8159
    %v8338 = vunpack.c.l.s4 1983009808
    %v8339 = vunpack.c.0.s8 %v8338
    %v8340 = vlaneseq
    %v8341 = vshrl.u32 %v8340, 7
    %v8342 = vsub.s32 %v8339, %v8341
    %v8343 = vrot.slane %v8335, %v8342
    %v8345 = vunpack.c.l.s4 1983009808
    %v8346 = vunpack.c.0.s8 %v8345
    %v8347 = vlaneseq
    %v8348 = vshrl.u32 %v8347, 7
    %v8349 = vsub.s32 %v8346, %v8348
    %v8350 = vrot.slane %v8336, %v8349
    %v8351 = vcombine.low %v8127, %v8191
    %v8352 = vcombine.high %v8127, %v8191
    %v8354 = vunpack.c.l.s4 1983009808
    %v8355 = vunpack.c.0.s8 %v8354
    %v8356 = vlaneseq
    %v8357 = vshrl.u32 %v8356, 7
    %v8358 = vsub.s32 %v8355, %v8357
    %v8359 = vrot.slane %v8351, %v8358
    %v8361 = vunpack.c.l.s4 1983009808
    %v8362 = vunpack.c.0.s8 %v8361
    %v8363 = vlaneseq
    %v8364 = vshrl.u32 %v8363, 7
    %v8365 = vsub.s32 %v8362, %v8364
    %v8366 = vrot.slane %v8352, %v8365
    %v8367 = vcombine.low %v8223, %v8287
    %v8368 = vcombine.high %v8223, %v8287
    %v8370 = vunpack.c.l.s4 1983009808
    %v8371 = vunpack.c.0.s8 %v8370
    %v8372 = vlaneseq
    %v8373 = vshrl.u32 %v8372, 7
    %v8374 = vsub.s32 %v8371, %v8373
    %v8375 = vrot.slane %v8367, %v8374
    %v8377 = vunpack.c.l.s4 1983009808
    %v8378 = vunpack.c.0.s8 %v8377
    %v8379 = vlaneseq
    %v8380 = vshrl.u32 %v8379, 7
    %v8381 = vsub.s32 %v8378, %v8380
    %v8382 = vrot.slane %v8368, %v8381
    %v8383 = vcombine.low %v8255, %v8319
    %v8384 = vcombine.high %v8255, %v8319
    %v8386 = vunpack.c.l.s4 1983009808
    %v8387 = vunpack.c.0.s8 %v8386
    %v8388 = vlaneseq
    %v8389 = vshrl.u32 %v8388, 7
    %v8390 = vsub.s32 %v8387, %v8389
    %v8391 = vrot.slane %v8383, %v8390
    %v8393 = vunpack.c.l.s4 1983009808
    %v8394 = vunpack.c.0.s8 %v8393
    %v8395 = vlaneseq
    %v8396 = vshrl.u32 %v8395, 7
    %v8397 = vsub.s32 %v8394, %v8396
    %v8398 = vrot.slane %v8384, %v8397
    %v8399 = vcombine.low %v8343, %v8359
    %v8400 = vcombine.high %v8343, %v8359
    %v8402 = vunpack.c.l.s4 1934713408
    %v8403 = vunpack.c.0.s8 %v8402
    %v8404 = vlaneseq
    %v8405 = vshrl.u32 %v8404, 7
    %v8406 = vsub.s32 %v8403, %v8405
    %v8407 = vrot.slane %v8399, %v8406
    %v8409 = vunpack.c.l.s4 1934713408
    %v8410 = vunpack.c.0.s8 %v8409
    %v8411 = vlaneseq
    %v8412 = vshrl.u32 %v8411, 7
    %v8413 = vsub.s32 %v8410, %v8412
    %v8414 = vrot.slane %v8400, %v8413
    %v8415 = vcombine.low %v8350, %v8366
    %v8416 = vcombine.high %v8350, %v8366
    %v8418 = vunpack.c.l.s4 1934713408
    %v8419 = vunpack.c.0.s8 %v8418
    %v8420 = vlaneseq
    %v8421 = vshrl.u32 %v8420, 7
    %v8422 = vsub.s32 %v8419, %v8421
    %v8423 = vrot.slane %v8415, %v8422
    %v8425 = vunpack.c.l.s4 1934713408
    %v8426 = vunpack.c.0.s8 %v8425
    %v8427 = vlaneseq
    %v8428 = vshrl.u32 %v8427, 7
    %v8429 = vsub.s32 %v8426, %v8428
    %v8430 = vrot.slane %v8416, %v8429
    %v8431 = vcombine.low %v8375, %v8391
    %v8432 = vcombine.high %v8375, %v8391
    %v8434 = vunpack.c.l.s4 1934713408
    %v8435 = vunpack.c.0.s8 %v8434
    %v8436 = vlaneseq
    %v8437 = vshrl.u32 %v8436, 7
    %v8438 = vsub.s32 %v8435, %v8437
    %v8439 = vrot.slane %v8431, %v8438
    %v8441 = vunpack.c.l.s4 1934713408
    %v8442 = vunpack.c.0.s8 %v8441
    %v8443 = vlaneseq
    %v8444 = vshrl.u32 %v8443, 7
    %v8445 = vsub.s32 %v8442, %v8444
    %v8446 = vrot.slane %v8432, %v8445
    %v8447 = vcombine.low %v8382, %v8398
    %v8448 = vcombine.high %v8382, %v8398
    %v8450 = vunpack.c.l.s4 1934713408
    %v8451 = vunpack.c.0.s8 %v8450
    %v8452 = vlaneseq
    %v8453 = vshrl.u32 %v8452, 7
    %v8454 = vsub.s32 %v8451, %v8453
    %v8455 = vrot.slane %v8447, %v8454
    %v8457 = vunpack.c.l.s4 1934713408
    %v8458 = vunpack.c.0.s8 %v8457
    %v8459 = vlaneseq
    %v8460 = vshrl.u32 %v8459, 7
    %v8461 = vsub.s32 %v8458, %v8460
    %v8462 = vrot.slane %v8448, %v8461
    %v8463 = vcombine.low %v8407, %v8439
    %v8464 = vcombine.high %v8407, %v8439
    %v8465 = vcombine.low %v8414, %v8446
    %v8466 = vcombine.high %v8414, %v8446
    %v8467 = vcombine.low %v8423, %v8455
    %v8468 = vcombine.high %v8423, %v8455
    %v8469 = vcombine.low %v8430, %v8462
    %v8470 = vcombine.high %v8430, %v8462
    %v8471 = vcombine.low %v8096, %v8160
    %v8472 = vcombine.high %v8096, %v8160
    %v8474 = vunpack.c.l.s4 1983009808
    %v8475 = vunpack.c.0.s8 %v8474
    %v8476 = vlaneseq
    %v8477 = vshrl.u32 %v8476, 7
    %v8478 = vsub.s32 %v8475, %v8477
    %v8479 = vrot.slane %v8471, %v8478
    %v8481 = vunpack.c.l.s4 1983009808
    %v8482 = vunpack.c.0.s8 %v8481
    %v8483 = vlaneseq
    %v8484 = vshrl.u32 %v8483, 7
    %v8485 = vsub.s32 %v8482, %v8484
    %v8486 = vrot.slane %v8472, %v8485
    %v8487 = vcombine.low %v8128, %v8192
    %v8488 = vcombine.high %v8128, %v8192
    %v8490 = vunpack.c.l.s4 1983009808
    %v8491 = vunpack.c.0.s8 %v8490
    %v8492 = vlaneseq
    %v8493 = vshrl.u32 %v8492, 7
    %v8494 = vsub.s32 %v8491, %v8493
    %v8495 = vrot.slane %v8487, %v8494
    %v8497 = vunpack.c.l.s4 1983009808
    %v8498 = vunpack.c.0.s8 %v8497
    %v8499 = vlaneseq
    %v8500 = vshrl.u32 %v8499, 7
    %v8501 = vsub.s32 %v8498, %v8500
    %v8502 = vrot.slane %v8488, %v8501
    %v8503 = vcombine.low %v8224, %v8288
    %v8504 = vcombine.high %v8224, %v8288
    %v8506 = vunpack.c.l.s4 1983009808
    %v8507 = vunpack.c.0.s8 %v8506
    %v8508 = vlaneseq
    %v8509 = vshrl.u32 %v8508, 7
    %v8510 = vsub.s32 %v8507, %v8509
    %v8511 = vrot.slane %v8503, %v8510
    %v8513 = vunpack.c.l.s4 1983009808
    %v8514 = vunpack.c.0.s8 %v8513
    %v8515 = vlaneseq
    %v8516 = vshrl.u32 %v8515, 7
    %v8517 = vsub.s32 %v8514, %v8516
    %v8518 = vrot.slane %v8504, %v8517
    %v8519 = vcombine.low %v8256, %v8320
    %v8520 = vcombine.high %v8256, %v8320
    %v8522 = vunpack.c.l.s4 1983009808
    %v8523 = vunpack.c.0.s8 %v8522
    %v8524 = vlaneseq
    %v8525 = vshrl.u32 %v8524, 7
    %v8526 = vsub.s32 %v8523, %v8525
    %v8527 = vrot.slane %v8519, %v8526
    %v8529 = vunpack.c.l.s4 1983009808
    %v8530 = vunpack.c.0.s8 %v8529
    %v8531 = vlaneseq
    %v8532 = vshrl.u32 %v8531, 7
    %v8533 = vsub.s32 %v8530, %v8532
    %v8534 = vrot.slane %v8520, %v8533
    %v8535 = vcombine.low %v8479, %v8495
    %v8536 = vcombine.high %v8479, %v8495
    %v8538 = vunpack.c.l.s4 1934713408
    %v8539 = vunpack.c.0.s8 %v8538
    %v8540 = vlaneseq
    %v8541 = vshrl.u32 %v8540, 7
    %v8542 = vsub.s32 %v8539, %v8541
    %v8543 = vrot.slane %v8535, %v8542
    %v8545 = vunpack.c.l.s4 1934713408
    %v8546 = vunpack.c.0.s8 %v8545
    %v8547 = vlaneseq
    %v8548 = vshrl.u32 %v8547, 7
    %v8549 = vsub.s32 %v8546, %v8548
    %v8550 = vrot.slane %v8536, %v8549
    %v8551 = vcombine.low %v8486, %v8502
    %v8552 = vcombine.high %v8486, %v8502
    %v8554 = vunpack.c.l.s4 1934713408
    %v8555 = vunpack.c.0.s8 %v8554
    %v8556 = vlaneseq
    %v8557 = vshrl.u32 %v8556, 7
    %v8558 = vsub.s32 %v8555, %v8557
    %v8559 = vrot.slane %v8551, %v8558
    %v8561 = vunpack.c.l.s4 1934713408
    %v8562 = vunpack.c.0.s8 %v8561
    %v8563 = vlaneseq
    %v8564 = vshrl.u32 %v8563, 7
    %v8565 = vsub.s32 %v8562, %v8564
    %v8566 = vrot.slane %v8552, %v8565
    %v8567 = vcombine.low %v8511, %v8527
    %v8568 = vcombine.high %v8511, %v8527
    %v8570 = vunpack.c.l.s4 1934713408
    %v8571 = vunpack.c.0.s8 %v8570
    %v8572 = vlaneseq
    %v8573 = vshrl.u32 %v8572, 7
    %v8574 = vsub.s32 %v8571, %v8573
    %v8575 = vrot.slane %v8567, %v8574
    %v8577 = vunpack.c.l.s4 1934713408
    %v8578 = vunpack.c.0.s8 %v8577
    %v8579 = vlaneseq
    %v8580 = vshrl.u32 %v8579, 7
    %v8581 = vsub.s32 %v8578, %v8580
    %v8582 = vrot.slane %v8568, %v8581
    %v8583 = vcombine.low %v8518, %v8534
    %v8584 = vcombine.high %v8518, %v8534
    %v8586 = vunpack.c.l.s4 1934713408
    %v8587 = vunpack.c.0.s8 %v8586
    %v8588 = vlaneseq
    %v8589 = vshrl.u32 %v8588, 7
    %v8590 = vsub.s32 %v8587, %v8589
    %v8591 = vrot.slane %v8583, %v8590
    %v8593 = vunpack.c.l.s4 1934713408
    %v8594 = vunpack.c.0.s8 %v8593
    %v8595 = vlaneseq
    %v8596 = vshrl.u32 %v8595, 7
    %v8597 = vsub.s32 %v8594, %v8596
    %v8598 = vrot.slane %v8584, %v8597
    %v8599 = vcombine.low %v8543, %v8575
    %v8600 = vcombine.high %v8543, %v8575
    %v8601 = vcombine.low %v8550, %v8582
    %v8602 = vcombine.high %v8550, %v8582
    %v8603 = vcombine.low %v8559, %v8591
    %v8604 = vcombine.high %v8559, %v8591
    %v8605 = vcombine.low %v8566, %v8598
    %v8606 = vcombine.high %v8566, %v8598
    %v8607 = vcombine.low %v8097, %v8161
    %v8608 = vcombine.high %v8097, %v8161
    %v8610 = vunpack.c.l.s4 1983009808
    %v8611 = vunpack.c.0.s8 %v8610
    %v8612 = vlaneseq
    %v8613 = vshrl.u32 %v8612, 7
    %v8614 = vsub.s32 %v8611, %v8613
    %v8615 = vrot.slane %v8607, %v8614
    %v8617 = vunpack.c.l.s4 1983009808
    %v8618 = vunpack.c.0.s8 %v8617
    %v8619 = vlaneseq
    %v8620 = vshrl.u32 %v8619, 7
    %v8621 = vsub.s32 %v8618, %v8620
    %v8622 = vrot.slane %v8608, %v8621
    %v8623 = vcombine.low %v8129, %v8193
    %v8624 = vcombine.high %v8129, %v8193
    %v8626 = vunpack.c.l.s4 1983009808
    %v8627 = vunpack.c.0.s8 %v8626
    %v8628 = vlaneseq
    %v8629 = vshrl.u32 %v8628, 7
    %v8630 = vsub.s32 %v8627, %v8629
    %v8631 = vrot.slane %v8623, %v8630
    %v8633 = vunpack.c.l.s4 1983009808
    %v8634 = vunpack.c.0.s8 %v8633
    %v8635 = vlaneseq
    %v8636 = vshrl.u32 %v8635, 7
    %v8637 = vsub.s32 %v8634, %v8636
    %v8638 = vrot.slane %v8624, %v8637
    %v8639 = vcombine.low %v8225, %v8289
    %v8640 = vcombine.high %v8225, %v8289
    %v8642 = vunpack.c.l.s4 1983009808
    %v8643 = vunpack.c.0.s8 %v8642
    %v8644 = vlaneseq
    %v8645 = vshrl.u32 %v8644, 7
    %v8646 = vsub.s32 %v8643, %v8645
    %v8647 = vrot.slane %v8639, %v8646
    %v8649 = vunpack.c.l.s4 1983009808
    %v8650 = vunpack.c.0.s8 %v8649
    %v8651 = vlaneseq
    %v8652 = vshrl.u32 %v8651, 7
    %v8653 = vsub.s32 %v8650, %v8652
    %v8654 = vrot.slane %v8640, %v8653
    %v8655 = vcombine.low %v8257, %v8321
    %v8656 = vcombine.high %v8257, %v8321
    %v8658 = vunpack.c.l.s4 1983009808
    %v8659 = vunpack.c.0.s8 %v8658
    %v8660 = vlaneseq
    %v8661 = vshrl.u32 %v8660, 7
    %v8662 = vsub.s32 %v8659, %v8661
    %v8663 = vrot.slane %v8655, %v8662
    %v8665 = vunpack.c.l.s4 1983009808
    %v8666 = vunpack.c.0.s8 %v8665
    %v8667 = vlaneseq
    %v8668 = vshrl.u32 %v8667, 7
    %v8669 = vsub.s32 %v8666, %v8668
    %v8670 = vrot.slane %v8656, %v8669
    %v8671 = vcombine.low %v8615, %v8631
    %v8672 = vcombine.high %v8615, %v8631
    %v8674 = vunpack.c.l.s4 1934713408
    %v8675 = vunpack.c.0.s8 %v8674
    %v8676 = vlaneseq
    %v8677 = vshrl.u32 %v8676, 7
    %v8678 = vsub.s32 %v8675, %v8677
    %v8679 = vrot.slane %v8671, %v8678
    %v8681 = vunpack.c.l.s4 1934713408
    %v8682 = vunpack.c.0.s8 %v8681
    %v8683 = vlaneseq
    %v8684 = vshrl.u32 %v8683, 7
    %v8685 = vsub.s32 %v8682, %v8684
    %v8686 = vrot.slane %v8672, %v8685
    %v8687 = vcombine.low %v8622, %v8638
    %v8688 = vcombine.high %v8622, %v8638
    %v8690 = vunpack.c.l.s4 1934713408
    %v8691 = vunpack.c.0.s8 %v8690
    %v8692 = vlaneseq
    %v8693 = vshrl.u32 %v8692, 7
    %v8694 = vsub.s32 %v8691, %v8693
    %v8695 = vrot.slane %v8687, %v8694
    %v8697 = vunpack.c.l.s4 1934713408
    %v8698 = vunpack.c.0.s8 %v8697
    %v8699 = vlaneseq
    %v8700 = vshrl.u32 %v8699, 7
    %v8701 = vsub.s32 %v8698, %v8700
    %v8702 = vrot.slane %v8688, %v8701
    %v8703 = vcombine.low %v8647, %v8663
    %v8704 = vcombine.high %v8647, %v8663
    %v8706 = vunpack.c.l.s4 1934713408
    %v8707 = vunpack.c.0.s8 %v8706
    %v8708 = vlaneseq
    %v8709 = vshrl.u32 %v8708, 7
    %v8710 = vsub.s32 %v8707, %v8709
    %v8711 = vrot.slane %v8703, %v8710
    %v8713 = vunpack.c.l.s4 1934713408
    %v8714 = vunpack.c.0.s8 %v8713
    %v8715 = vlaneseq
    %v8716 = vshrl.u32 %v8715, 7
    %v8717 = vsub.s32 %v8714, %v8716
    %v8718 = vrot.slane %v8704, %v8717
    %v8719 = vcombine.low %v8654, %v8670
    %v8720 = vcombine.high %v8654, %v8670
    %v8722 = vunpack.c.l.s4 1934713408
    %v8723 = vunpack.c.0.s8 %v8722
    %v8724 = vlaneseq
    %v8725 = vshrl.u32 %v8724, 7
    %v8726 = vsub.s32 %v8723, %v8725
    %v8727 = vrot.slane %v8719, %v8726
    %v8729 = vunpack.c.l.s4 1934713408
    %v8730 = vunpack.c.0.s8 %v8729
    %v8731 = vlaneseq
    %v8732 = vshrl.u32 %v8731, 7
    %v8733 = vsub.s32 %v8730, %v8732
    %v8734 = vrot.slane %v8720, %v8733
    %v8735 = vcombine.low %v8679, %v8711
    %v8736 = vcombine.high %v8679, %v8711
    %v8737 = vcombine.low %v8686, %v8718
    %v8738 = vcombine.high %v8686, %v8718
    %v8739 = vcombine.low %v8695, %v8727
    %v8740 = vcombine.high %v8695, %v8727
    %v8741 = vcombine.low %v8702, %v8734
    %v8742 = vcombine.high %v8702, %v8734
    %v8743 = vcombine.low %v8098, %v8162
    %v8744 = vcombine.high %v8098, %v8162
    %v8746 = vunpack.c.l.s4 1983009808
    %v8747 = vunpack.c.0.s8 %v8746
    %v8748 = vlaneseq
    %v8749 = vshrl.u32 %v8748, 7
    %v8750 = vsub.s32 %v8747, %v8749
    %v8751 = vrot.slane %v8743, %v8750
    %v8753 = vunpack.c.l.s4 1983009808
    %v8754 = vunpack.c.0.s8 %v8753
    %v8755 = vlaneseq
    %v8756 = vshrl.u32 %v8755, 7
    %v8757 = vsub.s32 %v8754, %v8756
    %v8758 = vrot.slane %v8744, %v8757
    %v8759 = vcombine.low %v8130, %v8194
    %v8760 = vcombine.high %v8130, %v8194
    %v8762 = vunpack.c.l.s4 1983009808
    %v8763 = vunpack.c.0.s8 %v8762
    %v8764 = vlaneseq
    %v8765 = vshrl.u32 %v8764, 7
    %v8766 = vsub.s32 %v8763, %v8765
    %v8767 = vrot.slane %v8759, %v8766
    %v8769 = vunpack.c.l.s4 1983009808
    %v8770 = vunpack.c.0.s8 %v8769
    %v8771 = vlaneseq
    %v8772 = vshrl.u32 %v8771, 7
    %v8773 = vsub.s32 %v8770, %v8772
    %v8774 = vrot.slane %v8760, %v8773
    %v8775 = vcombine.low %v8226, %v8290
    %v8776 = vcombine.high %v8226, %v8290
    %v8778 = vunpack.c.l.s4 1983009808
    %v8779 = vunpack.c.0.s8 %v8778
    %v8780 = vlaneseq
    %v8781 = vshrl.u32 %v8780, 7
    %v8782 = vsub.s32 %v8779, %v8781
    %v8783 = vrot.slane %v8775, %v8782
    %v8785 = vunpack.c.l.s4 1983009808
    %v8786 = vunpack.c.0.s8 %v8785
    %v8787 = vlaneseq
    %v8788 = vshrl.u32 %v8787, 7
    %v8789 = vsub.s32 %v8786, %v8788
    %v8790 = vrot.slane %v8776, %v8789
    %v8791 = vcombine.low %v8258, %v8322
    %v8792 = vcombine.high %v8258, %v8322
    %v8794 = vunpack.c.l.s4 1983009808
    %v8795 = vunpack.c.0.s8 %v8794
    %v8796 = vlaneseq
    %v8797 = vshrl.u32 %v8796, 7
    %v8798 = vsub.s32 %v8795, %v8797
    %v8799 = vrot.slane %v8791, %v8798
    %v8801 = vunpack.c.l.s4 1983009808
    %v8802 = vunpack.c.0.s8 %v8801
    %v8803 = vlaneseq
    %v8804 = vshrl.u32 %v8803, 7
    %v8805 = vsub.s32 %v8802, %v8804
    %v8806 = vrot.slane %v8792, %v8805
    %v8807 = vcombine.low %v8751, %v8767
    %v8808 = vcombine.high %v8751, %v8767
    %v8810 = vunpack.c.l.s4 1934713408
    %v8811 = vunpack.c.0.s8 %v8810
    %v8812 = vlaneseq
    %v8813 = vshrl.u32 %v8812, 7
    %v8814 = vsub.s32 %v8811, %v8813
    %v8815 = vrot.slane %v8807, %v8814
    %v8817 = vunpack.c.l.s4 1934713408
    %v8818 = vunpack.c.0.s8 %v8817
    %v8819 = vlaneseq
    %v8820 = vshrl.u32 %v8819, 7
    %v8821 = vsub.s32 %v8818, %v8820
    %v8822 = vrot.slane %v8808, %v8821
    %v8823 = vcombine.low %v8758, %v8774
    %v8824 = vcombine.high %v8758, %v8774
    %v8826 = vunpack.c.l.s4 1934713408
    %v8827 = vunpack.c.0.s8 %v8826
    %v8828 = vlaneseq
    %v8829 = vshrl.u32 %v8828, 7
    %v8830 = vsub.s32 %v8827, %v8829
    %v8831 = vrot.slane %v8823, %v8830
    %v8833 = vunpack.c.l.s4 1934713408
    %v8834 = vunpack.c.0.s8 %v8833
    %v8835 = vlaneseq
    %v8836 = vshrl.u32 %v8835, 7
    %v8837 = vsub.s32 %v8834, %v8836
    %v8838 = vrot.slane %v8824, %v8837
    %v8839 = vcombine.low %v8783, %v8799
    %v8840 = vcombine.high %v8783, %v8799
    %v8842 = vunpack.c.l.s4 1934713408
    %v8843 = vunpack.c.0.s8 %v8842
    %v8844 = vlaneseq
    %v8845 = vshrl.u32 %v8844, 7
    %v8846 = vsub.s32 %v8843, %v8845
    %v8847 = vrot.slane %v8839, %v8846
    %v8849 = vunpack.c.l.s4 1934713408
    %v8850 = vunpack.c.0.s8 %v8849
    %v8851 = vlaneseq
    %v8852 = vshrl.u32 %v8851, 7
    %v8853 = vsub.s32 %v8850, %v8852
    %v8854 = vrot.slane %v8840, %v8853
    %v8855 = vcombine.low %v8790, %v8806
    %v8856 = vcombine.high %v8790, %v8806
    %v8858 = vunpack.c.l.s4 1934713408
    %v8859 = vunpack.c.0.s8 %v8858
    %v8860 = vlaneseq
    %v8861 = vshrl.u32 %v8860, 7
    %v8862 = vsub.s32 %v8859, %v8861
    %v8863 = vrot.slane %v8855, %v8862
    %v8865 = vunpack.c.l.s4 1934713408
    %v8866 = vunpack.c.0.s8 %v8865
    %v8867 = vlaneseq
    %v8868 = vshrl.u32 %v8867, 7
    %v8869 = vsub.s32 %v8866, %v8868
    %v8870 = vrot.slane %v8856, %v8869
    %v8871 = vcombine.low %v8815, %v8847
    %v8872 = vcombine.high %v8815, %v8847
    %v8873 = vcombine.low %v8822, %v8854
    %v8874 = vcombine.high %v8822, %v8854
    %v8875 = vcombine.low %v8831, %v8863
    %v8876 = vcombine.high %v8831, %v8863
    %v8877 = vcombine.low %v8838, %v8870
    %v8878 = vcombine.high %v8838, %v8870
    %v8879 = vcombine.low %v8099, %v8163
    %v8880 = vcombine.high %v8099, %v8163
    %v8882 = vunpack.c.l.s4 1983009808
    %v8883 = vunpack.c.0.s8 %v8882
    %v8884 = vlaneseq
    %v8885 = vshrl.u32 %v8884, 7
    %v8886 = vsub.s32 %v8883, %v8885
    %v8887 = vrot.slane %v8879, %v8886
    %v8889 = vunpack.c.l.s4 1983009808
    %v8890 = vunpack.c.0.s8 %v8889
    %v8891 = vlaneseq
    %v8892 = vshrl.u32 %v8891, 7
    %v8893 = vsub.s32 %v8890, %v8892
    %v8894 = vrot.slane %v8880, %v8893
    %v8895 = vcombine.low %v8131, %v8195
    %v8896 = vcombine.high %v8131, %v8195
    %v8898 = vunpack.c.l.s4 1983009808
    %v8899 = vunpack.c.0.s8 %v8898
    %v8900 = vlaneseq
    %v8901 = vshrl.u32 %v8900, 7
    %v8902 = vsub.s32 %v8899, %v8901
    %v8903 = vrot.slane %v8895, %v8902
    %v8905 = vunpack.c.l.s4 1983009808
    %v8906 = vunpack.c.0.s8 %v8905
    %v8907 = vlaneseq
    %v8908 = vshrl.u32 %v8907, 7
    %v8909 = vsub.s32 %v8906, %v8908
    %v8910 = vrot.slane %v8896, %v8909
    %v8911 = vcombine.low %v8227, %v8291
    %v8912 = vcombine.high %v8227, %v8291
    %v8914 = vunpack.c.l.s4 1983009808
    %v8915 = vunpack.c.0.s8 %v8914
    %v8916 = vlaneseq
    %v8917 = vshrl.u32 %v8916, 7
    %v8918 = vsub.s32 %v8915, %v8917
    %v8919 = vrot.slane %v8911, %v8918
    %v8921 = vunpack.c.l.s4 1983009808
    %v8922 = vunpack.c.0.s8 %v8921
    %v8923 = vlaneseq
    %v8924 = vshrl.u32 %v8923, 7
    %v8925 = vsub.s32 %v8922, %v8924
    %v8926 = vrot.slane %v8912, %v8925
    %v8927 = vcombine.low %v8259, %v8323
    %v8928 = vcombine.high %v8259, %v8323
    %v8930 = vunpack.c.l.s4 1983009808
    %v8931 = vunpack.c.0.s8 %v8930
    %v8932 = vlaneseq
    %v8933 = vshrl.u32 %v8932, 7
    %v8934 = vsub.s32 %v8931, %v8933
    %v8935 = vrot.slane %v8927, %v8934
    %v8937 = vunpack.c.l.s4 1983009808
    %v8938 = vunpack.c.0.s8 %v8937
    %v8939 = vlaneseq
    %v8940 = vshrl.u32 %v8939, 7
    %v8941 = vsub.s32 %v8938, %v8940
    %v8942 = vrot.slane %v8928, %v8941
    %v8943 = vcombine.low %v8887, %v8903
    %v8944 = vcombine.high %v8887, %v8903
    %v8946 = vunpack.c.l.s4 1934713408
    %v8947 = vunpack.c.0.s8 %v8946
    %v8948 = vlaneseq
    %v8949 = vshrl.u32 %v8948, 7
    %v8950 = vsub.s32 %v8947, %v8949
    %v8951 = vrot.slane %v8943, %v8950
    %v8953 = vunpack.c.l.s4 1934713408
    %v8954 = vunpack.c.0.s8 %v8953
    %v8955 = vlaneseq
    %v8956 = vshrl.u32 %v8955, 7
    %v8957 = vsub.s32 %v8954, %v8956
    %v8958 = vrot.slane %v8944, %v8957
    %v8959 = vcombine.low %v8894, %v8910
    %v8960 = vcombine.high %v8894, %v8910
    %v8962 = vunpack.c.l.s4 1934713408
    %v8963 = vunpack.c.0.s8 %v8962
    %v8964 = vlaneseq
    %v8965 = vshrl.u32 %v8964, 7
    %v8966 = vsub.s32 %v8963, %v8965
    %v8967 = vrot.slane %v8959, %v8966
    %v8969 = vunpack.c.l.s4 1934713408
    %v8970 = vunpack.c.0.s8 %v8969
    %v8971 = vlaneseq
    %v8972 = vshrl.u32 %v8971, 7
    %v8973 = vsub.s32 %v8970, %v8972
    %v8974 = vrot.slane %v8960, %v8973
    %v8975 = vcombine.low %v8919, %v8935
    %v8976 = vcombine.high %v8919, %v8935
    %v8978 = vunpack.c.l.s4 1934713408
    %v8979 = vunpack.c.0.s8 %v8978
    %v8980 = vlaneseq
    %v8981 = vshrl.u32 %v8980, 7
    %v8982 = vsub.s32 %v8979, %v8981
    %v8983 = vrot.slane %v8975, %v8982
    %v8985 = vunpack.c.l.s4 1934713408
    %v8986 = vunpack.c.0.s8 %v8985
    %v8987 = vlaneseq
    %v8988 = vshrl.u32 %v8987, 7
    %v8989 = vsub.s32 %v8986, %v8988
    %v8990 = vrot.slane %v8976, %v8989
    %v8991 = vcombine.low %v8926, %v8942
    %v8992 = vcombine.high %v8926, %v8942
    %v8994 = vunpack.c.l.s4 1934713408
    %v8995 = vunpack.c.0.s8 %v8994
    %v8996 = vlaneseq
    %v8997 = vshrl.u32 %v8996, 7
    %v8998 = vsub.s32 %v8995, %v8997
    %v8999 = vrot.slane %v8991, %v8998
    %v9001 = vunpack.c.l.s4 1934713408
    %v9002 = vunpack.c.0.s8 %v9001
    %v9003 = vlaneseq
    %v9004 = vshrl.u32 %v9003, 7
    %v9005 = vsub.s32 %v9002, %v9004
    %v9006 = vrot.slane %v8992, %v9005
    %v9007 = vcombine.low %v8951, %v8983
    %v9008 = vcombine.high %v8951, %v8983
    %v9009 = vcombine.low %v8958, %v8990
    %v9010 = vcombine.high %v8958, %v8990
    %v9011 = vcombine.low %v8967, %v8999
    %v9012 = vcombine.high %v8967, %v8999
    %v9013 = vcombine.low %v8974, %v9006
    %v9014 = vcombine.high %v8974, %v9006
    %v9015 = vcombine.low %v8100, %v8164
    %v9016 = vcombine.high %v8100, %v8164
    %v9018 = vunpack.c.l.s4 1983009808
    %v9019 = vunpack.c.0.s8 %v9018
    %v9020 = vlaneseq
    %v9021 = vshrl.u32 %v9020, 7
    %v9022 = vsub.s32 %v9019, %v9021
    %v9023 = vrot.slane %v9015, %v9022
    %v9025 = vunpack.c.l.s4 1983009808
    %v9026 = vunpack.c.0.s8 %v9025
    %v9027 = vlaneseq
    %v9028 = vshrl.u32 %v9027, 7
    %v9029 = vsub.s32 %v9026, %v9028
    %v9030 = vrot.slane %v9016, %v9029
    %v9031 = vcombine.low %v8132, %v8196
    %v9032 = vcombine.high %v8132, %v8196
    %v9034 = vunpack.c.l.s4 1983009808
    %v9035 = vunpack.c.0.s8 %v9034
    %v9036 = vlaneseq
    %v9037 = vshrl.u32 %v9036, 7
    %v9038 = vsub.s32 %v9035, %v9037
    %v9039 = vrot.slane %v9031, %v9038
    %v9041 = vunpack.c.l.s4 1983009808
    %v9042 = vunpack.c.0.s8 %v9041
    %v9043 = vlaneseq
    %v9044 = vshrl.u32 %v9043, 7
    %v9045 = vsub.s32 %v9042, %v9044
    %v9046 = vrot.slane %v9032, %v9045
    %v9047 = vcombine.low %v8228, %v8292
    %v9048 = vcombine.high %v8228, %v8292
    %v9050 = vunpack.c.l.s4 1983009808
    %v9051 = vunpack.c.0.s8 %v9050
    %v9052 = vlaneseq
    %v9053 = vshrl.u32 %v9052, 7
    %v9054 = vsub.s32 %v9051, %v9053
    %v9055 = vrot.slane %v9047, %v9054
    %v9057 = vunpack.c.l.s4 1983009808
    %v9058 = vunpack.c.0.s8 %v9057
    %v9059 = vlaneseq
    %v9060 = vshrl.u32 %v9059, 7
    %v9061 = vsub.s32 %v9058, %v9060
    %v9062 = vrot.slane %v9048, %v9061
    %v9063 = vcombine.low %v8260, %v8324
    %v9064 = vcombine.high %v8260, %v8324
    %v9066 = vunpack.c.l.s4 1983009808
    %v9067 = vunpack.c.0.s8 %v9066
    %v9068 = vlaneseq
    %v9069 = vshrl.u32 %v9068, 7
    %v9070 = vsub.s32 %v9067, %v9069
    %v9071 = vrot.slane %v9063, %v9070
    %v9073 = vunpack.c.l.s4 1983009808
    %v9074 = vunpack.c.0.s8 %v9073
    %v9075 = vlaneseq
    %v9076 = vshrl.u32 %v9075, 7
    %v9077 = vsub.s32 %v9074, %v9076
    %v9078 = vrot.slane %v9064, %v9077
    %v9079 = vcombine.low %v9023, %v9039
    %v9080 = vcombine.high %v9023, %v9039
    %v9082 = vunpack.c.l.s4 1934713408
    %v9083 = vunpack.c.0.s8 %v9082
    %v9084 = vlaneseq
    %v9085 = vshrl.u32 %v9084, 7
    %v9086 = vsub.s32 %v9083, %v9085
    %v9087 = vrot.slane %v9079, %v9086
    %v9089 = vunpack.c.l.s4 1934713408
    %v9090 = vunpack.c.0.s8 %v9089
    %v9091 = vlaneseq
    %v9092 = vshrl.u32 %v9091, 7
    %v9093 = vsub.s32 %v9090, %v9092
    %v9094 = vrot.slane %v9080, %v9093
    %v9095 = vcombine.low %v9030, %v9046
    %v9096 = vcombine.high %v9030, %v9046
    %v9098 = vunpack.c.l.s4 1934713408
    %v9099 = vunpack.c.0.s8 %v9098
    %v9100 = vlaneseq
    %v9101 = vshrl.u32 %v9100, 7
    %v9102 = vsub.s32 %v9099, %v9101
    %v9103 = vrot.slane %v9095, %v9102
    %v9105 = vunpack.c.l.s4 1934713408
    %v9106 = vunpack.c.0.s8 %v9105
    %v9107 = vlaneseq
    %v9108 = vshrl.u32 %v9107, 7
    %v9109 = vsub.s32 %v9106, %v9108
    %v9110 = vrot.slane %v9096, %v9109
    %v9111 = vcombine.low %v9055, %v9071
    %v9112 = vcombine.high %v9055, %v9071
    %v9114 = vunpack.c.l.s4 1934713408
    %v9115 = vunpack.c.0.s8 %v9114
    %v9116 = vlaneseq
    %v9117 = vshrl.u32 %v9116, 7
    %v9118 = vsub.s32 %v9115, %v9117
    %v9119 = vrot.slane %v9111, %v9118
    %v9121 = vunpack.c.l.s4 1934713408
    %v9122 = vunpack.c.0.s8 %v9121
    %v9123 = vlaneseq
    %v9124 = vshrl.u32 %v9123, 7
    %v9125 = vsub.s32 %v9122, %v9124
    %v9126 = vrot.slane %v9112, %v9125
    %v9127 = vcombine.low %v9062, %v9078
    %v9128 = vcombine.high %v9062, %v9078
    %v9130 = vunpack.c.l.s4 1934713408
    %v9131 = vunpack.c.0.s8 %v9130
    %v9132 = vlaneseq
    %v9133 = vshrl.u32 %v9132, 7
    %v9134 = vsub.s32 %v9131, %v9133
    %v9135 = vrot.slane %v9127, %v9134
    %v9137 = vunpack.c.l.s4 1934713408
    %v9138 = vunpack.c.0.s8 %v9137
    %v9139 = vlaneseq
    %v9140 = vshrl.u32 %v9139, 7
    %v9141 = vsub.s32 %v9138, %v9140
    %v9142 = vrot.slane %v9128, %v9141
    %v9143 = vcombine.low %v9087, %v9119
    %v9144 = vcombine.high %v9087, %v9119
    %v9145 = vcombine.low %v9094, %v9126
    %v9146 = vcombine.high %v9094, %v9126
    %v9147 = vcombine.low %v9103, %v9135
    %v9148 = vcombine.high %v9103, %v9135
    %v9149 = vcombine.low %v9110, %v9142
    %v9150 = vcombine.high %v9110, %v9142
    %v9151 = vcombine.low %v8101, %v8165
    %v9152 = vcombine.high %v8101, %v8165
    %v9154 = vunpack.c.l.s4 1983009808
    %v9155 = vunpack.c.0.s8 %v9154
    %v9156 = vlaneseq
    %v9157 = vshrl.u32 %v9156, 7
    %v9158 = vsub.s32 %v9155, %v9157
    %v9159 = vrot.slane %v9151, %v9158
    %v9161 = vunpack.c.l.s4 1983009808
    %v9162 = vunpack.c.0.s8 %v9161
    %v9163 = vlaneseq
    %v9164 = vshrl.u32 %v9163, 7
    %v9165 = vsub.s32 %v9162, %v9164
    %v9166 = vrot.slane %v9152, %v9165
    %v9167 = vcombine.low %v8133, %v8197
    %v9168 = vcombine.high %v8133, %v8197
    %v9170 = vunpack.c.l.s4 1983009808
    %v9171 = vunpack.c.0.s8 %v9170
    %v9172 = vlaneseq
    %v9173 = vshrl.u32 %v9172, 7
    %v9174 = vsub.s32 %v9171, %v9173
    %v9175 = vrot.slane %v9167, %v9174
    %v9177 = vunpack.c.l.s4 1983009808
    %v9178 = vunpack.c.0.s8 %v9177
    %v9179 = vlaneseq
    %v9180 = vshrl.u32 %v9179, 7
    %v9181 = vsub.s32 %v9178, %v9180
    %v9182 = vrot.slane %v9168, %v9181
    %v9183 = vcombine.low %v8229, %v8293
    %v9184 = vcombine.high %v8229, %v8293
    %v9186 = vunpack.c.l.s4 1983009808
    %v9187 = vunpack.c.0.s8 %v9186
    %v9188 = vlaneseq
    %v9189 = vshrl.u32 %v9188, 7
    %v9190 = vsub.s32 %v9187, %v9189
    %v9191 = vrot.slane %v9183, %v9190
    %v9193 = vunpack.c.l.s4 1983009808
    %v9194 = vunpack.c.0.s8 %v9193
    %v9195 = vlaneseq
    %v9196 = vshrl.u32 %v9195, 7
    %v9197 = vsub.s32 %v9194, %v9196
    %v9198 = vrot.slane %v9184, %v9197
    %v9199 = vcombine.low %v8261, %v8325
    %v9200 = vcombine.high %v8261, %v8325
    %v9202 = vunpack.c.l.s4 1983009808
    %v9203 = vunpack.c.0.s8 %v9202
    %v9204 = vlaneseq
    %v9205 = vshrl.u32 %v9204, 7
    %v9206 = vsub.s32 %v9203, %v9205
    %v9207 = vrot.slane %v9199, %v9206
    %v9209 = vunpack.c.l.s4 1983009808
    %v9210 = vunpack.c.0.s8 %v9209
    %v9211 = vlaneseq
    %v9212 = vshrl.u32 %v9211, 7
    %v9213 = vsub.s32 %v9210, %v9212
    %v9214 = vrot.slane %v9200, %v9213
    %v9215 = vcombine.low %v9159, %v9175
    %v9216 = vcombine.high %v9159, %v9175
    %v9218 = vunpack.c.l.s4 1934713408
    %v9219 = vunpack.c.0.s8 %v9218
    %v9220 = vlaneseq
    %v9221 = vshrl.u32 %v9220, 7
    %v9222 = vsub.s32 %v9219, %v9221
    %v9223 = vrot.slane %v9215, %v9222
    %v9225 = vunpack.c.l.s4 1934713408
    %v9226 = vunpack.c.0.s8 %v9225
    %v9227 = vlaneseq
    %v9228 = vshrl.u32 %v9227, 7
    %v9229 = vsub.s32 %v9226, %v9228
    %v9230 = vrot.slane %v9216, %v9229
    %v9231 = vcombine.low %v9166, %v9182
    %v9232 = vcombine.high %v9166, %v9182
    %v9234 = vunpack.c.l.s4 1934713408
    %v9235 = vunpack.c.0.s8 %v9234
    %v9236 = vlaneseq
    %v9237 = vshrl.u32 %v9236, 7
    %v9238 = vsub.s32 %v9235, %v9237
    %v9239 = vrot.slane %v9231, %v9238
    %v9241 = vunpack.c.l.s4 1934713408
    %v9242 = vunpack.c.0.s8 %v9241
    %v9243 = vlaneseq
    %v9244 = vshrl.u32 %v9243, 7
    %v9245 = vsub.s32 %v9242, %v9244
    %v9246 = vrot.slane %v9232, %v9245
    %v9247 = vcombine.low %v9191, %v9207
    %v9248 = vcombine.high %v9191, %v9207
    %v9250 = vunpack.c.l.s4 1934713408
    %v9251 = vunpack.c.0.s8 %v9250
    %v9252 = vlaneseq
    %v9253 = vshrl.u32 %v9252, 7
    %v9254 = vsub.s32 %v9251, %v9253
    %v9255 = vrot.slane %v9247, %v9254
    %v9257 = vunpack.c.l.s4 1934713408
    %v9258 = vunpack.c.0.s8 %v9257
    %v9259 = vlaneseq
    %v9260 = vshrl.u32 %v9259, 7
    %v9261 = vsub.s32 %v9258, %v9260
    %v9262 = vrot.slane %v9248, %v9261
    %v9263 = vcombine.low %v9198, %v9214
    %v9264 = vcombine.high %v9198, %v9214
    %v9266 = vunpack.c.l.s4 1934713408
    %v9267 = vunpack.c.0.s8 %v9266
    %v9268 = vlaneseq
    %v9269 = vshrl.u32 %v9268, 7
    %v9270 = vsub.s32 %v9267, %v9269
    %v9271 = vrot.slane %v9263, %v9270
    %v9273 = vunpack.c.l.s4 1934713408
    %v9274 = vunpack.c.0.s8 %v9273
    %v9275 = vlaneseq
    %v9276 = vshrl.u32 %v9275, 7
    %v9277 = vsub.s32 %v9274, %v9276
    %v9278 = vrot.slane %v9264, %v9277
    %v9279 = vcombine.low %v9223, %v9255
    %v9280 = vcombine.high %v9223, %v9255
    %v9281 = vcombine.low %v9230, %v9262
    %v9282 = vcombine.high %v9230, %v9262
    %v9283 = vcombine.low %v9239, %v9271
    %v9284 = vcombine.high %v9239, %v9271
    %v9285 = vcombine.low %v9246, %v9278
    %v9286 = vcombine.high %v9246, %v9278
    %v9287 = vcombine.low %v8102, %v8166
    %v9288 = vcombine.high %v8102, %v8166
    %v9290 = vunpack.c.l.s4 1983009808
    %v9291 = vunpack.c.0.s8 %v9290
    %v9292 = vlaneseq
    %v9293 = vshrl.u32 %v9292, 7
    %v9294 = vsub.s32 %v9291, %v9293
    %v9295 = vrot.slane %v9287, %v9294
    %v9297 = vunpack.c.l.s4 1983009808
    %v9298 = vunpack.c.0.s8 %v9297
    %v9299 = vlaneseq
    %v9300 = vshrl.u32 %v9299, 7
    %v9301 = vsub.s32 %v9298, %v9300
    %v9302 = vrot.slane %v9288, %v9301
    %v9303 = vcombine.low %v8134, %v8198
    %v9304 = vcombine.high %v8134, %v8198
    %v9306 = vunpack.c.l.s4 1983009808
    %v9307 = vunpack.c.0.s8 %v9306
    %v9308 = vlaneseq
    %v9309 = vshrl.u32 %v9308, 7
    %v9310 = vsub.s32 %v9307, %v9309
    %v9311 = vrot.slane %v9303, %v9310
    %v9313 = vunpack.c.l.s4 1983009808
    %v9314 = vunpack.c.0.s8 %v9313
    %v9315 = vlaneseq
    %v9316 = vshrl.u32 %v9315, 7
    %v9317 = vsub.s32 %v9314, %v9316
    %v9318 = vrot.slane %v9304, %v9317
    %v9319 = vcombine.low %v8230, %v8294
    %v9320 = vcombine.high %v8230, %v8294
    %v9322 = vunpack.c.l.s4 1983009808
    %v9323 = vunpack.c.0.s8 %v9322
    %v9324 = vlaneseq
    %v9325 = vshrl.u32 %v9324, 7
    %v9326 = vsub.s32 %v9323, %v9325
    %v9327 = vrot.slane %v9319, %v9326
    %v9329 = vunpack.c.l.s4 1983009808
    %v9330 = vunpack.c.0.s8 %v9329
    %v9331 = vlaneseq
    %v9332 = vshrl.u32 %v9331, 7
    %v9333 = vsub.s32 %v9330, %v9332
    %v9334 = vrot.slane %v9320, %v9333
    %v9335 = vcombine.low %v8262, %v8326
    %v9336 = vcombine.high %v8262, %v8326
    %v9338 = vunpack.c.l.s4 1983009808
    %v9339 = vunpack.c.0.s8 %v9338
    %v9340 = vlaneseq
    %v9341 = vshrl.u32 %v9340, 7
    %v9342 = vsub.s32 %v9339, %v9341
    %v9343 = vrot.slane %v9335, %v9342
    %v9345 = vunpack.c.l.s4 1983009808
    %v9346 = vunpack.c.0.s8 %v9345
    %v9347 = vlaneseq
    %v9348 = vshrl.u32 %v9347, 7
    %v9349 = vsub.s32 %v9346, %v9348
    %v9350 = vrot.slane %v9336, %v9349
    %v9351 = vcombine.low %v9295, %v9311
    %v9352 = vcombine.high %v9295, %v9311
    %v9354 = vunpack.c.l.s4 1934713408
    %v9355 = vunpack.c.0.s8 %v9354
    %v9356 = vlaneseq
    %v9357 = vshrl.u32 %v9356, 7
    %v9358 = vsub.s32 %v9355, %v9357
    %v9359 = vrot.slane %v9351, %v9358
    %v9361 = vunpack.c.l.s4 1934713408
    %v9362 = vunpack.c.0.s8 %v9361
    %v9363 = vlaneseq
    %v9364 = vshrl.u32 %v9363, 7
    %v9365 = vsub.s32 %v9362, %v9364
    %v9366 = vrot.slane %v9352, %v9365
    %v9367 = vcombine.low %v9302, %v9318
    %v9368 = vcombine.high %v9302, %v9318
    %v9370 = vunpack.c.l.s4 1934713408
    %v9371 = vunpack.c.0.s8 %v9370
    %v9372 = vlaneseq
    %v9373 = vshrl.u32 %v9372, 7
    %v9374 = vsub.s32 %v9371, %v9373
    %v9375 = vrot.slane %v9367, %v9374
    %v9377 = vunpack.c.l.s4 1934713408
    %v9378 = vunpack.c.0.s8 %v9377
    %v9379 = vlaneseq
    %v9380 = vshrl.u32 %v9379, 7
    %v9381 = vsub.s32 %v9378, %v9380
    %v9382 = vrot.slane %v9368, %v9381
    %v9383 = vcombine.low %v9327, %v9343
    %v9384 = vcombine.high %v9327, %v9343
    %v9386 = vunpack.c.l.s4 1934713408
    %v9387 = vunpack.c.0.s8 %v9386
    %v9388 = vlaneseq
    %v9389 = vshrl.u32 %v9388, 7
    %v9390 = vsub.s32 %v9387, %v9389
    %v9391 = vrot.slane %v9383, %v9390
    %v9393 = vunpack.c.l.s4 1934713408
    %v9394 = vunpack.c.0.s8 %v9393
    %v9395 = vlaneseq
    %v9396 = vshrl.u32 %v9395, 7
    %v9397 = vsub.s32 %v9394, %v9396
    %v9398 = vrot.slane %v9384, %v9397
    %v9399 = vcombine.low %v9334, %v9350
    %v9400 = vcombine.high %v9334, %v9350
    %v9402 = vunpack.c.l.s4 1934713408
    %v9403 = vunpack.c.0.s8 %v9402
    %v9404 = vlaneseq
    %v9405 = vshrl.u32 %v9404, 7
    %v9406 = vsub.s32 %v9403, %v9405
    %v9407 = vrot.slane %v9399, %v9406
    %v9409 = vunpack.c.l.s4 1934713408
    %v9410 = vunpack.c.0.s8 %v9409
    %v9411 = vlaneseq
    %v9412 = vshrl.u32 %v9411, 7
    %v9413 = vsub.s32 %v9410, %v9412
    %v9414 = vrot.slane %v9400, %v9413
    %v9415 = vcombine.low %v9359, %v9391
    %v9416 = vcombine.high %v9359, %v9391
    %v9417 = vcombine.low %v9366, %v9398
    %v9418 = vcombine.high %v9366, %v9398
    %v9419 = vcombine.low %v9375, %v9407
    %v9420 = vcombine.high %v9375, %v9407
    %v9421 = vcombine.low %v9382, %v9414
    %v9422 = vcombine.high %v9382, %v9414
    %v9423 = vcombine.low %v8463, %v8465
    %v9424 = vcombine.high %v8463, %v8465
    %v9426 = vunpack.c.l.s4 1983009808
    %v9427 = vunpack.c.0.s8 %v9426
    %v9428 = vlaneseq
    %v9429 = vshrl.u32 %v9428, 7
    %v9430 = vsub.s32 %v9427, %v9429
    %v9431 = vrot.slane %v9423, %v9430
    %v9433 = vunpack.c.l.s4 1983009808
    %v9434 = vunpack.c.0.s8 %v9433
    %v9435 = vlaneseq
    %v9436 = vshrl.u32 %v9435, 7
    %v9437 = vsub.s32 %v9434, %v9436
    %v9438 = vrot.slane %v9424, %v9437
    %v9439 = vcombine.low %v8464, %v8466
    %v9440 = vcombine.high %v8464, %v8466
    %v9442 = vunpack.c.l.s4 1983009808
    %v9443 = vunpack.c.0.s8 %v9442
    %v9444 = vlaneseq
    %v9445 = vshrl.u32 %v9444, 7
    %v9446 = vsub.s32 %v9443, %v9445
    %v9447 = vrot.slane %v9439, %v9446
    %v9449 = vunpack.c.l.s4 1983009808
    %v9450 = vunpack.c.0.s8 %v9449
    %v9451 = vlaneseq
    %v9452 = vshrl.u32 %v9451, 7
    %v9453 = vsub.s32 %v9450, %v9452
    %v9454 = vrot.slane %v9440, %v9453
    %v9455 = vcombine.low %v8467, %v8469
    %v9456 = vcombine.high %v8467, %v8469
    %v9458 = vunpack.c.l.s4 1983009808
    %v9459 = vunpack.c.0.s8 %v9458
    %v9460 = vlaneseq
    %v9461 = vshrl.u32 %v9460, 7
    %v9462 = vsub.s32 %v9459, %v9461
    %v9463 = vrot.slane %v9455, %v9462
    %v9465 = vunpack.c.l.s4 1983009808
    %v9466 = vunpack.c.0.s8 %v9465
    %v9467 = vlaneseq
    %v9468 = vshrl.u32 %v9467, 7
    %v9469 = vsub.s32 %v9466, %v9468
    %v9470 = vrot.slane %v9456, %v9469
    %v9471 = vcombine.low %v8468, %v8470
    %v9472 = vcombine.high %v8468, %v8470
    %v9474 = vunpack.c.l.s4 1983009808
    %v9475 = vunpack.c.0.s8 %v9474
    %v9476 = vlaneseq
    %v9477 = vshrl.u32 %v9476, 7
    %v9478 = vsub.s32 %v9475, %v9477
    %v9479 = vrot.slane %v9471, %v9478
    %v9481 = vunpack.c.l.s4 1983009808
    %v9482 = vunpack.c.0.s8 %v9481
    %v9483 = vlaneseq
    %v9484 = vshrl.u32 %v9483, 7
    %v9485 = vsub.s32 %v9482, %v9484
    %v9486 = vrot.slane %v9472, %v9485
    %v9487 = vcombine.low %v9431, %v9447
    %v9488 = vcombine.high %v9431, %v9447
    %v9490 = vunpack.c.l.s4 1934713408
    %v9491 = vunpack.c.0.s8 %v9490
    %v9492 = vlaneseq
    %v9493 = vshrl.u32 %v9492, 7
    %v9494 = vsub.s32 %v9491, %v9493
    %v9495 = vrot.slane %v9487, %v9494
    %v9497 = vunpack.c.l.s4 1934713408
    %v9498 = vunpack.c.0.s8 %v9497
    %v9499 = vlaneseq
    %v9500 = vshrl.u32 %v9499, 7
    %v9501 = vsub.s32 %v9498, %v9500
    %v9502 = vrot.slane %v9488, %v9501
    %v9503 = vcombine.low %v9438, %v9454
    %v9504 = vcombine.high %v9438, %v9454
    %v9506 = vunpack.c.l.s4 1934713408
    %v9507 = vunpack.c.0.s8 %v9506
    %v9508 = vlaneseq
    %v9509 = vshrl.u32 %v9508, 7
    %v9510 = vsub.s32 %v9507, %v9509
    %v9511 = vrot.slane %v9503, %v9510
    %v9513 = vunpack.c.l.s4 1934713408
    %v9514 = vunpack.c.0.s8 %v9513
    %v9515 = vlaneseq
    %v9516 = vshrl.u32 %v9515, 7
    %v9517 = vsub.s32 %v9514, %v9516
    %v9518 = vrot.slane %v9504, %v9517
    %v9519 = vcombine.low %v9463, %v9479
    %v9520 = vcombine.high %v9463, %v9479
    %v9522 = vunpack.c.l.s4 1934713408
    %v9523 = vunpack.c.0.s8 %v9522
    %v9524 = vlaneseq
    %v9525 = vshrl.u32 %v9524, 7
    %v9526 = vsub.s32 %v9523, %v9525
    %v9527 = vrot.slane %v9519, %v9526
    %v9529 = vunpack.c.l.s4 1934713408
    %v9530 = vunpack.c.0.s8 %v9529
    %v9531 = vlaneseq
    %v9532 = vshrl.u32 %v9531, 7
    %v9533 = vsub.s32 %v9530, %v9532
    %v9534 = vrot.slane %v9520, %v9533
    %v9535 = vcombine.low %v9470, %v9486
    %v9536 = vcombine.high %v9470, %v9486
    %v9538 = vunpack.c.l.s4 1934713408
    %v9539 = vunpack.c.0.s8 %v9538
    %v9540 = vlaneseq
    %v9541 = vshrl.u32 %v9540, 7
    %v9542 = vsub.s32 %v9539, %v9541
    %v9543 = vrot.slane %v9535, %v9542
    %v9545 = vunpack.c.l.s4 1934713408
    %v9546 = vunpack.c.0.s8 %v9545
    %v9547 = vlaneseq
    %v9548 = vshrl.u32 %v9547, 7
    %v9549 = vsub.s32 %v9546, %v9548
    %v9550 = vrot.slane %v9536, %v9549
    %v9551 = vcombine.low %v9495, %v9527
    %v9552 = vcombine.high %v9495, %v9527
    %v9553 = vcombine.low %v9502, %v9534
    %v9554 = vcombine.high %v9502, %v9534
    %v9555 = vcombine.low %v9511, %v9543
    %v9556 = vcombine.high %v9511, %v9543
    %v9557 = vcombine.low %v9518, %v9550
    %v9558 = vcombine.high %v9518, %v9550
    %v9559 = vcombine.low %v8599, %v8601
    %v9560 = vcombine.high %v8599, %v8601
    %v9562 = vunpack.c.l.s4 1983009808
    %v9563 = vunpack.c.0.s8 %v9562
    %v9564 = vlaneseq
    %v9565 = vshrl.u32 %v9564, 7
    %v9566 = vsub.s32 %v9563, %v9565
    %v9567 = vrot.slane %v9559, %v9566
    %v9569 = vunpack.c.l.s4 1983009808
    %v9570 = vunpack.c.0.s8 %v9569
    %v9571 = vlaneseq
    %v9572 = vshrl.u32 %v9571, 7
    %v9573 = vsub.s32 %v9570, %v9572
    %v9574 = vrot.slane %v9560, %v9573
    %v9575 = vcombine.low %v8600, %v8602
    %v9576 = vcombine.high %v8600, %v8602
    %v9578 = vunpack.c.l.s4 1983009808
    %v9579 = vunpack.c.0.s8 %v9578
    %v9580 = vlaneseq
    %v9581 = vshrl.u32 %v9580, 7
    %v9582 = vsub.s32 %v9579, %v9581
    %v9583 = vrot.slane %v9575, %v9582
    %v9585 = vunpack.c.l.s4 1983009808
    %v9586 = vunpack.c.0.s8 %v9585
    %v9587 = vlaneseq
    %v9588 = vshrl.u32 %v9587, 7
    %v9589 = vsub.s32 %v9586, %v9588
    %v9590 = vrot.slane %v9576, %v9589
    %v9591 = vcombine.low %v8603, %v8605
    %v9592 = vcombine.high %v8603, %v8605
    %v9594 = vunpack.c.l.s4 1983009808
    %v9595 = vunpack.c.0.s8 %v9594
    %v9596 = vlaneseq
    %v9597 = vshrl.u32 %v9596, 7
    %v9598 = vsub.s32 %v9595, %v9597
    %v9599 = vrot.slane %v9591, %v9598
    %v9601 = vunpack.c.l.s4 1983009808
    %v9602 = vunpack.c.0.s8 %v9601
    %v9603 = vlaneseq
    %v9604 = vshrl.u32 %v9603, 7
    %v9605 = vsub.s32 %v9602, %v9604
    %v9606 = vrot.slane %v9592, %v9605
    %v9607 = vcombine.low %v8604, %v8606
    %v9608 = vcombine.high %v8604, %v8606
    %v9610 = vunpack.c.l.s4 1983009808
    %v9611 = vunpack.c.0.s8 %v9610
    %v9612 = vlaneseq
    %v9613 = vshrl.u32 %v9612, 7
    %v9614 = vsub.s32 %v9611, %v9613
    %v9615 = vrot.slane %v9607, %v9614
    %v9617 = vunpack.c.l.s4 1983009808
    %v9618 = vunpack.c.0.s8 %v9617
    %v9619 = vlaneseq
    %v9620 = vshrl.u32 %v9619, 7
    %v9621 = vsub.s32 %v9618, %v9620
    %v9622 = vrot.slane %v9608, %v9621
    %v9623 = vcombine.low %v9567, %v9583
    %v9624 = vcombine.high %v9567, %v9583
    %v9626 = vunpack.c.l.s4 1934713408
    %v9627 = vunpack.c.0.s8 %v9626
    %v9628 = vlaneseq
    %v9629 = vshrl.u32 %v9628, 7
    %v9630 = vsub.s32 %v9627, %v9629
    %v9631 = vrot.slane %v9623, %v9630
    %v9633 = vunpack.c.l.s4 1934713408
    %v9634 = vunpack.c.0.s8 %v9633
    %v9635 = vlaneseq
    %v9636 = vshrl.u32 %v9635, 7
    %v9637 = vsub.s32 %v9634, %v9636
    %v9638 = vrot.slane %v9624, %v9637
    %v9639 = vcombine.low %v9574, %v9590
    %v9640 = vcombine.high %v9574, %v9590
    %v9642 = vunpack.c.l.s4 1934713408
    %v9643 = vunpack.c.0.s8 %v9642
    %v9644 = vlaneseq
    %v9645 = vshrl.u32 %v9644, 7
    %v9646 = vsub.s32 %v9643, %v9645
    %v9647 = vrot.slane %v9639, %v9646
    %v9649 = vunpack.c.l.s4 1934713408
    %v9650 = vunpack.c.0.s8 %v9649
    %v9651 = vlaneseq
    %v9652 = vshrl.u32 %v9651, 7
    %v9653 = vsub.s32 %v9650, %v9652
    %v9654 = vrot.slane %v9640, %v9653
    %v9655 = vcombine.low %v9599, %v9615
    %v9656 = vcombine.high %v9599, %v9615
    %v9658 = vunpack.c.l.s4 1934713408
    %v9659 = vunpack.c.0.s8 %v9658
    %v9660 = vlaneseq
    %v9661 = vshrl.u32 %v9660, 7
    %v9662 = vsub.s32 %v9659, %v9661
    %v9663 = vrot.slane %v9655, %v9662
    %v9665 = vunpack.c.l.s4 1934713408
    %v9666 = vunpack.c.0.s8 %v9665
    %v9667 = vlaneseq
    %v9668 = vshrl.u32 %v9667, 7
    %v9669 = vsub.s32 %v9666, %v9668
    %v9670 = vrot.slane %v9656, %v9669
    %v9671 = vcombine.low %v9606, %v9622
    %v9672 = vcombine.high %v9606, %v9622
    %v9674 = vunpack.c.l.s4 1934713408
    %v9675 = vunpack.c.0.s8 %v9674
    %v9676 = vlaneseq
    %v9677 = vshrl.u32 %v9676, 7
    %v9678 = vsub.s32 %v9675, %v9677
    %v9679 = vrot.slane %v9671, %v9678
    %v9681 = vunpack.c.l.s4 1934713408
    %v9682 = vunpack.c.0.s8 %v9681
    %v9683 = vlaneseq
    %v9684 = vshrl.u32 %v9683, 7
    %v9685 = vsub.s32 %v9682, %v9684
    %v9686 = vrot.slane %v9672, %v9685
    %v9687 = vcombine.low %v9631, %v9663
    %v9688 = vcombine.high %v9631, %v9663
    %v9689 = vcombine.low %v9638, %v9670
    %v9690 = vcombine.high %v9638, %v9670
    %v9691 = vcombine.low %v9647, %v9679
    %v9692 = vcombine.high %v9647, %v9679
    %v9693 = vcombine.low %v9654, %v9686
    %v9694 = vcombine.high %v9654, %v9686
    %v9695 = vcombine.low %v8735, %v8737
    %v9696 = vcombine.high %v8735, %v8737
    %v9698 = vunpack.c.l.s4 1983009808
    %v9699 = vunpack.c.0.s8 %v9698
    %v9700 = vlaneseq
    %v9701 = vshrl.u32 %v9700, 7
    %v9702 = vsub.s32 %v9699, %v9701
    %v9703 = vrot.slane %v9695, %v9702
    %v9705 = vunpack.c.l.s4 1983009808
    %v9706 = vunpack.c.0.s8 %v9705
    %v9707 = vlaneseq
    %v9708 = vshrl.u32 %v9707, 7
    %v9709 = vsub.s32 %v9706, %v9708
    %v9710 = vrot.slane %v9696, %v9709
    %v9711 = vcombine.low %v8736, %v8738
    %v9712 = vcombine.high %v8736, %v8738
    %v9714 = vunpack.c.l.s4 1983009808
    %v9715 = vunpack.c.0.s8 %v9714
    %v9716 = vlaneseq
    %v9717 = vshrl.u32 %v9716, 7
    %v9718 = vsub.s32 %v9715, %v9717
    %v9719 = vrot.slane %v9711, %v9718
    %v9721 = vunpack.c.l.s4 1983009808
    %v9722 = vunpack.c.0.s8 %v9721
    %v9723 = vlaneseq
    %v9724 = vshrl.u32 %v9723, 7
    %v9725 = vsub.s32 %v9722, %v9724
    %v9726 = vrot.slane %v9712, %v9725
    %v9727 = vcombine.low %v8739, %v8741
    %v9728 = vcombine.high %v8739, %v8741
    %v9730 = vunpack.c.l.s4 1983009808
    %v9731 = vunpack.c.0.s8 %v9730
    %v9732 = vlaneseq
    %v9733 = vshrl.u32 %v9732, 7
    %v9734 = vsub.s32 %v9731, %v9733
    %v9735 = vrot.slane %v9727, %v9734
    %v9737 = vunpack.c.l.s4 1983009808
    %v9738 = vunpack.c.0.s8 %v9737
    %v9739 = vlaneseq
    %v9740 = vshrl.u32 %v9739, 7
    %v9741 = vsub.s32 %v9738, %v9740
    %v9742 = vrot.slane %v9728, %v9741
    %v9743 = vcombine.low %v8740, %v8742
    %v9744 = vcombine.high %v8740, %v8742
    %v9746 = vunpack.c.l.s4 1983009808
    %v9747 = vunpack.c.0.s8 %v9746
    %v9748 = vlaneseq
    %v9749 = vshrl.u32 %v9748, 7
    %v9750 = vsub.s32 %v9747, %v9749
    %v9751 = vrot.slane %v9743, %v9750
    %v9753 = vunpack.c.l.s4 1983009808
    %v9754 = vunpack.c.0.s8 %v9753
    %v9755 = vlaneseq
    %v9756 = vshrl.u32 %v9755, 7
    %v9757 = vsub.s32 %v9754, %v9756
    %v9758 = vrot.slane %v9744, %v9757
    %v9759 = vcombine.low %v9703, %v9719
    %v9760 = vcombine.high %v9703, %v9719
    %v9762 = vunpack.c.l.s4 1934713408
    %v9763 = vunpack.c.0.s8 %v9762
    %v9764 = vlaneseq
    %v9765 = vshrl.u32 %v9764, 7
    %v9766 = vsub.s32 %v9763, %v9765
    %v9767 = vrot.slane %v9759, %v9766
    %v9769 = vunpack.c.l.s4 1934713408
    %v9770 = vunpack.c.0.s8 %v9769
    %v9771 = vlaneseq
    %v9772 = vshrl.u32 %v9771, 7
    %v9773 = vsub.s32 %v9770, %v9772
    %v9774 = vrot.slane %v9760, %v9773
    %v9775 = vcombine.low %v9710, %v9726
    %v9776 = vcombine.high %v9710, %v9726
    %v9778 = vunpack.c.l.s4 1934713408
    %v9779 = vunpack.c.0.s8 %v9778
    %v9780 = vlaneseq
    %v9781 = vshrl.u32 %v9780, 7
    %v9782 = vsub.s32 %v9779, %v9781
    %v9783 = vrot.slane %v9775, %v9782
    %v9785 = vunpack.c.l.s4 1934713408
    %v9786 = vunpack.c.0.s8 %v9785
    %v9787 = vlaneseq
    %v9788 = vshrl.u32 %v9787, 7
    %v9789 = vsub.s32 %v9786, %v9788
    %v9790 = vrot.slane %v9776, %v9789
    %v9791 = vcombine.low %v9735, %v9751
    %v9792 = vcombine.high %v9735, %v9751
    %v9794 = vunpack.c.l.s4 1934713408
    %v9795 = vunpack.c.0.s8 %v9794
    %v9796 = vlaneseq
    %v9797 = vshrl.u32 %v9796, 7
    %v9798 = vsub.s32 %v9795, %v9797
    %v9799 = vrot.slane %v9791, %v9798
    %v9801 = vunpack.c.l.s4 1934713408
    %v9802 = vunpack.c.0.s8 %v9801
    %v9803 = vlaneseq
    %v9804 = vshrl.u32 %v9803, 7
    %v9805 = vsub.s32 %v9802, %v9804
    %v9806 = vrot.slane %v9792, %v9805
    %v9807 = vcombine.low %v9742, %v9758
    %v9808 = vcombine.high %v9742, %v9758
    %v9810 = vunpack.c.l.s4 1934713408
    %v9811 = vunpack.c.0.s8 %v9810
    %v9812 = vlaneseq
    %v9813 = vshrl.u32 %v9812, 7
    %v9814 = vsub.s32 %v9811, %v9813
    %v9815 = vrot.slane %v9807, %v9814
    %v9817 = vunpack.c.l.s4 1934713408
    %v9818 = vunpack.c.0.s8 %v9817
    %v9819 = vlaneseq
    %v9820 = vshrl.u32 %v9819, 7
    %v9821 = vsub.s32 %v9818, %v9820
    %v9822 = vrot.slane %v9808, %v9821
    %v9823 = vcombine.low %v9767, %v9799
    %v9824 = vcombine.high %v9767, %v9799
    %v9825 = vcombine.low %v9774, %v9806
    %v9826 = vcombine.high %v9774, %v9806
    %v9827 = vcombine.low %v9783, %v9815
    %v9828 = vcombine.high %v9783, %v9815
    %v9829 = vcombine.low %v9790, %v9822
    %v9830 = vcombine.high %v9790, %v9822
    %v9831 = vcombine.low %v8871, %v8873
    %v9832 = vcombine.high %v8871, %v8873
    %v9834 = vunpack.c.l.s4 1983009808
    %v9835 = vunpack.c.0.s8 %v9834
    %v9836 = vlaneseq
    %v9837 = vshrl.u32 %v9836, 7
    %v9838 = vsub.s32 %v9835, %v9837
    %v9839 = vrot.slane %v9831, %v9838
    %v9841 = vunpack.c.l.s4 1983009808
    %v9842 = vunpack.c.0.s8 %v9841
    %v9843 = vlaneseq
    %v9844 = vshrl.u32 %v9843, 7
    %v9845 = vsub.s32 %v9842, %v9844
    %v9846 = vrot.slane %v9832, %v9845
    %v9847 = vcombine.low %v8872, %v8874
    %v9848 = vcombine.high %v8872, %v8874
    %v9850 = vunpack.c.l.s4 1983009808
    %v9851 = vunpack.c.0.s8 %v9850
    %v9852 = vlaneseq
    %v9853 = vshrl.u32 %v9852, 7
    %v9854 = vsub.s32 %v9851, %v9853
    %v9855 = vrot.slane %v9847, %v9854
    %v9857 = vunpack.c.l.s4 1983009808
    %v9858 = vunpack.c.0.s8 %v9857
    %v9859 = vlaneseq
    %v9860 = vshrl.u32 %v9859, 7
    %v9861 = vsub.s32 %v9858, %v9860
    %v9862 = vrot.slane %v9848, %v9861
    %v9863 = vcombine.low %v8875, %v8877
    %v9864 = vcombine.high %v8875, %v8877
    %v9866 = vunpack.c.l.s4 1983009808
    %v9867 = vunpack.c.0.s8 %v9866
    %v9868 = vlaneseq
    %v9869 = vshrl.u32 %v9868, 7
    %v9870 = vsub.s32 %v9867, %v9869
    %v9871 = vrot.slane %v9863, %v9870
    %v9873 = vunpack.c.l.s4 1983009808
    %v9874 = vunpack.c.0.s8 %v9873
    %v9875 = vlaneseq
    %v9876 = vshrl.u32 %v9875, 7
    %v9877 = vsub.s32 %v9874, %v9876
    %v9878 = vrot.slane %v9864, %v9877
    %v9879 = vcombine.low %v8876, %v8878
    %v9880 = vcombine.high %v8876, %v8878
    %v9882 = vunpack.c.l.s4 1983009808
    %v9883 = vunpack.c.0.s8 %v9882
    %v9884 = vlaneseq
    %v9885 = vshrl.u32 %v9884, 7
    %v9886 = vsub.s32 %v9883, %v9885
    %v9887 = vrot.slane %v9879, %v9886
    %v9889 = vunpack.c.l.s4 1983009808
    %v9890 = vunpack.c.0.s8 %v9889
    %v9891 = vlaneseq
    %v9892 = vshrl.u32 %v9891, 7
    %v9893 = vsub.s32 %v9890, %v9892
    %v9894 = vrot.slane %v9880, %v9893
    %v9895 = vcombine.low %v9839, %v9855
    %v9896 = vcombine.high %v9839, %v9855
    %v9898 = vunpack.c.l.s4 1934713408
    %v9899 = vunpack.c.0.s8 %v9898
    %v9900 = vlaneseq
    %v9901 = vshrl.u32 %v9900, 7
    %v9902 = vsub.s32 %v9899, %v9901
    %v9903 = vrot.slane %v9895, %v9902
    %v9905 = vunpack.c.l.s4 1934713408
    %v9906 = vunpack.c.0.s8 %v9905
    %v9907 = vlaneseq
    %v9908 = vshrl.u32 %v9907, 7
    %v9909 = vsub.s32 %v9906, %v9908
    %v9910 = vrot.slane %v9896, %v9909
    %v9911 = vcombine.low %v9846, %v9862
    %v9912 = vcombine.high %v9846, %v9862
    %v9914 = vunpack.c.l.s4 1934713408
    %v9915 = vunpack.c.0.s8 %v9914
    %v9916 = vlaneseq
    %v9917 = vshrl.u32 %v9916, 7
    %v9918 = vsub.s32 %v9915, %v9917
    %v9919 = vrot.slane %v9911, %v9918
    %v9921 = vunpack.c.l.s4 1934713408
    %v9922 = vunpack.c.0.s8 %v9921
    %v9923 = vlaneseq
    %v9924 = vshrl.u32 %v9923, 7
    %v9925 = vsub.s32 %v9922, %v9924
    %v9926 = vrot.slane %v9912, %v9925
    %v9927 = vcombine.low %v9871, %v9887
    %v9928 = vcombine.high %v9871, %v9887
    %v9930 = vunpack.c.l.s4 1934713408
    %v9931 = vunpack.c.0.s8 %v9930
    %v9932 = vlaneseq
    %v9933 = vshrl.u32 %v9932, 7
    %v9934 = vsub.s32 %v9931, %v9933
    %v9935 = vrot.slane %v9927, %v9934
    %v9937 = vunpack.c.l.s4 1934713408
    %v9938 = vunpack.c.0.s8 %v9937
    %v9939 = vlaneseq
    %v9940 = vshrl.u32 %v9939, 7
    %v9941 = vsub.s32 %v9938, %v9940
    %v9942 = vrot.slane %v9928, %v9941
    %v9943 = vcombine.low %v9878, %v9894
    %v9944 = vcombine.high %v9878, %v9894
    %v9946 = vunpack.c.l.s4 1934713408
    %v9947 = vunpack.c.0.s8 %v9946
    %v9948 = vlaneseq
    %v9949 = vshrl.u32 %v9948, 7
    %v9950 = vsub.s32 %v9947, %v9949
    %v9951 = vrot.slane %v9943, %v9950
    %v9953 = vunpack.c.l.s4 1934713408
    %v9954 = vunpack.c.0.s8 %v9953
    %v9955 = vlaneseq
    %v9956 = vshrl.u32 %v9955, 7
    %v9957 = vsub.s32 %v9954, %v9956
    %v9958 = vrot.slane %v9944, %v9957
    %v9959 = vcombine.low %v9903, %v9935
    %v9960 = vcombine.high %v9903, %v9935
    %v9961 = vcombine.low %v9910, %v9942
    %v9962 = vcombine.high %v9910, %v9942
    %v9963 = vcombine.low %v9919, %v9951
    %v9964 = vcombine.high %v9919, %v9951
    %v9965 = vcombine.low %v9926, %v9958
    %v9966 = vcombine.high %v9926, %v9958
    %v9967 = vcombine.low %v9007, %v9009
    %v9968 = vcombine.high %v9007, %v9009
    %v9970 = vunpack.c.l.s4 1983009808
    %v9971 = vunpack.c.0.s8 %v9970
    %v9972 = vlaneseq
    %v9973 = vshrl.u32 %v9972, 7
    %v9974 = vsub.s32 %v9971, %v9973
    %v9975 = vrot.slane %v9967, %v9974
    %v9977 = vunpack.c.l.s4 1983009808
    %v9978 = vunpack.c.0.s8 %v9977
    %v9979 = vlaneseq
    %v9980 = vshrl.u32 %v9979, 7
    %v9981 = vsub.s32 %v9978, %v9980
    %v9982 = vrot.slane %v9968, %v9981
    %v9983 = vcombine.low %v9008, %v9010
    %v9984 = vcombine.high %v9008, %v9010
    %v9986 = vunpack.c.l.s4 1983009808
    %v9987 = vunpack.c.0.s8 %v9986
    %v9988 = vlaneseq
    %v9989 = vshrl.u32 %v9988, 7
    %v9990 = vsub.s32 %v9987, %v9989
    %v9991 = vrot.slane %v9983, %v9990
    %v9993 = vunpack.c.l.s4 1983009808
    %v9994 = vunpack.c.0.s8 %v9993
    %v9995 = vlaneseq
    %v9996 = vshrl.u32 %v9995, 7
    %v9997 = vsub.s32 %v9994, %v9996
    %v9998 = vrot.slane %v9984, %v9997
    %v9999 = vcombine.low %v9011, %v9013
    %v10000 = vcombine.high %v9011, %v9013
    %v10002 = vunpack.c.l.s4 1983009808
    %v10003 = vunpack.c.0.s8 %v10002
    %v10004 = vlaneseq
    %v10005 = vshrl.u32 %v10004, 7
    %v10006 = vsub.s32 %v10003, %v10005
    %v10007 = vrot.slane %v9999, %v10006
    %v10009 = vunpack.c.l.s4 1983009808
    %v10010 = vunpack.c.0.s8 %v10009
    %v10011 = vlaneseq
    %v10012 = vshrl.u32 %v10011, 7
    %v10013 = vsub.s32 %v10010, %v10012
    %v10014 = vrot.slane %v10000, %v10013
    %v10015 = vcombine.low %v9012, %v9014
    %v10016 = vcombine.high %v9012, %v9014
    %v10018 = vunpack.c.l.s4 1983009808
    %v10019 = vunpack.c.0.s8 %v10018
    %v10020 = vlaneseq
    %v10021 = vshrl.u32 %v10020, 7
    %v10022 = vsub.s32 %v10019, %v10021
    %v10023 = vrot.slane %v10015, %v10022
    %v10025 = vunpack.c.l.s4 1983009808
    %v10026 = vunpack.c.0.s8 %v10025
    %v10027 = vlaneseq
    %v10028 = vshrl.u32 %v10027, 7
    %v10029 = vsub.s32 %v10026, %v10028
    %v10030 = vrot.slane %v10016, %v10029
    %v10031 = vcombine.low %v9975, %v9991
    %v10032 = vcombine.high %v9975, %v9991
    %v10034 = vunpack.c.l.s4 1934713408
    %v10035 = vunpack.c.0.s8 %v10034
    %v10036 = vlaneseq
    %v10037 = vshrl.u32 %v10036, 7
    %v10038 = vsub.s32 %v10035, %v10037
    %v10039 = vrot.slane %v10031, %v10038
    %v10041 = vunpack.c.l.s4 1934713408
    %v10042 = vunpack.c.0.s8 %v10041
    %v10043 = vlaneseq
    %v10044 = vshrl.u32 %v10043, 7
    %v10045 = vsub.s32 %v10042, %v10044
    %v10046 = vrot.slane %v10032, %v10045
    %v10047 = vcombine.low %v9982, %v9998
    %v10048 = vcombine.high %v9982, %v9998
    %v10050 = vunpack.c.l.s4 1934713408
    %v10051 = vunpack.c.0.s8 %v10050
    %v10052 = vlaneseq
    %v10053 = vshrl.u32 %v10052, 7
    %v10054 = vsub.s32 %v10051, %v10053
    %v10055 = vrot.slane %v10047, %v10054
    %v10057 = vunpack.c.l.s4 1934713408
    %v10058 = vunpack.c.0.s8 %v10057
    %v10059 = vlaneseq
    %v10060 = vshrl.u32 %v10059, 7
    %v10061 = vsub.s32 %v10058, %v10060
    %v10062 = vrot.slane %v10048, %v10061
    %v10063 = vcombine.low %v10007, %v10023
    %v10064 = vcombine.high %v10007, %v10023
    %v10066 = vunpack.c.l.s4 1934713408
    %v10067 = vunpack.c.0.s8 %v10066
    %v10068 = vlaneseq
    %v10069 = vshrl.u32 %v10068, 7
    %v10070 = vsub.s32 %v10067, %v10069
    %v10071 = vrot.slane %v10063, %v10070
    %v10073 = vunpack.c.l.s4 1934713408
    %v10074 = vunpack.c.0.s8 %v10073
    %v10075 = vlaneseq
    %v10076 = vshrl.u32 %v10075, 7
    %v10077 = vsub.s32 %v10074, %v10076
    %v10078 = vrot.slane %v10064, %v10077
    %v10079 = vcombine.low %v10014, %v10030
    %v10080 = vcombine.high %v10014, %v10030
    %v10082 = vunpack.c.l.s4 1934713408
    %v10083 = vunpack.c.0.s8 %v10082
    %v10084 = vlaneseq
    %v10085 = vshrl.u32 %v10084, 7
    %v10086 = vsub.s32 %v10083, %v10085
    %v10087 = vrot.slane %v10079, %v10086
    %v10089 = vunpack.c.l.s4 1934713408
    %v10090 = vunpack.c.0.s8 %v10089
    %v10091 = vlaneseq
    %v10092 = vshrl.u32 %v10091, 7
    %v10093 = vsub.s32 %v10090, %v10092
    %v10094 = vrot.slane %v10080, %v10093
    %v10095 = vcombine.low %v10039, %v10071
    %v10096 = vcombine.high %v10039, %v10071
    %v10097 = vcombine.low %v10046, %v10078
    %v10098 = vcombine.high %v10046, %v10078
    %v10099 = vcombine.low %v10055, %v10087
    %v10100 = vcombine.high %v10055, %v10087
    %v10101 = vcombine.low %v10062, %v10094
    %v10102 = vcombine.high %v10062, %v10094
    %v10103 = vcombine.low %v9143, %v9145
    %v10104 = vcombine.high %v9143, %v9145
    %v10106 = vunpack.c.l.s4 1983009808
    %v10107 = vunpack.c.0.s8 %v10106
    %v10108 = vlaneseq
    %v10109 = vshrl.u32 %v10108, 7
    %v10110 = vsub.s32 %v10107, %v10109
    %v10111 = vrot.slane %v10103, %v10110
    %v10113 = vunpack.c.l.s4 1983009808
    %v10114 = vunpack.c.0.s8 %v10113
    %v10115 = vlaneseq
    %v10116 = vshrl.u32 %v10115, 7
    %v10117 = vsub.s32 %v10114, %v10116
    %v10118 = vrot.slane %v10104, %v10117
    %v10119 = vcombine.low %v9144, %v9146
    %v10120 = vcombine.high %v9144, %v9146
    %v10122 = vunpack.c.l.s4 1983009808
    %v10123 = vunpack.c.0.s8 %v10122
    %v10124 = vlaneseq
    %v10125 = vshrl.u32 %v10124, 7
    %v10126 = vsub.s32 %v10123, %v10125
    %v10127 = vrot.slane %v10119, %v10126
    %v10129 = vunpack.c.l.s4 1983009808
    %v10130 = vunpack.c.0.s8 %v10129
    %v10131 = vlaneseq
    %v10132 = vshrl.u32 %v10131, 7
    %v10133 = vsub.s32 %v10130, %v10132
    %v10134 = vrot.slane %v10120, %v10133
    %v10135 = vcombine.low %v9147, %v9149
    %v10136 = vcombine.high %v9147, %v9149
    %v10138 = vunpack.c.l.s4 1983009808
    %v10139 = vunpack.c.0.s8 %v10138
    %v10140 = vlaneseq
    %v10141 = vshrl.u32 %v10140, 7
    %v10142 = vsub.s32 %v10139, %v10141
    %v10143 = vrot.slane %v10135, %v10142
    %v10145 = vunpack.c.l.s4 1983009808
    %v10146 = vunpack.c.0.s8 %v10145
    %v10147 = vlaneseq
    %v10148 = vshrl.u32 %v10147, 7
    %v10149 = vsub.s32 %v10146, %v10148
    %v10150 = vrot.slane %v10136, %v10149
    %v10151 = vcombine.low %v9148, %v9150
    %v10152 = vcombine.high %v9148, %v9150
    %v10154 = vunpack.c.l.s4 1983009808
    %v10155 = vunpack.c.0.s8 %v10154
    %v10156 = vlaneseq
    %v10157 = vshrl.u32 %v10156, 7
    %v10158 = vsub.s32 %v10155, %v10157
    %v10159 = vrot.slane %v10151, %v10158
    %v10161 = vunpack.c.l.s4 1983009808
    %v10162 = vunpack.c.0.s8 %v10161
    %v10163 = vlaneseq
    %v10164 = vshrl.u32 %v10163, 7
    %v10165 = vsub.s32 %v10162, %v10164
    %v10166 = vrot.slane %v10152, %v10165
    %v10167 = vcombine.low %v10111, %v10127
    %v10168 = vcombine.high %v10111, %v10127
    %v10170 = vunpack.c.l.s4 1934713408
    %v10171 = vunpack.c.0.s8 %v10170
    %v10172 = vlaneseq
    %v10173 = vshrl.u32 %v10172, 7
    %v10174 = vsub.s32 %v10171, %v10173
    %v10175 = vrot.slane %v10167, %v10174
    %v10177 = vunpack.c.l.s4 1934713408
    %v10178 = vunpack.c.0.s8 %v10177
    %v10179 = vlaneseq
    %v10180 = vshrl.u32 %v10179, 7
    %v10181 = vsub.s32 %v10178, %v10180
    %v10182 = vrot.slane %v10168, %v10181
    %v10183 = vcombine.low %v10118, %v10134
    %v10184 = vcombine.high %v10118, %v10134
    %v10186 = vunpack.c.l.s4 1934713408
    %v10187 = vunpack.c.0.s8 %v10186
    %v10188 = vlaneseq
    %v10189 = vshrl.u32 %v10188, 7
    %v10190 = vsub.s32 %v10187, %v10189
    %v10191 = vrot.slane %v10183, %v10190
    %v10193 = vunpack.c.l.s4 1934713408
    %v10194 = vunpack.c.0.s8 %v10193
    %v10195 = vlaneseq
    %v10196 = vshrl.u32 %v10195, 7
    %v10197 = vsub.s32 %v10194, %v10196
    %v10198 = vrot.slane %v10184, %v10197
    %v10199 = vcombine.low %v10143, %v10159
    %v10200 = vcombine.high %v10143, %v10159
    %v10202 = vunpack.c.l.s4 1934713408
    %v10203 = vunpack.c.0.s8 %v10202
    %v10204 = vlaneseq
    %v10205 = vshrl.u32 %v10204, 7
    %v10206 = vsub.s32 %v10203, %v10205
    %v10207 = vrot.slane %v10199, %v10206
    %v10209 = vunpack.c.l.s4 1934713408
    %v10210 = vunpack.c.0.s8 %v10209
    %v10211 = vlaneseq
    %v10212 = vshrl.u32 %v10211, 7
    %v10213 = vsub.s32 %v10210, %v10212
    %v10214 = vrot.slane %v10200, %v10213
    %v10215 = vcombine.low %v10150, %v10166
    %v10216 = vcombine.high %v10150, %v10166
    %v10218 = vunpack.c.l.s4 1934713408
    %v10219 = vunpack.c.0.s8 %v10218
    %v10220 = vlaneseq
    %v10221 = vshrl.u32 %v10220, 7
    %v10222 = vsub.s32 %v10219, %v10221
    %v10223 = vrot.slane %v10215, %v10222
    %v10225 = vunpack.c.l.s4 1934713408
    %v10226 = vunpack.c.0.s8 %v10225
    %v10227 = vlaneseq
    %v10228 = vshrl.u32 %v10227, 7
    %v10229 = vsub.s32 %v10226, %v10228
    %v10230 = vrot.slane %v10216, %v10229
    %v10231 = vcombine.low %v10175, %v10207
    %v10232 = vcombine.high %v10175, %v10207
    %v10233 = vcombine.low %v10182, %v10214
    %v10234 = vcombine.high %v10182, %v10214
    %v10235 = vcombine.low %v10191, %v10223
    %v10236 = vcombine.high %v10191, %v10223
    %v10237 = vcombine.low %v10198, %v10230
    %v10238 = vcombine.high %v10198, %v10230
    %v10239 = vcombine.low %v9279, %v9281
    %v10240 = vcombine.high %v9279, %v9281
    %v10242 = vunpack.c.l.s4 1983009808
    %v10243 = vunpack.c.0.s8 %v10242
    %v10244 = vlaneseq
    %v10245 = vshrl.u32 %v10244, 7
    %v10246 = vsub.s32 %v10243, %v10245
    %v10247 = vrot.slane %v10239, %v10246
    %v10249 = vunpack.c.l.s4 1983009808
    %v10250 = vunpack.c.0.s8 %v10249
    %v10251 = vlaneseq
    %v10252 = vshrl.u32 %v10251, 7
    %v10253 = vsub.s32 %v10250, %v10252
    %v10254 = vrot.slane %v10240, %v10253
    %v10255 = vcombine.low %v9280, %v9282
    %v10256 = vcombine.high %v9280, %v9282
    %v10258 = vunpack.c.l.s4 1983009808
    %v10259 = vunpack.c.0.s8 %v10258
    %v10260 = vlaneseq
    %v10261 = vshrl.u32 %v10260, 7
    %v10262 = vsub.s32 %v10259, %v10261
    %v10263 = vrot.slane %v10255, %v10262
    %v10265 = vunpack.c.l.s4 1983009808
    %v10266 = vunpack.c.0.s8 %v10265
    %v10267 = vlaneseq
    %v10268 = vshrl.u32 %v10267, 7
    %v10269 = vsub.s32 %v10266, %v10268
    %v10270 = vrot.slane %v10256, %v10269
    %v10271 = vcombine.low %v9283, %v9285
    %v10272 = vcombine.high %v9283, %v9285
    %v10274 = vunpack.c.l.s4 1983009808
    %v10275 = vunpack.c.0.s8 %v10274
    %v10276 = vlaneseq
    %v10277 = vshrl.u32 %v10276, 7
    %v10278 = vsub.s32 %v10275, %v10277
    %v10279 = vrot.slane %v10271, %v10278
    %v10281 = vunpack.c.l.s4 1983009808
    %v10282 = vunpack.c.0.s8 %v10281
    %v10283 = vlaneseq
    %v10284 = vshrl.u32 %v10283, 7
    %v10285 = vsub.s32 %v10282, %v10284
    %v10286 = vrot.slane %v10272, %v10285
    %v10287 = vcombine.low %v9284, %v9286
    %v10288 = vcombine.high %v9284, %v9286
    %v10290 = vunpack.c.l.s4 1983009808
    %v10291 = vunpack.c.0.s8 %v10290
    %v10292 = vlaneseq
    %v10293 = vshrl.u32 %v10292, 7
    %v10294 = vsub.s32 %v10291, %v10293
    %v10295 = vrot.slane %v10287, %v10294
    %v10297 = vunpack.c.l.s4 1983009808
    %v10298 = vunpack.c.0.s8 %v10297
    %v10299 = vlaneseq
    %v10300 = vshrl.u32 %v10299, 7
    %v10301 = vsub.s32 %v10298, %v10300
    %v10302 = vrot.slane %v10288, %v10301
    %v10303 = vcombine.low %v10247, %v10263
    %v10304 = vcombine.high %v10247, %v10263
    %v10306 = vunpack.c.l.s4 1934713408
    %v10307 = vunpack.c.0.s8 %v10306
    %v10308 = vlaneseq
    %v10309 = vshrl.u32 %v10308, 7
    %v10310 = vsub.s32 %v10307, %v10309
    %v10311 = vrot.slane %v10303, %v10310
    %v10313 = vunpack.c.l.s4 1934713408
    %v10314 = vunpack.c.0.s8 %v10313
    %v10315 = vlaneseq
    %v10316 = vshrl.u32 %v10315, 7
    %v10317 = vsub.s32 %v10314, %v10316
    %v10318 = vrot.slane %v10304, %v10317
    %v10319 = vcombine.low %v10254, %v10270
    %v10320 = vcombine.high %v10254, %v10270
    %v10322 = vunpack.c.l.s4 1934713408
    %v10323 = vunpack.c.0.s8 %v10322
    %v10324 = vlaneseq
    %v10325 = vshrl.u32 %v10324, 7
    %v10326 = vsub.s32 %v10323, %v10325
    %v10327 = vrot.slane %v10319, %v10326
    %v10329 = vunpack.c.l.s4 1934713408
    %v10330 = vunpack.c.0.s8 %v10329
    %v10331 = vlaneseq
    %v10332 = vshrl.u32 %v10331, 7
    %v10333 = vsub.s32 %v10330, %v10332
    %v10334 = vrot.slane %v10320, %v10333
    %v10335 = vcombine.low %v10279, %v10295
    %v10336 = vcombine.high %v10279, %v10295
    %v10338 = vunpack.c.l.s4 1934713408
    %v10339 = vunpack.c.0.s8 %v10338
    %v10340 = vlaneseq
    %v10341 = vshrl.u32 %v10340, 7
    %v10342 = vsub.s32 %v10339, %v10341
    %v10343 = vrot.slane %v10335, %v10342
    %v10345 = vunpack.c.l.s4 1934713408
    %v10346 = vunpack.c.0.s8 %v10345
    %v10347 = vlaneseq
    %v10348 = vshrl.u32 %v10347, 7
    %v10349 = vsub.s32 %v10346, %v10348
    %v10350 = vrot.slane %v10336, %v10349
    %v10351 = vcombine.low %v10286, %v10302
    %v10352 = vcombine.high %v10286, %v10302
    %v10354 = vunpack.c.l.s4 1934713408
    %v10355 = vunpack.c.0.s8 %v10354
    %v10356 = vlaneseq
    %v10357 = vshrl.u32 %v10356, 7
    %v10358 = vsub.s32 %v10355, %v10357
    %v10359 = vrot.slane %v10351, %v10358
    %v10361 = vunpack.c.l.s4 1934713408
    %v10362 = vunpack.c.0.s8 %v10361
    %v10363 = vlaneseq
    %v10364 = vshrl.u32 %v10363, 7
    %v10365 = vsub.s32 %v10362, %v10364
    %v10366 = vrot.slane %v10352, %v10365
    %v10367 = vcombine.low %v10311, %v10343
    %v10368 = vcombine.high %v10311, %v10343
    %v10369 = vcombine.low %v10318, %v10350
    %v10370 = vcombine.high %v10318, %v10350
    %v10371 = vcombine.low %v10327, %v10359
    %v10372 = vcombine.high %v10327, %v10359
    %v10373 = vcombine.low %v10334, %v10366
    %v10374 = vcombine.high %v10334, %v10366
    %v10375 = vcombine.low %v9415, %v9417
    %v10376 = vcombine.high %v9415, %v9417
    %v10378 = vunpack.c.l.s4 1983009808
    %v10379 = vunpack.c.0.s8 %v10378
    %v10380 = vlaneseq
    %v10381 = vshrl.u32 %v10380, 7
    %v10382 = vsub.s32 %v10379, %v10381
    %v10383 = vrot.slane %v10375, %v10382
    %v10385 = vunpack.c.l.s4 1983009808
    %v10386 = vunpack.c.0.s8 %v10385
    %v10387 = vlaneseq
    %v10388 = vshrl.u32 %v10387, 7
    %v10389 = vsub.s32 %v10386, %v10388
    %v10390 = vrot.slane %v10376, %v10389
    %v10391 = vcombine.low %v9416, %v9418
    %v10392 = vcombine.high %v9416, %v9418
    %v10394 = vunpack.c.l.s4 1983009808
    %v10395 = vunpack.c.0.s8 %v10394
    %v10396 = vlaneseq
    %v10397 = vshrl.u32 %v10396, 7
    %v10398 = vsub.s32 %v10395, %v10397
    %v10399 = vrot.slane %v10391, %v10398
    %v10401 = vunpack.c.l.s4 1983009808
    %v10402 = vunpack.c.0.s8 %v10401
    %v10403 = vlaneseq
    %v10404 = vshrl.u32 %v10403, 7
    %v10405 = vsub.s32 %v10402, %v10404
    %v10406 = vrot.slane %v10392, %v10405
    %v10407 = vcombine.low %v9419, %v9421
    %v10408 = vcombine.high %v9419, %v9421
    %v10410 = vunpack.c.l.s4 1983009808
    %v10411 = vunpack.c.0.s8 %v10410
    %v10412 = vlaneseq
    %v10413 = vshrl.u32 %v10412, 7
    %v10414 = vsub.s32 %v10411, %v10413
    %v10415 = vrot.slane %v10407, %v10414
    %v10417 = vunpack.c.l.s4 1983009808
    %v10418 = vunpack.c.0.s8 %v10417
    %v10419 = vlaneseq
    %v10420 = vshrl.u32 %v10419, 7
    %v10421 = vsub.s32 %v10418, %v10420
    %v10422 = vrot.slane %v10408, %v10421
    %v10423 = vcombine.low %v9420, %v9422
    %v10424 = vcombine.high %v9420, %v9422
    %v10426 = vunpack.c.l.s4 1983009808
    %v10427 = vunpack.c.0.s8 %v10426
    %v10428 = vlaneseq
    %v10429 = vshrl.u32 %v10428, 7
    %v10430 = vsub.s32 %v10427, %v10429
    %v10431 = vrot.slane %v10423, %v10430
    %v10433 = vunpack.c.l.s4 1983009808
    %v10434 = vunpack.c.0.s8 %v10433
    %v10435 = vlaneseq
    %v10436 = vshrl.u32 %v10435, 7
    %v10437 = vsub.s32 %v10434, %v10436
    %v10438 = vrot.slane %v10424, %v10437
    %v10439 = vcombine.low %v10383, %v10399
    %v10440 = vcombine.high %v10383, %v10399
    %v10442 = vunpack.c.l.s4 1934713408
    %v10443 = vunpack.c.0.s8 %v10442
    %v10444 = vlaneseq
    %v10445 = vshrl.u32 %v10444, 7
    %v10446 = vsub.s32 %v10443, %v10445
    %v10447 = vrot.slane %v10439, %v10446
    %v10449 = vunpack.c.l.s4 1934713408
    %v10450 = vunpack.c.0.s8 %v10449
    %v10451 = vlaneseq
    %v10452 = vshrl.u32 %v10451, 7
    %v10453 = vsub.s32 %v10450, %v10452
    %v10454 = vrot.slane %v10440, %v10453
    %v10455 = vcombine.low %v10390, %v10406
    %v10456 = vcombine.high %v10390, %v10406
    %v10458 = vunpack.c.l.s4 1934713408
    %v10459 = vunpack.c.0.s8 %v10458
    %v10460 = vlaneseq
    %v10461 = vshrl.u32 %v10460, 7
    %v10462 = vsub.s32 %v10459, %v10461
    %v10463 = vrot.slane %v10455, %v10462
    %v10465 = vunpack.c.l.s4 1934713408
    %v10466 = vunpack.c.0.s8 %v10465
    %v10467 = vlaneseq
    %v10468 = vshrl.u32 %v10467, 7
    %v10469 = vsub.s32 %v10466, %v10468
    %v10470 = vrot.slane %v10456, %v10469
    %v10471 = vcombine.low %v10415, %v10431
    %v10472 = vcombine.high %v10415, %v10431
    %v10474 = vunpack.c.l.s4 1934713408
    %v10475 = vunpack.c.0.s8 %v10474
    %v10476 = vlaneseq
    %v10477 = vshrl.u32 %v10476, 7
    %v10478 = vsub.s32 %v10475, %v10477
    %v10479 = vrot.slane %v10471, %v10478
    %v10481 = vunpack.c.l.s4 1934713408
    %v10482 = vunpack.c.0.s8 %v10481
    %v10483 = vlaneseq
    %v10484 = vshrl.u32 %v10483, 7
    %v10485 = vsub.s32 %v10482, %v10484
    %v10486 = vrot.slane %v10472, %v10485
    %v10487 = vcombine.low %v10422, %v10438
    %v10488 = vcombine.high %v10422, %v10438
    %v10490 = vunpack.c.l.s4 1934713408
    %v10491 = vunpack.c.0.s8 %v10490
    %v10492 = vlaneseq
    %v10493 = vshrl.u32 %v10492, 7
    %v10494 = vsub.s32 %v10491, %v10493
    %v10495 = vrot.slane %v10487, %v10494
    %v10497 = vunpack.c.l.s4 1934713408
    %v10498 = vunpack.c.0.s8 %v10497
    %v10499 = vlaneseq
    %v10500 = vshrl.u32 %v10499, 7
    %v10501 = vsub.s32 %v10498, %v10500
    %v10502 = vrot.slane %v10488, %v10501
    %v10503 = vcombine.low %v10447, %v10479
    %v10504 = vcombine.high %v10447, %v10479
    %v10505 = vcombine.low %v10454, %v10486
    %v10506 = vcombine.high %v10454, %v10486
    %v10507 = vcombine.low %v10463, %v10495
    %v10508 = vcombine.high %v10463, %v10495
    %v10509 = vcombine.low %v10470, %v10502
    %v10510 = vcombine.high %v10470, %v10502
    %10519 = vrot.lane.b32.xlu0 %v9552, 8
    %v10520 = vpop.permute.xlu0 %10519
    %10521 = vrot.lane.b32.xlu0 %v9688, 8
    %v10522 = vpop.permute.xlu0 %10521
    %10523 = vrot.lane.b32.xlu0 %v9824, 8
    %v10524 = vpop.permute.xlu0 %10523
    %10525 = vrot.lane.b32.xlu0 %v9960, 8
    %v10526 = vpop.permute.xlu0 %10525
    %10527 = vrot.lane.b32.xlu0 %v10096, 8
    %v10528 = vpop.permute.xlu0 %10527
    %10529 = vrot.lane.b32.xlu0 %v10232, 8
    %v10530 = vpop.permute.xlu0 %10529
    %10531 = vrot.lane.b32.xlu0 %v10368, 8
    %v10532 = vpop.permute.xlu0 %10531
    %10533 = vrot.lane.b32.xlu0 %v10504, 8
    %v10534 = vpop.permute.xlu0 %10533
    %10551 = vrot.lane.b32.xlu0 %v9553, 16
    %v10552 = vpop.permute.xlu0 %10551
    %10553 = vrot.lane.b32.xlu0 %v9689, 16
    %v10554 = vpop.permute.xlu0 %10553
    %10555 = vrot.lane.b32.xlu0 %v9825, 16
    %v10556 = vpop.permute.xlu0 %10555
    %10557 = vrot.lane.b32.xlu0 %v9961, 16
    %v10558 = vpop.permute.xlu0 %10557
    %10559 = vrot.lane.b32.xlu0 %v10097, 16
    %v10560 = vpop.permute.xlu0 %10559
    %10561 = vrot.lane.b32.xlu0 %v10233, 16
    %v10562 = vpop.permute.xlu0 %10561
    %10563 = vrot.lane.b32.xlu0 %v10369, 16
    %v10564 = vpop.permute.xlu0 %10563
    %10565 = vrot.lane.b32.xlu0 %v10505, 16
    %v10566 = vpop.permute.xlu0 %10565
    %10583 = vrot.lane.b32.xlu0 %v9554, 24
    %v10584 = vpop.permute.xlu0 %10583
    %10585 = vrot.lane.b32.xlu0 %v9690, 24
    %v10586 = vpop.permute.xlu0 %10585
    %10587 = vrot.lane.b32.xlu0 %v9826, 24
    %v10588 = vpop.permute.xlu0 %10587
    %10589 = vrot.lane.b32.xlu0 %v9962, 24
    %v10590 = vpop.permute.xlu0 %10589
    %10591 = vrot.lane.b32.xlu0 %v10098, 24
    %v10592 = vpop.permute.xlu0 %10591
    %10593 = vrot.lane.b32.xlu0 %v10234, 24
    %v10594 = vpop.permute.xlu0 %10593
    %10595 = vrot.lane.b32.xlu0 %v10370, 24
    %v10596 = vpop.permute.xlu0 %10595
    %10597 = vrot.lane.b32.xlu0 %v10506, 24
    %v10598 = vpop.permute.xlu0 %10597
    %10615 = vrot.lane.b32.xlu0 %v9555, 32
    %v10616 = vpop.permute.xlu0 %10615
    %10617 = vrot.lane.b32.xlu0 %v9691, 32
    %v10618 = vpop.permute.xlu0 %10617
    %10619 = vrot.lane.b32.xlu0 %v9827, 32
    %v10620 = vpop.permute.xlu0 %10619
    %10621 = vrot.lane.b32.xlu0 %v9963, 32
    %v10622 = vpop.permute.xlu0 %10621
    %10623 = vrot.lane.b32.xlu0 %v10099, 32
    %v10624 = vpop.permute.xlu0 %10623
    %10625 = vrot.lane.b32.xlu0 %v10235, 32
    %v10626 = vpop.permute.xlu0 %10625
    %10627 = vrot.lane.b32.xlu0 %v10371, 32
    %v10628 = vpop.permute.xlu0 %10627
    %10629 = vrot.lane.b32.xlu0 %v10507, 32
    %v10630 = vpop.permute.xlu0 %10629
    %10647 = vrot.lane.b32.xlu0 %v9556, 40
    %v10648 = vpop.permute.xlu0 %10647
    %10649 = vrot.lane.b32.xlu0 %v9692, 40
    %v10650 = vpop.permute.xlu0 %10649
    %10651 = vrot.lane.b32.xlu0 %v9828, 40
    %v10652 = vpop.permute.xlu0 %10651
    %10653 = vrot.lane.b32.xlu0 %v9964, 40
    %v10654 = vpop.permute.xlu0 %10653
    %10655 = vrot.lane.b32.xlu0 %v10100, 40
    %v10656 = vpop.permute.xlu0 %10655
    %10657 = vrot.lane.b32.xlu0 %v10236, 40
    %v10658 = vpop.permute.xlu0 %10657
    %10659 = vrot.lane.b32.xlu0 %v10372, 40
    %v10660 = vpop.permute.xlu0 %10659
    %10661 = vrot.lane.b32.xlu0 %v10508, 40
    %v10662 = vpop.permute.xlu0 %10661
    %10679 = vrot.lane.b32.xlu0 %v9557, 48
    %v10680 = vpop.permute.xlu0 %10679
    %10681 = vrot.lane.b32.xlu0 %v9693, 48
    %v10682 = vpop.permute.xlu0 %10681
    %10683 = vrot.lane.b32.xlu0 %v9829, 48
    %v10684 = vpop.permute.xlu0 %10683
    %10685 = vrot.lane.b32.xlu0 %v9965, 48
    %v10686 = vpop.permute.xlu0 %10685
    %10687 = vrot.lane.b32.xlu0 %v10101, 48
    %v10688 = vpop.permute.xlu0 %10687
    %10689 = vrot.lane.b32.xlu0 %v10237, 48
    %v10690 = vpop.permute.xlu0 %10689
    %10691 = vrot.lane.b32.xlu0 %v10373, 48
    %v10692 = vpop.permute.xlu0 %10691
    %10693 = vrot.lane.b32.xlu0 %v10509, 48
    %v10694 = vpop.permute.xlu0 %10693
    %10711 = vrot.lane.b32.xlu0 %v9558, 56
    %v10712 = vpop.permute.xlu0 %10711
    %10713 = vrot.lane.b32.xlu0 %v9694, 56
    %v10714 = vpop.permute.xlu0 %10713
    %10715 = vrot.lane.b32.xlu0 %v9830, 56
    %v10716 = vpop.permute.xlu0 %10715
    %10717 = vrot.lane.b32.xlu0 %v9966, 56
    %v10718 = vpop.permute.xlu0 %10717
    %10719 = vrot.lane.b32.xlu0 %v10102, 56
    %v10720 = vpop.permute.xlu0 %10719
    %10721 = vrot.lane.b32.xlu0 %v10238, 56
    %v10722 = vpop.permute.xlu0 %10721
    %10723 = vrot.lane.b32.xlu0 %v10374, 56
    %v10724 = vpop.permute.xlu0 %10723
    %10725 = vrot.lane.b32.xlu0 %v10510, 56
    %v10726 = vpop.permute.xlu0 %10725
    %v10735 = vsel %vm979, %v9551, %v10520
    %v10736 = vsel %vm979, %v9687, %v10522
    %v10737 = vsel %vm979, %v9823, %v10524
    %v10738 = vsel %vm979, %v9959, %v10526
    %v10739 = vsel %vm979, %v10095, %v10528
    %v10740 = vsel %vm979, %v10231, %v10530
    %v10741 = vsel %vm979, %v10367, %v10532
    %v10742 = vsel %vm979, %v10503, %v10534
    %v10743 = vsel %vm5589, %v10735, %v10552
    %v10744 = vsel %vm5589, %v10736, %v10554
    %v10745 = vsel %vm5589, %v10737, %v10556
    %v10746 = vsel %vm5589, %v10738, %v10558
    %v10747 = vsel %vm5589, %v10739, %v10560
    %v10748 = vsel %vm5589, %v10740, %v10562
    %v10749 = vsel %vm5589, %v10741, %v10564
    %v10750 = vsel %vm5589, %v10742, %v10566
    %v10751 = vsel %vm5598, %v10743, %v10584
    %v10752 = vsel %vm5598, %v10744, %v10586
    %v10753 = vsel %vm5598, %v10745, %v10588
    %v10754 = vsel %vm5598, %v10746, %v10590
    %v10755 = vsel %vm5598, %v10747, %v10592
    %v10756 = vsel %vm5598, %v10748, %v10594
    %v10757 = vsel %vm5598, %v10749, %v10596
    %v10758 = vsel %vm5598, %v10750, %v10598
    %v10759 = vsel %vm5607, %v10751, %v10616
    %v10760 = vsel %vm5607, %v10752, %v10618
    %v10761 = vsel %vm5607, %v10753, %v10620
    %v10762 = vsel %vm5607, %v10754, %v10622
    %v10763 = vsel %vm5607, %v10755, %v10624
    %v10764 = vsel %vm5607, %v10756, %v10626
    %v10765 = vsel %vm5607, %v10757, %v10628
    %v10766 = vsel %vm5607, %v10758, %v10630
    %v10767 = vsel %vm5616, %v10759, %v10648
    %v10768 = vsel %vm5616, %v10760, %v10650
    %v10769 = vsel %vm5616, %v10761, %v10652
    %v10770 = vsel %vm5616, %v10762, %v10654
    %v10771 = vsel %vm5616, %v10763, %v10656
    %v10772 = vsel %vm5616, %v10764, %v10658
    %v10773 = vsel %vm5616, %v10765, %v10660
    %v10774 = vsel %vm5616, %v10766, %v10662
    %v10775 = vsel %vm5625, %v10767, %v10680
    %v10776 = vsel %vm5625, %v10768, %v10682
    %v10777 = vsel %vm5625, %v10769, %v10684
    %v10778 = vsel %vm5625, %v10770, %v10686
    %v10779 = vsel %vm5625, %v10771, %v10688
    %v10780 = vsel %vm5625, %v10772, %v10690
    %v10781 = vsel %vm5625, %v10773, %v10692
    %v10782 = vsel %vm5625, %v10774, %v10694
    %v10783 = vsel %vm5634, %v10775, %v10712
    %v10784 = vsel %vm5634, %v10776, %v10714
    %v10785 = vsel %vm5634, %v10777, %v10716
    %v10786 = vsel %vm5634, %v10778, %v10718
    %v10787 = vsel %vm5634, %v10779, %v10720
    %v10788 = vsel %vm5634, %v10780, %v10722
    %v10789 = vsel %vm5634, %v10781, %v10724
    %v10790 = vsel %vm5634, %v10782, %v10726
    %v10791 = vpack.c.bf16 %v10784, %v10783
    %v10792 = vpack.c.bf16 %v10786, %v10785
    %v10793 = vpack.c.bf16 %v10788, %v10787
    %v10794 = vpack.c.bf16 %v10790, %v10789
    %v10795 = vld [vmem:[#allocation10] sm:$0xf]
    %v10796 = vld [vmem:[#allocation10 + $0x4] sm:$0xf]
    %v10797 = vld [vmem:[#allocation10 + $0x8] sm:$0xf]
    %v10798 = vld [vmem:[#allocation10 + $0xc] sm:$0xf]
    %v10799 = vld [vmem:[#allocation10 + $0x10] sm:$0xf]
    %v10800 = vld [vmem:[#allocation10 + $0x14] sm:$0xf]
    %v10801 = vld [vmem:[#allocation10 + $0x18] sm:$0xf]
    %v10802 = vld [vmem:[#allocation10 + $0x1c] sm:$0xf]
    %v10803 = vld [vmem:[%s8] sm:$0x1]
    %v10805 = vlaneseq
    %v10806 = vshrl.u32 %v10805, 7
    %v10807 = vsub.s32 0, %v10806
    %v10808 = vrot.slane %v10803, %v10807
    %v10818 = vunpack.c.l.b16 %v10795
    %v10819 = vunpack.c.l.b16 %v10796
    %v10820 = vunpack.c.l.b16 %v10797
    %v10821 = vunpack.c.l.b16 %v10798
    %v10822 = vunpack.c.l.b16 %v10799
    %v10823 = vunpack.c.l.b16 %v10800
    %v10824 = vunpack.c.l.b16 %v10801
    %v10825 = vunpack.c.l.b16 %v10802
    %v10826 = vpack.c.b16 %v10819, %v10818
    %v10827 = vpack.c.b16 %v10821, %v10820
    %v10828 = vpack.c.b16 %v10823, %v10822
    %v10829 = vpack.c.b16 %v10825, %v10824
    %v10835 = vsel %vm197, %v10791, 0
    %v10838 = vsel %vm197, %v10792, 0
    %v10841 = vsel %vm197, %v10793, 0
    %v10844 = vsel %vm197, %v10794, 0
    %10846 = vmatprep.subr.bf16.mxu0 0
    %10847 = vmatpush1.bf16.msra.mxu0 0
    %10848 = vmatprep.subr.bf16.mxu0 0
    %10849 = vmatpush1.bf16.msra.mxu0 0
    %10850 = vmatprep.subr.bf16.mxu0 0
    %10851 = vmatpush1.bf16.msra.mxu0 0
    %10852 = vmatprep.subr.bf16.mxu0 0
    %10853 = vmatpush1.bf16.msra.mxu0 0
    %10854 = vmatprep.subr.bf16.mxu0 0
    %10855 = vmatpush1.bf16.msra.mxu0 %v10829
    %10856 = vmatprep.subr.bf16.mxu0 0
    %10857 = vmatpush1.bf16.msra.mxu0 %v10828
    %10858 = vmatprep.subr.bf16.mxu0 0
    %10859 = vmatpush1.bf16.msra.mxu0 %v10827
    %10860 = vmatprep.subr.bf16.mxu0 0
    %10861 = vmatpush1.bf16.msra.mxu0 %v10826
    %10862 = vmatprep.subr.bf16.mxu0 0
    %10863 = vmatpush2.bf16.msra.mxu0 0
    %10864 = vmatprep.subr.bf16.mxu0 0
    %10865 = vmatpush2.bf16.msra.mxu0 0
    %10866 = vmatprep.subr.bf16.mxu0 0
    %10867 = vmatpush2.bf16.msra.mxu0 0
    %10868 = vmatprep.subr.bf16.mxu0 0
    %10869 = vmatpush2.bf16.msra.mxu0 0
    %10870 = vmatprep.subr.bf16.mxu0 0
    %10871 = vmatpush2.bf16.msra.mxu0 0
    %10872 = vmatprep.subr.bf16.mxu0 0
    %10873 = vmatpush2.bf16.msra.mxu0 0
    %10874 = vmatprep.subr.bf16.mxu0 0
    %10875 = vmatpush2.bf16.msra.mxu0 0
    %10876 = vmatprep.subr.bf16.mxu0 0
    %10877 = vmatpush2.bf16.msra.mxu0 0
    %10878 = vmatprep.mubr.bf16.mxu0 0
    %10879 = vmatmul.mubr.bf16.gmra.mxu0 %v10835
    %v10880 = vpop.f32.mrf.mxu0
    %v10881 = vadd.f32 %v10808, %v10880
    %v10882 = vpop.f32.mrf.mxu0
    %v10883 = vpop.f32.mrf.mxu0
    %v10884 = vadd.f32 %v10808, %v10883
    %v10885 = vpop.f32.mrf.mxu0
    %10886 = vmatprep.mubr.bf16.mxu0 0
    %10887 = vmatmul.mubr.bf16.gmra.mxu0 %v10838
    %v10888 = vpop.f32.mrf.mxu0
    %v10889 = vadd.f32 %v10808, %v10888
    %v10890 = vpop.f32.mrf.mxu0
    %v10891 = vpop.f32.mrf.mxu0
    %v10892 = vadd.f32 %v10808, %v10891
    %v10893 = vpop.f32.mrf.mxu0
    %10894 = vmatprep.mubr.bf16.mxu0 0
    %10895 = vmatmul.mubr.bf16.gmra.mxu0 %v10841
    %v10896 = vpop.f32.mrf.mxu0
    %v10897 = vadd.f32 %v10808, %v10896
    %v10898 = vpop.f32.mrf.mxu0
    %v10899 = vpop.f32.mrf.mxu0
    %v10900 = vadd.f32 %v10808, %v10899
    %v10901 = vpop.f32.mrf.mxu0
    %10902 = vmatprep.mubr.bf16.mxu0 0
    %10903 = vmatmul.mubr.bf16.gmra.mxu0 %v10844
    %v10904 = vpop.f32.mrf.mxu0
    %v10905 = vadd.f32 %v10808, %v10904
    %v10906 = vpop.f32.mrf.mxu0
    %v10907 = vpop.f32.mrf.mxu0
    %v10908 = vadd.f32 %v10808, %v10907
    %v10909 = vpop.f32.mrf.mxu0
    %10910 = vdwg.mxu0
    %s10911 = scalar_lea.vmem [#allocation11], 64
    %10912 = vst.msk [vmem:[%s10911] sm:$0xff] %vm197, %v10881
    %10913 = vst.msk [vmem:[%s10911 + $0x8] sm:$0xff] %vm197, %v10884
    %10914 = vst.msk [vmem:[%s10911 + $0x10] sm:$0xff] %vm197, %v10889
    %10915 = vst.msk [vmem:[%s10911 + $0x18] sm:$0xff] %vm197, %v10892
    %10916 = vst.msk [vmem:[%s10911 + $0x20] sm:$0xff] %vm197, %v10897
    %10917 = vst.msk [vmem:[%s10911 + $0x28] sm:$0xff] %vm197, %v10900
    %10918 = vst.msk [vmem:[%s10911 + $0x30] sm:$0xff] %vm197, %v10905
    %10919 = vst.msk [vmem:[%s10911 + $0x38] sm:$0xff] %vm197, %v10908
    // Predicated region
    $region58: #{tpu_custom_call.1} parent=1 // pred_check
      _
    $region59: #{tpu_custom_call.1} parent=1 // pred_check_branch
      %10921 = sbr.rel (0) target = $region61
    $region60: #{tpu_custom_call.1} parent=1 // pred_region
      %s10923 = ssub.s32 2048, 2048
      %10924 = vsyncadd [#allocation4], %s10923
      %s10925 = sshll.u32 [#allocation11], 4
      %s10926 = int_to_ptr.vmem [resolvable:$true] %s10925
      %10931 = dma.vmem_to_hbm [thread:$0]  %s10926, 2048, %s9, [#allocation4], 128, 128, 8
    $region61: #{tpu_custom_call.1} parent=1 // pred_fallthru
      _
    // Predicated region
    $region62: #{tpu_custom_call.1} parent=1 // pred_check
      _
    $region63: #{tpu_custom_call.1} parent=1 // pred_check_branch
      %10933 = sbr.rel (0) target = $region65
    $region64: #{tpu_custom_call.1} parent=1 // pred_region
      %10934 = dma.done [#allocation4], 2048
    $region65: #{tpu_custom_call.1} parent=1 // pred_fallthru
      _
    %10935 = vsyncpa [#allocation3], 1
    %10936 = vsyncpa [#allocation6], 1
    %10937 = vsyncpa [#allocation9], 1
    %10938 = vsyncpa [#allocation4], 1

</llo_original>
